<compile_context>
chip_gen: v7x
topology: tpu7x:2x2x1
jax: 0.10.0
libtpu: 0.0.40
codegen_flags: <defaults>
</compile_context>

<pallas_src>
import functools

import jax
import jax.numpy as jnp
import numpy as np
from jax.experimental import pallas as pl
from jax.experimental.pallas import tpu as pltpu

F32 = jnp.float32


# ============================================================================
# Trace-time (numpy) constant builders — nothing here runs on the TPU.
# ============================================================================
def _attn_consts(seq_rows, embed, num_heads, batch):
    """Constants for packed-Q multi-head attention on an (R, E) matrix whose
    rows are seq-major / batch-minor:
      rep   (H*R, R): tiles the queries once per head,
      bmask (H*R, E): zeroes every column outside the row's head,
      repT  (R, H*R): collapses per-head contexts back to (R, E),
      amask (H*R, R): additive 0/-1e9 mask restricting attention to rows of
                      the same batch element (all-zero when batch == 1)."""
    R, E = seq_rows, embed
    dh = E // num_heads
    HR = num_heads * R
    rep = np.zeros((HR, R), np.float32)
    bmask = np.zeros((HR, E), np.float32)
    for h in range(num_heads):
        rep[h * R:(h + 1) * R, :] = np.eye(R, dtype=np.float32)
        bmask[h * R:(h + 1) * R, h * dh:(h + 1) * dh] = 1.0
    qi = np.arange(HR) % R
    kj = np.arange(R)
    amask = np.where((qi[:, None] % batch) == (kj[None, :] % batch),
                     0.0, -1e9).astype(np.float32)
    return rep, bmask, np.ascontiguousarray(rep.T), amask


def _perm_a_consts(n, c, sc):
    """(NR, C) rows (n,h,w,d) -> (R1, E) rows (n,w,d), cols c*sc+h."""
    nr, r1, e = n * sc ** 3, n * sc * sc, c * sc
    P = np.zeros((sc, r1, nr), np.float32)
    Q = np.zeros((sc, c, e), np.float32)
    rp = np.arange(r1)[:, None]
    rs = np.arange(nr)[None, :]
    cq = np.arange(c)[:, None]
    ce = np.arange(e)[None, :]
    for h in range(sc):
        P[h] = ((rs // sc ** 3 == rp // sc ** 2)
                & ((rs // sc ** 2) % sc == h)
                & (rs % sc ** 2 == rp % sc ** 2))
        Q[h] = (ce == cq * sc + h)
    return P.reshape(sc * r1, nr), Q.reshape(sc * c, e)


def _swap_consts(n, c, sc, mid):
    """Exchange a row sub-index (middle / low) with the column-block index:
    the relabeling between consecutive h_att passes in the reference."""
    r1, e, k = n * sc * sc, c * sc, sc * sc
    P = np.zeros((k, r1, r1), np.float32)
    Q = np.zeros((k, e, e), np.float32)
    rr = np.arange(r1)[:, None]
    rc = np.arange(r1)[None, :]
    er = np.arange(e)[:, None]
    ec = np.arange(e)[None, :]
    idx = 0
    for a in range(sc):
        for b in range(sc):
            if mid:
                pm = ((rr // sc ** 2 == rc // sc ** 2)
                      & ((rr // sc) % sc == b) & ((rc // sc) % sc == a)
                      & (rr % sc == rc % sc))
            else:
                pm = ((rr // sc == rc // sc)
                      & (rr % sc == b) & (rc % sc == a))
            qm = (er // c == b) & (ec // c == a) & (er % c == ec % c)
            P[idx] = pm
            Q[idx] = qm
            idx += 1
    return P.reshape(k * r1, r1), Q.reshape(k * e, e)


def _perm_d_consts(n, c, sc):
    """(R1, E) rows (n,h,w), cols d*C+c -> (NR, C) rows (n,h,w,d)."""
    nr, r1, e = n * sc ** 3, n * sc * sc, c * sc
    P = np.zeros((sc, nr, r1), np.float32)
    Q = np.zeros((sc, e, c), np.float32)
    rp = np.arange(nr)[:, None]
    rs = np.arange(r1)[None, :]
    er = np.arange(e)[:, None]
    ec = np.arange(c)[None, :]
    for d in range(sc):
        P[d] = (rp == rs * sc + d)
        Q[d] = (er == ec + d * c)
    return P.reshape(sc * nr, r1), Q.reshape(sc * e, c)


def _gate_consts(n, c):
    nc = n * c
    gsel = (np.arange(n)[:, None] == np.arange(nc)[None, :] // c)   # (N, NC)
    rsel = (np.arange(nc)[:, None] % c == np.arange(c)[None, :])    # (NC, C)
    asel = (np.arange(nc)[:, None] // c == np.arange(n)[None, :])   # (NC, N)
    return (gsel.astype(np.float32), rsel.astype(np.float32),
            asel.astype(np.float32))


# ============================================================================
# In-kernel building block: post-LN nn.TransformerEncoderLayer on (R, E)
# ============================================================================
def _encoder_layer(x, rep, bmask, repT,
                   wi, bi, wo, bo, w1, b1, w2, b2, g1, be1, g2, be2,
                   amask=None):
    """Packed-Q multi-head attention + FFN, post-LayerNorm (PyTorch default,
    eval mode).  wi/bi are the fused (E, 3E) in-projection with the 1/sqrt(dh)
    attention scale pre-folded into the Q third.  rep/bmask/repT/amask are
    precomputed constants; dropout = identity."""
    R, E = x.shape

    qkv = jnp.dot(x, wi, preferred_element_type=F32) + bi          # (R, 3E)
    q = qkv[:, 0:E]
    k = qkv[:, E:2 * E]
    v = qkv[:, 2 * E:3 * E]

    q_pack = jnp.dot(rep, q, preferred_element_type=F32) * bmask   # (H*R, E)
    scores = jax.lax.dot_general(q_pack, k, (((1,), (1,)), ((), ())),
                                 preferred_element_type=F32)       # (H*R, R)
    if amask is not None:
        scores = scores + amask
    m = jnp.max(scores, axis=-1, keepdims=True)                    # per-head max
    p = jnp.exp(scores - m)
    denom = jnp.sum(p, axis=-1, keepdims=True)                     # >= 1 always
    p = p * pl.reciprocal(denom, approx=True)
    ctx_pack = jnp.dot(p, v, preferred_element_type=F32)           # (H*R, E)
    ctx = jnp.dot(repT, ctx_pack * bmask, preferred_element_type=F32)  # (R, E)

    src = x + jnp.dot(ctx, wo, preferred_element_type=F32) + bo
    mu = jnp.mean(src, axis=-1, keepdims=True)
    var = jnp.mean((src - mu) ** 2, axis=-1, keepdims=True)
    y = (src - mu) * jax.lax.rsqrt(var + 1e-5) * g1 + be1

    h = jnp.maximum(jnp.dot(y, w1, preferred_element_type=F32) + b1, 0.0)
    src2 = y + jnp.dot(h, w2, preferred_element_type=F32) + b2
    mu2 = jnp.mean(src2, axis=-1, keepdims=True)
    var2 = jnp.mean((src2 - mu2) ** 2, axis=-1, keepdims=True)
    return (src2 - mu2) * jax.lax.rsqrt(var2 + 1e-5) * g2 + be2


# ============================================================================
# Kernel 1: fused ChAtt branch + channel gate
# ============================================================================
def chatt_gate_kernel(x_ref, wmr_ref, war_ref, gsel_ref, cb_ref, asel_ref,
                      rsel_ref, rep_ref, bmask_ref, repT_ref,
                      wi_ref, bi_ref, wo_ref, bo_ref, w1_ref, b1_ref,
                      w2_ref, b2_ref, g1_ref, be1_ref, g2_ref, be2_ref,
                      ident_ref):
    x = x_ref[...]                                          # (N*C, S0)

    # AdaptiveMax/AvgPool3d(1) + Conv3d(2C, C, 1) on cat([max, avg], dim=1):
    # the conv weight rows are pre-tiled per (n, c) row at trace time, so the
    # whole chain is 2 broadcast FMAs + ONE matmul.
    mv = jnp.max(x, axis=-1, keepdims=True)                 # (NC, 1)
    av = jnp.mean(x, axis=-1, keepdims=True)                # (NC, 1)
    tmp = mv * wmr_ref[...] + av * war_ref[...]             # (NC, C)
    conv_out = (jnp.dot(gsel_ref[...], tmp, preferred_element_type=F32)
                + cb_ref[...])                              # (N, C)

    # TransformerEncoderLayer (seq=N, batch=1, E=C) -> gate (N, C)
    gate = _encoder_layer(conv_out, rep_ref[...], bmask_ref[...], repT_ref[...],
                          wi_ref[...], bi_ref[...], wo_ref[...], bo_ref[...],
                          w1_ref[...], b1_ref[...], w2_ref[...], b2_ref[...],
                          g1_ref[...], be1_ref[...], g2_ref[...], be2_ref[...])

    # gate (N, C) -> per-row (NC, 1) column, then identity = x + x * gate
    col = jnp.sum(jnp.dot(asel_ref[...], gate, preferred_element_type=F32)
                  * rsel_ref[...], axis=-1, keepdims=True)  # (NC, 1)
    ident_ref[...] = x * (1.0 + col)


# ============================================================================
# Kernel 2: fused SpAtt branch (+ final residual), everything in patch layout
# ============================================================================
def spatt_kernel(p_ref, wcT_ref, cb_ref,
                 paP_ref, paQ_ref, smP_ref, smQ_ref, slP_ref, slQ_ref,
                 pdP_ref, pdQ_ref,
                 rep_ref, bmask_ref, repT_ref, amask_ref,
                 wi_ref, bi_ref, wo_ref, bo_ref, w1_ref, b1_ref,
                 w2_ref, b2_ref, g1_ref, be1_ref, g2_ref, be2_ref,
                 wt_ref, bt_ref,
                 out_ref, *, sc, c):
    patches = p_ref[...]                    # (N*sc^3, C*378) == identity, patch layout
    nr = patches.shape[0]                   # rows ordered (n, h, w, d)
    n = nr // sc ** 3
    r1 = n * sc * sc                        # transformer rows = seq N x batch sc^2
    e = c * sc                              # transformer width

    # Conv3d(C, C, (7,9,6), stride=(7,9,6)) as one lane-dense matmul with the
    # weight pre-transposed at trace time (no in-kernel relayout).
    y = jnp.dot(patches, wcT_ref[...], preferred_element_type=F32) + cb_ref[...]

    def perm(arr, P_cat, Q_cat, k, r_out, e_in):
        # sum_h pm_h @ arr @ qm_h with all pm/qm precomputed:
        # 1 stacked matmul + k tiny matmuls on aligned sublane slices.
        z = jnp.dot(P_cat, arr, preferred_element_type=F32)
        out = jnp.dot(z[0:r_out, :], Q_cat[0:e_in, :],
                      preferred_element_type=F32)
        for h in range(1, k):
            out = out + jnp.dot(z[h * r_out:(h + 1) * r_out, :],
                                Q_cat[h * e_in:(h + 1) * e_in, :],
                                preferred_element_type=F32)
        return out

    attn = (rep_ref[...], bmask_ref[...], repT_ref[...])
    wts = (wi_ref[...], bi_ref[...], wo_ref[...], bo_ref[...],
           w1_ref[...], b1_ref[...], w2_ref[...], b2_ref[...],
           g1_ref[...], be1_ref[...], g2_ref[...], be2_ref[...])
    amask = amask_ref[...]

    # three h_att passes (shared weights) interleaved with the relabelings of
    # the reference reshape/permute chain (element permutations).
    t = perm(y, paP_ref[...], paQ_ref[...], sc, r1, c)          # (R1, E)
    t = _encoder_layer(t, *attn, *wts, amask=amask)
    t = perm(t, smP_ref[...], smQ_ref[...], sc * sc, r1, e)
    t = _encoder_layer(t, *attn, *wts, amask=amask)
    t = perm(t, slP_ref[...], slQ_ref[...], sc * sc, r1, e)
    t = _encoder_layer(t, *attn, *wts, amask=amask)
    zin = perm(t, pdP_ref[...], pdQ_ref[...], sc, nr, e)        # (NR, C)

    # ConvTranspose3d(C, C, (7,9,6), stride=(7,9,6)) + final residual
    rev = jnp.dot(zin, wt_ref[...], preferred_element_type=F32) + bt_ref[...]
    out_ref[...] = patches + rev            # identity + sp_att(identity)


# ============================================================================
# pallas_call helpers (small problem -> single whole-array blocks in VMEM)
# ============================================================================
def _vmem():
    return pl.BlockSpec(memory_space=pltpu.MemorySpace.VMEM)


def _pcall(kernel, out_shape, *args, cost=None, alias=None):
    return pl.pallas_call(
        kernel,
        out_shape=out_shape,
        in_specs=[_vmem() for _ in args],
        out_specs=_vmem(),
        cost_estimate=cost,
        input_output_aliases=alias if alias is not None else {},
    )(*args)


def _tfm_inputs(p, num_heads):
    """PyTorch TransformerEncoderLayer params -> 12 matmul-ready kernel inputs.
    The in-projection stays fused (E, 3E) and the 1/sqrt(dh) attention scale is
    folded into its Q third at trace time."""
    E = p["ln1_g"].shape[0]
    Fh = p["lin1_w"].shape[0]
    dh = E // num_heads
    scale = 1.0 / float(dh) ** 0.5
    col_scale = jnp.concatenate([jnp.full((E,), scale, F32),
                                 jnp.ones((2 * E,), F32)])
    wi = p["in_proj_w"].T * col_scale[None, :]               # (E, 3E)
    bi = (p["in_proj_b"] * col_scale).reshape(1, 3 * E)
    return (
        wi, bi,
        p["out_proj_w"].T, p["out_proj_b"].reshape(1, E),
        p["lin1_w"].T, p["lin1_b"].reshape(1, Fh),
        p["lin2_w"].T, p["lin2_b"].reshape(1, E),
        p["ln1_g"].reshape(1, E), p["ln1_b"].reshape(1, E),
        p["ln2_g"].reshape(1, E), p["ln2_b"].reshape(1, E),
    )


# ============================================================================
# Parameter init (deterministic, synthetic)
# ============================================================================
def _init_transformer(key, d_model, dim_ff):
    ks = jax.random.split(key, 8)
    nrm = lambda k, s: 0.05 * jax.random.normal(k, s, F32)
    return dict(
        in_proj_w=nrm(ks[0], (3 * d_model, d_model)),
        in_proj_b=nrm(ks[1], (3 * d_model,)),
        out_proj_w=nrm(ks[2], (d_model, d_model)),
        out_proj_b=nrm(ks[3], (d_model,)),
        lin1_w=nrm(ks[4], (dim_ff, d_model)),
        lin1_b=nrm(ks[5], (dim_ff,)),
        lin2_w=nrm(ks[6], (d_model, dim_ff)),
        lin2_b=nrm(ks[7], (d_model,)),
        ln1_g=jnp.ones((d_model,), F32),
        ln1_b=jnp.zeros((d_model,), F32),
        ln2_g=jnp.ones((d_model,), F32),
        ln2_b=jnp.zeros((d_model,), F32),
    )


def init_params(key, C, scale):
    ks = jax.random.split(key, 6)
    nrm = lambda k, s: 0.05 * jax.random.normal(k, s, F32)
    return dict(
        chatt_conv_w=nrm(ks[0], (C, 2 * C)),          # Conv3d(2C, C, 1) weight (squeezed)
        chatt_conv_b=nrm(ks[1], (C,)),
        ch_att=_init_transformer(ks[2], C, max(C // 4, 1)),
        sp_conv_w=nrm(ks[3], (C, C, 7, 9, 6)),        # Conv3d(C, C, (7,9,6), stride=(7,9,6))
        sp_conv_b=nrm(ks[3], (C,)) * 0.0 + 0.01,
        h_att=_init_transformer(ks[4], C * scale, (C * scale) // 4),
        sp_rev_w=nrm(ks[5], (C, C, 7, 9, 6)),         # ConvTranspose3d(C, C, (7,9,6), stride)
        sp_rev_b=nrm(ks[5], (C,)) * 0.0 + 0.01,
    )


# ============================================================================
# Forward pass
# ============================================================================
def ch_sp_att_forward(x, params, *, num_heads=8):
    N, C, S1, S2, S3 = x.shape
    kH, kW, kD = 7, 9, 6
    H, W, D = S1 // kH, S2 // kW, S3 // kD
    assert H == W == D and H * kH == S1 and W * kW == S2 and D * kD == S3
    sc = H
    S0 = S1 * S2 * S3
    KV = kH * kW * kD
    NC = N * C
    NR = N * H * W * D
    assert C % num_heads == 0 and (C * sc) % num_heads == 0

    x2d = x.astype(F32).reshape(NC, S0)

    # ------------- ChAtt: trace-time constants & matmul-ready weights -------
    gsel, rsel, asel = _gate_consts(N, C)
    rep1, bmask1, repT1, _ = _attn_consts(N, C, num_heads, batch=1)
    wmr = jnp.tile(params["chatt_conv_w"][:, :C].T, (N, 1))   # (NC, C)
    war = jnp.tile(params["chatt_conv_w"][:, C:].T, (N, 1))   # (NC, C)
    cb1 = params["chatt_conv_b"].reshape(1, C)
    ch_w = _tfm_inputs(params["ch_att"], num_heads)

    ce1 = pl.CostEstimate(
        flops=6 * NC * S0 + 8 * N * C * C,
        transcendentals=num_heads * N * N + 4 * N,
        bytes_accessed=4 * (2 * NC * S0 + 6 * NC * C),
    )

    identity2d = _pcall(
        chatt_gate_kernel,
        jax.ShapeDtypeStruct((NC, S0), F32),
        x2d, wmr, war, gsel, cb1, asel, rsel, rep1, bmask1, repT1, *ch_w,
        cost=ce1, alias={0: 0},
    )

    # patch gather: (N,C,S1,S2,S3) -> (N*H*W*D, C*7*9*6)  (pure relayout, XLA)
    patches = (identity2d.reshape(N, C, H, kH, W, kW, D, kD)
               .transpose(0, 2, 4, 6, 1, 3, 5, 7)
               .reshape(NR, C * KV))

    # ------------- SpAtt: trace-time constants & matmul-ready weights -------
    R2, E2 = N * sc * sc, C * sc
    rep2, bmask2, repT2, amask2 = _attn_consts(R2, E2, num_heads, batch=sc * sc)
    paP, paQ = _perm_a_consts(N, C, sc)
    smP, smQ = _swap_consts(N, C, sc, mid=True)
    slP, slQ = _swap_consts(N, C, sc, mid=False)
    pdP, pdQ = _perm_d_consts(N, C, sc)
    wcT = params["sp_conv_w"].reshape(C, C * KV).T            # (C*KV, C)
    cb2 = params["sp_conv_b"].reshape(1, C)
    h_w = _tfm_inputs(params["h_att"], num_heads)
    wt = params["sp_rev_w"].reshape(C, C * KV)
    bt = jnp.repeat(params["sp_rev_b"], KV).reshape(1, C * KV)

    ce2 = pl.CostEstimate(
        flops=4 * NR * C * KV * C + 24 * R2 * E2 * E2,
        transcendentals=3 * (num_heads * R2 * R2 + 4 * R2),
        bytes_accessed=4 * (2 * NR * C * KV + 2 * C * C * KV + C * KV),
    )

    k2 = functools.partial(spatt_kernel, sc=sc, c=C)
    out_patches = _pcall(
        k2, jax.ShapeDtypeStruct((NR, C * KV), F32),
        patches, wcT, cb2,
        paP, paQ, smP, smQ, slP, slQ, pdP, pdQ,
        rep2, bmask2, repT2, amask2, *h_w, wt, bt,
        cost=ce2, alias={0: 0},
    )

    # patch scatter back: (N*H*W*D, C*7*9*6) -> (N, C, S1, S2, S3)
    out = (out_patches.reshape(N, H, W, D, C, kH, kW, kD)
           .transpose(0, 4, 1, 5, 2, 6, 3, 7)
           .reshape(N, C, S1, S2, S3))
    return out


# ============================================================================
if __name__ == "__main__":
    key = jax.random.PRNGKey(0)
    N, C, scale = 2, 8, 2                         # in_channels=8 (div. by nhead=8), scale=2
    S1, S2, S3 = 7 * scale, 9 * scale, 6 * scale  # (14, 18, 12)

    k_param, k_x = jax.random.split(key)
    params = init_params(k_param, C, scale)
    x = jax.random.normal(k_x, (N, C, S1, S2, S3), F32)

    fwd = jax.jit(ch_sp_att_forward)
    out = fwd(x, params)
    jax.block_until_ready(out)
    assert out.shape == (N, C, S1, S2, S3), out.shape
    assert jnp.isfinite(out).all()
    print("KERNEL_OK")
</pallas_src>

<mosaic_0001>
module attributes {stable_mosaic.version = 11 : i64} {
  func.func @chatt_gate_kernel(%arg0: memref<16x3024xf32, #tpu.memory_space<vmem>>, %arg1: memref<16x8xf32, #tpu.memory_space<vmem>>, %arg2: memref<16x8xf32, #tpu.memory_space<vmem>>, %arg3: memref<2x16xf32, #tpu.memory_space<vmem>>, %arg4: memref<1x8xf32, #tpu.memory_space<vmem>>, %arg5: memref<16x2xf32, #tpu.memory_space<vmem>>, %arg6: memref<16x8xf32, #tpu.memory_space<vmem>>, %arg7: memref<16x2xf32, #tpu.memory_space<vmem>>, %arg8: memref<16x8xf32, #tpu.memory_space<vmem>>, %arg9: memref<2x16xf32, #tpu.memory_space<vmem>>, %arg10: memref<8x24xf32, #tpu.memory_space<vmem>>, %arg11: memref<1x24xf32, #tpu.memory_space<vmem>>, %arg12: memref<8x8xf32, #tpu.memory_space<vmem>>, %arg13: memref<1x8xf32, #tpu.memory_space<vmem>>, %arg14: memref<8x2xf32, #tpu.memory_space<vmem>>, %arg15: memref<1x2xf32, #tpu.memory_space<vmem>>, %arg16: memref<2x8xf32, #tpu.memory_space<vmem>>, %arg17: memref<1x8xf32, #tpu.memory_space<vmem>>, %arg18: memref<1x8xf32, #tpu.memory_space<vmem>>, %arg19: memref<1x8xf32, #tpu.memory_space<vmem>>, %arg20: memref<1x8xf32, #tpu.memory_space<vmem>>, %arg21: memref<1x8xf32, #tpu.memory_space<vmem>>, %arg22: memref<16x3024xf32, #tpu.memory_space<vmem>>) attributes {dimension_semantics = [], scalar_prefetch = 0 : i64, scratch_operands = 0 : i64, tpu.core_type = #tpu.core_type<tc>} {
    %c0 = arith.constant 0 : index
    %c0_0 = arith.constant 0 : index
    %0 = vector.load %arg0[%c0, %c0_0] : memref<16x3024xf32, #tpu.memory_space<vmem>>, vector<16x3024xf32>
    %cst = arith.constant dense<0xFF800000> : vector<16xf32>
    %1 = vector.multi_reduction <maximumf>, %0, %cst [1] : vector<16x3024xf32> to vector<16xf32>
    %2 = vector.shape_cast %1 : vector<16xf32> to vector<16x1xf32>
    %cst_1 = arith.constant dense<0.000000e+00> : vector<16xf32>
    %3 = vector.multi_reduction <add>, %0, %cst_1 [1] : vector<16x3024xf32> to vector<16xf32>
    %4 = vector.shape_cast %3 : vector<16xf32> to vector<16x1xf32>
    %cst_2 = arith.constant 3.024000e+03 : f32
    %5 = vector.broadcast %cst_2 : f32 to vector<16x1xf32>
    %6 = arith.divf %4, %5 : vector<16x1xf32>
    %c0_3 = arith.constant 0 : index
    %c0_4 = arith.constant 0 : index
    %7 = vector.load %arg1[%c0_3, %c0_4] : memref<16x8xf32, #tpu.memory_space<vmem>>, vector<16x8xf32>
    %8 = vector.broadcast %2 : vector<16x1xf32> to vector<16x8xf32>
    %9 = arith.mulf %8, %7 : vector<16x8xf32>
    %c0_5 = arith.constant 0 : index
    %c0_6 = arith.constant 0 : index
    %10 = vector.load %arg2[%c0_5, %c0_6] : memref<16x8xf32, #tpu.memory_space<vmem>>, vector<16x8xf32>
    %11 = vector.broadcast %6 : vector<16x1xf32> to vector<16x8xf32>
    %12 = arith.mulf %11, %10 : vector<16x8xf32>
    %13 = arith.addf %9, %12 : vector<16x8xf32>
    %c0_7 = arith.constant 0 : index
    %c0_8 = arith.constant 0 : index
    %14 = vector.load %arg3[%c0_7, %c0_8] : memref<2x16xf32, #tpu.memory_space<vmem>>, vector<2x16xf32>
    %cst_9 = arith.constant dense<0.000000e+00> : vector<2x8xf32>
    %15 = tpu.matmul %14, %13, %cst_9 {dimension_numbers = #tpu.dot_dimension_numbers<[1], [0], [0], [1], [0, 0, 1, 1], [], []>} : vector<2x16xf32>, vector<16x8xf32>, vector<2x8xf32> -> vector<2x8xf32>
    %c0_10 = arith.constant 0 : index
    %c0_11 = arith.constant 0 : index
    %16 = vector.load %arg4[%c0_10, %c0_11] : memref<1x8xf32, #tpu.memory_space<vmem>>, vector<1x8xf32>
    %17 = vector.broadcast %16 : vector<1x8xf32> to vector<2x8xf32>
    %18 = arith.addf %15, %17 : vector<2x8xf32>
    %c0_12 = arith.constant 0 : index
    %c0_13 = arith.constant 0 : index
    %19 = vector.load %arg7[%c0_12, %c0_13] : memref<16x2xf32, #tpu.memory_space<vmem>>, vector<16x2xf32>
    %c0_14 = arith.constant 0 : index
    %c0_15 = arith.constant 0 : index
    %20 = vector.load %arg8[%c0_14, %c0_15] : memref<16x8xf32, #tpu.memory_space<vmem>>, vector<16x8xf32>
    %c0_16 = arith.constant 0 : index
    %c0_17 = arith.constant 0 : index
    %21 = vector.load %arg9[%c0_16, %c0_17] : memref<2x16xf32, #tpu.memory_space<vmem>>, vector<2x16xf32>
    %c0_18 = arith.constant 0 : index
    %c0_19 = arith.constant 0 : index
    %22 = vector.load %arg10[%c0_18, %c0_19] : memref<8x24xf32, #tpu.memory_space<vmem>>, vector<8x24xf32>
    %c0_20 = arith.constant 0 : index
    %c0_21 = arith.constant 0 : index
    %23 = vector.load %arg11[%c0_20, %c0_21] : memref<1x24xf32, #tpu.memory_space<vmem>>, vector<1x24xf32>
    %c0_22 = arith.constant 0 : index
    %c0_23 = arith.constant 0 : index
    %24 = vector.load %arg12[%c0_22, %c0_23] : memref<8x8xf32, #tpu.memory_space<vmem>>, vector<8x8xf32>
    %c0_24 = arith.constant 0 : index
    %c0_25 = arith.constant 0 : index
    %25 = vector.load %arg13[%c0_24, %c0_25] : memref<1x8xf32, #tpu.memory_space<vmem>>, vector<1x8xf32>
    %c0_26 = arith.constant 0 : index
    %c0_27 = arith.constant 0 : index
    %26 = vector.load %arg14[%c0_26, %c0_27] : memref<8x2xf32, #tpu.memory_space<vmem>>, vector<8x2xf32>
    %c0_28 = arith.constant 0 : index
    %c0_29 = arith.constant 0 : index
    %27 = vector.load %arg15[%c0_28, %c0_29] : memref<1x2xf32, #tpu.memory_space<vmem>>, vector<1x2xf32>
    %c0_30 = arith.constant 0 : index
    %c0_31 = arith.constant 0 : index
    %28 = vector.load %arg16[%c0_30, %c0_31] : memref<2x8xf32, #tpu.memory_space<vmem>>, vector<2x8xf32>
    %c0_32 = arith.constant 0 : index
    %c0_33 = arith.constant 0 : index
    %29 = vector.load %arg17[%c0_32, %c0_33] : memref<1x8xf32, #tpu.memory_space<vmem>>, vector<1x8xf32>
    %c0_34 = arith.constant 0 : index
    %c0_35 = arith.constant 0 : index
    %30 = vector.load %arg18[%c0_34, %c0_35] : memref<1x8xf32, #tpu.memory_space<vmem>>, vector<1x8xf32>
    %c0_36 = arith.constant 0 : index
    %c0_37 = arith.constant 0 : index
    %31 = vector.load %arg19[%c0_36, %c0_37] : memref<1x8xf32, #tpu.memory_space<vmem>>, vector<1x8xf32>
    %c0_38 = arith.constant 0 : index
    %c0_39 = arith.constant 0 : index
    %32 = vector.load %arg20[%c0_38, %c0_39] : memref<1x8xf32, #tpu.memory_space<vmem>>, vector<1x8xf32>
    %c0_40 = arith.constant 0 : index
    %c0_41 = arith.constant 0 : index
    %33 = vector.load %arg21[%c0_40, %c0_41] : memref<1x8xf32, #tpu.memory_space<vmem>>, vector<1x8xf32>
    %cst_42 = arith.constant dense<0.000000e+00> : vector<2x24xf32>
    %34 = tpu.matmul %18, %22, %cst_42 {dimension_numbers = #tpu.dot_dimension_numbers<[1], [0], [0], [1], [0, 0, 1, 1], [], []>} : vector<2x8xf32>, vector<8x24xf32>, vector<2x24xf32> -> vector<2x24xf32>
    %35 = vector.broadcast %23 : vector<1x24xf32> to vector<2x24xf32>
    %36 = arith.addf %34, %35 : vector<2x24xf32>
    %37 = vector.extract_strided_slice %36 {offsets = [0, 0], sizes = [2, 8], strides = [1, 1]} : vector<2x24xf32> to vector<2x8xf32>
    %38 = vector.extract_strided_slice %36 {offsets = [0, 8], sizes = [2, 8], strides = [1, 1]} : vector<2x24xf32> to vector<2x8xf32>
    %39 = vector.extract_strided_slice %36 {offsets = [0, 16], sizes = [2, 8], strides = [1, 1]} : vector<2x24xf32> to vector<2x8xf32>
    %cst_43 = arith.constant dense<0.000000e+00> : vector<16x8xf32>
    %40 = tpu.matmul %19, %37, %cst_43 {dimension_numbers = #tpu.dot_dimension_numbers<[1], [0], [0], [1], [0, 0, 1, 1], [], []>} : vector<16x2xf32>, vector<2x8xf32>, vector<16x8xf32> -> vector<16x8xf32>
    %41 = arith.mulf %40, %20 : vector<16x8xf32>
    %cst_44 = arith.constant dense<0.000000e+00> : vector<16x2xf32>
    %42 = tpu.matmul %41, %38, %cst_44 {dimension_numbers = #tpu.dot_dimension_numbers<[1], [1], [0], [0], [0, 0, 1, 0], [], []>} : vector<16x8xf32>, vector<2x8xf32>, vector<16x2xf32> -> vector<16x2xf32>
    %cst_45 = arith.constant dense<0xFF800000> : vector<16xf32>
    %43 = vector.multi_reduction <maximumf>, %42, %cst_45 [1] : vector<16x2xf32> to vector<16xf32>
    %44 = vector.shape_cast %43 : vector<16xf32> to vector<16x1xf32>
    %45 = vector.broadcast %44 : vector<16x1xf32> to vector<16x2xf32>
    %46 = arith.subf %42, %45 : vector<16x2xf32>
    %47 = math.exp %46 : vector<16x2xf32>
    %cst_46 = arith.constant dense<0.000000e+00> : vector<16xf32>
    %48 = vector.multi_reduction <add>, %47, %cst_46 [1] : vector<16x2xf32> to vector<16xf32>
    %49 = vector.shape_cast %48 : vector<16xf32> to vector<16x1xf32>
    %50 = tpu.reciprocal %49 {approx = true} : vector<16x1xf32> -> vector<16x1xf32>
    %51 = vector.broadcast %50 : vector<16x1xf32> to vector<16x2xf32>
    %52 = arith.mulf %47, %51 : vector<16x2xf32>
    %cst_47 = arith.constant dense<0.000000e+00> : vector<16x8xf32>
    %53 = tpu.matmul %52, %39, %cst_47 {dimension_numbers = #tpu.dot_dimension_numbers<[1], [0], [0], [1], [0, 0, 1, 1], [], []>} : vector<16x2xf32>, vector<2x8xf32>, vector<16x8xf32> -> vector<16x8xf32>
    %54 = arith.mulf %53, %20 : vector<16x8xf32>
    %cst_48 = arith.constant dense<0.000000e+00> : vector<2x8xf32>
    %55 = tpu.matmul %21, %54, %cst_48 {dimension_numbers = #tpu.dot_dimension_numbers<[1], [0], [0], [1], [0, 0, 1, 1], [], []>} : vector<2x16xf32>, vector<16x8xf32>, vector<2x8xf32> -> vector<2x8xf32>
    %cst_49 = arith.constant dense<0.000000e+00> : vector<2x8xf32>
    %56 = tpu.matmul %55, %24, %cst_49 {dimension_numbers = #tpu.dot_dimension_numbers<[1], [0], [0], [1], [0, 0, 1, 1], [], []>} : vector<2x8xf32>, vector<8x8xf32>, vector<2x8xf32> -> vector<2x8xf32>
    %57 = arith.addf %18, %56 : vector<2x8xf32>
    %58 = vector.broadcast %25 : vector<1x8xf32> to vector<2x8xf32>
    %59 = arith.addf %57, %58 : vector<2x8xf32>
    %cst_50 = arith.constant dense<0.000000e+00> : vector<2xf32>
    %60 = vector.multi_reduction <add>, %59, %cst_50 [1] : vector<2x8xf32> to vector<2xf32>
    %61 = vector.shape_cast %60 : vector<2xf32> to vector<2x1xf32>
    %cst_51 = arith.constant 8.000000e+00 : f32
    %62 = vector.broadcast %cst_51 : f32 to vector<2x1xf32>
    %63 = arith.divf %61, %62 : vector<2x1xf32>
    %64 = vector.broadcast %63 : vector<2x1xf32> to vector<2x8xf32>
    %65 = arith.subf %59, %64 : vector<2x8xf32>
    %66 = arith.mulf %65, %65 : vector<2x8xf32>
    %cst_52 = arith.constant dense<0.000000e+00> : vector<2xf32>
    %67 = vector.multi_reduction <add>, %66, %cst_52 [1] : vector<2x8xf32> to vector<2xf32>
    %68 = vector.shape_cast %67 : vector<2xf32> to vector<2x1xf32>
    %cst_53 = arith.constant 8.000000e+00 : f32
    %69 = vector.broadcast %cst_53 : f32 to vector<2x1xf32>
    %70 = arith.divf %68, %69 : vector<2x1xf32>
    %71 = vector.broadcast %63 : vector<2x1xf32> to vector<2x8xf32>
    %72 = arith.subf %59, %71 : vector<2x8xf32>
    %cst_54 = arith.constant 9.99999974E-6 : f32
    %73 = vector.broadcast %cst_54 : f32 to vector<2x1xf32>
    %74 = arith.addf %70, %73 : vector<2x1xf32>
    %75 = math.rsqrt %74 : vector<2x1xf32>
    %76 = vector.broadcast %75 : vector<2x1xf32> to vector<2x8xf32>
    %77 = arith.mulf %72, %76 : vector<2x8xf32>
    %78 = vector.broadcast %30 : vector<1x8xf32> to vector<2x8xf32>
    %79 = arith.mulf %77, %78 : vector<2x8xf32>
    %80 = vector.broadcast %31 : vector<1x8xf32> to vector<2x8xf32>
    %81 = arith.addf %79, %80 : vector<2x8xf32>
    %cst_55 = arith.constant dense<0.000000e+00> : vector<2x2xf32>
    %82 = tpu.matmul %81, %26, %cst_55 {dimension_numbers = #tpu.dot_dimension_numbers<[1], [0], [0], [1], [0, 0, 1, 1], [], []>} : vector<2x8xf32>, vector<8x2xf32>, vector<2x2xf32> -> vector<2x2xf32>
    %83 = vector.broadcast %27 : vector<1x2xf32> to vector<2x2xf32>
    %84 = arith.addf %82, %83 : vector<2x2xf32>
    %cst_56 = arith.constant 0.000000e+00 : f32
    %85 = vector.broadcast %cst_56 : f32 to vector<2x2xf32>
    %86 = arith.maximumf %84, %85 : vector<2x2xf32>
    %cst_57 = arith.constant dense<0.000000e+00> : vector<2x8xf32>
    %87 = tpu.matmul %86, %28, %cst_57 {dimension_numbers = #tpu.dot_dimension_numbers<[1], [0], [0], [1], [0, 0, 1, 1], [], []>} : vector<2x2xf32>, vector<2x8xf32>, vector<2x8xf32> -> vector<2x8xf32>
    %88 = arith.addf %81, %87 : vector<2x8xf32>
    %89 = vector.broadcast %29 : vector<1x8xf32> to vector<2x8xf32>
    %90 = arith.addf %88, %89 : vector<2x8xf32>
    %cst_58 = arith.constant dense<0.000000e+00> : vector<2xf32>
    %91 = vector.multi_reduction <add>, %90, %cst_58 [1] : vector<2x8xf32> to vector<2xf32>
    %92 = vector.shape_cast %91 : vector<2xf32> to vector<2x1xf32>
    %cst_59 = arith.constant 8.000000e+00 : f32
    %93 = vector.broadcast %cst_59 : f32 to vector<2x1xf32>
    %94 = arith.divf %92, %93 : vector<2x1xf32>
    %95 = vector.broadcast %94 : vector<2x1xf32> to vector<2x8xf32>
    %96 = arith.subf %90, %95 : vector<2x8xf32>
    %97 = arith.mulf %96, %96 : vector<2x8xf32>
    %cst_60 = arith.constant dense<0.000000e+00> : vector<2xf32>
    %98 = vector.multi_reduction <add>, %97, %cst_60 [1] : vector<2x8xf32> to vector<2xf32>
    %99 = vector.shape_cast %98 : vector<2xf32> to vector<2x1xf32>
    %cst_61 = arith.constant 8.000000e+00 : f32
    %100 = vector.broadcast %cst_61 : f32 to vector<2x1xf32>
    %101 = arith.divf %99, %100 : vector<2x1xf32>
    %102 = vector.broadcast %94 : vector<2x1xf32> to vector<2x8xf32>
    %103 = arith.subf %90, %102 : vector<2x8xf32>
    %cst_62 = arith.constant 9.99999974E-6 : f32
    %104 = vector.broadcast %cst_62 : f32 to vector<2x1xf32>
    %105 = arith.addf %101, %104 : vector<2x1xf32>
    %106 = math.rsqrt %105 : vector<2x1xf32>
    %107 = vector.broadcast %106 : vector<2x1xf32> to vector<2x8xf32>
    %108 = arith.mulf %103, %107 : vector<2x8xf32>
    %109 = vector.broadcast %32 : vector<1x8xf32> to vector<2x8xf32>
    %110 = arith.mulf %108, %109 : vector<2x8xf32>
    %111 = vector.broadcast %33 : vector<1x8xf32> to vector<2x8xf32>
    %112 = arith.addf %110, %111 : vector<2x8xf32>
    %c0_63 = arith.constant 0 : index
    %c0_64 = arith.constant 0 : index
    %113 = vector.load %arg5[%c0_63, %c0_64] : memref<16x2xf32, #tpu.memory_space<vmem>>, vector<16x2xf32>
    %cst_65 = arith.constant dense<0.000000e+00> : vector<16x8xf32>
    %114 = tpu.matmul %113, %112, %cst_65 {dimension_numbers = #tpu.dot_dimension_numbers<[1], [0], [0], [1], [0, 0, 1, 1], [], []>} : vector<16x2xf32>, vector<2x8xf32>, vector<16x8xf32> -> vector<16x8xf32>
    %c0_66 = arith.constant 0 : index
    %c0_67 = arith.constant 0 : index
    %115 = vector.load %arg6[%c0_66, %c0_67] : memref<16x8xf32, #tpu.memory_space<vmem>>, vector<16x8xf32>
    %116 = arith.mulf %114, %115 : vector<16x8xf32>
    %cst_68 = arith.constant dense<0.000000e+00> : vector<16xf32>
    %117 = vector.multi_reduction <add>, %116, %cst_68 [1] : vector<16x8xf32> to vector<16xf32>
    %118 = vector.shape_cast %117 : vector<16xf32> to vector<16x1xf32>
    %cst_69 = arith.constant 1.000000e+00 : f32
    %119 = vector.broadcast %cst_69 : f32 to vector<16x1xf32>
    %120 = arith.addf %119, %118 : vector<16x1xf32>
    %121 = vector.broadcast %120 : vector<16x1xf32> to vector<16x3024xf32>
    %122 = arith.mulf %0, %121 : vector<16x3024xf32>
    %c0_70 = arith.constant 0 : index
    %c0_71 = arith.constant 0 : index
    %123 = vector.load %arg22[%c0_70, %c0_71] : memref<16x3024xf32, #tpu.memory_space<vmem>>, vector<16x3024xf32>
    tpu.vector_store %arg22[%c0_70, %c0_71], %122 {strides = array<i32>} : memref<16x3024xf32, #tpu.memory_space<vmem>>, vector<16x3024xf32>,
    return
  }
}

module attributes {stable_mosaic.version = 11 : i64} {
  func.func @spatt_kernel(%arg0: memref<16x3024xf32, #tpu.memory_space<vmem>>, %arg1: memref<3024x8xf32, #tpu.memory_space<vmem>>, %arg2: memref<1x8xf32, #tpu.memory_space<vmem>>, %arg3: memref<16x16xf32, #tpu.memory_space<vmem>>, %arg4: memref<16x16xf32, #tpu.memory_space<vmem>>, %arg5: memref<32x8xf32, #tpu.memory_space<vmem>>, %arg6: memref<64x16xf32, #tpu.memory_space<vmem>>, %arg7: memref<32x8xf32, #tpu.memory_space<vmem>>, %arg8: memref<64x16xf32, #tpu.memory_space<vmem>>, %arg9: memref<32x8xf32, #tpu.memory_space<vmem>>, %arg10: memref<32x8xf32, #tpu.memory_space<vmem>>, %arg11: memref<64x8xf32, #tpu.memory_space<vmem>>, %arg12: memref<64x16xf32, #tpu.memory_space<vmem>>, %arg13: memref<8x64xf32, #tpu.memory_space<vmem>>, %arg14: memref<64x8xf32, #tpu.memory_space<vmem>>, %arg15: memref<16x48xf32, #tpu.memory_space<vmem>>, %arg16: memref<1x48xf32, #tpu.memory_space<vmem>>, %arg17: memref<16x16xf32, #tpu.memory_space<vmem>>, %arg18: memref<1x16xf32, #tpu.memory_space<vmem>>, %arg19: memref<16x4xf32, #tpu.memory_space<vmem>>, %arg20: memref<1x4xf32, #tpu.memory_space<vmem>>, %arg21: memref<4x16xf32, #tpu.memory_space<vmem>>, %arg22: memref<1x16xf32, #tpu.memory_space<vmem>>, %arg23: memref<1x16xf32, #tpu.memory_space<vmem>>, %arg24: memref<1x16xf32, #tpu.memory_space<vmem>>, %arg25: memref<1x16xf32, #tpu.memory_space<vmem>>, %arg26: memref<1x16xf32, #tpu.memory_space<vmem>>, %arg27: memref<8x3024xf32, #tpu.memory_space<vmem>>, %arg28: memref<1x3024xf32, #tpu.memory_space<vmem>>, %arg29: memref<16x3024xf32, #tpu.memory_space<vmem>>) attributes {dimension_semantics = [], scalar_prefetch = 0 : i64, scratch_operands = 0 : i64, tpu.core_type = #tpu.core_type<tc>} {
    %c0 = arith.constant 0 : index
    %c0_0 = arith.constant 0 : index
    %0 = vector.load %arg0[%c0, %c0_0] : memref<16x3024xf32, #tpu.memory_space<vmem>>, vector<16x3024xf32>
    %c0_1 = arith.constant 0 : index
    %c0_2 = arith.constant 0 : index
    %1 = vector.load %arg1[%c0_1, %c0_2] : memref<3024x8xf32, #tpu.memory_space<vmem>>, vector<3024x8xf32>
    %cst = arith.constant dense<0.000000e+00> : vector<16x8xf32>
    %2 = tpu.matmul %0, %1, %cst {dimension_numbers = #tpu.dot_dimension_numbers<[1], [0], [0], [1], [0, 0, 1, 1], [], []>} : vector<16x3024xf32>, vector<3024x8xf32>, vector<16x8xf32> -> vector<16x8xf32>
    %c0_3 = arith.constant 0 : index
    %c0_4 = arith.constant 0 : index
    %3 = vector.load %arg2[%c0_3, %c0_4] : memref<1x8xf32, #tpu.memory_space<vmem>>, vector<1x8xf32>
    %4 = vector.broadcast %3 : vector<1x8xf32> to vector<16x8xf32>
    %5 = arith.addf %2, %4 : vector<16x8xf32>
    %c0_5 = arith.constant 0 : index
    %c0_6 = arith.constant 0 : index
    %6 = vector.load %arg11[%c0_5, %c0_6] : memref<64x8xf32, #tpu.memory_space<vmem>>, vector<64x8xf32>
    %c0_7 = arith.constant 0 : index
    %c0_8 = arith.constant 0 : index
    %7 = vector.load %arg12[%c0_7, %c0_8] : memref<64x16xf32, #tpu.memory_space<vmem>>, vector<64x16xf32>
    %c0_9 = arith.constant 0 : index
    %c0_10 = arith.constant 0 : index
    %8 = vector.load %arg13[%c0_9, %c0_10] : memref<8x64xf32, #tpu.memory_space<vmem>>, vector<8x64xf32>
    %c0_11 = arith.constant 0 : index
    %c0_12 = arith.constant 0 : index
    %9 = vector.load %arg15[%c0_11, %c0_12] : memref<16x48xf32, #tpu.memory_space<vmem>>, vector<16x48xf32>
    %c0_13 = arith.constant 0 : index
    %c0_14 = arith.constant 0 : index
    %10 = vector.load %arg16[%c0_13, %c0_14] : memref<1x48xf32, #tpu.memory_space<vmem>>, vector<1x48xf32>
    %c0_15 = arith.constant 0 : index
    %c0_16 = arith.constant 0 : index
    %11 = vector.load %arg17[%c0_15, %c0_16] : memref<16x16xf32, #tpu.memory_space<vmem>>, vector<16x16xf32>
    %c0_17 = arith.constant 0 : index
    %c0_18 = arith.constant 0 : index
    %12 = vector.load %arg18[%c0_17, %c0_18] : memref<1x16xf32, #tpu.memory_space<vmem>>, vector<1x16xf32>
    %c0_19 = arith.constant 0 : index
    %c0_20 = arith.constant 0 : index
    %13 = vector.load %arg19[%c0_19, %c0_20] : memref<16x4xf32, #tpu.memory_space<vmem>>, vector<16x4xf32>
    %c0_21 = arith.constant 0 : index
    %c0_22 = arith.constant 0 : index
    %14 = vector.load %arg20[%c0_21, %c0_22] : memref<1x4xf32, #tpu.memory_space<vmem>>, vector<1x4xf32>
    %c0_23 = arith.constant 0 : index
    %c0_24 = arith.constant 0 : index
    %15 = vector.load %arg21[%c0_23, %c0_24] : memref<4x16xf32, #tpu.memory_space<vmem>>, vector<4x16xf32>
    %c0_25 = arith.constant 0 : index
    %c0_26 = arith.constant 0 : index
    %16 = vector.load %arg22[%c0_25, %c0_26] : memref<1x16xf32, #tpu.memory_space<vmem>>, vector<1x16xf32>
    %c0_27 = arith.constant 0 : index
    %c0_28 = arith.constant 0 : index
    %17 = vector.load %arg23[%c0_27, %c0_28] : memref<1x16xf32, #tpu.memory_space<vmem>>, vector<1x16xf32>
    %c0_29 = arith.constant 0 : index
    %c0_30 = arith.constant 0 : index
    %18 = vector.load %arg24[%c0_29, %c0_30] : memref<1x16xf32, #tpu.memory_space<vmem>>, vector<1x16xf32>
    %c0_31 = arith.constant 0 : index
    %c0_32 = arith.constant 0 : index
    %19 = vector.load %arg25[%c0_31, %c0_32] : memref<1x16xf32, #tpu.memory_space<vmem>>, vector<1x16xf32>
    %c0_33 = arith.constant 0 : index
    %c0_34 = arith.constant 0 : index
    %20 = vector.load %arg26[%c0_33, %c0_34] : memref<1x16xf32, #tpu.memory_space<vmem>>, vector<1x16xf32>
    %c0_35 = arith.constant 0 : index
    %c0_36 = arith.constant 0 : index
    %21 = vector.load %arg14[%c0_35, %c0_36] : memref<64x8xf32, #tpu.memory_space<vmem>>, vector<64x8xf32>
    %c0_37 = arith.constant 0 : index
    %c0_38 = arith.constant 0 : index
    %22 = vector.load %arg3[%c0_37, %c0_38] : memref<16x16xf32, #tpu.memory_space<vmem>>, vector<16x16xf32>
    %c0_39 = arith.constant 0 : index
    %c0_40 = arith.constant 0 : index
    %23 = vector.load %arg4[%c0_39, %c0_40] : memref<16x16xf32, #tpu.memory_space<vmem>>, vector<16x16xf32>
    %cst_41 = arith.constant dense<0.000000e+00> : vector<16x8xf32>
    %24 = tpu.matmul %22, %5, %cst_41 {dimension_numbers = #tpu.dot_dimension_numbers<[1], [0], [0], [1], [0, 0, 1, 1], [], []>} : vector<16x16xf32>, vector<16x8xf32>, vector<16x8xf32> -> vector<16x8xf32>
    %25 = vector.extract_strided_slice %24 {offsets = [0, 0], sizes = [8, 8], strides = [1, 1]} : vector<16x8xf32> to vector<8x8xf32>
    %26 = vector.extract_strided_slice %23 {offsets = [0, 0], sizes = [8, 16], strides = [1, 1]} : vector<16x16xf32> to vector<8x16xf32>
    %cst_42 = arith.constant dense<0.000000e+00> : vector<8x16xf32>
    %27 = tpu.matmul %25, %26, %cst_42 {dimension_numbers = #tpu.dot_dimension_numbers<[1], [0], [0], [1], [0, 0, 1, 1], [], []>} : vector<8x8xf32>, vector<8x16xf32>, vector<8x16xf32> -> vector<8x16xf32>
    %28 = vector.extract_strided_slice %24 {offsets = [8, 0], sizes = [8, 8], strides = [1, 1]} : vector<16x8xf32> to vector<8x8xf32>
    %29 = vector.extract_strided_slice %23 {offsets = [8, 0], sizes = [8, 16], strides = [1, 1]} : vector<16x16xf32> to vector<8x16xf32>
    %cst_43 = arith.constant dense<0.000000e+00> : vector<8x16xf32>
    %30 = tpu.matmul %28, %29, %cst_43 {dimension_numbers = #tpu.dot_dimension_numbers<[1], [0], [0], [1], [0, 0, 1, 1], [], []>} : vector<8x8xf32>, vector<8x16xf32>, vector<8x16xf32> -> vector<8x16xf32>
    %31 = arith.addf %27, %30 : vector<8x16xf32>
    %cst_44 = arith.constant dense<0.000000e+00> : vector<8x48xf32>
    %32 = tpu.matmul %31, %9, %cst_44 {dimension_numbers = #tpu.dot_dimension_numbers<[1], [0], [0], [1], [0, 0, 1, 1], [], []>} : vector<8x16xf32>, vector<16x48xf32>, vector<8x48xf32> -> vector<8x48xf32>
    %33 = vector.broadcast %10 : vector<1x48xf32> to vector<8x48xf32>
    %34 = arith.addf %32, %33 : vector<8x48xf32>
    %35 = vector.extract_strided_slice %34 {offsets = [0, 0], sizes = [8, 16], strides = [1, 1]} : vector<8x48xf32> to vector<8x16xf32>
    %36 = vector.extract_strided_slice %34 {offsets = [0, 16], sizes = [8, 16], strides = [1, 1]} : vector<8x48xf32> to vector<8x16xf32>
    %37 = vector.extract_strided_slice %34 {offsets = [0, 32], sizes = [8, 16], strides = [1, 1]} : vector<8x48xf32> to vector<8x16xf32>
    %cst_45 = arith.constant dense<0.000000e+00> : vector<64x16xf32>
    %38 = tpu.matmul %6, %35, %cst_45 {dimension_numbers = #tpu.dot_dimension_numbers<[1], [0], [0], [1], [0, 0, 1, 1], [], []>} : vector<64x8xf32>, vector<8x16xf32>, vector<64x16xf32> -> vector<64x16xf32>
    %39 = arith.mulf %38, %7 : vector<64x16xf32>
    %cst_46 = arith.constant dense<0.000000e+00> : vector<64x8xf32>
    %40 = tpu.matmul %39, %36, %cst_46 {dimension_numbers = #tpu.dot_dimension_numbers<[1], [1], [0], [0], [0, 0, 1, 0], [], []>} : vector<64x16xf32>, vector<8x16xf32>, vector<64x8xf32> -> vector<64x8xf32>
    %41 = arith.addf %40, %21 : vector<64x8xf32>
    %cst_47 = arith.constant dense<0xFF800000> : vector<64xf32>
    %42 = vector.multi_reduction <maximumf>, %41, %cst_47 [1] : vector<64x8xf32> to vector<64xf32>
    %43 = vector.shape_cast %42 : vector<64xf32> to vector<64x1xf32>
    %44 = vector.broadcast %43 : vector<64x1xf32> to vector<64x8xf32>
    %45 = arith.subf %41, %44 : vector<64x8xf32>
    %46 = math.exp %45 : vector<64x8xf32>
    %cst_48 = arith.constant dense<0.000000e+00> : vector<64xf32>
    %47 = vector.multi_reduction <add>, %46, %cst_48 [1] : vector<64x8xf32> to vector<64xf32>
    %48 = vector.shape_cast %47 : vector<64xf32> to vector<64x1xf32>
    %49 = tpu.reciprocal %48 {approx = true} : vector<64x1xf32> -> vector<64x1xf32>
    %50 = vector.broadcast %49 : vector<64x1xf32> to vector<64x8xf32>
    %51 = arith.mulf %46, %50 : vector<64x8xf32>
    %cst_49 = arith.constant dense<0.000000e+00> : vector<64x16xf32>
    %52 = tpu.matmul %51, %37, %cst_49 {dimension_numbers = #tpu.dot_dimension_numbers<[1], [0], [0], [1], [0, 0, 1, 1], [], []>} : vector<64x8xf32>, vector<8x16xf32>, vector<64x16xf32> -> vector<64x16xf32>
    %53 = arith.mulf %52, %7 : vector<64x16xf32>
    %cst_50 = arith.constant dense<0.000000e+00> : vector<8x16xf32>
    %54 = tpu.matmul %8, %53, %cst_50 {dimension_numbers = #tpu.dot_dimension_numbers<[1], [0], [0], [1], [0, 0, 1, 1], [], []>} : vector<8x64xf32>, vector<64x16xf32>, vector<8x16xf32> -> vector<8x16xf32>
    %cst_51 = arith.constant dense<0.000000e+00> : vector<8x16xf32>
    %55 = tpu.matmul %54, %11, %cst_51 {dimension_numbers = #tpu.dot_dimension_numbers<[1], [0], [0], [1], [0, 0, 1, 1], [], []>} : vector<8x16xf32>, vector<16x16xf32>, vector<8x16xf32> -> vector<8x16xf32>
    %56 = arith.addf %31, %55 : vector<8x16xf32>
    %57 = vector.broadcast %12 : vector<1x16xf32> to vector<8x16xf32>
    %58 = arith.addf %56, %57 : vector<8x16xf32>
    %cst_52 = arith.constant dense<0.000000e+00> : vector<8xf32>
    %59 = vector.multi_reduction <add>, %58, %cst_52 [1] : vector<8x16xf32> to vector<8xf32>
    %60 = vector.shape_cast %59 : vector<8xf32> to vector<8x1xf32>
    %cst_53 = arith.constant 1.600000e+01 : f32
    %61 = vector.broadcast %cst_53 : f32 to vector<8x1xf32>
    %62 = arith.divf %60, %61 : vector<8x1xf32>
    %63 = vector.broadcast %62 : vector<8x1xf32> to vector<8x16xf32>
    %64 = arith.subf %58, %63 : vector<8x16xf32>
    %65 = arith.mulf %64, %64 : vector<8x16xf32>
    %cst_54 = arith.constant dense<0.000000e+00> : vector<8xf32>
    %66 = vector.multi_reduction <add>, %65, %cst_54 [1] : vector<8x16xf32> to vector<8xf32>
    %67 = vector.shape_cast %66 : vector<8xf32> to vector<8x1xf32>
    %cst_55 = arith.constant 1.600000e+01 : f32
    %68 = vector.broadcast %cst_55 : f32 to vector<8x1xf32>
    %69 = arith.divf %67, %68 : vector<8x1xf32>
    %70 = vector.broadcast %62 : vector<8x1xf32> to vector<8x16xf32>
    %71 = arith.subf %58, %70 : vector<8x16xf32>
    %cst_56 = arith.constant 9.99999974E-6 : f32
    %72 = vector.broadcast %cst_56 : f32 to vector<8x1xf32>
    %73 = arith.addf %69, %72 : vector<8x1xf32>
    %74 = math.rsqrt %73 : vector<8x1xf32>
    %75 = vector.broadcast %74 : vector<8x1xf32> to vector<8x16xf32>
    %76 = arith.mulf %71, %75 : vector<8x16xf32>
    %77 = vector.broadcast %17 : vector<1x16xf32> to vector<8x16xf32>
    %78 = arith.mulf %76, %77 : vector<8x16xf32>
    %79 = vector.broadcast %18 : vector<1x16xf32> to vector<8x16xf32>
    %80 = arith.addf %78, %79 : vector<8x16xf32>
    %cst_57 = arith.constant dense<0.000000e+00> : vector<8x4xf32>
    %81 = tpu.matmul %80, %13, %cst_57 {dimension_numbers = #tpu.dot_dimension_numbers<[1], [0], [0], [1], [0, 0, 1, 1], [], []>} : vector<8x16xf32>, vector<16x4xf32>, vector<8x4xf32> -> vector<8x4xf32>
    %82 = vector.broadcast %14 : vector<1x4xf32> to vector<8x4xf32>
    %83 = arith.addf %81, %82 : vector<8x4xf32>
    %cst_58 = arith.constant 0.000000e+00 : f32
    %84 = vector.broadcast %cst_58 : f32 to vector<8x4xf32>
    %85 = arith.maximumf %83, %84 : vector<8x4xf32>
    %cst_59 = arith.constant dense<0.000000e+00> : vector<8x16xf32>
    %86 = tpu.matmul %85, %15, %cst_59 {dimension_numbers = #tpu.dot_dimension_numbers<[1], [0], [0], [1], [0, 0, 1, 1], [], []>} : vector<8x4xf32>, vector<4x16xf32>, vector<8x16xf32> -> vector<8x16xf32>
    %87 = arith.addf %80, %86 : vector<8x16xf32>
    %88 = vector.broadcast %16 : vector<1x16xf32> to vector<8x16xf32>
    %89 = arith.addf %87, %88 : vector<8x16xf32>
    %cst_60 = arith.constant dense<0.000000e+00> : vector<8xf32>
    %90 = vector.multi_reduction <add>, %89, %cst_60 [1] : vector<8x16xf32> to vector<8xf32>
    %91 = vector.shape_cast %90 : vector<8xf32> to vector<8x1xf32>
    %cst_61 = arith.constant 1.600000e+01 : f32
    %92 = vector.broadcast %cst_61 : f32 to vector<8x1xf32>
    %93 = arith.divf %91, %92 : vector<8x1xf32>
    %94 = vector.broadcast %93 : vector<8x1xf32> to vector<8x16xf32>
    %95 = arith.subf %89, %94 : vector<8x16xf32>
    %96 = arith.mulf %95, %95 : vector<8x16xf32>
    %cst_62 = arith.constant dense<0.000000e+00> : vector<8xf32>
    %97 = vector.multi_reduction <add>, %96, %cst_62 [1] : vector<8x16xf32> to vector<8xf32>
    %98 = vector.shape_cast %97 : vector<8xf32> to vector<8x1xf32>
    %cst_63 = arith.constant 1.600000e+01 : f32
    %99 = vector.broadcast %cst_63 : f32 to vector<8x1xf32>
    %100 = arith.divf %98, %99 : vector<8x1xf32>
    %101 = vector.broadcast %93 : vector<8x1xf32> to vector<8x16xf32>
    %102 = arith.subf %89, %101 : vector<8x16xf32>
    %cst_64 = arith.constant 9.99999974E-6 : f32
    %103 = vector.broadcast %cst_64 : f32 to vector<8x1xf32>
    %104 = arith.addf %100, %103 : vector<8x1xf32>
    %105 = math.rsqrt %104 : vector<8x1xf32>
    %106 = vector.broadcast %105 : vector<8x1xf32> to vector<8x16xf32>
    %107 = arith.mulf %102, %106 : vector<8x16xf32>
    %108 = vector.broadcast %19 : vector<1x16xf32> to vector<8x16xf32>
    %109 = arith.mulf %107, %108 : vector<8x16xf32>
    %110 = vector.broadcast %20 : vector<1x16xf32> to vector<8x16xf32>
    %111 = arith.addf %109, %110 : vector<8x16xf32>
    %c0_65 = arith.constant 0 : index
    %c0_66 = arith.constant 0 : index
    %112 = vector.load %arg5[%c0_65, %c0_66] : memref<32x8xf32, #tpu.memory_space<vmem>>, vector<32x8xf32>
    %c0_67 = arith.constant 0 : index
    %c0_68 = arith.constant 0 : index
    %113 = vector.load %arg6[%c0_67, %c0_68] : memref<64x16xf32, #tpu.memory_space<vmem>>, vector<64x16xf32>
    %cst_69 = arith.constant dense<0.000000e+00> : vector<32x16xf32>
    %114 = tpu.matmul %112, %111, %cst_69 {dimension_numbers = #tpu.dot_dimension_numbers<[1], [0], [0], [1], [0, 0, 1, 1], [], []>} : vector<32x8xf32>, vector<8x16xf32>, vector<32x16xf32> -> vector<32x16xf32>
    %115 = vector.extract_strided_slice %114 {offsets = [0, 0], sizes = [8, 16], strides = [1, 1]} : vector<32x16xf32> to vector<8x16xf32>
    %116 = vector.extract_strided_slice %113 {offsets = [0, 0], sizes = [16, 16], strides = [1, 1]} : vector<64x16xf32> to vector<16x16xf32>
    %cst_70 = arith.constant dense<0.000000e+00> : vector<8x16xf32>
    %117 = tpu.matmul %115, %116, %cst_70 {dimension_numbers = #tpu.dot_dimension_numbers<[1], [0], [0], [1], [0, 0, 1, 1], [], []>} : vector<8x16xf32>, vector<16x16xf32>, vector<8x16xf32> -> vector<8x16xf32>
    %118 = vector.extract_strided_slice %114 {offsets = [8, 0], sizes = [8, 16], strides = [1, 1]} : vector<32x16xf32> to vector<8x16xf32>
    %119 = vector.extract_strided_slice %113 {offsets = [16, 0], sizes = [16, 16], strides = [1, 1]} : vector<64x16xf32> to vector<16x16xf32>
    %cst_71 = arith.constant dense<0.000000e+00> : vector<8x16xf32>
    %120 = tpu.matmul %118, %119, %cst_71 {dimension_numbers = #tpu.dot_dimension_numbers<[1], [0], [0], [1], [0, 0, 1, 1], [], []>} : vector<8x16xf32>, vector<16x16xf32>, vector<8x16xf32> -> vector<8x16xf32>
    %121 = arith.addf %117, %120 : vector<8x16xf32>
    %122 = vector.extract_strided_slice %114 {offsets = [16, 0], sizes = [8, 16], strides = [1, 1]} : vector<32x16xf32> to vector<8x16xf32>
    %123 = vector.extract_strided_slice %113 {offsets = [32, 0], sizes = [16, 16], strides = [1, 1]} : vector<64x16xf32> to vector<16x16xf32>
    %cst_72 = arith.constant dense<0.000000e+00> : vector<8x16xf32>
    %124 = tpu.matmul %122, %123, %cst_72 {dimension_numbers = #tpu.dot_dimension_numbers<[1], [0], [0], [1], [0, 0, 1, 1], [], []>} : vector<8x16xf32>, vector<16x16xf32>, vector<8x16xf32> -> vector<8x16xf32>
    %125 = arith.addf %121, %124 : vector<8x16xf32>
    %126 = vector.extract_strided_slice %114 {offsets = [24, 0], sizes = [8, 16], strides = [1, 1]} : vector<32x16xf32> to vector<8x16xf32>
    %127 = vector.extract_strided_slice %113 {offsets = [48, 0], sizes = [16, 16], strides = [1, 1]} : vector<64x16xf32> to vector<16x16xf32>
    %cst_73 = arith.constant dense<0.000000e+00> : vector<8x16xf32>
    %128 = tpu.matmul %126, %127, %cst_73 {dimension_numbers = #tpu.dot_dimension_numbers<[1], [0], [0], [1], [0, 0, 1, 1], [], []>} : vector<8x16xf32>, vector<16x16xf32>, vector<8x16xf32> -> vector<8x16xf32>
    %129 = arith.addf %125, %128 : vector<8x16xf32>
    %cst_74 = arith.constant dense<0.000000e+00> : vector<8x48xf32>
    %130 = tpu.matmul %129, %9, %cst_74 {dimension_numbers = #tpu.dot_dimension_numbers<[1], [0], [0], [1], [0, 0, 1, 1], [], []>} : vector<8x16xf32>, vector<16x48xf32>, vector<8x48xf32> -> vector<8x48xf32>
    %131 = vector.broadcast %10 : vector<1x48xf32> to vector<8x48xf32>
    %132 = arith.addf %130, %131 : vector<8x48xf32>
    %133 = vector.extract_strided_slice %132 {offsets = [0, 0], sizes = [8, 16], strides = [1, 1]} : vector<8x48xf32> to vector<8x16xf32>
    %134 = vector.extract_strided_slice %132 {offsets = [0, 16], sizes = [8, 16], strides = [1, 1]} : vector<8x48xf32> to vector<8x16xf32>
    %135 = vector.extract_strided_slice %132 {offsets = [0, 32], sizes = [8, 16], strides = [1, 1]} : vector<8x48xf32> to vector<8x16xf32>
    %cst_75 = arith.constant dense<0.000000e+00> : vector<64x16xf32>
    %136 = tpu.matmul %6, %133, %cst_75 {dimension_numbers = #tpu.dot_dimension_numbers<[1], [0], [0], [1], [0, 0, 1, 1], [], []>} : vector<64x8xf32>, vector<8x16xf32>, vector<64x16xf32> -> vector<64x16xf32>
    %137 = arith.mulf %136, %7 : vector<64x16xf32>
    %cst_76 = arith.constant dense<0.000000e+00> : vector<64x8xf32>
    %138 = tpu.matmul %137, %134, %cst_76 {dimension_numbers = #tpu.dot_dimension_numbers<[1], [1], [0], [0], [0, 0, 1, 0], [], []>} : vector<64x16xf32>, vector<8x16xf32>, vector<64x8xf32> -> vector<64x8xf32>
    %139 = arith.addf %138, %21 : vector<64x8xf32>
    %cst_77 = arith.constant dense<0xFF800000> : vector<64xf32>
    %140 = vector.multi_reduction <maximumf>, %139, %cst_77 [1] : vector<64x8xf32> to vector<64xf32>
    %141 = vector.shape_cast %140 : vector<64xf32> to vector<64x1xf32>
    %142 = vector.broadcast %141 : vector<64x1xf32> to vector<64x8xf32>
    %143 = arith.subf %139, %142 : vector<64x8xf32>
    %144 = math.exp %143 : vector<64x8xf32>
    %cst_78 = arith.constant dense<0.000000e+00> : vector<64xf32>
    %145 = vector.multi_reduction <add>, %144, %cst_78 [1] : vector<64x8xf32> to vector<64xf32>
    %146 = vector.shape_cast %145 : vector<64xf32> to vector<64x1xf32>
    %147 = tpu.reciprocal %146 {approx = true} : vector<64x1xf32> -> vector<64x1xf32>
    %148 = vector.broadcast %147 : vector<64x1xf32> to vector<64x8xf32>
    %149 = arith.mulf %144, %148 : vector<64x8xf32>
    %cst_79 = arith.constant dense<0.000000e+00> : vector<64x16xf32>
    %150 = tpu.matmul %149, %135, %cst_79 {dimension_numbers = #tpu.dot_dimension_numbers<[1], [0], [0], [1], [0, 0, 1, 1], [], []>} : vector<64x8xf32>, vector<8x16xf32>, vector<64x16xf32> -> vector<64x16xf32>
    %151 = arith.mulf %150, %7 : vector<64x16xf32>
    %cst_80 = arith.constant dense<0.000000e+00> : vector<8x16xf32>
    %152 = tpu.matmul %8, %151, %cst_80 {dimension_numbers = #tpu.dot_dimension_numbers<[1], [0], [0], [1], [0, 0, 1, 1], [], []>} : vector<8x64xf32>, vector<64x16xf32>, vector<8x16xf32> -> vector<8x16xf32>
    %cst_81 = arith.constant dense<0.000000e+00> : vector<8x16xf32>
    %153 = tpu.matmul %152, %11, %cst_81 {dimension_numbers = #tpu.dot_dimension_numbers<[1], [0], [0], [1], [0, 0, 1, 1], [], []>} : vector<8x16xf32>, vector<16x16xf32>, vector<8x16xf32> -> vector<8x16xf32>
    %154 = arith.addf %129, %153 : vector<8x16xf32>
    %155 = vector.broadcast %12 : vector<1x16xf32> to vector<8x16xf32>
    %156 = arith.addf %154, %155 : vector<8x16xf32>
    %cst_82 = arith.constant dense<0.000000e+00> : vector<8xf32>
    %157 = vector.multi_reduction <add>, %156, %cst_82 [1] : vector<8x16xf32> to vector<8xf32>
    %158 = vector.shape_cast %157 : vector<8xf32> to vector<8x1xf32>
    %cst_83 = arith.constant 1.600000e+01 : f32
    %159 = vector.broadcast %cst_83 : f32 to vector<8x1xf32>
    %160 = arith.divf %158, %159 : vector<8x1xf32>
    %161 = vector.broadcast %160 : vector<8x1xf32> to vector<8x16xf32>
    %162 = arith.subf %156, %161 : vector<8x16xf32>
    %163 = arith.mulf %162, %162 : vector<8x16xf32>
    %cst_84 = arith.constant dense<0.000000e+00> : vector<8xf32>
    %164 = vector.multi_reduction <add>, %163, %cst_84 [1] : vector<8x16xf32> to vector<8xf32>
    %165 = vector.shape_cast %164 : vector<8xf32> to vector<8x1xf32>
    %cst_85 = arith.constant 1.600000e+01 : f32
    %166 = vector.broadcast %cst_85 : f32 to vector<8x1xf32>
    %167 = arith.divf %165, %166 : vector<8x1xf32>
    %168 = vector.broadcast %160 : vector<8x1xf32> to vector<8x16xf32>
    %169 = arith.subf %156, %168 : vector<8x16xf32>
    %cst_86 = arith.constant 9.99999974E-6 : f32
    %170 = vector.broadcast %cst_86 : f32 to vector<8x1xf32>
    %171 = arith.addf %167, %170 : vector<8x1xf32>
    %172 = math.rsqrt %171 : vector<8x1xf32>
    %173 = vector.broadcast %172 : vector<8x1xf32> to vector<8x16xf32>
    %174 = arith.mulf %169, %173 : vector<8x16xf32>
    %175 = vector.broadcast %17 : vector<1x16xf32> to vector<8x16xf32>
    %176 = arith.mulf %174, %175 : vector<8x16xf32>
    %177 = vector.broadcast %18 : vector<1x16xf32> to vector<8x16xf32>
    %178 = arith.addf %176, %177 : vector<8x16xf32>
    %cst_87 = arith.constant dense<0.000000e+00> : vector<8x4xf32>
    %179 = tpu.matmul %178, %13, %cst_87 {dimension_numbers = #tpu.dot_dimension_numbers<[1], [0], [0], [1], [0, 0, 1, 1], [], []>} : vector<8x16xf32>, vector<16x4xf32>, vector<8x4xf32> -> vector<8x4xf32>
    %180 = vector.broadcast %14 : vector<1x4xf32> to vector<8x4xf32>
    %181 = arith.addf %179, %180 : vector<8x4xf32>
    %cst_88 = arith.constant 0.000000e+00 : f32
    %182 = vector.broadcast %cst_88 : f32 to vector<8x4xf32>
    %183 = arith.maximumf %181, %182 : vector<8x4xf32>
    %cst_89 = arith.constant dense<0.000000e+00> : vector<8x16xf32>
    %184 = tpu.matmul %183, %15, %cst_89 {dimension_numbers = #tpu.dot_dimension_numbers<[1], [0], [0], [1], [0, 0, 1, 1], [], []>} : vector<8x4xf32>, vector<4x16xf32>, vector<8x16xf32> -> vector<8x16xf32>
    %185 = arith.addf %178, %184 : vector<8x16xf32>
    %186 = vector.broadcast %16 : vector<1x16xf32> to vector<8x16xf32>
    %187 = arith.addf %185, %186 : vector<8x16xf32>
    %cst_90 = arith.constant dense<0.000000e+00> : vector<8xf32>
    %188 = vector.multi_reduction <add>, %187, %cst_90 [1] : vector<8x16xf32> to vector<8xf32>
    %189 = vector.shape_cast %188 : vector<8xf32> to vector<8x1xf32>
    %cst_91 = arith.constant 1.600000e+01 : f32
    %190 = vector.broadcast %cst_91 : f32 to vector<8x1xf32>
    %191 = arith.divf %189, %190 : vector<8x1xf32>
    %192 = vector.broadcast %191 : vector<8x1xf32> to vector<8x16xf32>
    %193 = arith.subf %187, %192 : vector<8x16xf32>
    %194 = arith.mulf %193, %193 : vector<8x16xf32>
    %cst_92 = arith.constant dense<0.000000e+00> : vector<8xf32>
    %195 = vector.multi_reduction <add>, %194, %cst_92 [1] : vector<8x16xf32> to vector<8xf32>
    %196 = vector.shape_cast %195 : vector<8xf32> to vector<8x1xf32>
    %cst_93 = arith.constant 1.600000e+01 : f32
    %197 = vector.broadcast %cst_93 : f32 to vector<8x1xf32>
    %198 = arith.divf %196, %197 : vector<8x1xf32>
    %199 = vector.broadcast %191 : vector<8x1xf32> to vector<8x16xf32>
    %200 = arith.subf %187, %199 : vector<8x16xf32>
    %cst_94 = arith.constant 9.99999974E-6 : f32
    %201 = vector.broadcast %cst_94 : f32 to vector<8x1xf32>
    %202 = arith.addf %198, %201 : vector<8x1xf32>
    %203 = math.rsqrt %202 : vector<8x1xf32>
    %204 = vector.broadcast %203 : vector<8x1xf32> to vector<8x16xf32>
    %205 = arith.mulf %200, %204 : vector<8x16xf32>
    %206 = vector.broadcast %19 : vector<1x16xf32> to vector<8x16xf32>
    %207 = arith.mulf %205, %206 : vector<8x16xf32>
    %208 = vector.broadcast %20 : vector<1x16xf32> to vector<8x16xf32>
    %209 = arith.addf %207, %208 : vector<8x16xf32>
    %c0_95 = arith.constant 0 : index
    %c0_96 = arith.constant 0 : index
    %210 = vector.load %arg7[%c0_95, %c0_96] : memref<32x8xf32, #tpu.memory_space<vmem>>, vector<32x8xf32>
    %c0_97 = arith.constant 0 : index
    %c0_98 = arith.constant 0 : index
    %211 = vector.load %arg8[%c0_97, %c0_98] : memref<64x16xf32, #tpu.memory_space<vmem>>, vector<64x16xf32>
    %cst_99 = arith.constant dense<0.000000e+00> : vector<32x16xf32>
    %212 = tpu.matmul %210, %209, %cst_99 {dimension_numbers = #tpu.dot_dimension_numbers<[1], [0], [0], [1], [0, 0, 1, 1], [], []>} : vector<32x8xf32>, vector<8x16xf32>, vector<32x16xf32> -> vector<32x16xf32>
    %213 = vector.extract_strided_slice %212 {offsets = [0, 0], sizes = [8, 16], strides = [1, 1]} : vector<32x16xf32> to vector<8x16xf32>
    %214 = vector.extract_strided_slice %211 {offsets = [0, 0], sizes = [16, 16], strides = [1, 1]} : vector<64x16xf32> to vector<16x16xf32>
    %cst_100 = arith.constant dense<0.000000e+00> : vector<8x16xf32>
    %215 = tpu.matmul %213, %214, %cst_100 {dimension_numbers = #tpu.dot_dimension_numbers<[1], [0], [0], [1], [0, 0, 1, 1], [], []>} : vector<8x16xf32>, vector<16x16xf32>, vector<8x16xf32> -> vector<8x16xf32>
    %216 = vector.extract_strided_slice %212 {offsets = [8, 0], sizes = [8, 16], strides = [1, 1]} : vector<32x16xf32> to vector<8x16xf32>
    %217 = vector.extract_strided_slice %211 {offsets = [16, 0], sizes = [16, 16], strides = [1, 1]} : vector<64x16xf32> to vector<16x16xf32>
    %cst_101 = arith.constant dense<0.000000e+00> : vector<8x16xf32>
    %218 = tpu.matmul %216, %217, %cst_101 {dimension_numbers = #tpu.dot_dimension_numbers<[1], [0], [0], [1], [0, 0, 1, 1], [], []>} : vector<8x16xf32>, vector<16x16xf32>, vector<8x16xf32> -> vector<8x16xf32>
    %219 = arith.addf %215, %218 : vector<8x16xf32>
    %220 = vector.extract_strided_slice %212 {offsets = [16, 0], sizes = [8, 16], strides = [1, 1]} : vector<32x16xf32> to vector<8x16xf32>
    %221 = vector.extract_strided_slice %211 {offsets = [32, 0], sizes = [16, 16], strides = [1, 1]} : vector<64x16xf32> to vector<16x16xf32>
    %cst_102 = arith.constant dense<0.000000e+00> : vector<8x16xf32>
    %222 = tpu.matmul %220, %221, %cst_102 {dimension_numbers = #tpu.dot_dimension_numbers<[1], [0], [0], [1], [0, 0, 1, 1], [], []>} : vector<8x16xf32>, vector<16x16xf32>, vector<8x16xf32> -> vector<8x16xf32>
    %223 = arith.addf %219, %222 : vector<8x16xf32>
    %224 = vector.extract_strided_slice %212 {offsets = [24, 0], sizes = [8, 16], strides = [1, 1]} : vector<32x16xf32> to vector<8x16xf32>
    %225 = vector.extract_strided_slice %211 {offsets = [48, 0], sizes = [16, 16], strides = [1, 1]} : vector<64x16xf32> to vector<16x16xf32>
    %cst_103 = arith.constant dense<0.000000e+00> : vector<8x16xf32>
    %226 = tpu.matmul %224, %225, %cst_103 {dimension_numbers = #tpu.dot_dimension_numbers<[1], [0], [0], [1], [0, 0, 1, 1], [], []>} : vector<8x16xf32>, vector<16x16xf32>, vector<8x16xf32> -> vector<8x16xf32>
    %227 = arith.addf %223, %226 : vector<8x16xf32>
    %cst_104 = arith.constant dense<0.000000e+00> : vector<8x48xf32>
    %228 = tpu.matmul %227, %9, %cst_104 {dimension_numbers = #tpu.dot_dimension_numbers<[1], [0], [0], [1], [0, 0, 1, 1], [], []>} : vector<8x16xf32>, vector<16x48xf32>, vector<8x48xf32> -> vector<8x48xf32>
    %229 = vector.broadcast %10 : vector<1x48xf32> to vector<8x48xf32>
    %230 = arith.addf %228, %229 : vector<8x48xf32>
    %231 = vector.extract_strided_slice %230 {offsets = [0, 0], sizes = [8, 16], strides = [1, 1]} : vector<8x48xf32> to vector<8x16xf32>
    %232 = vector.extract_strided_slice %230 {offsets = [0, 16], sizes = [8, 16], strides = [1, 1]} : vector<8x48xf32> to vector<8x16xf32>
    %233 = vector.extract_strided_slice %230 {offsets = [0, 32], sizes = [8, 16], strides = [1, 1]} : vector<8x48xf32> to vector<8x16xf32>
    %cst_105 = arith.constant dense<0.000000e+00> : vector<64x16xf32>
    %234 = tpu.matmul %6, %231, %cst_105 {dimension_numbers = #tpu.dot_dimension_numbers<[1], [0], [0], [1], [0, 0, 1, 1], [], []>} : vector<64x8xf32>, vector<8x16xf32>, vector<64x16xf32> -> vector<64x16xf32>
    %235 = arith.mulf %234, %7 : vector<64x16xf32>
    %cst_106 = arith.constant dense<0.000000e+00> : vector<64x8xf32>
    %236 = tpu.matmul %235, %232, %cst_106 {dimension_numbers = #tpu.dot_dimension_numbers<[1], [1], [0], [0], [0, 0, 1, 0], [], []>} : vector<64x16xf32>, vector<8x16xf32>, vector<64x8xf32> -> vector<64x8xf32>
    %237 = arith.addf %236, %21 : vector<64x8xf32>
    %cst_107 = arith.constant dense<0xFF800000> : vector<64xf32>
    %238 = vector.multi_reduction <maximumf>, %237, %cst_107 [1] : vector<64x8xf32> to vector<64xf32>
    %239 = vector.shape_cast %238 : vector<64xf32> to vector<64x1xf32>
    %240 = vector.broadcast %239 : vector<64x1xf32> to vector<64x8xf32>
    %241 = arith.subf %237, %240 : vector<64x8xf32>
    %242 = math.exp %241 : vector<64x8xf32>
    %cst_108 = arith.constant dense<0.000000e+00> : vector<64xf32>
    %243 = vector.multi_reduction <add>, %242, %cst_108 [1] : vector<64x8xf32> to vector<64xf32>
    %244 = vector.shape_cast %243 : vector<64xf32> to vector<64x1xf32>
    %245 = tpu.reciprocal %244 {approx = true} : vector<64x1xf32> -> vector<64x1xf32>
    %246 = vector.broadcast %245 : vector<64x1xf32> to vector<64x8xf32>
    %247 = arith.mulf %242, %246 : vector<64x8xf32>
    %cst_109 = arith.constant dense<0.000000e+00> : vector<64x16xf32>
    %248 = tpu.matmul %247, %233, %cst_109 {dimension_numbers = #tpu.dot_dimension_numbers<[1], [0], [0], [1], [0, 0, 1, 1], [], []>} : vector<64x8xf32>, vector<8x16xf32>, vector<64x16xf32> -> vector<64x16xf32>
    %249 = arith.mulf %248, %7 : vector<64x16xf32>
    %cst_110 = arith.constant dense<0.000000e+00> : vector<8x16xf32>
    %250 = tpu.matmul %8, %249, %cst_110 {dimension_numbers = #tpu.dot_dimension_numbers<[1], [0], [0], [1], [0, 0, 1, 1], [], []>} : vector<8x64xf32>, vector<64x16xf32>, vector<8x16xf32> -> vector<8x16xf32>
    %cst_111 = arith.constant dense<0.000000e+00> : vector<8x16xf32>
    %251 = tpu.matmul %250, %11, %cst_111 {dimension_numbers = #tpu.dot_dimension_numbers<[1], [0], [0], [1], [0, 0, 1, 1], [], []>} : vector<8x16xf32>, vector<16x16xf32>, vector<8x16xf32> -> vector<8x16xf32>
    %252 = arith.addf %227, %251 : vector<8x16xf32>
    %253 = vector.broadcast %12 : vector<1x16xf32> to vector<8x16xf32>
    %254 = arith.addf %252, %253 : vector<8x16xf32>
    %cst_112 = arith.constant dense<0.000000e+00> : vector<8xf32>
    %255 = vector.multi_reduction <add>, %254, %cst_112 [1] : vector<8x16xf32> to vector<8xf32>
    %256 = vector.shape_cast %255 : vector<8xf32> to vector<8x1xf32>
    %cst_113 = arith.constant 1.600000e+01 : f32
    %257 = vector.broadcast %cst_113 : f32 to vector<8x1xf32>
    %258 = arith.divf %256, %257 : vector<8x1xf32>
    %259 = vector.broadcast %258 : vector<8x1xf32> to vector<8x16xf32>
    %260 = arith.subf %254, %259 : vector<8x16xf32>
    %261 = arith.mulf %260, %260 : vector<8x16xf32>
    %cst_114 = arith.constant dense<0.000000e+00> : vector<8xf32>
    %262 = vector.multi_reduction <add>, %261, %cst_114 [1] : vector<8x16xf32> to vector<8xf32>
    %263 = vector.shape_cast %262 : vector<8xf32> to vector<8x1xf32>
    %cst_115 = arith.constant 1.600000e+01 : f32
    %264 = vector.broadcast %cst_115 : f32 to vector<8x1xf32>
    %265 = arith.divf %263, %264 : vector<8x1xf32>
    %266 = vector.broadcast %258 : vector<8x1xf32> to vector<8x16xf32>
    %267 = arith.subf %254, %266 : vector<8x16xf32>
    %cst_116 = arith.constant 9.99999974E-6 : f32
    %268 = vector.broadcast %cst_116 : f32 to vector<8x1xf32>
    %269 = arith.addf %265, %268 : vector<8x1xf32>
    %270 = math.rsqrt %269 : vector<8x1xf32>
    %271 = vector.broadcast %270 : vector<8x1xf32> to vector<8x16xf32>
    %272 = arith.mulf %267, %271 : vector<8x16xf32>
    %273 = vector.broadcast %17 : vector<1x16xf32> to vector<8x16xf32>
    %274 = arith.mulf %272, %273 : vector<8x16xf32>
    %275 = vector.broadcast %18 : vector<1x16xf32> to vector<8x16xf32>
    %276 = arith.addf %274, %275 : vector<8x16xf32>
    %cst_117 = arith.constant dense<0.000000e+00> : vector<8x4xf32>
    %277 = tpu.matmul %276, %13, %cst_117 {dimension_numbers = #tpu.dot_dimension_numbers<[1], [0], [0], [1], [0, 0, 1, 1], [], []>} : vector<8x16xf32>, vector<16x4xf32>, vector<8x4xf32> -> vector<8x4xf32>
    %278 = vector.broadcast %14 : vector<1x4xf32> to vector<8x4xf32>
    %279 = arith.addf %277, %278 : vector<8x4xf32>
    %cst_118 = arith.constant 0.000000e+00 : f32
    %280 = vector.broadcast %cst_118 : f32 to vector<8x4xf32>
    %281 = arith.maximumf %279, %280 : vector<8x4xf32>
    %cst_119 = arith.constant dense<0.000000e+00> : vector<8x16xf32>
    %282 = tpu.matmul %281, %15, %cst_119 {dimension_numbers = #tpu.dot_dimension_numbers<[1], [0], [0], [1], [0, 0, 1, 1], [], []>} : vector<8x4xf32>, vector<4x16xf32>, vector<8x16xf32> -> vector<8x16xf32>
    %283 = arith.addf %276, %282 : vector<8x16xf32>
    %284 = vector.broadcast %16 : vector<1x16xf32> to vector<8x16xf32>
    %285 = arith.addf %283, %284 : vector<8x16xf32>
    %cst_120 = arith.constant dense<0.000000e+00> : vector<8xf32>
    %286 = vector.multi_reduction <add>, %285, %cst_120 [1] : vector<8x16xf32> to vector<8xf32>
    %287 = vector.shape_cast %286 : vector<8xf32> to vector<8x1xf32>
    %cst_121 = arith.constant 1.600000e+01 : f32
    %288 = vector.broadcast %cst_121 : f32 to vector<8x1xf32>
    %289 = arith.divf %287, %288 : vector<8x1xf32>
    %290 = vector.broadcast %289 : vector<8x1xf32> to vector<8x16xf32>
    %291 = arith.subf %285, %290 : vector<8x16xf32>
    %292 = arith.mulf %291, %291 : vector<8x16xf32>
    %cst_122 = arith.constant dense<0.000000e+00> : vector<8xf32>
    %293 = vector.multi_reduction <add>, %292, %cst_122 [1] : vector<8x16xf32> to vector<8xf32>
    %294 = vector.shape_cast %293 : vector<8xf32> to vector<8x1xf32>
    %cst_123 = arith.constant 1.600000e+01 : f32
    %295 = vector.broadcast %cst_123 : f32 to vector<8x1xf32>
    %296 = arith.divf %294, %295 : vector<8x1xf32>
    %297 = vector.broadcast %289 : vector<8x1xf32> to vector<8x16xf32>
    %298 = arith.subf %285, %297 : vector<8x16xf32>
    %cst_124 = arith.constant 9.99999974E-6 : f32
    %299 = vector.broadcast %cst_124 : f32 to vector<8x1xf32>
    %300 = arith.addf %296, %299 : vector<8x1xf32>
    %301 = math.rsqrt %300 : vector<8x1xf32>
    %302 = vector.broadcast %301 : vector<8x1xf32> to vector<8x16xf32>
    %303 = arith.mulf %298, %302 : vector<8x16xf32>
    %304 = vector.broadcast %19 : vector<1x16xf32> to vector<8x16xf32>
    %305 = arith.mulf %303, %304 : vector<8x16xf32>
    %306 = vector.broadcast %20 : vector<1x16xf32> to vector<8x16xf32>
    %307 = arith.addf %305, %306 : vector<8x16xf32>
    %c0_125 = arith.constant 0 : index
    %c0_126 = arith.constant 0 : index
    %308 = vector.load %arg9[%c0_125, %c0_126] : memref<32x8xf32, #tpu.memory_space<vmem>>, vector<32x8xf32>
    %c0_127 = arith.constant 0 : index
    %c0_128 = arith.constant 0 : index
    %309 = vector.load %arg10[%c0_127, %c0_128] : memref<32x8xf32, #tpu.memory_space<vmem>>, vector<32x8xf32>
    %cst_129 = arith.constant dense<0.000000e+00> : vector<32x16xf32>
    %310 = tpu.matmul %308, %307, %cst_129 {dimension_numbers = #tpu.dot_dimension_numbers<[1], [0], [0], [1], [0, 0, 1, 1], [], []>} : vector<32x8xf32>, vector<8x16xf32>, vector<32x16xf32> -> vector<32x16xf32>
    %311 = vector.extract_strided_slice %310 {offsets = [0, 0], sizes = [16, 16], strides = [1, 1]} : vector<32x16xf32> to vector<16x16xf32>
    %312 = vector.extract_strided_slice %309 {offsets = [0, 0], sizes = [16, 8], strides = [1, 1]} : vector<32x8xf32> to vector<16x8xf32>
    %cst_130 = arith.constant dense<0.000000e+00> : vector<16x8xf32>
    %313 = tpu.matmul %311, %312, %cst_130 {dimension_numbers = #tpu.dot_dimension_numbers<[1], [0], [0], [1], [0, 0, 1, 1], [], []>} : vector<16x16xf32>, vector<16x8xf32>, vector<16x8xf32> -> vector<16x8xf32>
    %314 = vector.extract_strided_slice %310 {offsets = [16, 0], sizes = [16, 16], strides = [1, 1]} : vector<32x16xf32> to vector<16x16xf32>
    %315 = vector.extract_strided_slice %309 {offsets = [16, 0], sizes = [16, 8], strides = [1, 1]} : vector<32x8xf32> to vector<16x8xf32>
    %cst_131 = arith.constant dense<0.000000e+00> : vector<16x8xf32>
    %316 = tpu.matmul %314, %315, %cst_131 {dimension_numbers = #tpu.dot_dimension_numbers<[1], [0], [0], [1], [0, 0, 1, 1], [], []>} : vector<16x16xf32>, vector<16x8xf32>, vector<16x8xf32> -> vector<16x8xf32>
    %317 = arith.addf %313, %316 : vector<16x8xf32>
    %c0_132 = arith.constant 0 : index
    %c0_133 = arith.constant 0 : index
    %318 = vector.load %arg27[%c0_132, %c0_133] : memref<8x3024xf32, #tpu.memory_space<vmem>>, vector<8x3024xf32>
    %cst_134 = arith.constant dense<0.000000e+00> : vector<16x3024xf32>
    %319 = tpu.matmul %317, %318, %cst_134 {dimension_numbers = #tpu.dot_dimension_numbers<[1], [0], [0], [1], [0, 0, 1, 1], [], []>} : vector<16x8xf32>, vector<8x3024xf32>, vector<16x3024xf32> -> vector<16x3024xf32>
    %c0_135 = arith.constant 0 : index
    %c0_136 = arith.constant 0 : index
    %320 = vector.load %arg28[%c0_135, %c0_136] : memref<1x3024xf32, #tpu.memory_space<vmem>>, vector<1x3024xf32>
    %321 = vector.broadcast %320 : vector<1x3024xf32> to vector<16x3024xf32>
    %322 = arith.addf %319, %321 : vector<16x3024xf32>
    %323 = arith.addf %0, %322 : vector<16x3024xf32>
    %c0_137 = arith.constant 0 : index
    %c0_138 = arith.constant 0 : index
    %324 = vector.load %arg29[%c0_137, %c0_138] : memref<16x3024xf32, #tpu.memory_space<vmem>>, vector<16x3024xf32>
    tpu.vector_store %arg29[%c0_137, %c0_138], %323 {strides = array<i32>} : memref<16x3024xf32, #tpu.memory_space<vmem>>, vector<16x3024xf32>,
    return
  }
}

</mosaic_0001>

<llo_original>
// kernel: ch_sp_att_forward.2
$region0: #{ch_sp_att_forward.2}
  #allocation0 [shape = 'u32[]', space=smem, size = 0x4, offset = 0x4, fixed_abs, tag = 'smem constant byte address 0x4 - core index']
  #allocation1 [shape = 'u32[144,128]{1,0:T(1,128)}', space=vmem, size = 0x12000, scoped, tag = 'internal scratch']
  %s0 = inlined_call_operand.vmem [shape: f32[16,3024], index: 0, kind: input, shape index: {}, may-alias: {0,22}]
  %s1 = inlined_call_operand.vmem [shape: f32[16,8], index: 1, kind: input, shape index: {}]
  %s2 = inlined_call_operand.vmem [shape: f32[16,8], index: 2, kind: input, shape index: {}]
  %s3 = inlined_call_operand.vmem [shape: f32[2,16], index: 3, kind: input, shape index: {}]
  %s4 = inlined_call_operand.vmem [shape: f32[1,8], index: 4, kind: input, shape index: {}]
  %s5 = inlined_call_operand.vmem [shape: f32[16,2], index: 5, kind: input, shape index: {}]
  %s6 = inlined_call_operand.vmem [shape: f32[16,8], index: 6, kind: input, shape index: {}]
  %s7 = inlined_call_operand.vmem [shape: f32[16,2], index: 7, kind: input, shape index: {}]
  %s8 = inlined_call_operand.vmem [shape: f32[16,8], index: 8, kind: input, shape index: {}]
  %s9 = inlined_call_operand.vmem [shape: f32[2,16], index: 9, kind: input, shape index: {}]
  %s10 = inlined_call_operand.vmem [shape: f32[8,24], index: 10, kind: input, shape index: {}]
  %s11 = inlined_call_operand.vmem [shape: f32[1,24], index: 11, kind: input, shape index: {}]
  %s12 = inlined_call_operand.vmem [shape: f32[8,8], index: 12, kind: input, shape index: {}]
  %s13 = inlined_call_operand.vmem [shape: f32[1,8], index: 13, kind: input, shape index: {}]
  %s14 = inlined_call_operand.vmem [shape: f32[8,2], index: 14, kind: input, shape index: {}]
  %s15 = inlined_call_operand.vmem [shape: f32[1,2], index: 15, kind: input, shape index: {}]
  %s16 = inlined_call_operand.vmem [shape: f32[2,8], index: 16, kind: input, shape index: {}]
  %s17 = inlined_call_operand.vmem [shape: f32[1,8], index: 17, kind: input, shape index: {}]
  %s18 = inlined_call_operand.vmem [shape: f32[1,8], index: 18, kind: input, shape index: {}]
  %s19 = inlined_call_operand.vmem [shape: f32[1,8], index: 19, kind: input, shape index: {}]
  %s20 = inlined_call_operand.vmem [shape: f32[1,8], index: 20, kind: input, shape index: {}]
  %s21 = inlined_call_operand.vmem [shape: f32[1,8], index: 21, kind: input, shape index: {}]
  %s22 = inlined_call_operand.vmem [shape: f32[16,3024], index: 22, kind: output, shape index: {}, may-alias: {0,22}]
  %s23 = sld [smem:[#allocation0]]
  $region98: #{ch_sp_att_forward.2} parent=0
    _
  %s25 = ssub.s32 1, %s23
  %s26 = scalar_select 0, %s25, %s23
  // Predicated region
  $region2: #{ch_sp_att_forward.2} parent=0 // pred_check
    _
  $region3: #{ch_sp_att_forward.2} parent=0 // pred_check_branch
    %28 = sbr.rel (0) target = $region5
  $region4: #{ch_sp_att_forward.2} parent=0 // pred_region
    _
  $region5: #{ch_sp_att_forward.2} parent=0 // pred_fallthru
    _
  // Predicated region
  $region6: #{ch_sp_att_forward.2} parent=0 // pred_check
    _
  $region7: #{ch_sp_att_forward.2} parent=0 // pred_check_branch
    %30 = sbr.rel (0) target = $region9
  $region8: #{ch_sp_att_forward.2} parent=0 // pred_region
    _
  $region9: #{ch_sp_att_forward.2} parent=0 // pred_fallthru
    _
  // Predicated region
  $region10: #{ch_sp_att_forward.2} parent=0 // pred_check
    _
  $region11: #{ch_sp_att_forward.2} parent=0 // pred_check_branch
    %32 = sbr.rel (0) target = $region13
  $region12: #{ch_sp_att_forward.2} parent=0 // pred_region
    _
  $region13: #{ch_sp_att_forward.2} parent=0 // pred_fallthru
    _
  // Predicated region
  $region14: #{ch_sp_att_forward.2} parent=0 // pred_check
    _
  $region15: #{ch_sp_att_forward.2} parent=0 // pred_check_branch
    %34 = sbr.rel (0) target = $region17
  $region16: #{ch_sp_att_forward.2} parent=0 // pred_region
    _
  $region17: #{ch_sp_att_forward.2} parent=0 // pred_fallthru
    _
  // Predicated region
  $region18: #{ch_sp_att_forward.2} parent=0 // pred_check
    _
  $region19: #{ch_sp_att_forward.2} parent=0 // pred_check_branch
    %36 = sbr.rel (0) target = $region21
  $region20: #{ch_sp_att_forward.2} parent=0 // pred_region
    _
  $region21: #{ch_sp_att_forward.2} parent=0 // pred_fallthru
    _
  // Predicated region
  $region22: #{ch_sp_att_forward.2} parent=0 // pred_check
    _
  $region23: #{ch_sp_att_forward.2} parent=0 // pred_check_branch
    %38 = sbr.rel (0) target = $region25
  $region24: #{ch_sp_att_forward.2} parent=0 // pred_region
    _
  $region25: #{ch_sp_att_forward.2} parent=0 // pred_fallthru
    _
  // Predicated region
  $region26: #{ch_sp_att_forward.2} parent=0 // pred_check
    _
  $region27: #{ch_sp_att_forward.2} parent=0 // pred_check_branch
    %40 = sbr.rel (0) target = $region29
  $region28: #{ch_sp_att_forward.2} parent=0 // pred_region
    _
  $region29: #{ch_sp_att_forward.2} parent=0 // pred_fallthru
    _
  // Predicated region
  $region30: #{ch_sp_att_forward.2} parent=0 // pred_check
    _
  $region31: #{ch_sp_att_forward.2} parent=0 // pred_check_branch
    %42 = sbr.rel (0) target = $region33
  $region32: #{ch_sp_att_forward.2} parent=0 // pred_region
    _
  $region33: #{ch_sp_att_forward.2} parent=0 // pred_fallthru
    _
  // Predicated region
  $region34: #{ch_sp_att_forward.2} parent=0 // pred_check
    _
  $region35: #{ch_sp_att_forward.2} parent=0 // pred_check_branch
    %44 = sbr.rel (0) target = $region37
  $region36: #{ch_sp_att_forward.2} parent=0 // pred_region
    _
  $region37: #{ch_sp_att_forward.2} parent=0 // pred_fallthru
    _
  // Predicated region
  $region38: #{ch_sp_att_forward.2} parent=0 // pred_check
    _
  $region39: #{ch_sp_att_forward.2} parent=0 // pred_check_branch
    %46 = sbr.rel (0) target = $region41
  $region40: #{ch_sp_att_forward.2} parent=0 // pred_region
    _
  $region41: #{ch_sp_att_forward.2} parent=0 // pred_fallthru
    _
  // Predicated region
  $region42: #{ch_sp_att_forward.2} parent=0 // pred_check
    _
  $region43: #{ch_sp_att_forward.2} parent=0 // pred_check_branch
    %48 = sbr.rel (0) target = $region45
  $region44: #{ch_sp_att_forward.2} parent=0 // pred_region
    _
  $region45: #{ch_sp_att_forward.2} parent=0 // pred_fallthru
    _
  // Predicated region
  $region46: #{ch_sp_att_forward.2} parent=0 // pred_check
    _
  $region47: #{ch_sp_att_forward.2} parent=0 // pred_check_branch
    %50 = sbr.rel (0) target = $region49
  $region48: #{ch_sp_att_forward.2} parent=0 // pred_region
    _
  $region49: #{ch_sp_att_forward.2} parent=0 // pred_fallthru
    _
  // Predicated region
  $region50: #{ch_sp_att_forward.2} parent=0 // pred_check
    _
  $region51: #{ch_sp_att_forward.2} parent=0 // pred_check_branch
    %52 = sbr.rel (0) target = $region53
  $region52: #{ch_sp_att_forward.2} parent=0 // pred_region
    _
  $region53: #{ch_sp_att_forward.2} parent=0 // pred_fallthru
    _
  // Predicated region
  $region54: #{ch_sp_att_forward.2} parent=0 // pred_check
    _
  $region55: #{ch_sp_att_forward.2} parent=0 // pred_check_branch
    %54 = sbr.rel (0) target = $region57
  $region56: #{ch_sp_att_forward.2} parent=0 // pred_region
    _
  $region57: #{ch_sp_att_forward.2} parent=0 // pred_fallthru
    _
  // Predicated region
  $region58: #{ch_sp_att_forward.2} parent=0 // pred_check
    _
  $region59: #{ch_sp_att_forward.2} parent=0 // pred_check_branch
    %56 = sbr.rel (0) target = $region61
  $region60: #{ch_sp_att_forward.2} parent=0 // pred_region
    _
  $region61: #{ch_sp_att_forward.2} parent=0 // pred_fallthru
    _
  // Predicated region
  $region62: #{ch_sp_att_forward.2} parent=0 // pred_check
    _
  $region63: #{ch_sp_att_forward.2} parent=0 // pred_check_branch
    %58 = sbr.rel (0) target = $region65
  $region64: #{ch_sp_att_forward.2} parent=0 // pred_region
    _
  $region65: #{ch_sp_att_forward.2} parent=0 // pred_fallthru
    _
  // Predicated region
  $region66: #{ch_sp_att_forward.2} parent=0 // pred_check
    _
  $region67: #{ch_sp_att_forward.2} parent=0 // pred_check_branch
    %60 = sbr.rel (0) target = $region69
  $region68: #{ch_sp_att_forward.2} parent=0 // pred_region
    _
  $region69: #{ch_sp_att_forward.2} parent=0 // pred_fallthru
    _
  // Predicated region
  $region70: #{ch_sp_att_forward.2} parent=0 // pred_check
    _
  $region71: #{ch_sp_att_forward.2} parent=0 // pred_check_branch
    %62 = sbr.rel (0) target = $region73
  $region72: #{ch_sp_att_forward.2} parent=0 // pred_region
    _
  $region73: #{ch_sp_att_forward.2} parent=0 // pred_fallthru
    _
  // Predicated region
  $region74: #{ch_sp_att_forward.2} parent=0 // pred_check
    _
  $region75: #{ch_sp_att_forward.2} parent=0 // pred_check_branch
    %64 = sbr.rel (0) target = $region77
  $region76: #{ch_sp_att_forward.2} parent=0 // pred_region
    _
  $region77: #{ch_sp_att_forward.2} parent=0 // pred_fallthru
    _
  // Predicated region
  $region78: #{ch_sp_att_forward.2} parent=0 // pred_check
    _
  $region79: #{ch_sp_att_forward.2} parent=0 // pred_check_branch
    %66 = sbr.rel (0) target = $region81
  $region80: #{ch_sp_att_forward.2} parent=0 // pred_region
    _
  $region81: #{ch_sp_att_forward.2} parent=0 // pred_fallthru
    _
  // Predicated region
  $region82: #{ch_sp_att_forward.2} parent=0 // pred_check
    _
  $region83: #{ch_sp_att_forward.2} parent=0 // pred_check_branch
    %68 = sbr.rel (0) target = $region85
  $region84: #{ch_sp_att_forward.2} parent=0 // pred_region
    _
  $region85: #{ch_sp_att_forward.2} parent=0 // pred_fallthru
    _
  // Predicated region
  $region86: #{ch_sp_att_forward.2} parent=0 // pred_check
    _
  $region87: #{ch_sp_att_forward.2} parent=0 // pred_check_branch
    %70 = sbr.rel (0) target = $region89
  $region88: #{ch_sp_att_forward.2} parent=0 // pred_region
    _
  $region89: #{ch_sp_att_forward.2} parent=0 // pred_fallthru
    _
  %v71 = vld [vmem:[%s0] sm:$0xff]
  %v72 = vld [vmem:[%s0 + $0x8] sm:$0xff]
  %v73 = vld [vmem:[%s0 + $0x10] sm:$0xff]
  %v74 = vld [vmem:[%s0 + $0x18] sm:$0xff]
  %v75 = vld [vmem:[%s0 + $0x20] sm:$0xff]
  %v76 = vld [vmem:[%s0 + $0x28] sm:$0xff]
  %v77 = vld [vmem:[%s0 + $0x30] sm:$0xff]
  %v78 = vld [vmem:[%s0 + $0x38] sm:$0xff]
  %v79 = vld [vmem:[%s0 + $0x40] sm:$0xff]
  %v80 = vld [vmem:[%s0 + $0x48] sm:$0xff]
  %v81 = vld [vmem:[%s0 + $0x50] sm:$0xff]
  %v82 = vld [vmem:[%s0 + $0x58] sm:$0xff]
  %v83 = vld [vmem:[%s0 + $0x60] sm:$0xff]
  %v84 = vld [vmem:[%s0 + $0x68] sm:$0xff]
  %v85 = vld [vmem:[%s0 + $0x70] sm:$0xff]
  %v86 = vld [vmem:[%s0 + $0x78] sm:$0xff]
  %v87 = vld [vmem:[%s0 + $0x80] sm:$0xff]
  %v88 = vld [vmem:[%s0 + $0x88] sm:$0xff]
  %v89 = vld [vmem:[%s0 + $0x90] sm:$0xff]
  %v90 = vld [vmem:[%s0 + $0x98] sm:$0xff]
  %v91 = vld [vmem:[%s0 + $0xa0] sm:$0xff]
  %v92 = vld [vmem:[%s0 + $0xa8] sm:$0xff]
  %v93 = vld [vmem:[%s0 + $0xb0] sm:$0xff]
  %v94 = vld [vmem:[%s0 + $0xb8] sm:$0xff]
  %v95 = vld [vmem:[%s0 + $0xc0] sm:$0xff]
  %v96 = vld [vmem:[%s0 + $0xc8] sm:$0xff]
  %v97 = vld [vmem:[%s0 + $0xd0] sm:$0xff]
  %v98 = vld [vmem:[%s0 + $0xd8] sm:$0xff]
  %v99 = vld [vmem:[%s0 + $0xe0] sm:$0xff]
  %v100 = vld [vmem:[%s0 + $0xe8] sm:$0xff]
  %v101 = vld [vmem:[%s0 + $0xf0] sm:$0xff]
  %v102 = vld [vmem:[%s0 + $0xf8] sm:$0xff]
  %v103 = vld [vmem:[%s0 + $0x100] sm:$0xff]
  %v104 = vld [vmem:[%s0 + $0x108] sm:$0xff]
  %v105 = vld [vmem:[%s0 + $0x110] sm:$0xff]
  %v106 = vld [vmem:[%s0 + $0x118] sm:$0xff]
  %v107 = vld [vmem:[%s0 + $0x120] sm:$0xff]
  %v108 = vld [vmem:[%s0 + $0x128] sm:$0xff]
  %v109 = vld [vmem:[%s0 + $0x130] sm:$0xff]
  %v110 = vld [vmem:[%s0 + $0x138] sm:$0xff]
  %v111 = vld [vmem:[%s0 + $0x140] sm:$0xff]
  %v112 = vld [vmem:[%s0 + $0x148] sm:$0xff]
  %v113 = vld [vmem:[%s0 + $0x150] sm:$0xff]
  %v114 = vld [vmem:[%s0 + $0x158] sm:$0xff]
  %v115 = vld [vmem:[%s0 + $0x160] sm:$0xff]
  %v116 = vld [vmem:[%s0 + $0x168] sm:$0xff]
  %v117 = vld [vmem:[%s0 + $0x170] sm:$0xff]
  %v118 = vld [vmem:[%s0 + $0x178] sm:$0xff]
  %v119 = vmax.f32 %v71, %v73
  %v120 = vmax.f32 %v72, %v74
  %v121 = vmax.f32 %v119, %v75
  %v122 = vmax.f32 %v120, %v76
  %v123 = vmax.f32 %v121, %v77
  %v124 = vmax.f32 %v122, %v78
  %v125 = vmax.f32 %v123, %v79
  %v126 = vmax.f32 %v124, %v80
  %v127 = vmax.f32 %v125, %v81
  %v128 = vmax.f32 %v126, %v82
  %v129 = vmax.f32 %v127, %v83
  %v130 = vmax.f32 %v128, %v84
  %v131 = vmax.f32 %v129, %v85
  %v132 = vmax.f32 %v130, %v86
  %v133 = vmax.f32 %v131, %v87
  %v134 = vmax.f32 %v132, %v88
  %v135 = vmax.f32 %v133, %v89
  %v136 = vmax.f32 %v134, %v90
  %v137 = vmax.f32 %v135, %v91
  %v138 = vmax.f32 %v136, %v92
  %v139 = vmax.f32 %v137, %v93
  %vm140 = vcmask 654336
  %v141 = vsel %vm140, %v94, -inf
  %v142 = vmax.f32 %v138, %v141
  %v143 = vmax.f32 %v139, %v142
  %144 = vmax.xlane.f32.xlu0 %v143
  %v145 = vpop.xlane.xlu0 %144
  %v146 = vmax.f32 %v95, %v97
  %v147 = vmax.f32 %v96, %v98
  %v148 = vmax.f32 %v146, %v99
  %v149 = vmax.f32 %v147, %v100
  %v150 = vmax.f32 %v148, %v101
  %v151 = vmax.f32 %v149, %v102
  %v152 = vmax.f32 %v150, %v103
  %v153 = vmax.f32 %v151, %v104
  %v154 = vmax.f32 %v152, %v105
  %v155 = vmax.f32 %v153, %v106
  %v156 = vmax.f32 %v154, %v107
  %v157 = vmax.f32 %v155, %v108
  %v158 = vmax.f32 %v156, %v109
  %v159 = vmax.f32 %v157, %v110
  %v160 = vmax.f32 %v158, %v111
  %v161 = vmax.f32 %v159, %v112
  %v162 = vmax.f32 %v160, %v113
  %v163 = vmax.f32 %v161, %v114
  %v164 = vmax.f32 %v162, %v115
  %v165 = vmax.f32 %v163, %v116
  %v166 = vmax.f32 %v164, %v117
  %v167 = vsel %vm140, %v118, -inf
  %v168 = vmax.f32 %v165, %v167
  %v169 = vmax.f32 %v166, %v168
  %170 = vmax.xlane.f32.xlu0 %v169
  %v171 = vpop.xlane.xlu0 %170
  %v172 = vadd.f32 %v71, %v72
  %v173 = vadd.f32 %v172, %v73
  %v174 = vadd.f32 %v173, %v74
  %v175 = vadd.f32 %v174, %v75
  %v176 = vadd.f32 %v175, %v76
  %v177 = vadd.f32 %v176, %v77
  %v178 = vadd.f32 %v177, %v78
  %v179 = vadd.f32 %v178, %v79
  %v180 = vadd.f32 %v179, %v80
  %v181 = vadd.f32 %v180, %v81
  %v182 = vadd.f32 %v181, %v82
  %v183 = vadd.f32 %v182, %v83
  %v184 = vadd.f32 %v183, %v84
  %v185 = vadd.f32 %v184, %v85
  %v186 = vadd.f32 %v185, %v86
  %v187 = vadd.f32 %v186, %v87
  %v188 = vadd.f32 %v187, %v88
  %v189 = vadd.f32 %v188, %v89
  %v190 = vadd.f32 %v189, %v90
  %v191 = vadd.f32 %v190, %v91
  %v192 = vadd.f32 %v191, %v92
  %v193 = vadd.f32 %v192, %v93
  %v194 = vsel %vm140, %v94, 0.0
  %v195 = vadd.f32 %v193, %v194
  %196 = vadd.xlane.f32.xlu0 %v195
  %v197 = vpop.xlane.xlu0 %196
  %v198 = vadd.f32 %v95, %v96
  %v199 = vadd.f32 %v198, %v97
  %v200 = vadd.f32 %v199, %v98
  %v201 = vadd.f32 %v200, %v99
  %v202 = vadd.f32 %v201, %v100
  %v203 = vadd.f32 %v202, %v101
  %v204 = vadd.f32 %v203, %v102
  %v205 = vadd.f32 %v204, %v103
  %v206 = vadd.f32 %v205, %v104
  %v207 = vadd.f32 %v206, %v105
  %v208 = vadd.f32 %v207, %v106
  %v209 = vadd.f32 %v208, %v107
  %v210 = vadd.f32 %v209, %v108
  %v211 = vadd.f32 %v210, %v109
  %v212 = vadd.f32 %v211, %v110
  %v213 = vadd.f32 %v212, %v111
  %v214 = vadd.f32 %v213, %v112
  %v215 = vadd.f32 %v214, %v113
  %v216 = vadd.f32 %v215, %v114
  %v217 = vadd.f32 %v216, %v115
  %v218 = vadd.f32 %v217, %v116
  %v219 = vadd.f32 %v218, %v117
  %v220 = vsel %vm140, %v118, 0.0
  %v221 = vadd.f32 %v219, %v220
  %222 = vadd.xlane.f32.xlu0 %v221
  %v223 = vpop.xlane.xlu0 %222
  %v224 = vrcp.pop 3024.0
  %v225 = vmul.f32 %v197, %v224
  %v226 = vmul.f32 %v223, %v224
  %v227 = vld [vmem:[%s1] sm:$0xff]
  %v228 = vld [vmem:[%s1 + $0x8] sm:$0xff]
  %v229 = vmul.f32 %v145, %v227
  %v230 = vmul.f32 %v171, %v228
  %v231 = vld [vmem:[%s2] sm:$0xff]
  %v232 = vld [vmem:[%s2 + $0x8] sm:$0xff]
  %v233 = vmul.f32 %v225, %v231
  %v234 = vmul.f32 %v226, %v232
  %v235 = vadd.f32 %v229, %v233
  %v236 = vadd.f32 %v230, %v234
  %v237 = vld [vmem:[%s3] sm:$0x3]
  %v238 = vld [vmem:[%s4] sm:$0x1]
  %v240 = vlaneseq
  %v241 = vshrl.u32 %v240, 7
  %v242 = vsub.s32 0, %v241
  %v243 = vrot.slane %v238, %v242
  %vm245 = vcmask 130048
  %v247 = vsel %vm245, %v237, 0
  %249 = vmatprep.subr.mxu0 0.0
  %250 = vmatpush1.msra.mxu0 %v235
  %251 = vmatprep.subr.mxu0 0.0
  %252 = vmatpush1.msra.mxu0 %v236
  %253 = vmatprep.subr.mxu0 0.0
  %254 = vmatpush1.msra.mxu0 0.0
  %255 = vmatprep.subr.mxu0 0.0
  %256 = vmatpush1.msra.mxu0 0.0
  %257 = vmatprep.subr.mxu0 0.0
  %258 = vmatpush1.msra.mxu0 0.0
  %259 = vmatprep.subr.mxu0 0.0
  %260 = vmatpush1.msra.mxu0 0.0
  %261 = vmatprep.subr.mxu0 0.0
  %262 = vmatpush1.msra.mxu0 0.0
  %263 = vmatprep.subr.mxu0 0.0
  %264 = vmatpush1.msra.mxu0 0.0
  %265 = vmatprep.subr.mxu0 0.0
  %266 = vmatpush1.msra.mxu0 0.0
  %267 = vmatprep.subr.mxu0 0.0
  %268 = vmatpush1.msra.mxu0 0.0
  %269 = vmatprep.subr.mxu0 0.0
  %270 = vmatpush1.msra.mxu0 0.0
  %271 = vmatprep.subr.mxu0 0.0
  %272 = vmatpush1.msra.mxu0 0.0
  %273 = vmatprep.subr.mxu0 0.0
  %274 = vmatpush1.msra.mxu0 0.0
  %275 = vmatprep.subr.mxu0 0.0
  %276 = vmatpush1.msra.mxu0 0.0
  %277 = vmatprep.subr.mxu0 0.0
  %278 = vmatpush1.msra.mxu0 0.0
  %279 = vmatprep.subr.mxu0 0.0
  %280 = vmatpush1.msra.mxu0 0.0
  %281 = vmatprep.subr.mxu0 0.0
  %282 = vmatpush1.msra.mxu0 0.0
  %283 = vmatprep.subr.mxu0 0.0
  %284 = vmatpush1.msra.mxu0 0.0
  %285 = vmatprep.subr.mxu0 0.0
  %286 = vmatpush1.msra.mxu0 0.0
  %287 = vmatprep.subr.mxu0 0.0
  %288 = vmatpush1.msra.mxu0 0.0
  %289 = vmatprep.subr.mxu0 0.0
  %290 = vmatpush1.msra.mxu0 0.0
  %291 = vmatprep.subr.mxu0 0.0
  %292 = vmatpush1.msra.mxu0 0.0
  %293 = vmatprep.subr.mxu0 0.0
  %294 = vmatpush1.msra.mxu0 0.0
  %295 = vmatprep.subr.mxu0 0.0
  %296 = vmatpush1.msra.mxu0 0.0
  %297 = vmatprep.subr.mxu0 0.0
  %298 = vmatpush1.msra.mxu0 0.0
  %299 = vmatprep.subr.mxu0 0.0
  %300 = vmatpush1.msra.mxu0 0.0
  %301 = vmatprep.subr.mxu0 0.0
  %302 = vmatpush1.msra.mxu0 0.0
  %303 = vmatprep.subr.mxu0 0.0
  %304 = vmatpush1.msra.mxu0 0.0
  %305 = vmatprep.subr.mxu0 0.0
  %306 = vmatpush1.msra.mxu0 0.0
  %307 = vmatprep.subr.mxu0 0.0
  %308 = vmatpush1.msra.mxu0 0.0
  %309 = vmatprep.subr.mxu0 0.0
  %310 = vmatpush1.msra.mxu0 0.0
  %311 = vmatprep.subr.mxu0 0.0
  %312 = vmatpush1.msra.mxu0 0.0
  %313 = vmatprep.mubr.f32.mxu0 0.0
  %314 = vmatmul.mubr.f32.gmra.mrb[0].mxu0 %v247
  %v315 = vpop.f32.mrb[0].mxu0
  %v316 = vadd.f32 %v243, %v315
  %v317 = vpop.f32.mrb[0].mxu0
  %318 = vdwg.mxu0
  %v319 = vld [vmem:[%s7] sm:$0xff]
  %v320 = vld [vmem:[%s7 + $0x8] sm:$0xff]
  %v321 = vld [vmem:[%s8] sm:$0xff]
  %v322 = vld [vmem:[%s8 + $0x8] sm:$0xff]
  %v323 = vld [vmem:[%s9] sm:$0x3]
  %v324 = vld [vmem:[%s10] sm:$0xff]
  %v325 = vld [vmem:[%s11] sm:$0x1]
  %v326 = vld [vmem:[%s12] sm:$0xff]
  %v327 = vld [vmem:[%s13] sm:$0x1]
  %v328 = vld [vmem:[%s14] sm:$0xff]
  %v329 = vld [vmem:[%s15] sm:$0x1]
  %v330 = vld [vmem:[%s16] sm:$0x3]
  %v331 = vld [vmem:[%s17] sm:$0x1]
  %v332 = vld [vmem:[%s18] sm:$0x1]
  %v333 = vld [vmem:[%s19] sm:$0x1]
  %v334 = vld [vmem:[%s20] sm:$0x1]
  %v335 = vld [vmem:[%s21] sm:$0x1]
  %v337 = vlaneseq
  %v338 = vshrl.u32 %v337, 7
  %v339 = vsub.s32 0, %v338
  %v340 = vrot.slane %v325, %v339
  %vm342 = vcmask 64512
  %v344 = vsel %vm342, %v316, 0
  %346 = vmatprep.subr.mxu0 0.0
  %347 = vmatpush1.msra.mxu0 %v324
  %348 = vmatprep.subr.mxu0 0.0
  %349 = vmatpush1.msra.mxu0 0.0
  %350 = vmatprep.subr.mxu0 0.0
  %351 = vmatpush1.msra.mxu0 0.0
  %352 = vmatprep.subr.mxu0 0.0
  %353 = vmatpush1.msra.mxu0 0.0
  %354 = vmatprep.subr.mxu0 0.0
  %355 = vmatpush1.msra.mxu0 0.0
  %356 = vmatprep.subr.mxu0 0.0
  %357 = vmatpush1.msra.mxu0 0.0
  %358 = vmatprep.subr.mxu0 0.0
  %359 = vmatpush1.msra.mxu0 0.0
  %360 = vmatprep.subr.mxu0 0.0
  %361 = vmatpush1.msra.mxu0 0.0
  %362 = vmatprep.subr.mxu0 0.0
  %363 = vmatpush1.msra.mxu0 0.0
  %364 = vmatprep.subr.mxu0 0.0
  %365 = vmatpush1.msra.mxu0 0.0
  %366 = vmatprep.subr.mxu0 0.0
  %367 = vmatpush1.msra.mxu0 0.0
  %368 = vmatprep.subr.mxu0 0.0
  %369 = vmatpush1.msra.mxu0 0.0
  %370 = vmatprep.subr.mxu0 0.0
  %371 = vmatpush1.msra.mxu0 0.0
  %372 = vmatprep.subr.mxu0 0.0
  %373 = vmatpush1.msra.mxu0 0.0
  %374 = vmatprep.subr.mxu0 0.0
  %375 = vmatpush1.msra.mxu0 0.0
  %376 = vmatprep.subr.mxu0 0.0
  %377 = vmatpush1.msra.mxu0 0.0
  %378 = vmatprep.subr.mxu0 0.0
  %379 = vmatpush1.msra.mxu0 0.0
  %380 = vmatprep.subr.mxu0 0.0
  %381 = vmatpush1.msra.mxu0 0.0
  %382 = vmatprep.subr.mxu0 0.0
  %383 = vmatpush1.msra.mxu0 0.0
  %384 = vmatprep.subr.mxu0 0.0
  %385 = vmatpush1.msra.mxu0 0.0
  %386 = vmatprep.subr.mxu0 0.0
  %387 = vmatpush1.msra.mxu0 0.0
  %388 = vmatprep.subr.mxu0 0.0
  %389 = vmatpush1.msra.mxu0 0.0
  %390 = vmatprep.subr.mxu0 0.0
  %391 = vmatpush1.msra.mxu0 0.0
  %392 = vmatprep.subr.mxu0 0.0
  %393 = vmatpush1.msra.mxu0 0.0
  %394 = vmatprep.subr.mxu0 0.0
  %395 = vmatpush1.msra.mxu0 0.0
  %396 = vmatprep.subr.mxu0 0.0
  %397 = vmatpush1.msra.mxu0 0.0
  %398 = vmatprep.subr.mxu0 0.0
  %399 = vmatpush1.msra.mxu0 0.0
  %400 = vmatprep.subr.mxu0 0.0
  %401 = vmatpush1.msra.mxu0 0.0
  %402 = vmatprep.subr.mxu0 0.0
  %403 = vmatpush1.msra.mxu0 0.0
  %404 = vmatprep.subr.mxu0 0.0
  %405 = vmatpush1.msra.mxu0 0.0
  %406 = vmatprep.subr.mxu0 0.0
  %407 = vmatpush1.msra.mxu0 0.0
  %408 = vmatprep.subr.mxu0 0.0
  %409 = vmatpush1.msra.mxu0 0.0
  %410 = vmatprep.mubr.f32.mxu0 0.0
  %411 = vmatmul.mubr.f32.gmra.mrb[0].mxu0 %v344
  %v412 = vpop.f32.mrb[0].mxu0
  %v413 = vadd.f32 %v340, %v412
  %v414 = vpop.f32.mrb[0].mxu0
  %415 = vdwg.mxu0
  %vm416 = vcmask 15360
  %v418 = vsel %vm416, %v319, 0
  %v421 = vsel %vm416, %v320, 0
  %vm423 = vcmask 1041408
  %v425 = vsel %vm423, %v413, 0
  %427 = vmatprep.subr.mxu0 0.0
  %428 = vmatpush1.msra.mxu0 %v425
  %429 = vmatprep.subr.mxu0 0.0
  %430 = vmatpush1.msra.mxu0 0.0
  %431 = vmatprep.subr.mxu0 0.0
  %432 = vmatpush1.msra.mxu0 0.0
  %433 = vmatprep.subr.mxu0 0.0
  %434 = vmatpush1.msra.mxu0 0.0
  %435 = vmatprep.subr.mxu0 0.0
  %436 = vmatpush1.msra.mxu0 0.0
  %437 = vmatprep.subr.mxu0 0.0
  %438 = vmatpush1.msra.mxu0 0.0
  %439 = vmatprep.subr.mxu0 0.0
  %440 = vmatpush1.msra.mxu0 0.0
  %441 = vmatprep.subr.mxu0 0.0
  %442 = vmatpush1.msra.mxu0 0.0
  %443 = vmatprep.subr.mxu0 0.0
  %444 = vmatpush1.msra.mxu0 0.0
  %445 = vmatprep.subr.mxu0 0.0
  %446 = vmatpush1.msra.mxu0 0.0
  %447 = vmatprep.subr.mxu0 0.0
  %448 = vmatpush1.msra.mxu0 0.0
  %449 = vmatprep.subr.mxu0 0.0
  %450 = vmatpush1.msra.mxu0 0.0
  %451 = vmatprep.subr.mxu0 0.0
  %452 = vmatpush1.msra.mxu0 0.0
  %453 = vmatprep.subr.mxu0 0.0
  %454 = vmatpush1.msra.mxu0 0.0
  %455 = vmatprep.subr.mxu0 0.0
  %456 = vmatpush1.msra.mxu0 0.0
  %457 = vmatprep.subr.mxu0 0.0
  %458 = vmatpush1.msra.mxu0 0.0
  %459 = vmatprep.subr.mxu0 0.0
  %460 = vmatpush1.msra.mxu0 0.0
  %461 = vmatprep.subr.mxu0 0.0
  %462 = vmatpush1.msra.mxu0 0.0
  %463 = vmatprep.subr.mxu0 0.0
  %464 = vmatpush1.msra.mxu0 0.0
  %465 = vmatprep.subr.mxu0 0.0
  %466 = vmatpush1.msra.mxu0 0.0
  %467 = vmatprep.subr.mxu0 0.0
  %468 = vmatpush1.msra.mxu0 0.0
  %469 = vmatprep.subr.mxu0 0.0
  %470 = vmatpush1.msra.mxu0 0.0
  %471 = vmatprep.subr.mxu0 0.0
  %472 = vmatpush1.msra.mxu0 0.0
  %473 = vmatprep.subr.mxu0 0.0
  %474 = vmatpush1.msra.mxu0 0.0
  %475 = vmatprep.subr.mxu0 0.0
  %476 = vmatpush1.msra.mxu0 0.0
  %477 = vmatprep.subr.mxu0 0.0
  %478 = vmatpush1.msra.mxu0 0.0
  %479 = vmatprep.subr.mxu0 0.0
  %480 = vmatpush1.msra.mxu0 0.0
  %481 = vmatprep.subr.mxu0 0.0
  %482 = vmatpush1.msra.mxu0 0.0
  %483 = vmatprep.subr.mxu0 0.0
  %484 = vmatpush1.msra.mxu0 0.0
  %485 = vmatprep.subr.mxu0 0.0
  %486 = vmatpush1.msra.mxu0 0.0
  %487 = vmatprep.subr.mxu0 0.0
  %488 = vmatpush1.msra.mxu0 0.0
  %489 = vmatprep.subr.mxu0 0.0
  %490 = vmatpush1.msra.mxu0 0.0
  %491 = vmatprep.mubr.f32.mxu0 0.0
  %492 = vmatmul.mubr.f32.gmra.mrb[0].mxu0 %v418
  %v493 = vpop.f32.mrb[0].mxu0
  %v494 = vadd.f32 0.0, %v493
  %v495 = vpop.f32.mrb[0].mxu0
  %496 = vmatprep.mubr.f32.mxu0 0.0
  %497 = vmatmul.mubr.f32.gmra.mrb[0].mxu0 %v421
  %v498 = vpop.f32.mrb[0].mxu0
  %v499 = vadd.f32 0.0, %v498
  %v500 = vpop.f32.mrb[0].mxu0
  %501 = vdwg.mxu0
  %v502 = vmul.f32 %v494, %v321
  %v503 = vmul.f32 %v499, %v322
  %504 = vrot.lane.b32.xlu0 %v413, 120
  %v505 = vpop.permute.xlu0 %504
  %v507 = vsel %vm342, %v502, 0
  %v510 = vsel %vm342, %v503, 0
  %v512 = vsel %vm342, %v505, 0
  %514 = vmatprep.subr.mxu0 0.0
  %515 = vmatpush1.xpose.msra.mxu0 %v512
  %516 = vmatprep.subr.mxu0 0.0
  %517 = vmatpush1.xpose.msra.mxu0 0.0
  %518 = vmatprep.subr.mxu0 0.0
  %519 = vmatpush1.xpose.msra.mxu0 0.0
  %520 = vmatprep.subr.mxu0 0.0
  %521 = vmatpush1.xpose.msra.mxu0 0.0
  %522 = vmatprep.subr.mxu0 0.0
  %523 = vmatpush1.xpose.msra.mxu0 0.0
  %524 = vmatprep.subr.mxu0 0.0
  %525 = vmatpush1.xpose.msra.mxu0 0.0
  %526 = vmatprep.subr.mxu0 0.0
  %527 = vmatpush1.xpose.msra.mxu0 0.0
  %528 = vmatprep.subr.mxu0 0.0
  %529 = vmatpush1.xpose.msra.mxu0 0.0
  %530 = vmatprep.subr.mxu0 0.0
  %531 = vmatpush1.xpose.msra.mxu0 0.0
  %532 = vmatprep.subr.mxu0 0.0
  %533 = vmatpush1.xpose.msra.mxu0 0.0
  %534 = vmatprep.subr.mxu0 0.0
  %535 = vmatpush1.xpose.msra.mxu0 0.0
  %536 = vmatprep.subr.mxu0 0.0
  %537 = vmatpush1.xpose.msra.mxu0 0.0
  %538 = vmatprep.subr.mxu0 0.0
  %539 = vmatpush1.xpose.msra.mxu0 0.0
  %540 = vmatprep.subr.mxu0 0.0
  %541 = vmatpush1.xpose.msra.mxu0 0.0
  %542 = vmatprep.subr.mxu0 0.0
  %543 = vmatpush1.xpose.msra.mxu0 0.0
  %544 = vmatprep.subr.mxu0 0.0
  %545 = vmatpush1.xpose.msra.mxu0 0.0
  %546 = vmatprep.subr.mxu0 0.0
  %547 = vmatpush1.xpose.msra.mxu0 0.0
  %548 = vmatprep.subr.mxu0 0.0
  %549 = vmatpush1.xpose.msra.mxu0 0.0
  %550 = vmatprep.subr.mxu0 0.0
  %551 = vmatpush1.xpose.msra.mxu0 0.0
  %552 = vmatprep.subr.mxu0 0.0
  %553 = vmatpush1.xpose.msra.mxu0 0.0
  %554 = vmatprep.subr.mxu0 0.0
  %555 = vmatpush1.xpose.msra.mxu0 0.0
  %556 = vmatprep.subr.mxu0 0.0
  %557 = vmatpush1.xpose.msra.mxu0 0.0
  %558 = vmatprep.subr.mxu0 0.0
  %559 = vmatpush1.xpose.msra.mxu0 0.0
  %560 = vmatprep.subr.mxu0 0.0
  %561 = vmatpush1.xpose.msra.mxu0 0.0
  %562 = vmatprep.subr.mxu0 0.0
  %563 = vmatpush1.xpose.msra.mxu0 0.0
  %564 = vmatprep.subr.mxu0 0.0
  %565 = vmatpush1.xpose.msra.mxu0 0.0
  %566 = vmatprep.subr.mxu0 0.0
  %567 = vmatpush1.xpose.msra.mxu0 0.0
  %568 = vmatprep.subr.mxu0 0.0
  %569 = vmatpush1.xpose.msra.mxu0 0.0
  %570 = vmatprep.subr.mxu0 0.0
  %571 = vmatpush1.xpose.msra.mxu0 0.0
  %572 = vmatprep.subr.mxu0 0.0
  %573 = vmatpush1.xpose.msra.mxu0 0.0
  %574 = vmatprep.subr.mxu0 0.0
  %575 = vmatpush1.xpose.msra.mxu0 0.0
  %576 = vmatprep.subr.mxu0 0.0
  %577 = vmatpush1.xpose.msra.mxu0 0.0
  %578 = vmatprep.mubr.f32.mxu0 0.0
  %579 = vmatmul.mubr.f32.gmra.mrb[0].mxu0 %v507
  %v580 = vpop.f32.mrb[0].mxu0
  %v581 = vadd.f32 0.0, %v580
  %v582 = vpop.f32.mrb[0].mxu0
  %583 = vmatprep.mubr.f32.mxu0 0.0
  %584 = vmatmul.mubr.f32.gmra.mrb[0].mxu0 %v510
  %v585 = vpop.f32.mrb[0].mxu0
  %v586 = vadd.f32 0.0, %v585
  %v587 = vpop.f32.mrb[0].mxu0
  %588 = vdwg.mxu0
  %v589 = vsel %vm416, %v581, -inf
  %590 = vmax.xlane.f32.xlu0 %v589
  %v591 = vpop.xlane.xlu0 %590
  %v592 = vsel %vm416, %v586, -inf
  %593 = vmax.xlane.f32.xlu0 %v592
  %v594 = vpop.xlane.xlu0 %593
  %v595 = vsub.f32 %v581, %v591
  %v596 = vsub.f32 %v586, %v594
  %v597 = vmul.f32 %v595, 1.442695
  %v598 = vpow.pop %v597
  %v599 = vmul.f32 %v596, 1.442695
  %v600 = vpow.pop %v599
  %v601 = vsel %vm416, %v598, 0.0
  %602 = vadd.xlane.f32.xlu0 %v601
  %v603 = vpop.xlane.xlu0 %602
  %v604 = vsel %vm416, %v600, 0.0
  %605 = vadd.xlane.f32.xlu0 %v604
  %v606 = vpop.xlane.xlu0 %605
  %v607 = vrcp.pop %v603
  %v608 = vrcp.pop %v606
  %v609 = vmul.f32 %v598, %v607
  %v610 = vmul.f32 %v600, %v608
  %611 = vrot.lane.b32.xlu0 %v413, 112
  %v612 = vpop.permute.xlu0 %611
  %v614 = vsel %vm416, %v609, 0
  %v617 = vsel %vm416, %v610, 0
  %v619 = vsel %vm423, %v612, 0
  %621 = vmatprep.subr.mxu0 0.0
  %622 = vmatpush1.msra.mxu0 %v619
  %623 = vmatprep.subr.mxu0 0.0
  %624 = vmatpush1.msra.mxu0 0.0
  %625 = vmatprep.subr.mxu0 0.0
  %626 = vmatpush1.msra.mxu0 0.0
  %627 = vmatprep.subr.mxu0 0.0
  %628 = vmatpush1.msra.mxu0 0.0
  %629 = vmatprep.subr.mxu0 0.0
  %630 = vmatpush1.msra.mxu0 0.0
  %631 = vmatprep.subr.mxu0 0.0
  %632 = vmatpush1.msra.mxu0 0.0
  %633 = vmatprep.subr.mxu0 0.0
  %634 = vmatpush1.msra.mxu0 0.0
  %635 = vmatprep.subr.mxu0 0.0
  %636 = vmatpush1.msra.mxu0 0.0
  %637 = vmatprep.subr.mxu0 0.0
  %638 = vmatpush1.msra.mxu0 0.0
  %639 = vmatprep.subr.mxu0 0.0
  %640 = vmatpush1.msra.mxu0 0.0
  %641 = vmatprep.subr.mxu0 0.0
  %642 = vmatpush1.msra.mxu0 0.0
  %643 = vmatprep.subr.mxu0 0.0
  %644 = vmatpush1.msra.mxu0 0.0
  %645 = vmatprep.subr.mxu0 0.0
  %646 = vmatpush1.msra.mxu0 0.0
  %647 = vmatprep.subr.mxu0 0.0
  %648 = vmatpush1.msra.mxu0 0.0
  %649 = vmatprep.subr.mxu0 0.0
  %650 = vmatpush1.msra.mxu0 0.0
  %651 = vmatprep.subr.mxu0 0.0
  %652 = vmatpush1.msra.mxu0 0.0
  %653 = vmatprep.subr.mxu0 0.0
  %654 = vmatpush1.msra.mxu0 0.0
  %655 = vmatprep.subr.mxu0 0.0
  %656 = vmatpush1.msra.mxu0 0.0
  %657 = vmatprep.subr.mxu0 0.0
  %658 = vmatpush1.msra.mxu0 0.0
  %659 = vmatprep.subr.mxu0 0.0
  %660 = vmatpush1.msra.mxu0 0.0
  %661 = vmatprep.subr.mxu0 0.0
  %662 = vmatpush1.msra.mxu0 0.0
  %663 = vmatprep.subr.mxu0 0.0
  %664 = vmatpush1.msra.mxu0 0.0
  %665 = vmatprep.subr.mxu0 0.0
  %666 = vmatpush1.msra.mxu0 0.0
  %667 = vmatprep.subr.mxu0 0.0
  %668 = vmatpush1.msra.mxu0 0.0
  %669 = vmatprep.subr.mxu0 0.0
  %670 = vmatpush1.msra.mxu0 0.0
  %671 = vmatprep.subr.mxu0 0.0
  %672 = vmatpush1.msra.mxu0 0.0
  %673 = vmatprep.subr.mxu0 0.0
  %674 = vmatpush1.msra.mxu0 0.0
  %675 = vmatprep.subr.mxu0 0.0
  %676 = vmatpush1.msra.mxu0 0.0
  %677 = vmatprep.subr.mxu0 0.0
  %678 = vmatpush1.msra.mxu0 0.0
  %679 = vmatprep.subr.mxu0 0.0
  %680 = vmatpush1.msra.mxu0 0.0
  %681 = vmatprep.subr.mxu0 0.0
  %682 = vmatpush1.msra.mxu0 0.0
  %683 = vmatprep.subr.mxu0 0.0
  %684 = vmatpush1.msra.mxu0 0.0
  %685 = vmatprep.mubr.f32.mxu0 0.0
  %686 = vmatmul.mubr.f32.gmra.mrb[0].mxu0 %v614
  %v687 = vpop.f32.mrb[0].mxu0
  %v688 = vadd.f32 0.0, %v687
  %v689 = vpop.f32.mrb[0].mxu0
  %690 = vmatprep.mubr.f32.mxu0 0.0
  %691 = vmatmul.mubr.f32.gmra.mrb[0].mxu0 %v617
  %v692 = vpop.f32.mrb[0].mxu0
  %v693 = vadd.f32 0.0, %v692
  %v694 = vpop.f32.mrb[0].mxu0
  %695 = vdwg.mxu0
  %v696 = vmul.f32 %v688, %v321
  %v697 = vmul.f32 %v693, %v322
  %v699 = vsel %vm245, %v323, 0
  %701 = vmatprep.subr.mxu0 0.0
  %702 = vmatpush1.msra.mxu0 %v696
  %703 = vmatprep.subr.mxu0 0.0
  %704 = vmatpush1.msra.mxu0 %v697
  %705 = vmatprep.subr.mxu0 0.0
  %706 = vmatpush1.msra.mxu0 0.0
  %707 = vmatprep.subr.mxu0 0.0
  %708 = vmatpush1.msra.mxu0 0.0
  %709 = vmatprep.subr.mxu0 0.0
  %710 = vmatpush1.msra.mxu0 0.0
  %711 = vmatprep.subr.mxu0 0.0
  %712 = vmatpush1.msra.mxu0 0.0
  %713 = vmatprep.subr.mxu0 0.0
  %714 = vmatpush1.msra.mxu0 0.0
  %715 = vmatprep.subr.mxu0 0.0
  %716 = vmatpush1.msra.mxu0 0.0
  %717 = vmatprep.subr.mxu0 0.0
  %718 = vmatpush1.msra.mxu0 0.0
  %719 = vmatprep.subr.mxu0 0.0
  %720 = vmatpush1.msra.mxu0 0.0
  %721 = vmatprep.subr.mxu0 0.0
  %722 = vmatpush1.msra.mxu0 0.0
  %723 = vmatprep.subr.mxu0 0.0
  %724 = vmatpush1.msra.mxu0 0.0
  %725 = vmatprep.subr.mxu0 0.0
  %726 = vmatpush1.msra.mxu0 0.0
  %727 = vmatprep.subr.mxu0 0.0
  %728 = vmatpush1.msra.mxu0 0.0
  %729 = vmatprep.subr.mxu0 0.0
  %730 = vmatpush1.msra.mxu0 0.0
  %731 = vmatprep.subr.mxu0 0.0
  %732 = vmatpush1.msra.mxu0 0.0
  %733 = vmatprep.subr.mxu0 0.0
  %734 = vmatpush1.msra.mxu0 0.0
  %735 = vmatprep.subr.mxu0 0.0
  %736 = vmatpush1.msra.mxu0 0.0
  %737 = vmatprep.subr.mxu0 0.0
  %738 = vmatpush1.msra.mxu0 0.0
  %739 = vmatprep.subr.mxu0 0.0
  %740 = vmatpush1.msra.mxu0 0.0
  %741 = vmatprep.subr.mxu0 0.0
  %742 = vmatpush1.msra.mxu0 0.0
  %743 = vmatprep.subr.mxu0 0.0
  %744 = vmatpush1.msra.mxu0 0.0
  %745 = vmatprep.subr.mxu0 0.0
  %746 = vmatpush1.msra.mxu0 0.0
  %747 = vmatprep.subr.mxu0 0.0
  %748 = vmatpush1.msra.mxu0 0.0
  %749 = vmatprep.subr.mxu0 0.0
  %750 = vmatpush1.msra.mxu0 0.0
  %751 = vmatprep.subr.mxu0 0.0
  %752 = vmatpush1.msra.mxu0 0.0
  %753 = vmatprep.subr.mxu0 0.0
  %754 = vmatpush1.msra.mxu0 0.0
  %755 = vmatprep.subr.mxu0 0.0
  %756 = vmatpush1.msra.mxu0 0.0
  %757 = vmatprep.subr.mxu0 0.0
  %758 = vmatpush1.msra.mxu0 0.0
  %759 = vmatprep.subr.mxu0 0.0
  %760 = vmatpush1.msra.mxu0 0.0
  %761 = vmatprep.subr.mxu0 0.0
  %762 = vmatpush1.msra.mxu0 0.0
  %763 = vmatprep.subr.mxu0 0.0
  %764 = vmatpush1.msra.mxu0 0.0
  %765 = vmatprep.mubr.f32.mxu0 0.0
  %766 = vmatmul.mubr.f32.gmra.mrb[0].mxu0 %v699
  %v767 = vpop.f32.mrb[0].mxu0
  %v768 = vadd.f32 0.0, %v767
  %v769 = vpop.f32.mrb[0].mxu0
  %770 = vdwg.mxu0
  %v772 = vsel %vm342, %v768, 0
  %774 = vmatprep.subr.mxu0 0.0
  %775 = vmatpush1.msra.mxu0 %v326
  %776 = vmatprep.subr.mxu0 0.0
  %777 = vmatpush1.msra.mxu0 0.0
  %778 = vmatprep.subr.mxu0 0.0
  %779 = vmatpush1.msra.mxu0 0.0
  %780 = vmatprep.subr.mxu0 0.0
  %781 = vmatpush1.msra.mxu0 0.0
  %782 = vmatprep.subr.mxu0 0.0
  %783 = vmatpush1.msra.mxu0 0.0
  %784 = vmatprep.subr.mxu0 0.0
  %785 = vmatpush1.msra.mxu0 0.0
  %786 = vmatprep.subr.mxu0 0.0
  %787 = vmatpush1.msra.mxu0 0.0
  %788 = vmatprep.subr.mxu0 0.0
  %789 = vmatpush1.msra.mxu0 0.0
  %790 = vmatprep.subr.mxu0 0.0
  %791 = vmatpush1.msra.mxu0 0.0
  %792 = vmatprep.subr.mxu0 0.0
  %793 = vmatpush1.msra.mxu0 0.0
  %794 = vmatprep.subr.mxu0 0.0
  %795 = vmatpush1.msra.mxu0 0.0
  %796 = vmatprep.subr.mxu0 0.0
  %797 = vmatpush1.msra.mxu0 0.0
  %798 = vmatprep.subr.mxu0 0.0
  %799 = vmatpush1.msra.mxu0 0.0
  %800 = vmatprep.subr.mxu0 0.0
  %801 = vmatpush1.msra.mxu0 0.0
  %802 = vmatprep.subr.mxu0 0.0
  %803 = vmatpush1.msra.mxu0 0.0
  %804 = vmatprep.subr.mxu0 0.0
  %805 = vmatpush1.msra.mxu0 0.0
  %806 = vmatprep.subr.mxu0 0.0
  %807 = vmatpush1.msra.mxu0 0.0
  %808 = vmatprep.subr.mxu0 0.0
  %809 = vmatpush1.msra.mxu0 0.0
  %810 = vmatprep.subr.mxu0 0.0
  %811 = vmatpush1.msra.mxu0 0.0
  %812 = vmatprep.subr.mxu0 0.0
  %813 = vmatpush1.msra.mxu0 0.0
  %814 = vmatprep.subr.mxu0 0.0
  %815 = vmatpush1.msra.mxu0 0.0
  %816 = vmatprep.subr.mxu0 0.0
  %817 = vmatpush1.msra.mxu0 0.0
  %818 = vmatprep.subr.mxu0 0.0
  %819 = vmatpush1.msra.mxu0 0.0
  %820 = vmatprep.subr.mxu0 0.0
  %821 = vmatpush1.msra.mxu0 0.0
  %822 = vmatprep.subr.mxu0 0.0
  %823 = vmatpush1.msra.mxu0 0.0
  %824 = vmatprep.subr.mxu0 0.0
  %825 = vmatpush1.msra.mxu0 0.0
  %826 = vmatprep.subr.mxu0 0.0
  %827 = vmatpush1.msra.mxu0 0.0
  %828 = vmatprep.subr.mxu0 0.0
  %829 = vmatpush1.msra.mxu0 0.0
  %830 = vmatprep.subr.mxu0 0.0
  %831 = vmatpush1.msra.mxu0 0.0
  %832 = vmatprep.subr.mxu0 0.0
  %833 = vmatpush1.msra.mxu0 0.0
  %834 = vmatprep.subr.mxu0 0.0
  %835 = vmatpush1.msra.mxu0 0.0
  %836 = vmatprep.subr.mxu0 0.0
  %837 = vmatpush1.msra.mxu0 0.0
  %838 = vmatprep.mubr.f32.mxu0 0.0
  %839 = vmatmul.mubr.f32.gmra.mrb[0].mxu0 %v772
  %v840 = vpop.f32.mrb[0].mxu0
  %v841 = vadd.f32 0.0, %v840
  %v842 = vpop.f32.mrb[0].mxu0
  %843 = vdwg.mxu0
  %v844 = vadd.f32 %v316, %v841
  %v846 = vlaneseq
  %v847 = vshrl.u32 %v846, 7
  %v848 = vsub.s32 0, %v847
  %v849 = vrot.slane %v327, %v848
  %v851 = vadd.f32 %v844, %v849
  %vm852 = vcmask 58368
  %v853 = vsel %vm852, %v851, 0.0
  %854 = vadd.xlane.f32.xlu0 %v853
  %v855 = vpop.xlane.xlu0 %854
  %v856 = vrcp.pop 8.0
  %v857 = vmul.f32 %v855, %v856
  %v858 = vsub.f32 %v851, %v857
  %v859 = vmul.f32 %v858, %v858
  %v860 = vsel %vm852, %v859, 0.0
  %861 = vadd.xlane.f32.xlu0 %v860
  %v862 = vpop.xlane.xlu0 %861
  %v863 = vmul.f32 %v862, %v856
  %v864 = vadd.f32 %v863, 1e-05
  %v865 = vrsqrt.pop %v864
  %v866 = vmul.f32 %v858, %v865
  %v868 = vlaneseq
  %v869 = vshrl.u32 %v868, 7
  %v870 = vsub.s32 0, %v869
  %v871 = vrot.slane %v332, %v870
  %v873 = vmul.f32 %v866, %v871
  %v875 = vlaneseq
  %v876 = vshrl.u32 %v875, 7
  %v877 = vsub.s32 0, %v876
  %v878 = vrot.slane %v333, %v877
  %v880 = vadd.f32 %v873, %v878
  %v882 = vlaneseq
  %v883 = vshrl.u32 %v882, 7
  %v884 = vsub.s32 0, %v883
  %v885 = vrot.slane %v329, %v884
  %v888 = vsel %vm342, %v880, 0
  %890 = vmatprep.subr.mxu0 0.0
  %891 = vmatpush1.msra.mxu0 %v328
  %892 = vmatprep.subr.mxu0 0.0
  %893 = vmatpush1.msra.mxu0 0.0
  %894 = vmatprep.subr.mxu0 0.0
  %895 = vmatpush1.msra.mxu0 0.0
  %896 = vmatprep.subr.mxu0 0.0
  %897 = vmatpush1.msra.mxu0 0.0
  %898 = vmatprep.subr.mxu0 0.0
  %899 = vmatpush1.msra.mxu0 0.0
  %900 = vmatprep.subr.mxu0 0.0
  %901 = vmatpush1.msra.mxu0 0.0
  %902 = vmatprep.subr.mxu0 0.0
  %903 = vmatpush1.msra.mxu0 0.0
  %904 = vmatprep.subr.mxu0 0.0
  %905 = vmatpush1.msra.mxu0 0.0
  %906 = vmatprep.subr.mxu0 0.0
  %907 = vmatpush1.msra.mxu0 0.0
  %908 = vmatprep.subr.mxu0 0.0
  %909 = vmatpush1.msra.mxu0 0.0
  %910 = vmatprep.subr.mxu0 0.0
  %911 = vmatpush1.msra.mxu0 0.0
  %912 = vmatprep.subr.mxu0 0.0
  %913 = vmatpush1.msra.mxu0 0.0
  %914 = vmatprep.subr.mxu0 0.0
  %915 = vmatpush1.msra.mxu0 0.0
  %916 = vmatprep.subr.mxu0 0.0
  %917 = vmatpush1.msra.mxu0 0.0
  %918 = vmatprep.subr.mxu0 0.0
  %919 = vmatpush1.msra.mxu0 0.0
  %920 = vmatprep.subr.mxu0 0.0
  %921 = vmatpush1.msra.mxu0 0.0
  %922 = vmatprep.subr.mxu0 0.0
  %923 = vmatpush1.msra.mxu0 0.0
  %924 = vmatprep.subr.mxu0 0.0
  %925 = vmatpush1.msra.mxu0 0.0
  %926 = vmatprep.subr.mxu0 0.0
  %927 = vmatpush1.msra.mxu0 0.0
  %928 = vmatprep.subr.mxu0 0.0
  %929 = vmatpush1.msra.mxu0 0.0
  %930 = vmatprep.subr.mxu0 0.0
  %931 = vmatpush1.msra.mxu0 0.0
  %932 = vmatprep.subr.mxu0 0.0
  %933 = vmatpush1.msra.mxu0 0.0
  %934 = vmatprep.subr.mxu0 0.0
  %935 = vmatpush1.msra.mxu0 0.0
  %936 = vmatprep.subr.mxu0 0.0
  %937 = vmatpush1.msra.mxu0 0.0
  %938 = vmatprep.subr.mxu0 0.0
  %939 = vmatpush1.msra.mxu0 0.0
  %940 = vmatprep.subr.mxu0 0.0
  %941 = vmatpush1.msra.mxu0 0.0
  %942 = vmatprep.subr.mxu0 0.0
  %943 = vmatpush1.msra.mxu0 0.0
  %944 = vmatprep.subr.mxu0 0.0
  %945 = vmatpush1.msra.mxu0 0.0
  %946 = vmatprep.subr.mxu0 0.0
  %947 = vmatpush1.msra.mxu0 0.0
  %948 = vmatprep.subr.mxu0 0.0
  %949 = vmatpush1.msra.mxu0 0.0
  %950 = vmatprep.subr.mxu0 0.0
  %951 = vmatpush1.msra.mxu0 0.0
  %952 = vmatprep.subr.mxu0 0.0
  %953 = vmatpush1.msra.mxu0 0.0
  %954 = vmatprep.mubr.f32.mxu0 0.0
  %955 = vmatmul.mubr.f32.gmra.mrb[0].mxu0 %v888
  %v956 = vpop.f32.mrb[0].mxu0
  %v957 = vadd.f32 %v885, %v956
  %v958 = vpop.f32.mrb[0].mxu0
  %959 = vdwg.mxu0
  %v960 = vmax.f32 %v957, 0.0
  %v962 = vsel %vm416, %v960, 0
  %v965 = vsel %vm423, %v330, 0
  %967 = vmatprep.subr.mxu0 0.0
  %968 = vmatpush1.msra.mxu0 %v965
  %969 = vmatprep.subr.mxu0 0.0
  %970 = vmatpush1.msra.mxu0 0.0
  %971 = vmatprep.subr.mxu0 0.0
  %972 = vmatpush1.msra.mxu0 0.0
  %973 = vmatprep.subr.mxu0 0.0
  %974 = vmatpush1.msra.mxu0 0.0
  %975 = vmatprep.subr.mxu0 0.0
  %976 = vmatpush1.msra.mxu0 0.0
  %977 = vmatprep.subr.mxu0 0.0
  %978 = vmatpush1.msra.mxu0 0.0
  %979 = vmatprep.subr.mxu0 0.0
  %980 = vmatpush1.msra.mxu0 0.0
  %981 = vmatprep.subr.mxu0 0.0
  %982 = vmatpush1.msra.mxu0 0.0
  %983 = vmatprep.subr.mxu0 0.0
  %984 = vmatpush1.msra.mxu0 0.0
  %985 = vmatprep.subr.mxu0 0.0
  %986 = vmatpush1.msra.mxu0 0.0
  %987 = vmatprep.subr.mxu0 0.0
  %988 = vmatpush1.msra.mxu0 0.0
  %989 = vmatprep.subr.mxu0 0.0
  %990 = vmatpush1.msra.mxu0 0.0
  %991 = vmatprep.subr.mxu0 0.0
  %992 = vmatpush1.msra.mxu0 0.0
  %993 = vmatprep.subr.mxu0 0.0
  %994 = vmatpush1.msra.mxu0 0.0
  %995 = vmatprep.subr.mxu0 0.0
  %996 = vmatpush1.msra.mxu0 0.0
  %997 = vmatprep.subr.mxu0 0.0
  %998 = vmatpush1.msra.mxu0 0.0
  %999 = vmatprep.subr.mxu0 0.0
  %1000 = vmatpush1.msra.mxu0 0.0
  %1001 = vmatprep.subr.mxu0 0.0
  %1002 = vmatpush1.msra.mxu0 0.0
  %1003 = vmatprep.subr.mxu0 0.0
  %1004 = vmatpush1.msra.mxu0 0.0
  %1005 = vmatprep.subr.mxu0 0.0
  %1006 = vmatpush1.msra.mxu0 0.0
  %1007 = vmatprep.subr.mxu0 0.0
  %1008 = vmatpush1.msra.mxu0 0.0
  %1009 = vmatprep.subr.mxu0 0.0
  %1010 = vmatpush1.msra.mxu0 0.0
  %1011 = vmatprep.subr.mxu0 0.0
  %1012 = vmatpush1.msra.mxu0 0.0
  %1013 = vmatprep.subr.mxu0 0.0
  %1014 = vmatpush1.msra.mxu0 0.0
  %1015 = vmatprep.subr.mxu0 0.0
  %1016 = vmatpush1.msra.mxu0 0.0
  %1017 = vmatprep.subr.mxu0 0.0
  %1018 = vmatpush1.msra.mxu0 0.0
  %1019 = vmatprep.subr.mxu0 0.0
  %1020 = vmatpush1.msra.mxu0 0.0
  %1021 = vmatprep.subr.mxu0 0.0
  %1022 = vmatpush1.msra.mxu0 0.0
  %1023 = vmatprep.subr.mxu0 0.0
  %1024 = vmatpush1.msra.mxu0 0.0
  %1025 = vmatprep.subr.mxu0 0.0
  %1026 = vmatpush1.msra.mxu0 0.0
  %1027 = vmatprep.subr.mxu0 0.0
  %1028 = vmatpush1.msra.mxu0 0.0
  %1029 = vmatprep.subr.mxu0 0.0
  %1030 = vmatpush1.msra.mxu0 0.0
  %1031 = vmatprep.mubr.f32.mxu0 0.0
  %1032 = vmatmul.mubr.f32.gmra.mrb[0].mxu0 %v962
  %v1033 = vpop.f32.mrb[0].mxu0
  %v1034 = vadd.f32 0.0, %v1033
  %v1035 = vpop.f32.mrb[0].mxu0
  %1036 = vdwg.mxu0
  %v1037 = vadd.f32 %v880, %v1034
  %v1039 = vlaneseq
  %v1040 = vshrl.u32 %v1039, 7
  %v1041 = vsub.s32 0, %v1040
  %v1042 = vrot.slane %v331, %v1041
  %v1044 = vadd.f32 %v1037, %v1042
  %v1045 = vsel %vm852, %v1044, 0.0
  %1046 = vadd.xlane.f32.xlu0 %v1045
  %v1047 = vpop.xlane.xlu0 %1046
  %v1048 = vmul.f32 %v1047, %v856
  %v1049 = vsub.f32 %v1044, %v1048
  %v1050 = vmul.f32 %v1049, %v1049
  %v1051 = vsel %vm852, %v1050, 0.0
  %1052 = vadd.xlane.f32.xlu0 %v1051
  %v1053 = vpop.xlane.xlu0 %1052
  %v1054 = vmul.f32 %v1053, %v856
  %v1055 = vadd.f32 %v1054, 1e-05
  %v1056 = vrsqrt.pop %v1055
  %v1057 = vmul.f32 %v1049, %v1056
  %v1059 = vlaneseq
  %v1060 = vshrl.u32 %v1059, 7
  %v1061 = vsub.s32 0, %v1060
  %v1062 = vrot.slane %v334, %v1061
  %v1064 = vmul.f32 %v1057, %v1062
  %v1066 = vlaneseq
  %v1067 = vshrl.u32 %v1066, 7
  %v1068 = vsub.s32 0, %v1067
  %v1069 = vrot.slane %v335, %v1068
  %v1071 = vadd.f32 %v1064, %v1069
  %v1072 = vld [vmem:[%s5] sm:$0xff]
  %v1073 = vld [vmem:[%s5 + $0x8] sm:$0xff]
  %v1075 = vsel %vm416, %v1072, 0
  %v1078 = vsel %vm416, %v1073, 0
  %v1081 = vsel %vm423, %v1071, 0
  %1083 = vmatprep.subr.mxu0 0.0
  %1084 = vmatpush1.msra.mxu0 %v1081
  %1085 = vmatprep.subr.mxu0 0.0
  %1086 = vmatpush1.msra.mxu0 0.0
  %1087 = vmatprep.subr.mxu0 0.0
  %1088 = vmatpush1.msra.mxu0 0.0
  %1089 = vmatprep.subr.mxu0 0.0
  %1090 = vmatpush1.msra.mxu0 0.0
  %1091 = vmatprep.subr.mxu0 0.0
  %1092 = vmatpush1.msra.mxu0 0.0
  %1093 = vmatprep.subr.mxu0 0.0
  %1094 = vmatpush1.msra.mxu0 0.0
  %1095 = vmatprep.subr.mxu0 0.0
  %1096 = vmatpush1.msra.mxu0 0.0
  %1097 = vmatprep.subr.mxu0 0.0
  %1098 = vmatpush1.msra.mxu0 0.0
  %1099 = vmatprep.subr.mxu0 0.0
  %1100 = vmatpush1.msra.mxu0 0.0
  %1101 = vmatprep.subr.mxu0 0.0
  %1102 = vmatpush1.msra.mxu0 0.0
  %1103 = vmatprep.subr.mxu0 0.0
  %1104 = vmatpush1.msra.mxu0 0.0
  %1105 = vmatprep.subr.mxu0 0.0
  %1106 = vmatpush1.msra.mxu0 0.0
  %1107 = vmatprep.subr.mxu0 0.0
  %1108 = vmatpush1.msra.mxu0 0.0
  %1109 = vmatprep.subr.mxu0 0.0
  %1110 = vmatpush1.msra.mxu0 0.0
  %1111 = vmatprep.subr.mxu0 0.0
  %1112 = vmatpush1.msra.mxu0 0.0
  %1113 = vmatprep.subr.mxu0 0.0
  %1114 = vmatpush1.msra.mxu0 0.0
  %1115 = vmatprep.subr.mxu0 0.0
  %1116 = vmatpush1.msra.mxu0 0.0
  %1117 = vmatprep.subr.mxu0 0.0
  %1118 = vmatpush1.msra.mxu0 0.0
  %1119 = vmatprep.subr.mxu0 0.0
  %1120 = vmatpush1.msra.mxu0 0.0
  %1121 = vmatprep.subr.mxu0 0.0
  %1122 = vmatpush1.msra.mxu0 0.0
  %1123 = vmatprep.subr.mxu0 0.0
  %1124 = vmatpush1.msra.mxu0 0.0
  %1125 = vmatprep.subr.mxu0 0.0
  %1126 = vmatpush1.msra.mxu0 0.0
  %1127 = vmatprep.subr.mxu0 0.0
  %1128 = vmatpush1.msra.mxu0 0.0
  %1129 = vmatprep.subr.mxu0 0.0
  %1130 = vmatpush1.msra.mxu0 0.0
  %1131 = vmatprep.subr.mxu0 0.0
  %1132 = vmatpush1.msra.mxu0 0.0
  %1133 = vmatprep.subr.mxu0 0.0
  %1134 = vmatpush1.msra.mxu0 0.0
  %1135 = vmatprep.subr.mxu0 0.0
  %1136 = vmatpush1.msra.mxu0 0.0
  %1137 = vmatprep.subr.mxu0 0.0
  %1138 = vmatpush1.msra.mxu0 0.0
  %1139 = vmatprep.subr.mxu0 0.0
  %1140 = vmatpush1.msra.mxu0 0.0
  %1141 = vmatprep.subr.mxu0 0.0
  %1142 = vmatpush1.msra.mxu0 0.0
  %1143 = vmatprep.subr.mxu0 0.0
  %1144 = vmatpush1.msra.mxu0 0.0
  %1145 = vmatprep.subr.mxu0 0.0
  %1146 = vmatpush1.msra.mxu0 0.0
  %1147 = vmatprep.mubr.f32.mxu0 0.0
  %1148 = vmatmul.mubr.f32.gmra.mrb[0].mxu0 %v1075
  %v1149 = vpop.f32.mrb[0].mxu0
  %v1150 = vadd.f32 0.0, %v1149
  %v1151 = vpop.f32.mrb[0].mxu0
  %1152 = vmatprep.mubr.f32.mxu0 0.0
  %1153 = vmatmul.mubr.f32.gmra.mrb[0].mxu0 %v1078
  %v1154 = vpop.f32.mrb[0].mxu0
  %v1155 = vadd.f32 0.0, %v1154
  %v1156 = vpop.f32.mrb[0].mxu0
  %1157 = vdwg.mxu0
  %v1158 = vld [vmem:[%s6] sm:$0xff]
  %v1159 = vld [vmem:[%s6 + $0x8] sm:$0xff]
  %v1160 = vmul.f32 %v1150, %v1158
  %v1161 = vmul.f32 %v1155, %v1159
  %v1162 = vsel %vm342, %v1160, 0.0
  %1163 = vadd.xlane.f32.xlu0 %v1162
  %v1164 = vpop.xlane.xlu0 %1163
  %v1165 = vsel %vm342, %v1161, 0.0
  %1166 = vadd.xlane.f32.xlu0 %v1165
  %v1167 = vpop.xlane.xlu0 %1166
  %v1168 = vadd.f32 %v1164, 1.0
  %v1169 = vadd.f32 %v1167, 1.0
  %v1170 = vmul.f32 %v71, %v1168
  %v1171 = vmul.f32 %v72, %v1168
  %v1172 = vmul.f32 %v73, %v1168
  %v1173 = vmul.f32 %v74, %v1168
  %v1174 = vmul.f32 %v75, %v1168
  %v1175 = vmul.f32 %v76, %v1168
  %v1176 = vmul.f32 %v77, %v1168
  %v1177 = vmul.f32 %v78, %v1168
  %v1178 = vmul.f32 %v79, %v1168
  %v1179 = vmul.f32 %v80, %v1168
  %v1180 = vmul.f32 %v81, %v1168
  %v1181 = vmul.f32 %v82, %v1168
  %v1182 = vmul.f32 %v83, %v1168
  %v1183 = vmul.f32 %v84, %v1168
  %v1184 = vmul.f32 %v85, %v1168
  %v1185 = vmul.f32 %v86, %v1168
  %v1186 = vmul.f32 %v87, %v1168
  %v1187 = vmul.f32 %v88, %v1168
  %v1188 = vmul.f32 %v89, %v1168
  %v1189 = vmul.f32 %v90, %v1168
  %v1190 = vmul.f32 %v91, %v1168
  %v1191 = vmul.f32 %v92, %v1168
  %v1192 = vmul.f32 %v93, %v1168
  %v1193 = vmul.f32 %v94, %v1168
  %v1194 = vmul.f32 %v95, %v1169
  %v1195 = vmul.f32 %v96, %v1169
  %v1196 = vmul.f32 %v97, %v1169
  %v1197 = vmul.f32 %v98, %v1169
  %v1198 = vmul.f32 %v99, %v1169
  %v1199 = vmul.f32 %v100, %v1169
  %v1200 = vmul.f32 %v101, %v1169
  %v1201 = vmul.f32 %v102, %v1169
  %v1202 = vmul.f32 %v103, %v1169
  %v1203 = vmul.f32 %v104, %v1169
  %v1204 = vmul.f32 %v105, %v1169
  %v1205 = vmul.f32 %v106, %v1169
  %v1206 = vmul.f32 %v107, %v1169
  %v1207 = vmul.f32 %v108, %v1169
  %v1208 = vmul.f32 %v109, %v1169
  %v1209 = vmul.f32 %v110, %v1169
  %v1210 = vmul.f32 %v111, %v1169
  %v1211 = vmul.f32 %v112, %v1169
  %v1212 = vmul.f32 %v113, %v1169
  %v1213 = vmul.f32 %v114, %v1169
  %v1214 = vmul.f32 %v115, %v1169
  %v1215 = vmul.f32 %v116, %v1169
  %v1216 = vmul.f32 %v117, %v1169
  %v1217 = vmul.f32 %v118, %v1169
  %1218 = vst [vmem:[%s22] sm:$0xff] %v1170
  %1219 = vst [vmem:[%s22 + $0x8] sm:$0xff] %v1171
  %1220 = vst [vmem:[%s22 + $0x10] sm:$0xff] %v1172
  %1221 = vst [vmem:[%s22 + $0x18] sm:$0xff] %v1173
  %1222 = vst [vmem:[%s22 + $0x20] sm:$0xff] %v1174
  %1223 = vst [vmem:[%s22 + $0x28] sm:$0xff] %v1175
  %1224 = vst [vmem:[%s22 + $0x30] sm:$0xff] %v1176
  %1225 = vst [vmem:[%s22 + $0x38] sm:$0xff] %v1177
  %1226 = vst [vmem:[%s22 + $0x40] sm:$0xff] %v1178
  %1227 = vst [vmem:[%s22 + $0x48] sm:$0xff] %v1179
  %1228 = vst [vmem:[%s22 + $0x50] sm:$0xff] %v1180
  %1229 = vst [vmem:[%s22 + $0x58] sm:$0xff] %v1181
  %1230 = vst [vmem:[%s22 + $0x60] sm:$0xff] %v1182
  %1231 = vst [vmem:[%s22 + $0x68] sm:$0xff] %v1183
  %1232 = vst [vmem:[%s22 + $0x70] sm:$0xff] %v1184
  %1233 = vst [vmem:[%s22 + $0x78] sm:$0xff] %v1185
  %1234 = vst [vmem:[%s22 + $0x80] sm:$0xff] %v1186
  %1235 = vst [vmem:[%s22 + $0x88] sm:$0xff] %v1187
  %1236 = vst [vmem:[%s22 + $0x90] sm:$0xff] %v1188
  %1237 = vst [vmem:[%s22 + $0x98] sm:$0xff] %v1189
  %1238 = vst [vmem:[%s22 + $0xa0] sm:$0xff] %v1190
  %1239 = vst [vmem:[%s22 + $0xa8] sm:$0xff] %v1191
  %1240 = vst [vmem:[%s22 + $0xb0] sm:$0xff] %v1192
  %1241 = vst.msk [vmem:[%s22 + $0xb8] sm:$0xff] %vm140, %v1193
  %1242 = vst [vmem:[%s22 + $0xc0] sm:$0xff] %v1194
  %1243 = vst [vmem:[%s22 + $0xc8] sm:$0xff] %v1195
  %1244 = vst [vmem:[%s22 + $0xd0] sm:$0xff] %v1196
  %1245 = vst [vmem:[%s22 + $0xd8] sm:$0xff] %v1197
  %1246 = vst [vmem:[%s22 + $0xe0] sm:$0xff] %v1198
  %1247 = vst [vmem:[%s22 + $0xe8] sm:$0xff] %v1199
  %1248 = vst [vmem:[%s22 + $0xf0] sm:$0xff] %v1200
  %1249 = vst [vmem:[%s22 + $0xf8] sm:$0xff] %v1201
  %1250 = vst [vmem:[%s22 + $0x100] sm:$0xff] %v1202
  %1251 = vst [vmem:[%s22 + $0x108] sm:$0xff] %v1203
  %1252 = vst [vmem:[%s22 + $0x110] sm:$0xff] %v1204
  %1253 = vst [vmem:[%s22 + $0x118] sm:$0xff] %v1205
  %1254 = vst [vmem:[%s22 + $0x120] sm:$0xff] %v1206
  %1255 = vst [vmem:[%s22 + $0x128] sm:$0xff] %v1207
  %1256 = vst [vmem:[%s22 + $0x130] sm:$0xff] %v1208
  %1257 = vst [vmem:[%s22 + $0x138] sm:$0xff] %v1209
  %1258 = vst [vmem:[%s22 + $0x140] sm:$0xff] %v1210
  %1259 = vst [vmem:[%s22 + $0x148] sm:$0xff] %v1211
  %1260 = vst [vmem:[%s22 + $0x150] sm:$0xff] %v1212
  %1261 = vst [vmem:[%s22 + $0x158] sm:$0xff] %v1213
  %1262 = vst [vmem:[%s22 + $0x160] sm:$0xff] %v1214
  %1263 = vst [vmem:[%s22 + $0x168] sm:$0xff] %v1215
  %1264 = vst [vmem:[%s22 + $0x170] sm:$0xff] %v1216
  %1265 = vst.msk [vmem:[%s22 + $0x178] sm:$0xff] %vm140, %v1217
  // Predicated region
  $region90: #{ch_sp_att_forward.2} parent=0 // pred_check
    _
  $region91: #{ch_sp_att_forward.2} parent=0 // pred_check_branch
    %1267 = sbr.rel (0) target = $region93
  $region92: #{ch_sp_att_forward.2} parent=0 // pred_region
    _
  $region93: #{ch_sp_att_forward.2} parent=0 // pred_fallthru
    _
  // Predicated region
  $region94: #{ch_sp_att_forward.2} parent=0 // pred_check
    _
  $region95: #{ch_sp_att_forward.2} parent=0 // pred_check_branch
    %1269 = sbr.rel (0) target = $region97
  $region96: #{ch_sp_att_forward.2} parent=0 // pred_region
    _
  $region97: #{ch_sp_att_forward.2} parent=0 // pred_fallthru
    _

// kernel: ch_sp_att_forward.3
$region0: #{ch_sp_att_forward.3}
  #allocation0 [shape = 'u32[]', space=smem, size = 0x4, offset = 0x4, fixed_abs, tag = 'smem constant byte address 0x4 - core index']
  #allocation1 [shape = 'u32[144,128]{1,0:T(1,128)}', space=vmem, size = 0x12000, scoped, tag = 'internal scratch']
  %s0 = inlined_call_operand.smem [shape: u32[30], index: -1, kind: input, shape index: {}]
  %s1 = sld [smem:[%s0]]
  %s2 = scalar_lea.smem %s0, 1
  %s3 = sld [smem:[%s2]]
  %s4 = scalar_lea.smem %s0, 2
  %s5 = sld [smem:[%s4]]
  %s6 = scalar_lea.smem %s0, 3
  %s7 = sld [smem:[%s6]]
  %s8 = scalar_lea.smem %s0, 4
  %s9 = sld [smem:[%s8]]
  %s10 = scalar_lea.smem %s0, 5
  %s11 = sld [smem:[%s10]]
  %s12 = scalar_lea.smem %s0, 6
  %s13 = sld [smem:[%s12]]
  %s14 = scalar_lea.smem %s0, 7
  %s15 = sld [smem:[%s14]]
  %s16 = scalar_lea.smem %s0, 8
  %s17 = sld [smem:[%s16]]
  %s18 = scalar_lea.smem %s0, 9
  %s19 = sld [smem:[%s18]]
  %s20 = scalar_lea.smem %s0, 10
  %s21 = sld [smem:[%s20]]
  %s22 = scalar_lea.smem %s0, 11
  %s23 = sld [smem:[%s22]]
  %s24 = scalar_lea.smem %s0, 12
  %s25 = sld [smem:[%s24]]
  %s26 = scalar_lea.smem %s0, 13
  %s27 = sld [smem:[%s26]]
  %s28 = scalar_lea.smem %s0, 14
  %s29 = sld [smem:[%s28]]
  %s30 = scalar_lea.smem %s0, 15
  %s31 = sld [smem:[%s30]]
  %s32 = scalar_lea.smem %s0, 16
  %s33 = sld [smem:[%s32]]
  %s34 = scalar_lea.smem %s0, 17
  %s35 = sld [smem:[%s34]]
  %s36 = scalar_lea.smem %s0, 18
  %s37 = sld [smem:[%s36]]
  %s38 = scalar_lea.smem %s0, 19
  %s39 = sld [smem:[%s38]]
  %s40 = scalar_lea.smem %s0, 20
  %s41 = sld [smem:[%s40]]
  %s42 = scalar_lea.smem %s0, 21
  %s43 = sld [smem:[%s42]]
  %s44 = scalar_lea.smem %s0, 22
  %s45 = sld [smem:[%s44]]
  %s46 = scalar_lea.smem %s0, 23
  %s47 = sld [smem:[%s46]]
  %s48 = scalar_lea.smem %s0, 24
  %s49 = sld [smem:[%s48]]
  %s50 = scalar_lea.smem %s0, 25
  %s51 = sld [smem:[%s50]]
  %s52 = scalar_lea.smem %s0, 26
  %s53 = sld [smem:[%s52]]
  %s54 = scalar_lea.smem %s0, 27
  %s55 = sld [smem:[%s54]]
  %s56 = scalar_lea.smem %s0, 28
  %s57 = sld [smem:[%s56]]
  %s58 = scalar_lea.smem %s0, 29
  %s59 = sld [smem:[%s58]]
  %s60 = sld [smem:[#allocation0]]
  $region126: #{ch_sp_att_forward.3} parent=0
    _
  %s62 = ssub.s32 1, %s60
  %s63 = scalar_select 0, %s62, %s60
  // Predicated region
  $region2: #{ch_sp_att_forward.3} parent=0 // pred_check
    _
  $region3: #{ch_sp_att_forward.3} parent=0 // pred_check_branch
    %65 = sbr.rel (0) target = $region5
  $region4: #{ch_sp_att_forward.3} parent=0 // pred_region
    _
  $region5: #{ch_sp_att_forward.3} parent=0 // pred_fallthru
    _
  // Predicated region
  $region6: #{ch_sp_att_forward.3} parent=0 // pred_check
    _
  $region7: #{ch_sp_att_forward.3} parent=0 // pred_check_branch
    %67 = sbr.rel (0) target = $region9
  $region8: #{ch_sp_att_forward.3} parent=0 // pred_region
    _
  $region9: #{ch_sp_att_forward.3} parent=0 // pred_fallthru
    _
  // Predicated region
  $region10: #{ch_sp_att_forward.3} parent=0 // pred_check
    _
  $region11: #{ch_sp_att_forward.3} parent=0 // pred_check_branch
    %69 = sbr.rel (0) target = $region13
  $region12: #{ch_sp_att_forward.3} parent=0 // pred_region
    _
  $region13: #{ch_sp_att_forward.3} parent=0 // pred_fallthru
    _
  // Predicated region
  $region14: #{ch_sp_att_forward.3} parent=0 // pred_check
    _
  $region15: #{ch_sp_att_forward.3} parent=0 // pred_check_branch
    %71 = sbr.rel (0) target = $region17
  $region16: #{ch_sp_att_forward.3} parent=0 // pred_region
    _
  $region17: #{ch_sp_att_forward.3} parent=0 // pred_fallthru
    _
  // Predicated region
  $region18: #{ch_sp_att_forward.3} parent=0 // pred_check
    _
  $region19: #{ch_sp_att_forward.3} parent=0 // pred_check_branch
    %73 = sbr.rel (0) target = $region21
  $region20: #{ch_sp_att_forward.3} parent=0 // pred_region
    _
  $region21: #{ch_sp_att_forward.3} parent=0 // pred_fallthru
    _
  // Predicated region
  $region22: #{ch_sp_att_forward.3} parent=0 // pred_check
    _
  $region23: #{ch_sp_att_forward.3} parent=0 // pred_check_branch
    %75 = sbr.rel (0) target = $region25
  $region24: #{ch_sp_att_forward.3} parent=0 // pred_region
    _
  $region25: #{ch_sp_att_forward.3} parent=0 // pred_fallthru
    _
  // Predicated region
  $region26: #{ch_sp_att_forward.3} parent=0 // pred_check
    _
  $region27: #{ch_sp_att_forward.3} parent=0 // pred_check_branch
    %77 = sbr.rel (0) target = $region29
  $region28: #{ch_sp_att_forward.3} parent=0 // pred_region
    _
  $region29: #{ch_sp_att_forward.3} parent=0 // pred_fallthru
    _
  // Predicated region
  $region30: #{ch_sp_att_forward.3} parent=0 // pred_check
    _
  $region31: #{ch_sp_att_forward.3} parent=0 // pred_check_branch
    %79 = sbr.rel (0) target = $region33
  $region32: #{ch_sp_att_forward.3} parent=0 // pred_region
    _
  $region33: #{ch_sp_att_forward.3} parent=0 // pred_fallthru
    _
  // Predicated region
  $region34: #{ch_sp_att_forward.3} parent=0 // pred_check
    _
  $region35: #{ch_sp_att_forward.3} parent=0 // pred_check_branch
    %81 = sbr.rel (0) target = $region37
  $region36: #{ch_sp_att_forward.3} parent=0 // pred_region
    _
  $region37: #{ch_sp_att_forward.3} parent=0 // pred_fallthru
    _
  // Predicated region
  $region38: #{ch_sp_att_forward.3} parent=0 // pred_check
    _
  $region39: #{ch_sp_att_forward.3} parent=0 // pred_check_branch
    %83 = sbr.rel (0) target = $region41
  $region40: #{ch_sp_att_forward.3} parent=0 // pred_region
    _
  $region41: #{ch_sp_att_forward.3} parent=0 // pred_fallthru
    _
  // Predicated region
  $region42: #{ch_sp_att_forward.3} parent=0 // pred_check
    _
  $region43: #{ch_sp_att_forward.3} parent=0 // pred_check_branch
    %85 = sbr.rel (0) target = $region45
  $region44: #{ch_sp_att_forward.3} parent=0 // pred_region
    _
  $region45: #{ch_sp_att_forward.3} parent=0 // pred_fallthru
    _
  // Predicated region
  $region46: #{ch_sp_att_forward.3} parent=0 // pred_check
    _
  $region47: #{ch_sp_att_forward.3} parent=0 // pred_check_branch
    %87 = sbr.rel (0) target = $region49
  $region48: #{ch_sp_att_forward.3} parent=0 // pred_region
    _
  $region49: #{ch_sp_att_forward.3} parent=0 // pred_fallthru
    _
  // Predicated region
  $region50: #{ch_sp_att_forward.3} parent=0 // pred_check
    _
  $region51: #{ch_sp_att_forward.3} parent=0 // pred_check_branch
    %89 = sbr.rel (0) target = $region53
  $region52: #{ch_sp_att_forward.3} parent=0 // pred_region
    _
  $region53: #{ch_sp_att_forward.3} parent=0 // pred_fallthru
    _
  // Predicated region
  $region54: #{ch_sp_att_forward.3} parent=0 // pred_check
    _
  $region55: #{ch_sp_att_forward.3} parent=0 // pred_check_branch
    %91 = sbr.rel (0) target = $region57
  $region56: #{ch_sp_att_forward.3} parent=0 // pred_region
    _
  $region57: #{ch_sp_att_forward.3} parent=0 // pred_fallthru
    _
  // Predicated region
  $region58: #{ch_sp_att_forward.3} parent=0 // pred_check
    _
  $region59: #{ch_sp_att_forward.3} parent=0 // pred_check_branch
    %93 = sbr.rel (0) target = $region61
  $region60: #{ch_sp_att_forward.3} parent=0 // pred_region
    _
  $region61: #{ch_sp_att_forward.3} parent=0 // pred_fallthru
    _
  // Predicated region
  $region62: #{ch_sp_att_forward.3} parent=0 // pred_check
    _
  $region63: #{ch_sp_att_forward.3} parent=0 // pred_check_branch
    %95 = sbr.rel (0) target = $region65
  $region64: #{ch_sp_att_forward.3} parent=0 // pred_region
    _
  $region65: #{ch_sp_att_forward.3} parent=0 // pred_fallthru
    _
  // Predicated region
  $region66: #{ch_sp_att_forward.3} parent=0 // pred_check
    _
  $region67: #{ch_sp_att_forward.3} parent=0 // pred_check_branch
    %97 = sbr.rel (0) target = $region69
  $region68: #{ch_sp_att_forward.3} parent=0 // pred_region
    _
  $region69: #{ch_sp_att_forward.3} parent=0 // pred_fallthru
    _
  // Predicated region
  $region70: #{ch_sp_att_forward.3} parent=0 // pred_check
    _
  $region71: #{ch_sp_att_forward.3} parent=0 // pred_check_branch
    %99 = sbr.rel (0) target = $region73
  $region72: #{ch_sp_att_forward.3} parent=0 // pred_region
    _
  $region73: #{ch_sp_att_forward.3} parent=0 // pred_fallthru
    _
  // Predicated region
  $region74: #{ch_sp_att_forward.3} parent=0 // pred_check
    _
  $region75: #{ch_sp_att_forward.3} parent=0 // pred_check_branch
    %101 = sbr.rel (0) target = $region77
  $region76: #{ch_sp_att_forward.3} parent=0 // pred_region
    _
  $region77: #{ch_sp_att_forward.3} parent=0 // pred_fallthru
    _
  // Predicated region
  $region78: #{ch_sp_att_forward.3} parent=0 // pred_check
    _
  $region79: #{ch_sp_att_forward.3} parent=0 // pred_check_branch
    %103 = sbr.rel (0) target = $region81
  $region80: #{ch_sp_att_forward.3} parent=0 // pred_region
    _
  $region81: #{ch_sp_att_forward.3} parent=0 // pred_fallthru
    _
  // Predicated region
  $region82: #{ch_sp_att_forward.3} parent=0 // pred_check
    _
  $region83: #{ch_sp_att_forward.3} parent=0 // pred_check_branch
    %105 = sbr.rel (0) target = $region85
  $region84: #{ch_sp_att_forward.3} parent=0 // pred_region
    _
  $region85: #{ch_sp_att_forward.3} parent=0 // pred_fallthru
    _
  // Predicated region
  $region86: #{ch_sp_att_forward.3} parent=0 // pred_check
    _
  $region87: #{ch_sp_att_forward.3} parent=0 // pred_check_branch
    %107 = sbr.rel (0) target = $region89
  $region88: #{ch_sp_att_forward.3} parent=0 // pred_region
    _
  $region89: #{ch_sp_att_forward.3} parent=0 // pred_fallthru
    _
  // Predicated region
  $region90: #{ch_sp_att_forward.3} parent=0 // pred_check
    _
  $region91: #{ch_sp_att_forward.3} parent=0 // pred_check_branch
    %109 = sbr.rel (0) target = $region93
  $region92: #{ch_sp_att_forward.3} parent=0 // pred_region
    _
  $region93: #{ch_sp_att_forward.3} parent=0 // pred_fallthru
    _
  // Predicated region
  $region94: #{ch_sp_att_forward.3} parent=0 // pred_check
    _
  $region95: #{ch_sp_att_forward.3} parent=0 // pred_check_branch
    %111 = sbr.rel (0) target = $region97
  $region96: #{ch_sp_att_forward.3} parent=0 // pred_region
    _
  $region97: #{ch_sp_att_forward.3} parent=0 // pred_fallthru
    _
  // Predicated region
  $region98: #{ch_sp_att_forward.3} parent=0 // pred_check
    _
  $region99: #{ch_sp_att_forward.3} parent=0 // pred_check_branch
    %113 = sbr.rel (0) target = $region101
  $region100: #{ch_sp_att_forward.3} parent=0 // pred_region
    _
  $region101: #{ch_sp_att_forward.3} parent=0 // pred_fallthru
    _
  // Predicated region
  $region102: #{ch_sp_att_forward.3} parent=0 // pred_check
    _
  $region103: #{ch_sp_att_forward.3} parent=0 // pred_check_branch
    %115 = sbr.rel (0) target = $region105
  $region104: #{ch_sp_att_forward.3} parent=0 // pred_region
    _
  $region105: #{ch_sp_att_forward.3} parent=0 // pred_fallthru
    _
  // Predicated region
  $region106: #{ch_sp_att_forward.3} parent=0 // pred_check
    _
  $region107: #{ch_sp_att_forward.3} parent=0 // pred_check_branch
    %117 = sbr.rel (0) target = $region109
  $region108: #{ch_sp_att_forward.3} parent=0 // pred_region
    _
  $region109: #{ch_sp_att_forward.3} parent=0 // pred_fallthru
    _
  // Predicated region
  $region110: #{ch_sp_att_forward.3} parent=0 // pred_check
    _
  $region111: #{ch_sp_att_forward.3} parent=0 // pred_check_branch
    %119 = sbr.rel (0) target = $region113
  $region112: #{ch_sp_att_forward.3} parent=0 // pred_region
    _
  $region113: #{ch_sp_att_forward.3} parent=0 // pred_fallthru
    _
  // Predicated region
  $region114: #{ch_sp_att_forward.3} parent=0 // pred_check
    _
  $region115: #{ch_sp_att_forward.3} parent=0 // pred_check_branch
    %121 = sbr.rel (0) target = $region117
  $region116: #{ch_sp_att_forward.3} parent=0 // pred_region
    _
  $region117: #{ch_sp_att_forward.3} parent=0 // pred_fallthru
    _
  %v122 = vld [vmem:[%s1] sm:$0xff]
  %v123 = vld [vmem:[%s1 + $0x8] sm:$0xff]
  %v124 = vld [vmem:[%s1 + $0x10] sm:$0xff]
  %v125 = vld [vmem:[%s1 + $0x18] sm:$0xff]
  %v126 = vld [vmem:[%s1 + $0x20] sm:$0xff]
  %v127 = vld [vmem:[%s1 + $0x28] sm:$0xff]
  %v128 = vld [vmem:[%s1 + $0x30] sm:$0xff]
  %v129 = vld [vmem:[%s1 + $0x38] sm:$0xff]
  %v130 = vld [vmem:[%s1 + $0x40] sm:$0xff]
  %v131 = vld [vmem:[%s1 + $0x48] sm:$0xff]
  %v132 = vld [vmem:[%s1 + $0x50] sm:$0xff]
  %v133 = vld [vmem:[%s1 + $0x58] sm:$0xff]
  %v134 = vld [vmem:[%s1 + $0x60] sm:$0xff]
  %v135 = vld [vmem:[%s1 + $0x68] sm:$0xff]
  %v136 = vld [vmem:[%s1 + $0x70] sm:$0xff]
  %v137 = vld [vmem:[%s1 + $0x78] sm:$0xff]
  %v138 = vld [vmem:[%s1 + $0x80] sm:$0xff]
  %v139 = vld [vmem:[%s1 + $0x88] sm:$0xff]
  %v140 = vld [vmem:[%s1 + $0x90] sm:$0xff]
  %v141 = vld [vmem:[%s1 + $0x98] sm:$0xff]
  %v142 = vld [vmem:[%s1 + $0xa0] sm:$0xff]
  %v143 = vld [vmem:[%s1 + $0xa8] sm:$0xff]
  %v144 = vld [vmem:[%s1 + $0xb0] sm:$0xff]
  %v145 = vld [vmem:[%s1 + $0xb8] sm:$0xff]
  %v146 = vld [vmem:[%s1 + $0xc0] sm:$0xff]
  %v147 = vld [vmem:[%s1 + $0xc8] sm:$0xff]
  %v148 = vld [vmem:[%s1 + $0xd0] sm:$0xff]
  %v149 = vld [vmem:[%s1 + $0xd8] sm:$0xff]
  %v150 = vld [vmem:[%s1 + $0xe0] sm:$0xff]
  %v151 = vld [vmem:[%s1 + $0xe8] sm:$0xff]
  %v152 = vld [vmem:[%s1 + $0xf0] sm:$0xff]
  %v153 = vld [vmem:[%s1 + $0xf8] sm:$0xff]
  %v154 = vld [vmem:[%s1 + $0x100] sm:$0xff]
  %v155 = vld [vmem:[%s1 + $0x108] sm:$0xff]
  %v156 = vld [vmem:[%s1 + $0x110] sm:$0xff]
  %v157 = vld [vmem:[%s1 + $0x118] sm:$0xff]
  %v158 = vld [vmem:[%s1 + $0x120] sm:$0xff]
  %v159 = vld [vmem:[%s1 + $0x128] sm:$0xff]
  %v160 = vld [vmem:[%s1 + $0x130] sm:$0xff]
  %v161 = vld [vmem:[%s1 + $0x138] sm:$0xff]
  %v162 = vld [vmem:[%s1 + $0x140] sm:$0xff]
  %v163 = vld [vmem:[%s1 + $0x148] sm:$0xff]
  %v164 = vld [vmem:[%s1 + $0x150] sm:$0xff]
  %v165 = vld [vmem:[%s1 + $0x158] sm:$0xff]
  %v166 = vld [vmem:[%s1 + $0x160] sm:$0xff]
  %v167 = vld [vmem:[%s1 + $0x168] sm:$0xff]
  %v168 = vld [vmem:[%s1 + $0x170] sm:$0xff]
  %v169 = vld [vmem:[%s1 + $0x178] sm:$0xff]
  %v170 = vld [vmem:[%s3] sm:$0xff]
  %v171 = vld [vmem:[%s3 + $0x8] sm:$0xff]
  %v172 = vld [vmem:[%s3 + $0x10] sm:$0xff]
  %v173 = vld [vmem:[%s3 + $0x18] sm:$0xff]
  %v174 = vld [vmem:[%s3 + $0x20] sm:$0xff]
  %v175 = vld [vmem:[%s3 + $0x28] sm:$0xff]
  %v176 = vld [vmem:[%s3 + $0x30] sm:$0xff]
  %v177 = vld [vmem:[%s3 + $0x38] sm:$0xff]
  %v178 = vld [vmem:[%s3 + $0x40] sm:$0xff]
  %v179 = vld [vmem:[%s3 + $0x48] sm:$0xff]
  %v180 = vld [vmem:[%s3 + $0x50] sm:$0xff]
  %v181 = vld [vmem:[%s3 + $0x58] sm:$0xff]
  %v182 = vld [vmem:[%s3 + $0x60] sm:$0xff]
  %v183 = vld [vmem:[%s3 + $0x68] sm:$0xff]
  %v184 = vld [vmem:[%s3 + $0x70] sm:$0xff]
  %v185 = vld [vmem:[%s3 + $0x78] sm:$0xff]
  %v186 = vld [vmem:[%s3 + $0x80] sm:$0xff]
  %v187 = vld [vmem:[%s3 + $0x88] sm:$0xff]
  %v188 = vld [vmem:[%s3 + $0x90] sm:$0xff]
  %v189 = vld [vmem:[%s3 + $0x98] sm:$0xff]
  %v190 = vld [vmem:[%s3 + $0xa0] sm:$0xff]
  %v191 = vld [vmem:[%s3 + $0xa8] sm:$0xff]
  %v192 = vld [vmem:[%s3 + $0xb0] sm:$0xff]
  %v193 = vld [vmem:[%s3 + $0xb8] sm:$0xff]
  %v194 = vld [vmem:[%s3 + $0xc0] sm:$0xff]
  %v195 = vld [vmem:[%s3 + $0xc8] sm:$0xff]
  %v196 = vld [vmem:[%s3 + $0xd0] sm:$0xff]
  %v197 = vld [vmem:[%s3 + $0xd8] sm:$0xff]
  %v198 = vld [vmem:[%s3 + $0xe0] sm:$0xff]
  %v199 = vld [vmem:[%s3 + $0xe8] sm:$0xff]
  %v200 = vld [vmem:[%s3 + $0xf0] sm:$0xff]
  %v201 = vld [vmem:[%s3 + $0xf8] sm:$0xff]
  %v202 = vld [vmem:[%s3 + $0x100] sm:$0xff]
  %v203 = vld [vmem:[%s3 + $0x108] sm:$0xff]
  %v204 = vld [vmem:[%s3 + $0x110] sm:$0xff]
  %v205 = vld [vmem:[%s3 + $0x118] sm:$0xff]
  %v206 = vld [vmem:[%s3 + $0x120] sm:$0xff]
  %v207 = vld [vmem:[%s3 + $0x128] sm:$0xff]
  %v208 = vld [vmem:[%s3 + $0x130] sm:$0xff]
  %v209 = vld [vmem:[%s3 + $0x138] sm:$0xff]
  %v210 = vld [vmem:[%s3 + $0x140] sm:$0xff]
  %v211 = vld [vmem:[%s3 + $0x148] sm:$0xff]
  %v212 = vld [vmem:[%s3 + $0x150] sm:$0xff]
  %v213 = vld [vmem:[%s3 + $0x158] sm:$0xff]
  %v214 = vld [vmem:[%s3 + $0x160] sm:$0xff]
  %v215 = vld [vmem:[%s3 + $0x168] sm:$0xff]
  %v216 = vld [vmem:[%s3 + $0x170] sm:$0xff]
  %v217 = vld [vmem:[%s3 + $0x178] sm:$0xff]
  %v218 = vld [vmem:[%s3 + $0x180] sm:$0xff]
  %v219 = vld [vmem:[%s3 + $0x188] sm:$0xff]
  %v220 = vld [vmem:[%s3 + $0x190] sm:$0xff]
  %v221 = vld [vmem:[%s3 + $0x198] sm:$0xff]
  %v222 = vld [vmem:[%s3 + $0x1a0] sm:$0xff]
  %v223 = vld [vmem:[%s3 + $0x1a8] sm:$0xff]
  %v224 = vld [vmem:[%s3 + $0x1b0] sm:$0xff]
  %v225 = vld [vmem:[%s3 + $0x1b8] sm:$0xff]
  %v226 = vld [vmem:[%s3 + $0x1c0] sm:$0xff]
  %v227 = vld [vmem:[%s3 + $0x1c8] sm:$0xff]
  %v228 = vld [vmem:[%s3 + $0x1d0] sm:$0xff]
  %v229 = vld [vmem:[%s3 + $0x1d8] sm:$0xff]
  %v230 = vld [vmem:[%s3 + $0x1e0] sm:$0xff]
  %v231 = vld [vmem:[%s3 + $0x1e8] sm:$0xff]
  %v232 = vld [vmem:[%s3 + $0x1f0] sm:$0xff]
  %v233 = vld [vmem:[%s3 + $0x1f8] sm:$0xff]
  %v234 = vld [vmem:[%s3 + $0x200] sm:$0xff]
  %v235 = vld [vmem:[%s3 + $0x208] sm:$0xff]
  %v236 = vld [vmem:[%s3 + $0x210] sm:$0xff]
  %v237 = vld [vmem:[%s3 + $0x218] sm:$0xff]
  %v238 = vld [vmem:[%s3 + $0x220] sm:$0xff]
  %v239 = vld [vmem:[%s3 + $0x228] sm:$0xff]
  %v240 = vld [vmem:[%s3 + $0x230] sm:$0xff]
  %v241 = vld [vmem:[%s3 + $0x238] sm:$0xff]
  %v242 = vld [vmem:[%s3 + $0x240] sm:$0xff]
  %v243 = vld [vmem:[%s3 + $0x248] sm:$0xff]
  %v244 = vld [vmem:[%s3 + $0x250] sm:$0xff]
  %v245 = vld [vmem:[%s3 + $0x258] sm:$0xff]
  %v246 = vld [vmem:[%s3 + $0x260] sm:$0xff]
  %v247 = vld [vmem:[%s3 + $0x268] sm:$0xff]
  %v248 = vld [vmem:[%s3 + $0x270] sm:$0xff]
  %v249 = vld [vmem:[%s3 + $0x278] sm:$0xff]
  %v250 = vld [vmem:[%s3 + $0x280] sm:$0xff]
  %v251 = vld [vmem:[%s3 + $0x288] sm:$0xff]
  %v252 = vld [vmem:[%s3 + $0x290] sm:$0xff]
  %v253 = vld [vmem:[%s3 + $0x298] sm:$0xff]
  %v254 = vld [vmem:[%s3 + $0x2a0] sm:$0xff]
  %v255 = vld [vmem:[%s3 + $0x2a8] sm:$0xff]
  %v256 = vld [vmem:[%s3 + $0x2b0] sm:$0xff]
  %v257 = vld [vmem:[%s3 + $0x2b8] sm:$0xff]
  %v258 = vld [vmem:[%s3 + $0x2c0] sm:$0xff]
  %v259 = vld [vmem:[%s3 + $0x2c8] sm:$0xff]
  %v260 = vld [vmem:[%s3 + $0x2d0] sm:$0xff]
  %v261 = vld [vmem:[%s3 + $0x2d8] sm:$0xff]
  %v262 = vld [vmem:[%s3 + $0x2e0] sm:$0xff]
  %v263 = vld [vmem:[%s3 + $0x2e8] sm:$0xff]
  %v264 = vld [vmem:[%s3 + $0x2f0] sm:$0xff]
  %v265 = vld [vmem:[%s3 + $0x2f8] sm:$0xff]
  %v266 = vld [vmem:[%s3 + $0x300] sm:$0xff]
  %v267 = vld [vmem:[%s3 + $0x308] sm:$0xff]
  %v268 = vld [vmem:[%s3 + $0x310] sm:$0xff]
  %v269 = vld [vmem:[%s3 + $0x318] sm:$0xff]
  %v270 = vld [vmem:[%s3 + $0x320] sm:$0xff]
  %v271 = vld [vmem:[%s3 + $0x328] sm:$0xff]
  %v272 = vld [vmem:[%s3 + $0x330] sm:$0xff]
  %v273 = vld [vmem:[%s3 + $0x338] sm:$0xff]
  %v274 = vld [vmem:[%s3 + $0x340] sm:$0xff]
  %v275 = vld [vmem:[%s3 + $0x348] sm:$0xff]
  %v276 = vld [vmem:[%s3 + $0x350] sm:$0xff]
  %v277 = vld [vmem:[%s3 + $0x358] sm:$0xff]
  %v278 = vld [vmem:[%s3 + $0x360] sm:$0xff]
  %v279 = vld [vmem:[%s3 + $0x368] sm:$0xff]
  %v280 = vld [vmem:[%s3 + $0x370] sm:$0xff]
  %v281 = vld [vmem:[%s3 + $0x378] sm:$0xff]
  %v282 = vld [vmem:[%s3 + $0x380] sm:$0xff]
  %v283 = vld [vmem:[%s3 + $0x388] sm:$0xff]
  %v284 = vld [vmem:[%s3 + $0x390] sm:$0xff]
  %v285 = vld [vmem:[%s3 + $0x398] sm:$0xff]
  %v286 = vld [vmem:[%s3 + $0x3a0] sm:$0xff]
  %v287 = vld [vmem:[%s3 + $0x3a8] sm:$0xff]
  %v288 = vld [vmem:[%s3 + $0x3b0] sm:$0xff]
  %v289 = vld [vmem:[%s3 + $0x3b8] sm:$0xff]
  %v290 = vld [vmem:[%s3 + $0x3c0] sm:$0xff]
  %v291 = vld [vmem:[%s3 + $0x3c8] sm:$0xff]
  %v292 = vld [vmem:[%s3 + $0x3d0] sm:$0xff]
  %v293 = vld [vmem:[%s3 + $0x3d8] sm:$0xff]
  %v294 = vld [vmem:[%s3 + $0x3e0] sm:$0xff]
  %v295 = vld [vmem:[%s3 + $0x3e8] sm:$0xff]
  %v296 = vld [vmem:[%s3 + $0x3f0] sm:$0xff]
  %v297 = vld [vmem:[%s3 + $0x3f8] sm:$0xff]
  %v298 = vld [vmem:[%s3 + $0x400] sm:$0xff]
  %v299 = vld [vmem:[%s3 + $0x408] sm:$0xff]
  %v300 = vld [vmem:[%s3 + $0x410] sm:$0xff]
  %v301 = vld [vmem:[%s3 + $0x418] sm:$0xff]
  %v302 = vld [vmem:[%s3 + $0x420] sm:$0xff]
  %v303 = vld [vmem:[%s3 + $0x428] sm:$0xff]
  %v304 = vld [vmem:[%s3 + $0x430] sm:$0xff]
  %v305 = vld [vmem:[%s3 + $0x438] sm:$0xff]
  %v306 = vld [vmem:[%s3 + $0x440] sm:$0xff]
  %v307 = vld [vmem:[%s3 + $0x448] sm:$0xff]
  %v308 = vld [vmem:[%s3 + $0x450] sm:$0xff]
  %v309 = vld [vmem:[%s3 + $0x458] sm:$0xff]
  %v310 = vld [vmem:[%s3 + $0x460] sm:$0xff]
  %v311 = vld [vmem:[%s3 + $0x468] sm:$0xff]
  %v312 = vld [vmem:[%s3 + $0x470] sm:$0xff]
  %v313 = vld [vmem:[%s3 + $0x478] sm:$0xff]
  %v314 = vld [vmem:[%s3 + $0x480] sm:$0xff]
  %v315 = vld [vmem:[%s3 + $0x488] sm:$0xff]
  %v316 = vld [vmem:[%s3 + $0x490] sm:$0xff]
  %v317 = vld [vmem:[%s3 + $0x498] sm:$0xff]
  %v318 = vld [vmem:[%s3 + $0x4a0] sm:$0xff]
  %v319 = vld [vmem:[%s3 + $0x4a8] sm:$0xff]
  %v320 = vld [vmem:[%s3 + $0x4b0] sm:$0xff]
  %v321 = vld [vmem:[%s3 + $0x4b8] sm:$0xff]
  %v322 = vld [vmem:[%s3 + $0x4c0] sm:$0xff]
  %v323 = vld [vmem:[%s3 + $0x4c8] sm:$0xff]
  %v324 = vld [vmem:[%s3 + $0x4d0] sm:$0xff]
  %v325 = vld [vmem:[%s3 + $0x4d8] sm:$0xff]
  %v326 = vld [vmem:[%s3 + $0x4e0] sm:$0xff]
  %v327 = vld [vmem:[%s3 + $0x4e8] sm:$0xff]
  %v328 = vld [vmem:[%s3 + $0x4f0] sm:$0xff]
  %v329 = vld [vmem:[%s3 + $0x4f8] sm:$0xff]
  %v330 = vld [vmem:[%s3 + $0x500] sm:$0xff]
  %v331 = vld [vmem:[%s3 + $0x508] sm:$0xff]
  %v332 = vld [vmem:[%s3 + $0x510] sm:$0xff]
  %v333 = vld [vmem:[%s3 + $0x518] sm:$0xff]
  %v334 = vld [vmem:[%s3 + $0x520] sm:$0xff]
  %v335 = vld [vmem:[%s3 + $0x528] sm:$0xff]
  %v336 = vld [vmem:[%s3 + $0x530] sm:$0xff]
  %v337 = vld [vmem:[%s3 + $0x538] sm:$0xff]
  %v338 = vld [vmem:[%s3 + $0x540] sm:$0xff]
  %v339 = vld [vmem:[%s3 + $0x548] sm:$0xff]
  %v340 = vld [vmem:[%s3 + $0x550] sm:$0xff]
  %v341 = vld [vmem:[%s3 + $0x558] sm:$0xff]
  %v342 = vld [vmem:[%s3 + $0x560] sm:$0xff]
  %v343 = vld [vmem:[%s3 + $0x568] sm:$0xff]
  %v344 = vld [vmem:[%s3 + $0x570] sm:$0xff]
  %v345 = vld [vmem:[%s3 + $0x578] sm:$0xff]
  %v346 = vld [vmem:[%s3 + $0x580] sm:$0xff]
  %v347 = vld [vmem:[%s3 + $0x588] sm:$0xff]
  %v348 = vld [vmem:[%s3 + $0x590] sm:$0xff]
  %v349 = vld [vmem:[%s3 + $0x598] sm:$0xff]
  %v350 = vld [vmem:[%s3 + $0x5a0] sm:$0xff]
  %v351 = vld [vmem:[%s3 + $0x5a8] sm:$0xff]
  %v352 = vld [vmem:[%s3 + $0x5b0] sm:$0xff]
  %v353 = vld [vmem:[%s3 + $0x5b8] sm:$0xff]
  %v354 = vld [vmem:[%s3 + $0x5c0] sm:$0xff]
  %v355 = vld [vmem:[%s3 + $0x5c8] sm:$0xff]
  %v356 = vld [vmem:[%s3 + $0x5d0] sm:$0xff]
  %v357 = vld [vmem:[%s3 + $0x5d8] sm:$0xff]
  %v358 = vld [vmem:[%s3 + $0x5e0] sm:$0xff]
  %v359 = vld [vmem:[%s3 + $0x5e8] sm:$0xff]
  %v360 = vld [vmem:[%s3 + $0x5f0] sm:$0xff]
  %v361 = vld [vmem:[%s3 + $0x5f8] sm:$0xff]
  %v362 = vld [vmem:[%s3 + $0x600] sm:$0xff]
  %v363 = vld [vmem:[%s3 + $0x608] sm:$0xff]
  %v364 = vld [vmem:[%s3 + $0x610] sm:$0xff]
  %v365 = vld [vmem:[%s3 + $0x618] sm:$0xff]
  %v366 = vld [vmem:[%s3 + $0x620] sm:$0xff]
  %v367 = vld [vmem:[%s3 + $0x628] sm:$0xff]
  %v368 = vld [vmem:[%s3 + $0x630] sm:$0xff]
  %v369 = vld [vmem:[%s3 + $0x638] sm:$0xff]
  %v370 = vld [vmem:[%s3 + $0x640] sm:$0xff]
  %v371 = vld [vmem:[%s3 + $0x648] sm:$0xff]
  %v372 = vld [vmem:[%s3 + $0x650] sm:$0xff]
  %v373 = vld [vmem:[%s3 + $0x658] sm:$0xff]
  %v374 = vld [vmem:[%s3 + $0x660] sm:$0xff]
  %v375 = vld [vmem:[%s3 + $0x668] sm:$0xff]
  %v376 = vld [vmem:[%s3 + $0x670] sm:$0xff]
  %v377 = vld [vmem:[%s3 + $0x678] sm:$0xff]
  %v378 = vld [vmem:[%s3 + $0x680] sm:$0xff]
  %v379 = vld [vmem:[%s3 + $0x688] sm:$0xff]
  %v380 = vld [vmem:[%s3 + $0x690] sm:$0xff]
  %v381 = vld [vmem:[%s3 + $0x698] sm:$0xff]
  %v382 = vld [vmem:[%s3 + $0x6a0] sm:$0xff]
  %v383 = vld [vmem:[%s3 + $0x6a8] sm:$0xff]
  %v384 = vld [vmem:[%s3 + $0x6b0] sm:$0xff]
  %v385 = vld [vmem:[%s3 + $0x6b8] sm:$0xff]
  %v386 = vld [vmem:[%s3 + $0x6c0] sm:$0xff]
  %v387 = vld [vmem:[%s3 + $0x6c8] sm:$0xff]
  %v388 = vld [vmem:[%s3 + $0x6d0] sm:$0xff]
  %v389 = vld [vmem:[%s3 + $0x6d8] sm:$0xff]
  %v390 = vld [vmem:[%s3 + $0x6e0] sm:$0xff]
  %v391 = vld [vmem:[%s3 + $0x6e8] sm:$0xff]
  %v392 = vld [vmem:[%s3 + $0x6f0] sm:$0xff]
  %v393 = vld [vmem:[%s3 + $0x6f8] sm:$0xff]
  %v394 = vld [vmem:[%s3 + $0x700] sm:$0xff]
  %v395 = vld [vmem:[%s3 + $0x708] sm:$0xff]
  %v396 = vld [vmem:[%s3 + $0x710] sm:$0xff]
  %v397 = vld [vmem:[%s3 + $0x718] sm:$0xff]
  %v398 = vld [vmem:[%s3 + $0x720] sm:$0xff]
  %v399 = vld [vmem:[%s3 + $0x728] sm:$0xff]
  %v400 = vld [vmem:[%s3 + $0x730] sm:$0xff]
  %v401 = vld [vmem:[%s3 + $0x738] sm:$0xff]
  %v402 = vld [vmem:[%s3 + $0x740] sm:$0xff]
  %v403 = vld [vmem:[%s3 + $0x748] sm:$0xff]
  %v404 = vld [vmem:[%s3 + $0x750] sm:$0xff]
  %v405 = vld [vmem:[%s3 + $0x758] sm:$0xff]
  %v406 = vld [vmem:[%s3 + $0x760] sm:$0xff]
  %v407 = vld [vmem:[%s3 + $0x768] sm:$0xff]
  %v408 = vld [vmem:[%s3 + $0x770] sm:$0xff]
  %v409 = vld [vmem:[%s3 + $0x778] sm:$0xff]
  %v410 = vld [vmem:[%s3 + $0x780] sm:$0xff]
  %v411 = vld [vmem:[%s3 + $0x788] sm:$0xff]
  %v412 = vld [vmem:[%s3 + $0x790] sm:$0xff]
  %v413 = vld [vmem:[%s3 + $0x798] sm:$0xff]
  %v414 = vld [vmem:[%s3 + $0x7a0] sm:$0xff]
  %v415 = vld [vmem:[%s3 + $0x7a8] sm:$0xff]
  %v416 = vld [vmem:[%s3 + $0x7b0] sm:$0xff]
  %v417 = vld [vmem:[%s3 + $0x7b8] sm:$0xff]
  %v418 = vld [vmem:[%s3 + $0x7c0] sm:$0xff]
  %v419 = vld [vmem:[%s3 + $0x7c8] sm:$0xff]
  %v420 = vld [vmem:[%s3 + $0x7d0] sm:$0xff]
  %v421 = vld [vmem:[%s3 + $0x7d8] sm:$0xff]
  %v422 = vld [vmem:[%s3 + $0x7e0] sm:$0xff]
  %v423 = vld [vmem:[%s3 + $0x7e8] sm:$0xff]
  %v424 = vld [vmem:[%s3 + $0x7f0] sm:$0xff]
  %v425 = vld [vmem:[%s3 + $0x7f8] sm:$0xff]
  %v426 = vld [vmem:[%s3 + $0x800] sm:$0xff]
  %v427 = vld [vmem:[%s3 + $0x808] sm:$0xff]
  %v428 = vld [vmem:[%s3 + $0x810] sm:$0xff]
  %v429 = vld [vmem:[%s3 + $0x818] sm:$0xff]
  %v430 = vld [vmem:[%s3 + $0x820] sm:$0xff]
  %v431 = vld [vmem:[%s3 + $0x828] sm:$0xff]
  %v432 = vld [vmem:[%s3 + $0x830] sm:$0xff]
  %v433 = vld [vmem:[%s3 + $0x838] sm:$0xff]
  %v434 = vld [vmem:[%s3 + $0x840] sm:$0xff]
  %v435 = vld [vmem:[%s3 + $0x848] sm:$0xff]
  %v436 = vld [vmem:[%s3 + $0x850] sm:$0xff]
  %v437 = vld [vmem:[%s3 + $0x858] sm:$0xff]
  %v438 = vld [vmem:[%s3 + $0x860] sm:$0xff]
  %v439 = vld [vmem:[%s3 + $0x868] sm:$0xff]
  %v440 = vld [vmem:[%s3 + $0x870] sm:$0xff]
  %v441 = vld [vmem:[%s3 + $0x878] sm:$0xff]
  %v442 = vld [vmem:[%s3 + $0x880] sm:$0xff]
  %v443 = vld [vmem:[%s3 + $0x888] sm:$0xff]
  %v444 = vld [vmem:[%s3 + $0x890] sm:$0xff]
  %v445 = vld [vmem:[%s3 + $0x898] sm:$0xff]
  %v446 = vld [vmem:[%s3 + $0x8a0] sm:$0xff]
  %v447 = vld [vmem:[%s3 + $0x8a8] sm:$0xff]
  %v448 = vld [vmem:[%s3 + $0x8b0] sm:$0xff]
  %v449 = vld [vmem:[%s3 + $0x8b8] sm:$0xff]
  %v450 = vld [vmem:[%s3 + $0x8c0] sm:$0xff]
  %v451 = vld [vmem:[%s3 + $0x8c8] sm:$0xff]
  %v452 = vld [vmem:[%s3 + $0x8d0] sm:$0xff]
  %v453 = vld [vmem:[%s3 + $0x8d8] sm:$0xff]
  %v454 = vld [vmem:[%s3 + $0x8e0] sm:$0xff]
  %v455 = vld [vmem:[%s3 + $0x8e8] sm:$0xff]
  %v456 = vld [vmem:[%s3 + $0x8f0] sm:$0xff]
  %v457 = vld [vmem:[%s3 + $0x8f8] sm:$0xff]
  %v458 = vld [vmem:[%s3 + $0x900] sm:$0xff]
  %v459 = vld [vmem:[%s3 + $0x908] sm:$0xff]
  %v460 = vld [vmem:[%s3 + $0x910] sm:$0xff]
  %v461 = vld [vmem:[%s3 + $0x918] sm:$0xff]
  %v462 = vld [vmem:[%s3 + $0x920] sm:$0xff]
  %v463 = vld [vmem:[%s3 + $0x928] sm:$0xff]
  %v464 = vld [vmem:[%s3 + $0x930] sm:$0xff]
  %v465 = vld [vmem:[%s3 + $0x938] sm:$0xff]
  %v466 = vld [vmem:[%s3 + $0x940] sm:$0xff]
  %v467 = vld [vmem:[%s3 + $0x948] sm:$0xff]
  %v468 = vld [vmem:[%s3 + $0x950] sm:$0xff]
  %v469 = vld [vmem:[%s3 + $0x958] sm:$0xff]
  %v470 = vld [vmem:[%s3 + $0x960] sm:$0xff]
  %v471 = vld [vmem:[%s3 + $0x968] sm:$0xff]
  %v472 = vld [vmem:[%s3 + $0x970] sm:$0xff]
  %v473 = vld [vmem:[%s3 + $0x978] sm:$0xff]
  %v474 = vld [vmem:[%s3 + $0x980] sm:$0xff]
  %v475 = vld [vmem:[%s3 + $0x988] sm:$0xff]
  %v476 = vld [vmem:[%s3 + $0x990] sm:$0xff]
  %v477 = vld [vmem:[%s3 + $0x998] sm:$0xff]
  %v478 = vld [vmem:[%s3 + $0x9a0] sm:$0xff]
  %v479 = vld [vmem:[%s3 + $0x9a8] sm:$0xff]
  %v480 = vld [vmem:[%s3 + $0x9b0] sm:$0xff]
  %v481 = vld [vmem:[%s3 + $0x9b8] sm:$0xff]
  %v482 = vld [vmem:[%s3 + $0x9c0] sm:$0xff]
  %v483 = vld [vmem:[%s3 + $0x9c8] sm:$0xff]
  %v484 = vld [vmem:[%s3 + $0x9d0] sm:$0xff]
  %v485 = vld [vmem:[%s3 + $0x9d8] sm:$0xff]
  %v486 = vld [vmem:[%s3 + $0x9e0] sm:$0xff]
  %v487 = vld [vmem:[%s3 + $0x9e8] sm:$0xff]
  %v488 = vld [vmem:[%s3 + $0x9f0] sm:$0xff]
  %v489 = vld [vmem:[%s3 + $0x9f8] sm:$0xff]
  %v490 = vld [vmem:[%s3 + $0xa00] sm:$0xff]
  %v491 = vld [vmem:[%s3 + $0xa08] sm:$0xff]
  %v492 = vld [vmem:[%s3 + $0xa10] sm:$0xff]
  %v493 = vld [vmem:[%s3 + $0xa18] sm:$0xff]
  %v494 = vld [vmem:[%s3 + $0xa20] sm:$0xff]
  %v495 = vld [vmem:[%s3 + $0xa28] sm:$0xff]
  %v496 = vld [vmem:[%s3 + $0xa30] sm:$0xff]
  %v497 = vld [vmem:[%s3 + $0xa38] sm:$0xff]
  %v498 = vld [vmem:[%s3 + $0xa40] sm:$0xff]
  %v499 = vld [vmem:[%s3 + $0xa48] sm:$0xff]
  %v500 = vld [vmem:[%s3 + $0xa50] sm:$0xff]
  %v501 = vld [vmem:[%s3 + $0xa58] sm:$0xff]
  %v502 = vld [vmem:[%s3 + $0xa60] sm:$0xff]
  %v503 = vld [vmem:[%s3 + $0xa68] sm:$0xff]
  %v504 = vld [vmem:[%s3 + $0xa70] sm:$0xff]
  %v505 = vld [vmem:[%s3 + $0xa78] sm:$0xff]
  %v506 = vld [vmem:[%s3 + $0xa80] sm:$0xff]
  %v507 = vld [vmem:[%s3 + $0xa88] sm:$0xff]
  %v508 = vld [vmem:[%s3 + $0xa90] sm:$0xff]
  %v509 = vld [vmem:[%s3 + $0xa98] sm:$0xff]
  %v510 = vld [vmem:[%s3 + $0xaa0] sm:$0xff]
  %v511 = vld [vmem:[%s3 + $0xaa8] sm:$0xff]
  %v512 = vld [vmem:[%s3 + $0xab0] sm:$0xff]
  %v513 = vld [vmem:[%s3 + $0xab8] sm:$0xff]
  %v514 = vld [vmem:[%s3 + $0xac0] sm:$0xff]
  %v515 = vld [vmem:[%s3 + $0xac8] sm:$0xff]
  %v516 = vld [vmem:[%s3 + $0xad0] sm:$0xff]
  %v517 = vld [vmem:[%s3 + $0xad8] sm:$0xff]
  %v518 = vld [vmem:[%s3 + $0xae0] sm:$0xff]
  %v519 = vld [vmem:[%s3 + $0xae8] sm:$0xff]
  %v520 = vld [vmem:[%s3 + $0xaf0] sm:$0xff]
  %v521 = vld [vmem:[%s3 + $0xaf8] sm:$0xff]
  %v522 = vld [vmem:[%s3 + $0xb00] sm:$0xff]
  %v523 = vld [vmem:[%s3 + $0xb08] sm:$0xff]
  %v524 = vld [vmem:[%s3 + $0xb10] sm:$0xff]
  %v525 = vld [vmem:[%s3 + $0xb18] sm:$0xff]
  %v526 = vld [vmem:[%s3 + $0xb20] sm:$0xff]
  %v527 = vld [vmem:[%s3 + $0xb28] sm:$0xff]
  %v528 = vld [vmem:[%s3 + $0xb30] sm:$0xff]
  %v529 = vld [vmem:[%s3 + $0xb38] sm:$0xff]
  %v530 = vld [vmem:[%s3 + $0xb40] sm:$0xff]
  %v531 = vld [vmem:[%s3 + $0xb48] sm:$0xff]
  %v532 = vld [vmem:[%s3 + $0xb50] sm:$0xff]
  %v533 = vld [vmem:[%s3 + $0xb58] sm:$0xff]
  %v534 = vld [vmem:[%s3 + $0xb60] sm:$0xff]
  %v535 = vld [vmem:[%s3 + $0xb68] sm:$0xff]
  %v536 = vld [vmem:[%s3 + $0xb70] sm:$0xff]
  %v537 = vld [vmem:[%s3 + $0xb78] sm:$0xff]
  %v538 = vld [vmem:[%s3 + $0xb80] sm:$0xff]
  %v539 = vld [vmem:[%s3 + $0xb88] sm:$0xff]
  %v540 = vld [vmem:[%s3 + $0xb90] sm:$0xff]
  %v541 = vld [vmem:[%s3 + $0xb98] sm:$0xff]
  %v542 = vld [vmem:[%s3 + $0xba0] sm:$0xff]
  %v543 = vld [vmem:[%s3 + $0xba8] sm:$0xff]
  %v544 = vld [vmem:[%s3 + $0xbb0] sm:$0xff]
  %v545 = vld [vmem:[%s3 + $0xbb8] sm:$0xff]
  %v546 = vld [vmem:[%s3 + $0xbc0] sm:$0xff]
  %v547 = vld [vmem:[%s3 + $0xbc8] sm:$0xff]
  %v548 = vld [vmem:[%s5] sm:$0x1]
  %v550 = vlaneseq
  %v551 = vshrl.u32 %v550, 7
  %v552 = vsub.s32 0, %v551
  %v553 = vrot.slane %v548, %v552
  %vm555 = vcmask 654336
  %v557 = vsel %vm555, %v145, 0
  %v560 = vsel %vm555, %v169, 0
  %562 = vmatprep.subr.mxu0 0.0
  %563 = vmatpush1.msra.mxu0 %v170
  %564 = vmatprep.subr.mxu0 0.0
  %565 = vmatpush1.msra.mxu0 %v171
  %566 = vmatprep.subr.mxu0 0.0
  %567 = vmatpush1.msra.mxu0 %v172
  %568 = vmatprep.subr.mxu0 0.0
  %569 = vmatpush1.msra.mxu0 %v173
  %570 = vmatprep.subr.mxu0 0.0
  %571 = vmatpush1.msra.mxu0 %v174
  %572 = vmatprep.subr.mxu0 0.0
  %573 = vmatpush1.msra.mxu0 %v175
  %574 = vmatprep.subr.mxu0 0.0
  %575 = vmatpush1.msra.mxu0 %v176
  %576 = vmatprep.subr.mxu0 0.0
  %577 = vmatpush1.msra.mxu0 %v177
  %578 = vmatprep.subr.mxu0 0.0
  %579 = vmatpush1.msra.mxu0 %v178
  %580 = vmatprep.subr.mxu0 0.0
  %581 = vmatpush1.msra.mxu0 %v179
  %582 = vmatprep.subr.mxu0 0.0
  %583 = vmatpush1.msra.mxu0 %v180
  %584 = vmatprep.subr.mxu0 0.0
  %585 = vmatpush1.msra.mxu0 %v181
  %586 = vmatprep.subr.mxu0 0.0
  %587 = vmatpush1.msra.mxu0 %v182
  %588 = vmatprep.subr.mxu0 0.0
  %589 = vmatpush1.msra.mxu0 %v183
  %590 = vmatprep.subr.mxu0 0.0
  %591 = vmatpush1.msra.mxu0 %v184
  %592 = vmatprep.subr.mxu0 0.0
  %593 = vmatpush1.msra.mxu0 %v185
  %594 = vmatprep.subr.mxu0 0.0
  %595 = vmatpush1.msra.mxu0 %v186
  %596 = vmatprep.subr.mxu0 0.0
  %597 = vmatpush1.msra.mxu0 %v187
  %598 = vmatprep.subr.mxu0 0.0
  %599 = vmatpush1.msra.mxu0 %v188
  %600 = vmatprep.subr.mxu0 0.0
  %601 = vmatpush1.msra.mxu0 %v189
  %602 = vmatprep.subr.mxu0 0.0
  %603 = vmatpush1.msra.mxu0 %v190
  %604 = vmatprep.subr.mxu0 0.0
  %605 = vmatpush1.msra.mxu0 %v191
  %606 = vmatprep.subr.mxu0 0.0
  %607 = vmatpush1.msra.mxu0 %v192
  %608 = vmatprep.subr.mxu0 0.0
  %609 = vmatpush1.msra.mxu0 %v193
  %610 = vmatprep.subr.mxu0 0.0
  %611 = vmatpush1.msra.mxu0 %v194
  %612 = vmatprep.subr.mxu0 0.0
  %613 = vmatpush1.msra.mxu0 %v195
  %614 = vmatprep.subr.mxu0 0.0
  %615 = vmatpush1.msra.mxu0 %v196
  %616 = vmatprep.subr.mxu0 0.0
  %617 = vmatpush1.msra.mxu0 %v197
  %618 = vmatprep.subr.mxu0 0.0
  %619 = vmatpush1.msra.mxu0 %v198
  %620 = vmatprep.subr.mxu0 0.0
  %621 = vmatpush1.msra.mxu0 %v199
  %622 = vmatprep.subr.mxu0 0.0
  %623 = vmatpush1.msra.mxu0 %v200
  %624 = vmatprep.subr.mxu0 0.0
  %625 = vmatpush1.msra.mxu0 %v201
  %626 = vmatprep.mubr.f32.mxu0 %v123
  %627 = vmatmul.mubr.f32.gmra.mrb[0].mxu0 %v122
  %v628 = vpop.f32.mrb[0].mxu0
  %v629 = vadd.f32 %v553, %v628
  %v630 = vpop.f32.mrb[0].mxu0
  %631 = vmatprep.mubr.f32.mxu0 %v147
  %632 = vmatmul.mubr.f32.gmra.mrb[0].mxu0 %v146
  %v633 = vpop.f32.mrb[0].mxu0
  %v634 = vadd.f32 %v553, %v633
  %v635 = vpop.f32.mrb[0].mxu0
  %636 = vdwg.mxu0
  %637 = vmatprep.subr.mxu0 0.0
  %638 = vmatpush1.msra.mxu0 %v202
  %639 = vmatprep.subr.mxu0 0.0
  %640 = vmatpush1.msra.mxu0 %v203
  %641 = vmatprep.subr.mxu0 0.0
  %642 = vmatpush1.msra.mxu0 %v204
  %643 = vmatprep.subr.mxu0 0.0
  %644 = vmatpush1.msra.mxu0 %v205
  %645 = vmatprep.subr.mxu0 0.0
  %646 = vmatpush1.msra.mxu0 %v206
  %647 = vmatprep.subr.mxu0 0.0
  %648 = vmatpush1.msra.mxu0 %v207
  %649 = vmatprep.subr.mxu0 0.0
  %650 = vmatpush1.msra.mxu0 %v208
  %651 = vmatprep.subr.mxu0 0.0
  %652 = vmatpush1.msra.mxu0 %v209
  %653 = vmatprep.subr.mxu0 0.0
  %654 = vmatpush1.msra.mxu0 %v210
  %655 = vmatprep.subr.mxu0 0.0
  %656 = vmatpush1.msra.mxu0 %v211
  %657 = vmatprep.subr.mxu0 0.0
  %658 = vmatpush1.msra.mxu0 %v212
  %659 = vmatprep.subr.mxu0 0.0
  %660 = vmatpush1.msra.mxu0 %v213
  %661 = vmatprep.subr.mxu0 0.0
  %662 = vmatpush1.msra.mxu0 %v214
  %663 = vmatprep.subr.mxu0 0.0
  %664 = vmatpush1.msra.mxu0 %v215
  %665 = vmatprep.subr.mxu0 0.0
  %666 = vmatpush1.msra.mxu0 %v216
  %667 = vmatprep.subr.mxu0 0.0
  %668 = vmatpush1.msra.mxu0 %v217
  %669 = vmatprep.subr.mxu0 0.0
  %670 = vmatpush1.msra.mxu0 %v218
  %671 = vmatprep.subr.mxu0 0.0
  %672 = vmatpush1.msra.mxu0 %v219
  %673 = vmatprep.subr.mxu0 0.0
  %674 = vmatpush1.msra.mxu0 %v220
  %675 = vmatprep.subr.mxu0 0.0
  %676 = vmatpush1.msra.mxu0 %v221
  %677 = vmatprep.subr.mxu0 0.0
  %678 = vmatpush1.msra.mxu0 %v222
  %679 = vmatprep.subr.mxu0 0.0
  %680 = vmatpush1.msra.mxu0 %v223
  %681 = vmatprep.subr.mxu0 0.0
  %682 = vmatpush1.msra.mxu0 %v224
  %683 = vmatprep.subr.mxu0 0.0
  %684 = vmatpush1.msra.mxu0 %v225
  %685 = vmatprep.subr.mxu0 0.0
  %686 = vmatpush1.msra.mxu0 %v226
  %687 = vmatprep.subr.mxu0 0.0
  %688 = vmatpush1.msra.mxu0 %v227
  %689 = vmatprep.subr.mxu0 0.0
  %690 = vmatpush1.msra.mxu0 %v228
  %691 = vmatprep.subr.mxu0 0.0
  %692 = vmatpush1.msra.mxu0 %v229
  %693 = vmatprep.subr.mxu0 0.0
  %694 = vmatpush1.msra.mxu0 %v230
  %695 = vmatprep.subr.mxu0 0.0
  %696 = vmatpush1.msra.mxu0 %v231
  %697 = vmatprep.subr.mxu0 0.0
  %698 = vmatpush1.msra.mxu0 %v232
  %699 = vmatprep.subr.mxu0 0.0
  %700 = vmatpush1.msra.mxu0 %v233
  %701 = vmatprep.mubr.f32.mxu0 %v125
  %702 = vmatmul.mubr.f32.gmra.mrb[0].mxu0 %v124
  %v703 = vpop.f32.mrb[0].mxu0
  %v704 = vadd.f32 %v629, %v703
  %v705 = vpop.f32.mrb[0].mxu0
  %706 = vmatprep.mubr.f32.mxu0 %v149
  %707 = vmatmul.mubr.f32.gmra.mrb[0].mxu0 %v148
  %v708 = vpop.f32.mrb[0].mxu0
  %v709 = vadd.f32 %v634, %v708
  %v710 = vpop.f32.mrb[0].mxu0
  %711 = vdwg.mxu0
  %712 = vmatprep.subr.mxu0 0.0
  %713 = vmatpush1.msra.mxu0 %v234
  %714 = vmatprep.subr.mxu0 0.0
  %715 = vmatpush1.msra.mxu0 %v235
  %716 = vmatprep.subr.mxu0 0.0
  %717 = vmatpush1.msra.mxu0 %v236
  %718 = vmatprep.subr.mxu0 0.0
  %719 = vmatpush1.msra.mxu0 %v237
  %720 = vmatprep.subr.mxu0 0.0
  %721 = vmatpush1.msra.mxu0 %v238
  %722 = vmatprep.subr.mxu0 0.0
  %723 = vmatpush1.msra.mxu0 %v239
  %724 = vmatprep.subr.mxu0 0.0
  %725 = vmatpush1.msra.mxu0 %v240
  %726 = vmatprep.subr.mxu0 0.0
  %727 = vmatpush1.msra.mxu0 %v241
  %728 = vmatprep.subr.mxu0 0.0
  %729 = vmatpush1.msra.mxu0 %v242
  %730 = vmatprep.subr.mxu0 0.0
  %731 = vmatpush1.msra.mxu0 %v243
  %732 = vmatprep.subr.mxu0 0.0
  %733 = vmatpush1.msra.mxu0 %v244
  %734 = vmatprep.subr.mxu0 0.0
  %735 = vmatpush1.msra.mxu0 %v245
  %736 = vmatprep.subr.mxu0 0.0
  %737 = vmatpush1.msra.mxu0 %v246
  %738 = vmatprep.subr.mxu0 0.0
  %739 = vmatpush1.msra.mxu0 %v247
  %740 = vmatprep.subr.mxu0 0.0
  %741 = vmatpush1.msra.mxu0 %v248
  %742 = vmatprep.subr.mxu0 0.0
  %743 = vmatpush1.msra.mxu0 %v249
  %744 = vmatprep.subr.mxu0 0.0
  %745 = vmatpush1.msra.mxu0 %v250
  %746 = vmatprep.subr.mxu0 0.0
  %747 = vmatpush1.msra.mxu0 %v251
  %748 = vmatprep.subr.mxu0 0.0
  %749 = vmatpush1.msra.mxu0 %v252
  %750 = vmatprep.subr.mxu0 0.0
  %751 = vmatpush1.msra.mxu0 %v253
  %752 = vmatprep.subr.mxu0 0.0
  %753 = vmatpush1.msra.mxu0 %v254
  %754 = vmatprep.subr.mxu0 0.0
  %755 = vmatpush1.msra.mxu0 %v255
  %756 = vmatprep.subr.mxu0 0.0
  %757 = vmatpush1.msra.mxu0 %v256
  %758 = vmatprep.subr.mxu0 0.0
  %759 = vmatpush1.msra.mxu0 %v257
  %760 = vmatprep.subr.mxu0 0.0
  %761 = vmatpush1.msra.mxu0 %v258
  %762 = vmatprep.subr.mxu0 0.0
  %763 = vmatpush1.msra.mxu0 %v259
  %764 = vmatprep.subr.mxu0 0.0
  %765 = vmatpush1.msra.mxu0 %v260
  %766 = vmatprep.subr.mxu0 0.0
  %767 = vmatpush1.msra.mxu0 %v261
  %768 = vmatprep.subr.mxu0 0.0
  %769 = vmatpush1.msra.mxu0 %v262
  %770 = vmatprep.subr.mxu0 0.0
  %771 = vmatpush1.msra.mxu0 %v263
  %772 = vmatprep.subr.mxu0 0.0
  %773 = vmatpush1.msra.mxu0 %v264
  %774 = vmatprep.subr.mxu0 0.0
  %775 = vmatpush1.msra.mxu0 %v265
  %776 = vmatprep.mubr.f32.mxu0 %v127
  %777 = vmatmul.mubr.f32.gmra.mrb[0].mxu0 %v126
  %v778 = vpop.f32.mrb[0].mxu0
  %v779 = vadd.f32 %v704, %v778
  %v780 = vpop.f32.mrb[0].mxu0
  %781 = vmatprep.mubr.f32.mxu0 %v151
  %782 = vmatmul.mubr.f32.gmra.mrb[0].mxu0 %v150
  %v783 = vpop.f32.mrb[0].mxu0
  %v784 = vadd.f32 %v709, %v783
  %v785 = vpop.f32.mrb[0].mxu0
  %786 = vdwg.mxu0
  %787 = vmatprep.subr.mxu0 0.0
  %788 = vmatpush1.msra.mxu0 %v266
  %789 = vmatprep.subr.mxu0 0.0
  %790 = vmatpush1.msra.mxu0 %v267
  %791 = vmatprep.subr.mxu0 0.0
  %792 = vmatpush1.msra.mxu0 %v268
  %793 = vmatprep.subr.mxu0 0.0
  %794 = vmatpush1.msra.mxu0 %v269
  %795 = vmatprep.subr.mxu0 0.0
  %796 = vmatpush1.msra.mxu0 %v270
  %797 = vmatprep.subr.mxu0 0.0
  %798 = vmatpush1.msra.mxu0 %v271
  %799 = vmatprep.subr.mxu0 0.0
  %800 = vmatpush1.msra.mxu0 %v272
  %801 = vmatprep.subr.mxu0 0.0
  %802 = vmatpush1.msra.mxu0 %v273
  %803 = vmatprep.subr.mxu0 0.0
  %804 = vmatpush1.msra.mxu0 %v274
  %805 = vmatprep.subr.mxu0 0.0
  %806 = vmatpush1.msra.mxu0 %v275
  %807 = vmatprep.subr.mxu0 0.0
  %808 = vmatpush1.msra.mxu0 %v276
  %809 = vmatprep.subr.mxu0 0.0
  %810 = vmatpush1.msra.mxu0 %v277
  %811 = vmatprep.subr.mxu0 0.0
  %812 = vmatpush1.msra.mxu0 %v278
  %813 = vmatprep.subr.mxu0 0.0
  %814 = vmatpush1.msra.mxu0 %v279
  %815 = vmatprep.subr.mxu0 0.0
  %816 = vmatpush1.msra.mxu0 %v280
  %817 = vmatprep.subr.mxu0 0.0
  %818 = vmatpush1.msra.mxu0 %v281
  %819 = vmatprep.subr.mxu0 0.0
  %820 = vmatpush1.msra.mxu0 %v282
  %821 = vmatprep.subr.mxu0 0.0
  %822 = vmatpush1.msra.mxu0 %v283
  %823 = vmatprep.subr.mxu0 0.0
  %824 = vmatpush1.msra.mxu0 %v284
  %825 = vmatprep.subr.mxu0 0.0
  %826 = vmatpush1.msra.mxu0 %v285
  %827 = vmatprep.subr.mxu0 0.0
  %828 = vmatpush1.msra.mxu0 %v286
  %829 = vmatprep.subr.mxu0 0.0
  %830 = vmatpush1.msra.mxu0 %v287
  %831 = vmatprep.subr.mxu0 0.0
  %832 = vmatpush1.msra.mxu0 %v288
  %833 = vmatprep.subr.mxu0 0.0
  %834 = vmatpush1.msra.mxu0 %v289
  %835 = vmatprep.subr.mxu0 0.0
  %836 = vmatpush1.msra.mxu0 %v290
  %837 = vmatprep.subr.mxu0 0.0
  %838 = vmatpush1.msra.mxu0 %v291
  %839 = vmatprep.subr.mxu0 0.0
  %840 = vmatpush1.msra.mxu0 %v292
  %841 = vmatprep.subr.mxu0 0.0
  %842 = vmatpush1.msra.mxu0 %v293
  %843 = vmatprep.subr.mxu0 0.0
  %844 = vmatpush1.msra.mxu0 %v294
  %845 = vmatprep.subr.mxu0 0.0
  %846 = vmatpush1.msra.mxu0 %v295
  %847 = vmatprep.subr.mxu0 0.0
  %848 = vmatpush1.msra.mxu0 %v296
  %849 = vmatprep.subr.mxu0 0.0
  %850 = vmatpush1.msra.mxu0 %v297
  %851 = vmatprep.mubr.f32.mxu0 %v129
  %852 = vmatmul.mubr.f32.gmra.mrb[0].mxu0 %v128
  %v853 = vpop.f32.mrb[0].mxu0
  %v854 = vadd.f32 %v779, %v853
  %v855 = vpop.f32.mrb[0].mxu0
  %856 = vmatprep.mubr.f32.mxu0 %v153
  %857 = vmatmul.mubr.f32.gmra.mrb[0].mxu0 %v152
  %v858 = vpop.f32.mrb[0].mxu0
  %v859 = vadd.f32 %v784, %v858
  %v860 = vpop.f32.mrb[0].mxu0
  %861 = vdwg.mxu0
  %862 = vmatprep.subr.mxu0 0.0
  %863 = vmatpush1.msra.mxu0 %v298
  %864 = vmatprep.subr.mxu0 0.0
  %865 = vmatpush1.msra.mxu0 %v299
  %866 = vmatprep.subr.mxu0 0.0
  %867 = vmatpush1.msra.mxu0 %v300
  %868 = vmatprep.subr.mxu0 0.0
  %869 = vmatpush1.msra.mxu0 %v301
  %870 = vmatprep.subr.mxu0 0.0
  %871 = vmatpush1.msra.mxu0 %v302
  %872 = vmatprep.subr.mxu0 0.0
  %873 = vmatpush1.msra.mxu0 %v303
  %874 = vmatprep.subr.mxu0 0.0
  %875 = vmatpush1.msra.mxu0 %v304
  %876 = vmatprep.subr.mxu0 0.0
  %877 = vmatpush1.msra.mxu0 %v305
  %878 = vmatprep.subr.mxu0 0.0
  %879 = vmatpush1.msra.mxu0 %v306
  %880 = vmatprep.subr.mxu0 0.0
  %881 = vmatpush1.msra.mxu0 %v307
  %882 = vmatprep.subr.mxu0 0.0
  %883 = vmatpush1.msra.mxu0 %v308
  %884 = vmatprep.subr.mxu0 0.0
  %885 = vmatpush1.msra.mxu0 %v309
  %886 = vmatprep.subr.mxu0 0.0
  %887 = vmatpush1.msra.mxu0 %v310
  %888 = vmatprep.subr.mxu0 0.0
  %889 = vmatpush1.msra.mxu0 %v311
  %890 = vmatprep.subr.mxu0 0.0
  %891 = vmatpush1.msra.mxu0 %v312
  %892 = vmatprep.subr.mxu0 0.0
  %893 = vmatpush1.msra.mxu0 %v313
  %894 = vmatprep.subr.mxu0 0.0
  %895 = vmatpush1.msra.mxu0 %v314
  %896 = vmatprep.subr.mxu0 0.0
  %897 = vmatpush1.msra.mxu0 %v315
  %898 = vmatprep.subr.mxu0 0.0
  %899 = vmatpush1.msra.mxu0 %v316
  %900 = vmatprep.subr.mxu0 0.0
  %901 = vmatpush1.msra.mxu0 %v317
  %902 = vmatprep.subr.mxu0 0.0
  %903 = vmatpush1.msra.mxu0 %v318
  %904 = vmatprep.subr.mxu0 0.0
  %905 = vmatpush1.msra.mxu0 %v319
  %906 = vmatprep.subr.mxu0 0.0
  %907 = vmatpush1.msra.mxu0 %v320
  %908 = vmatprep.subr.mxu0 0.0
  %909 = vmatpush1.msra.mxu0 %v321
  %910 = vmatprep.subr.mxu0 0.0
  %911 = vmatpush1.msra.mxu0 %v322
  %912 = vmatprep.subr.mxu0 0.0
  %913 = vmatpush1.msra.mxu0 %v323
  %914 = vmatprep.subr.mxu0 0.0
  %915 = vmatpush1.msra.mxu0 %v324
  %916 = vmatprep.subr.mxu0 0.0
  %917 = vmatpush1.msra.mxu0 %v325
  %918 = vmatprep.subr.mxu0 0.0
  %919 = vmatpush1.msra.mxu0 %v326
  %920 = vmatprep.subr.mxu0 0.0
  %921 = vmatpush1.msra.mxu0 %v327
  %922 = vmatprep.subr.mxu0 0.0
  %923 = vmatpush1.msra.mxu0 %v328
  %924 = vmatprep.subr.mxu0 0.0
  %925 = vmatpush1.msra.mxu0 %v329
  %926 = vmatprep.mubr.f32.mxu0 %v131
  %927 = vmatmul.mubr.f32.gmra.mrb[0].mxu0 %v130
  %v928 = vpop.f32.mrb[0].mxu0
  %v929 = vadd.f32 %v854, %v928
  %v930 = vpop.f32.mrb[0].mxu0
  %931 = vmatprep.mubr.f32.mxu0 %v155
  %932 = vmatmul.mubr.f32.gmra.mrb[0].mxu0 %v154
  %v933 = vpop.f32.mrb[0].mxu0
  %v934 = vadd.f32 %v859, %v933
  %v935 = vpop.f32.mrb[0].mxu0
  %936 = vdwg.mxu0
  %937 = vmatprep.subr.mxu0 0.0
  %938 = vmatpush1.msra.mxu0 %v330
  %939 = vmatprep.subr.mxu0 0.0
  %940 = vmatpush1.msra.mxu0 %v331
  %941 = vmatprep.subr.mxu0 0.0
  %942 = vmatpush1.msra.mxu0 %v332
  %943 = vmatprep.subr.mxu0 0.0
  %944 = vmatpush1.msra.mxu0 %v333
  %945 = vmatprep.subr.mxu0 0.0
  %946 = vmatpush1.msra.mxu0 %v334
  %947 = vmatprep.subr.mxu0 0.0
  %948 = vmatpush1.msra.mxu0 %v335
  %949 = vmatprep.subr.mxu0 0.0
  %950 = vmatpush1.msra.mxu0 %v336
  %951 = vmatprep.subr.mxu0 0.0
  %952 = vmatpush1.msra.mxu0 %v337
  %953 = vmatprep.subr.mxu0 0.0
  %954 = vmatpush1.msra.mxu0 %v338
  %955 = vmatprep.subr.mxu0 0.0
  %956 = vmatpush1.msra.mxu0 %v339
  %957 = vmatprep.subr.mxu0 0.0
  %958 = vmatpush1.msra.mxu0 %v340
  %959 = vmatprep.subr.mxu0 0.0
  %960 = vmatpush1.msra.mxu0 %v341
  %961 = vmatprep.subr.mxu0 0.0
  %962 = vmatpush1.msra.mxu0 %v342
  %963 = vmatprep.subr.mxu0 0.0
  %964 = vmatpush1.msra.mxu0 %v343
  %965 = vmatprep.subr.mxu0 0.0
  %966 = vmatpush1.msra.mxu0 %v344
  %967 = vmatprep.subr.mxu0 0.0
  %968 = vmatpush1.msra.mxu0 %v345
  %969 = vmatprep.subr.mxu0 0.0
  %970 = vmatpush1.msra.mxu0 %v346
  %971 = vmatprep.subr.mxu0 0.0
  %972 = vmatpush1.msra.mxu0 %v347
  %973 = vmatprep.subr.mxu0 0.0
  %974 = vmatpush1.msra.mxu0 %v348
  %975 = vmatprep.subr.mxu0 0.0
  %976 = vmatpush1.msra.mxu0 %v349
  %977 = vmatprep.subr.mxu0 0.0
  %978 = vmatpush1.msra.mxu0 %v350
  %979 = vmatprep.subr.mxu0 0.0
  %980 = vmatpush1.msra.mxu0 %v351
  %981 = vmatprep.subr.mxu0 0.0
  %982 = vmatpush1.msra.mxu0 %v352
  %983 = vmatprep.subr.mxu0 0.0
  %984 = vmatpush1.msra.mxu0 %v353
  %985 = vmatprep.subr.mxu0 0.0
  %986 = vmatpush1.msra.mxu0 %v354
  %987 = vmatprep.subr.mxu0 0.0
  %988 = vmatpush1.msra.mxu0 %v355
  %989 = vmatprep.subr.mxu0 0.0
  %990 = vmatpush1.msra.mxu0 %v356
  %991 = vmatprep.subr.mxu0 0.0
  %992 = vmatpush1.msra.mxu0 %v357
  %993 = vmatprep.subr.mxu0 0.0
  %994 = vmatpush1.msra.mxu0 %v358
  %995 = vmatprep.subr.mxu0 0.0
  %996 = vmatpush1.msra.mxu0 %v359
  %997 = vmatprep.subr.mxu0 0.0
  %998 = vmatpush1.msra.mxu0 %v360
  %999 = vmatprep.subr.mxu0 0.0
  %1000 = vmatpush1.msra.mxu0 %v361
  %1001 = vmatprep.mubr.f32.mxu0 %v133
  %1002 = vmatmul.mubr.f32.gmra.mrb[0].mxu0 %v132
  %v1003 = vpop.f32.mrb[0].mxu0
  %v1004 = vadd.f32 %v929, %v1003
  %v1005 = vpop.f32.mrb[0].mxu0
  %1006 = vmatprep.mubr.f32.mxu0 %v157
  %1007 = vmatmul.mubr.f32.gmra.mrb[0].mxu0 %v156
  %v1008 = vpop.f32.mrb[0].mxu0
  %v1009 = vadd.f32 %v934, %v1008
  %v1010 = vpop.f32.mrb[0].mxu0
  %1011 = vdwg.mxu0
  %1012 = vmatprep.subr.mxu0 0.0
  %1013 = vmatpush1.msra.mxu0 %v362
  %1014 = vmatprep.subr.mxu0 0.0
  %1015 = vmatpush1.msra.mxu0 %v363
  %1016 = vmatprep.subr.mxu0 0.0
  %1017 = vmatpush1.msra.mxu0 %v364
  %1018 = vmatprep.subr.mxu0 0.0
  %1019 = vmatpush1.msra.mxu0 %v365
  %1020 = vmatprep.subr.mxu0 0.0
  %1021 = vmatpush1.msra.mxu0 %v366
  %1022 = vmatprep.subr.mxu0 0.0
  %1023 = vmatpush1.msra.mxu0 %v367
  %1024 = vmatprep.subr.mxu0 0.0
  %1025 = vmatpush1.msra.mxu0 %v368
  %1026 = vmatprep.subr.mxu0 0.0
  %1027 = vmatpush1.msra.mxu0 %v369
  %1028 = vmatprep.subr.mxu0 0.0
  %1029 = vmatpush1.msra.mxu0 %v370
  %1030 = vmatprep.subr.mxu0 0.0
  %1031 = vmatpush1.msra.mxu0 %v371
  %1032 = vmatprep.subr.mxu0 0.0
  %1033 = vmatpush1.msra.mxu0 %v372
  %1034 = vmatprep.subr.mxu0 0.0
  %1035 = vmatpush1.msra.mxu0 %v373
  %1036 = vmatprep.subr.mxu0 0.0
  %1037 = vmatpush1.msra.mxu0 %v374
  %1038 = vmatprep.subr.mxu0 0.0
  %1039 = vmatpush1.msra.mxu0 %v375
  %1040 = vmatprep.subr.mxu0 0.0
  %1041 = vmatpush1.msra.mxu0 %v376
  %1042 = vmatprep.subr.mxu0 0.0
  %1043 = vmatpush1.msra.mxu0 %v377
  %1044 = vmatprep.subr.mxu0 0.0
  %1045 = vmatpush1.msra.mxu0 %v378
  %1046 = vmatprep.subr.mxu0 0.0
  %1047 = vmatpush1.msra.mxu0 %v379
  %1048 = vmatprep.subr.mxu0 0.0
  %1049 = vmatpush1.msra.mxu0 %v380
  %1050 = vmatprep.subr.mxu0 0.0
  %1051 = vmatpush1.msra.mxu0 %v381
  %1052 = vmatprep.subr.mxu0 0.0
  %1053 = vmatpush1.msra.mxu0 %v382
  %1054 = vmatprep.subr.mxu0 0.0
  %1055 = vmatpush1.msra.mxu0 %v383
  %1056 = vmatprep.subr.mxu0 0.0
  %1057 = vmatpush1.msra.mxu0 %v384
  %1058 = vmatprep.subr.mxu0 0.0
  %1059 = vmatpush1.msra.mxu0 %v385
  %1060 = vmatprep.subr.mxu0 0.0
  %1061 = vmatpush1.msra.mxu0 %v386
  %1062 = vmatprep.subr.mxu0 0.0
  %1063 = vmatpush1.msra.mxu0 %v387
  %1064 = vmatprep.subr.mxu0 0.0
  %1065 = vmatpush1.msra.mxu0 %v388
  %1066 = vmatprep.subr.mxu0 0.0
  %1067 = vmatpush1.msra.mxu0 %v389
  %1068 = vmatprep.subr.mxu0 0.0
  %1069 = vmatpush1.msra.mxu0 %v390
  %1070 = vmatprep.subr.mxu0 0.0
  %1071 = vmatpush1.msra.mxu0 %v391
  %1072 = vmatprep.subr.mxu0 0.0
  %1073 = vmatpush1.msra.mxu0 %v392
  %1074 = vmatprep.subr.mxu0 0.0
  %1075 = vmatpush1.msra.mxu0 %v393
  %1076 = vmatprep.mubr.f32.mxu0 %v135
  %1077 = vmatmul.mubr.f32.gmra.mrb[0].mxu0 %v134
  %v1078 = vpop.f32.mrb[0].mxu0
  %v1079 = vadd.f32 %v1004, %v1078
  %v1080 = vpop.f32.mrb[0].mxu0
  %1081 = vmatprep.mubr.f32.mxu0 %v159
  %1082 = vmatmul.mubr.f32.gmra.mrb[0].mxu0 %v158
  %v1083 = vpop.f32.mrb[0].mxu0
  %v1084 = vadd.f32 %v1009, %v1083
  %v1085 = vpop.f32.mrb[0].mxu0
  %1086 = vdwg.mxu0
  %1087 = vmatprep.subr.mxu0 0.0
  %1088 = vmatpush1.msra.mxu0 %v394
  %1089 = vmatprep.subr.mxu0 0.0
  %1090 = vmatpush1.msra.mxu0 %v395
  %1091 = vmatprep.subr.mxu0 0.0
  %1092 = vmatpush1.msra.mxu0 %v396
  %1093 = vmatprep.subr.mxu0 0.0
  %1094 = vmatpush1.msra.mxu0 %v397
  %1095 = vmatprep.subr.mxu0 0.0
  %1096 = vmatpush1.msra.mxu0 %v398
  %1097 = vmatprep.subr.mxu0 0.0
  %1098 = vmatpush1.msra.mxu0 %v399
  %1099 = vmatprep.subr.mxu0 0.0
  %1100 = vmatpush1.msra.mxu0 %v400
  %1101 = vmatprep.subr.mxu0 0.0
  %1102 = vmatpush1.msra.mxu0 %v401
  %1103 = vmatprep.subr.mxu0 0.0
  %1104 = vmatpush1.msra.mxu0 %v402
  %1105 = vmatprep.subr.mxu0 0.0
  %1106 = vmatpush1.msra.mxu0 %v403
  %1107 = vmatprep.subr.mxu0 0.0
  %1108 = vmatpush1.msra.mxu0 %v404
  %1109 = vmatprep.subr.mxu0 0.0
  %1110 = vmatpush1.msra.mxu0 %v405
  %1111 = vmatprep.subr.mxu0 0.0
  %1112 = vmatpush1.msra.mxu0 %v406
  %1113 = vmatprep.subr.mxu0 0.0
  %1114 = vmatpush1.msra.mxu0 %v407
  %1115 = vmatprep.subr.mxu0 0.0
  %1116 = vmatpush1.msra.mxu0 %v408
  %1117 = vmatprep.subr.mxu0 0.0
  %1118 = vmatpush1.msra.mxu0 %v409
  %1119 = vmatprep.subr.mxu0 0.0
  %1120 = vmatpush1.msra.mxu0 %v410
  %1121 = vmatprep.subr.mxu0 0.0
  %1122 = vmatpush1.msra.mxu0 %v411
  %1123 = vmatprep.subr.mxu0 0.0
  %1124 = vmatpush1.msra.mxu0 %v412
  %1125 = vmatprep.subr.mxu0 0.0
  %1126 = vmatpush1.msra.mxu0 %v413
  %1127 = vmatprep.subr.mxu0 0.0
  %1128 = vmatpush1.msra.mxu0 %v414
  %1129 = vmatprep.subr.mxu0 0.0
  %1130 = vmatpush1.msra.mxu0 %v415
  %1131 = vmatprep.subr.mxu0 0.0
  %1132 = vmatpush1.msra.mxu0 %v416
  %1133 = vmatprep.subr.mxu0 0.0
  %1134 = vmatpush1.msra.mxu0 %v417
  %1135 = vmatprep.subr.mxu0 0.0
  %1136 = vmatpush1.msra.mxu0 %v418
  %1137 = vmatprep.subr.mxu0 0.0
  %1138 = vmatpush1.msra.mxu0 %v419
  %1139 = vmatprep.subr.mxu0 0.0
  %1140 = vmatpush1.msra.mxu0 %v420
  %1141 = vmatprep.subr.mxu0 0.0
  %1142 = vmatpush1.msra.mxu0 %v421
  %1143 = vmatprep.subr.mxu0 0.0
  %1144 = vmatpush1.msra.mxu0 %v422
  %1145 = vmatprep.subr.mxu0 0.0
  %1146 = vmatpush1.msra.mxu0 %v423
  %1147 = vmatprep.subr.mxu0 0.0
  %1148 = vmatpush1.msra.mxu0 %v424
  %1149 = vmatprep.subr.mxu0 0.0
  %1150 = vmatpush1.msra.mxu0 %v425
  %1151 = vmatprep.mubr.f32.mxu0 %v137
  %1152 = vmatmul.mubr.f32.gmra.mrb[0].mxu0 %v136
  %v1153 = vpop.f32.mrb[0].mxu0
  %v1154 = vadd.f32 %v1079, %v1153
  %v1155 = vpop.f32.mrb[0].mxu0
  %1156 = vmatprep.mubr.f32.mxu0 %v161
  %1157 = vmatmul.mubr.f32.gmra.mrb[0].mxu0 %v160
  %v1158 = vpop.f32.mrb[0].mxu0
  %v1159 = vadd.f32 %v1084, %v1158
  %v1160 = vpop.f32.mrb[0].mxu0
  %1161 = vdwg.mxu0
  %1162 = vmatprep.subr.mxu0 0.0
  %1163 = vmatpush1.msra.mxu0 %v426
  %1164 = vmatprep.subr.mxu0 0.0
  %1165 = vmatpush1.msra.mxu0 %v427
  %1166 = vmatprep.subr.mxu0 0.0
  %1167 = vmatpush1.msra.mxu0 %v428
  %1168 = vmatprep.subr.mxu0 0.0
  %1169 = vmatpush1.msra.mxu0 %v429
  %1170 = vmatprep.subr.mxu0 0.0
  %1171 = vmatpush1.msra.mxu0 %v430
  %1172 = vmatprep.subr.mxu0 0.0
  %1173 = vmatpush1.msra.mxu0 %v431
  %1174 = vmatprep.subr.mxu0 0.0
  %1175 = vmatpush1.msra.mxu0 %v432
  %1176 = vmatprep.subr.mxu0 0.0
  %1177 = vmatpush1.msra.mxu0 %v433
  %1178 = vmatprep.subr.mxu0 0.0
  %1179 = vmatpush1.msra.mxu0 %v434
  %1180 = vmatprep.subr.mxu0 0.0
  %1181 = vmatpush1.msra.mxu0 %v435
  %1182 = vmatprep.subr.mxu0 0.0
  %1183 = vmatpush1.msra.mxu0 %v436
  %1184 = vmatprep.subr.mxu0 0.0
  %1185 = vmatpush1.msra.mxu0 %v437
  %1186 = vmatprep.subr.mxu0 0.0
  %1187 = vmatpush1.msra.mxu0 %v438
  %1188 = vmatprep.subr.mxu0 0.0
  %1189 = vmatpush1.msra.mxu0 %v439
  %1190 = vmatprep.subr.mxu0 0.0
  %1191 = vmatpush1.msra.mxu0 %v440
  %1192 = vmatprep.subr.mxu0 0.0
  %1193 = vmatpush1.msra.mxu0 %v441
  %1194 = vmatprep.subr.mxu0 0.0
  %1195 = vmatpush1.msra.mxu0 %v442
  %1196 = vmatprep.subr.mxu0 0.0
  %1197 = vmatpush1.msra.mxu0 %v443
  %1198 = vmatprep.subr.mxu0 0.0
  %1199 = vmatpush1.msra.mxu0 %v444
  %1200 = vmatprep.subr.mxu0 0.0
  %1201 = vmatpush1.msra.mxu0 %v445
  %1202 = vmatprep.subr.mxu0 0.0
  %1203 = vmatpush1.msra.mxu0 %v446
  %1204 = vmatprep.subr.mxu0 0.0
  %1205 = vmatpush1.msra.mxu0 %v447
  %1206 = vmatprep.subr.mxu0 0.0
  %1207 = vmatpush1.msra.mxu0 %v448
  %1208 = vmatprep.subr.mxu0 0.0
  %1209 = vmatpush1.msra.mxu0 %v449
  %1210 = vmatprep.subr.mxu0 0.0
  %1211 = vmatpush1.msra.mxu0 %v450
  %1212 = vmatprep.subr.mxu0 0.0
  %1213 = vmatpush1.msra.mxu0 %v451
  %1214 = vmatprep.subr.mxu0 0.0
  %1215 = vmatpush1.msra.mxu0 %v452
  %1216 = vmatprep.subr.mxu0 0.0
  %1217 = vmatpush1.msra.mxu0 %v453
  %1218 = vmatprep.subr.mxu0 0.0
  %1219 = vmatpush1.msra.mxu0 %v454
  %1220 = vmatprep.subr.mxu0 0.0
  %1221 = vmatpush1.msra.mxu0 %v455
  %1222 = vmatprep.subr.mxu0 0.0
  %1223 = vmatpush1.msra.mxu0 %v456
  %1224 = vmatprep.subr.mxu0 0.0
  %1225 = vmatpush1.msra.mxu0 %v457
  %1226 = vmatprep.mubr.f32.mxu0 %v139
  %1227 = vmatmul.mubr.f32.gmra.mrb[0].mxu0 %v138
  %v1228 = vpop.f32.mrb[0].mxu0
  %v1229 = vadd.f32 %v1154, %v1228
  %v1230 = vpop.f32.mrb[0].mxu0
  %1231 = vmatprep.mubr.f32.mxu0 %v163
  %1232 = vmatmul.mubr.f32.gmra.mrb[0].mxu0 %v162
  %v1233 = vpop.f32.mrb[0].mxu0
  %v1234 = vadd.f32 %v1159, %v1233
  %v1235 = vpop.f32.mrb[0].mxu0
  %1236 = vdwg.mxu0
  %1237 = vmatprep.subr.mxu0 0.0
  %1238 = vmatpush1.msra.mxu0 %v458
  %1239 = vmatprep.subr.mxu0 0.0
  %1240 = vmatpush1.msra.mxu0 %v459
  %1241 = vmatprep.subr.mxu0 0.0
  %1242 = vmatpush1.msra.mxu0 %v460
  %1243 = vmatprep.subr.mxu0 0.0
  %1244 = vmatpush1.msra.mxu0 %v461
  %1245 = vmatprep.subr.mxu0 0.0
  %1246 = vmatpush1.msra.mxu0 %v462
  %1247 = vmatprep.subr.mxu0 0.0
  %1248 = vmatpush1.msra.mxu0 %v463
  %1249 = vmatprep.subr.mxu0 0.0
  %1250 = vmatpush1.msra.mxu0 %v464
  %1251 = vmatprep.subr.mxu0 0.0
  %1252 = vmatpush1.msra.mxu0 %v465
  %1253 = vmatprep.subr.mxu0 0.0
  %1254 = vmatpush1.msra.mxu0 %v466
  %1255 = vmatprep.subr.mxu0 0.0
  %1256 = vmatpush1.msra.mxu0 %v467
  %1257 = vmatprep.subr.mxu0 0.0
  %1258 = vmatpush1.msra.mxu0 %v468
  %1259 = vmatprep.subr.mxu0 0.0
  %1260 = vmatpush1.msra.mxu0 %v469
  %1261 = vmatprep.subr.mxu0 0.0
  %1262 = vmatpush1.msra.mxu0 %v470
  %1263 = vmatprep.subr.mxu0 0.0
  %1264 = vmatpush1.msra.mxu0 %v471
  %1265 = vmatprep.subr.mxu0 0.0
  %1266 = vmatpush1.msra.mxu0 %v472
  %1267 = vmatprep.subr.mxu0 0.0
  %1268 = vmatpush1.msra.mxu0 %v473
  %1269 = vmatprep.subr.mxu0 0.0
  %1270 = vmatpush1.msra.mxu0 %v474
  %1271 = vmatprep.subr.mxu0 0.0
  %1272 = vmatpush1.msra.mxu0 %v475
  %1273 = vmatprep.subr.mxu0 0.0
  %1274 = vmatpush1.msra.mxu0 %v476
  %1275 = vmatprep.subr.mxu0 0.0
  %1276 = vmatpush1.msra.mxu0 %v477
  %1277 = vmatprep.subr.mxu0 0.0
  %1278 = vmatpush1.msra.mxu0 %v478
  %1279 = vmatprep.subr.mxu0 0.0
  %1280 = vmatpush1.msra.mxu0 %v479
  %1281 = vmatprep.subr.mxu0 0.0
  %1282 = vmatpush1.msra.mxu0 %v480
  %1283 = vmatprep.subr.mxu0 0.0
  %1284 = vmatpush1.msra.mxu0 %v481
  %1285 = vmatprep.subr.mxu0 0.0
  %1286 = vmatpush1.msra.mxu0 %v482
  %1287 = vmatprep.subr.mxu0 0.0
  %1288 = vmatpush1.msra.mxu0 %v483
  %1289 = vmatprep.subr.mxu0 0.0
  %1290 = vmatpush1.msra.mxu0 %v484
  %1291 = vmatprep.subr.mxu0 0.0
  %1292 = vmatpush1.msra.mxu0 %v485
  %1293 = vmatprep.subr.mxu0 0.0
  %1294 = vmatpush1.msra.mxu0 %v486
  %1295 = vmatprep.subr.mxu0 0.0
  %1296 = vmatpush1.msra.mxu0 %v487
  %1297 = vmatprep.subr.mxu0 0.0
  %1298 = vmatpush1.msra.mxu0 %v488
  %1299 = vmatprep.subr.mxu0 0.0
  %1300 = vmatpush1.msra.mxu0 %v489
  %1301 = vmatprep.mubr.f32.mxu0 %v141
  %1302 = vmatmul.mubr.f32.gmra.mrb[0].mxu0 %v140
  %v1303 = vpop.f32.mrb[0].mxu0
  %v1304 = vadd.f32 %v1229, %v1303
  %v1305 = vpop.f32.mrb[0].mxu0
  %1306 = vmatprep.mubr.f32.mxu0 %v165
  %1307 = vmatmul.mubr.f32.gmra.mrb[0].mxu0 %v164
  %v1308 = vpop.f32.mrb[0].mxu0
  %v1309 = vadd.f32 %v1234, %v1308
  %v1310 = vpop.f32.mrb[0].mxu0
  %1311 = vdwg.mxu0
  %1312 = vmatprep.subr.mxu0 0.0
  %1313 = vmatpush1.msra.mxu0 %v490
  %1314 = vmatprep.subr.mxu0 0.0
  %1315 = vmatpush1.msra.mxu0 %v491
  %1316 = vmatprep.subr.mxu0 0.0
  %1317 = vmatpush1.msra.mxu0 %v492
  %1318 = vmatprep.subr.mxu0 0.0
  %1319 = vmatpush1.msra.mxu0 %v493
  %1320 = vmatprep.subr.mxu0 0.0
  %1321 = vmatpush1.msra.mxu0 %v494
  %1322 = vmatprep.subr.mxu0 0.0
  %1323 = vmatpush1.msra.mxu0 %v495
  %1324 = vmatprep.subr.mxu0 0.0
  %1325 = vmatpush1.msra.mxu0 %v496
  %1326 = vmatprep.subr.mxu0 0.0
  %1327 = vmatpush1.msra.mxu0 %v497
  %1328 = vmatprep.subr.mxu0 0.0
  %1329 = vmatpush1.msra.mxu0 %v498
  %1330 = vmatprep.subr.mxu0 0.0
  %1331 = vmatpush1.msra.mxu0 %v499
  %1332 = vmatprep.subr.mxu0 0.0
  %1333 = vmatpush1.msra.mxu0 %v500
  %1334 = vmatprep.subr.mxu0 0.0
  %1335 = vmatpush1.msra.mxu0 %v501
  %1336 = vmatprep.subr.mxu0 0.0
  %1337 = vmatpush1.msra.mxu0 %v502
  %1338 = vmatprep.subr.mxu0 0.0
  %1339 = vmatpush1.msra.mxu0 %v503
  %1340 = vmatprep.subr.mxu0 0.0
  %1341 = vmatpush1.msra.mxu0 %v504
  %1342 = vmatprep.subr.mxu0 0.0
  %1343 = vmatpush1.msra.mxu0 %v505
  %1344 = vmatprep.subr.mxu0 0.0
  %1345 = vmatpush1.msra.mxu0 %v506
  %1346 = vmatprep.subr.mxu0 0.0
  %1347 = vmatpush1.msra.mxu0 %v507
  %1348 = vmatprep.subr.mxu0 0.0
  %1349 = vmatpush1.msra.mxu0 %v508
  %1350 = vmatprep.subr.mxu0 0.0
  %1351 = vmatpush1.msra.mxu0 %v509
  %1352 = vmatprep.subr.mxu0 0.0
  %1353 = vmatpush1.msra.mxu0 %v510
  %1354 = vmatprep.subr.mxu0 0.0
  %1355 = vmatpush1.msra.mxu0 %v511
  %1356 = vmatprep.subr.mxu0 0.0
  %1357 = vmatpush1.msra.mxu0 %v512
  %1358 = vmatprep.subr.mxu0 0.0
  %1359 = vmatpush1.msra.mxu0 %v513
  %1360 = vmatprep.subr.mxu0 0.0
  %1361 = vmatpush1.msra.mxu0 %v514
  %1362 = vmatprep.subr.mxu0 0.0
  %1363 = vmatpush1.msra.mxu0 %v515
  %1364 = vmatprep.subr.mxu0 0.0
  %1365 = vmatpush1.msra.mxu0 %v516
  %1366 = vmatprep.subr.mxu0 0.0
  %1367 = vmatpush1.msra.mxu0 %v517
  %1368 = vmatprep.subr.mxu0 0.0
  %1369 = vmatpush1.msra.mxu0 %v518
  %1370 = vmatprep.subr.mxu0 0.0
  %1371 = vmatpush1.msra.mxu0 %v519
  %1372 = vmatprep.subr.mxu0 0.0
  %1373 = vmatpush1.msra.mxu0 %v520
  %1374 = vmatprep.subr.mxu0 0.0
  %1375 = vmatpush1.msra.mxu0 %v521
  %1376 = vmatprep.mubr.f32.mxu0 %v143
  %1377 = vmatmul.mubr.f32.gmra.mrb[0].mxu0 %v142
  %v1378 = vpop.f32.mrb[0].mxu0
  %v1379 = vadd.f32 %v1304, %v1378
  %v1380 = vpop.f32.mrb[0].mxu0
  %1381 = vmatprep.mubr.f32.mxu0 %v167
  %1382 = vmatmul.mubr.f32.gmra.mrb[0].mxu0 %v166
  %v1383 = vpop.f32.mrb[0].mxu0
  %v1384 = vadd.f32 %v1309, %v1383
  %v1385 = vpop.f32.mrb[0].mxu0
  %1386 = vdwg.mxu0
  %1387 = vmatprep.subr.mxu0 0.0
  %1388 = vmatpush1.msra.mxu0 %v522
  %1389 = vmatprep.subr.mxu0 0.0
  %1390 = vmatpush1.msra.mxu0 %v523
  %1391 = vmatprep.subr.mxu0 0.0
  %1392 = vmatpush1.msra.mxu0 %v524
  %1393 = vmatprep.subr.mxu0 0.0
  %1394 = vmatpush1.msra.mxu0 %v525
  %1395 = vmatprep.subr.mxu0 0.0
  %1396 = vmatpush1.msra.mxu0 %v526
  %1397 = vmatprep.subr.mxu0 0.0
  %1398 = vmatpush1.msra.mxu0 %v527
  %1399 = vmatprep.subr.mxu0 0.0
  %1400 = vmatpush1.msra.mxu0 %v528
  %1401 = vmatprep.subr.mxu0 0.0
  %1402 = vmatpush1.msra.mxu0 %v529
  %1403 = vmatprep.subr.mxu0 0.0
  %1404 = vmatpush1.msra.mxu0 %v530
  %1405 = vmatprep.subr.mxu0 0.0
  %1406 = vmatpush1.msra.mxu0 %v531
  %1407 = vmatprep.subr.mxu0 0.0
  %1408 = vmatpush1.msra.mxu0 %v532
  %1409 = vmatprep.subr.mxu0 0.0
  %1410 = vmatpush1.msra.mxu0 %v533
  %1411 = vmatprep.subr.mxu0 0.0
  %1412 = vmatpush1.msra.mxu0 %v534
  %1413 = vmatprep.subr.mxu0 0.0
  %1414 = vmatpush1.msra.mxu0 %v535
  %1415 = vmatprep.subr.mxu0 0.0
  %1416 = vmatpush1.msra.mxu0 %v536
  %1417 = vmatprep.subr.mxu0 0.0
  %1418 = vmatpush1.msra.mxu0 %v537
  %1419 = vmatprep.subr.mxu0 0.0
  %1420 = vmatpush1.msra.mxu0 %v538
  %1421 = vmatprep.subr.mxu0 0.0
  %1422 = vmatpush1.msra.mxu0 %v539
  %1423 = vmatprep.subr.mxu0 0.0
  %1424 = vmatpush1.msra.mxu0 %v540
  %1425 = vmatprep.subr.mxu0 0.0
  %1426 = vmatpush1.msra.mxu0 %v541
  %1427 = vmatprep.subr.mxu0 0.0
  %1428 = vmatpush1.msra.mxu0 %v542
  %1429 = vmatprep.subr.mxu0 0.0
  %1430 = vmatpush1.msra.mxu0 %v543
  %1431 = vmatprep.subr.mxu0 0.0
  %1432 = vmatpush1.msra.mxu0 %v544
  %1433 = vmatprep.subr.mxu0 0.0
  %1434 = vmatpush1.msra.mxu0 %v545
  %1435 = vmatprep.subr.mxu0 0.0
  %1436 = vmatpush1.msra.mxu0 %v546
  %1437 = vmatprep.subr.mxu0 0.0
  %1438 = vmatpush1.msra.mxu0 %v547
  %1439 = vmatprep.subr.mxu0 0.0
  %1440 = vmatpush1.msra.mxu0 0.0
  %1441 = vmatprep.subr.mxu0 0.0
  %1442 = vmatpush1.msra.mxu0 0.0
  %1443 = vmatprep.subr.mxu0 0.0
  %1444 = vmatpush1.msra.mxu0 0.0
  %1445 = vmatprep.subr.mxu0 0.0
  %1446 = vmatpush1.msra.mxu0 0.0
  %1447 = vmatprep.subr.mxu0 0.0
  %1448 = vmatpush1.msra.mxu0 0.0
  %1449 = vmatprep.subr.mxu0 0.0
  %1450 = vmatpush1.msra.mxu0 0.0
  %1451 = vmatprep.mubr.f32.mxu0 %v557
  %1452 = vmatmul.mubr.f32.gmra.mrb[0].mxu0 %v144
  %v1453 = vpop.f32.mrb[0].mxu0
  %v1454 = vadd.f32 %v1379, %v1453
  %v1455 = vpop.f32.mrb[0].mxu0
  %1456 = vmatprep.mubr.f32.mxu0 %v560
  %1457 = vmatmul.mubr.f32.gmra.mrb[0].mxu0 %v168
  %v1458 = vpop.f32.mrb[0].mxu0
  %v1459 = vadd.f32 %v1384, %v1458
  %v1460 = vpop.f32.mrb[0].mxu0
  %1461 = vdwg.mxu0
  %v1462 = vld [vmem:[%s23] sm:$0xff]
  %v1463 = vld [vmem:[%s23 + $0x8] sm:$0xff]
  %v1464 = vld [vmem:[%s23 + $0x10] sm:$0xff]
  %v1465 = vld [vmem:[%s23 + $0x18] sm:$0xff]
  %v1466 = vld [vmem:[%s23 + $0x20] sm:$0xff]
  %v1467 = vld [vmem:[%s23 + $0x28] sm:$0xff]
  %v1468 = vld [vmem:[%s23 + $0x30] sm:$0xff]
  %v1469 = vld [vmem:[%s23 + $0x38] sm:$0xff]
  %v1470 = vld [vmem:[%s25] sm:$0xff]
  %v1471 = vld [vmem:[%s25 + $0x8] sm:$0xff]
  %v1472 = vld [vmem:[%s25 + $0x10] sm:$0xff]
  %v1473 = vld [vmem:[%s25 + $0x18] sm:$0xff]
  %v1474 = vld [vmem:[%s25 + $0x20] sm:$0xff]
  %v1475 = vld [vmem:[%s25 + $0x28] sm:$0xff]
  %v1476 = vld [vmem:[%s25 + $0x30] sm:$0xff]
  %v1477 = vld [vmem:[%s25 + $0x38] sm:$0xff]
  %v1478 = vld [vmem:[%s27] sm:$0xff]
  %v1479 = vld [vmem:[%s31] sm:$0xff]
  %v1480 = vld [vmem:[%s31 + $0x8] sm:$0xff]
  %v1481 = vld [vmem:[%s33] sm:$0x1]
  %v1482 = vld [vmem:[%s35] sm:$0xff]
  %v1483 = vld [vmem:[%s35 + $0x8] sm:$0xff]
  %v1484 = vld [vmem:[%s37] sm:$0x1]
  %v1485 = vld [vmem:[%s39] sm:$0xff]
  %v1486 = vld [vmem:[%s39 + $0x8] sm:$0xff]
  %v1487 = vld [vmem:[%s41] sm:$0x1]
  %v1488 = vld [vmem:[%s43] sm:$0xf]
  %v1489 = vld [vmem:[%s45] sm:$0x1]
  %v1490 = vld [vmem:[%s47] sm:$0x1]
  %v1491 = vld [vmem:[%s49] sm:$0x1]
  %v1492 = vld [vmem:[%s51] sm:$0x1]
  %v1493 = vld [vmem:[%s53] sm:$0x1]
  %v1494 = vld [vmem:[%s29] sm:$0xff]
  %v1495 = vld [vmem:[%s29 + $0x8] sm:$0xff]
  %v1496 = vld [vmem:[%s29 + $0x10] sm:$0xff]
  %v1497 = vld [vmem:[%s29 + $0x18] sm:$0xff]
  %v1498 = vld [vmem:[%s29 + $0x20] sm:$0xff]
  %v1499 = vld [vmem:[%s29 + $0x28] sm:$0xff]
  %v1500 = vld [vmem:[%s29 + $0x30] sm:$0xff]
  %v1501 = vld [vmem:[%s29 + $0x38] sm:$0xff]
  %v1502 = vld [vmem:[%s7] sm:$0xff]
  %v1503 = vld [vmem:[%s7 + $0x8] sm:$0xff]
  %v1504 = vld [vmem:[%s9] sm:$0xff]
  %v1505 = vld [vmem:[%s9 + $0x8] sm:$0xff]
  %vm1506 = vcmask 130048
  %v1508 = vsel %vm1506, %v1502, 0
  %v1511 = vsel %vm1506, %v1503, 0
  %1513 = vmatprep.subr.mxu0 0.0
  %1514 = vmatpush1.msra.mxu0 %v1454
  %1515 = vmatprep.subr.mxu0 0.0
  %1516 = vmatpush1.msra.mxu0 %v1459
  %1517 = vmatprep.subr.mxu0 0.0
  %1518 = vmatpush1.msra.mxu0 0.0
  %1519 = vmatprep.subr.mxu0 0.0
  %1520 = vmatpush1.msra.mxu0 0.0
  %1521 = vmatprep.subr.mxu0 0.0
  %1522 = vmatpush1.msra.mxu0 0.0
  %1523 = vmatprep.subr.mxu0 0.0
  %1524 = vmatpush1.msra.mxu0 0.0
  %1525 = vmatprep.subr.mxu0 0.0
  %1526 = vmatpush1.msra.mxu0 0.0
  %1527 = vmatprep.subr.mxu0 0.0
  %1528 = vmatpush1.msra.mxu0 0.0
  %1529 = vmatprep.subr.mxu0 0.0
  %1530 = vmatpush1.msra.mxu0 0.0
  %1531 = vmatprep.subr.mxu0 0.0
  %1532 = vmatpush1.msra.mxu0 0.0
  %1533 = vmatprep.subr.mxu0 0.0
  %1534 = vmatpush1.msra.mxu0 0.0
  %1535 = vmatprep.subr.mxu0 0.0
  %1536 = vmatpush1.msra.mxu0 0.0
  %1537 = vmatprep.subr.mxu0 0.0
  %1538 = vmatpush1.msra.mxu0 0.0
  %1539 = vmatprep.subr.mxu0 0.0
  %1540 = vmatpush1.msra.mxu0 0.0
  %1541 = vmatprep.subr.mxu0 0.0
  %1542 = vmatpush1.msra.mxu0 0.0
  %1543 = vmatprep.subr.mxu0 0.0
  %1544 = vmatpush1.msra.mxu0 0.0
  %1545 = vmatprep.subr.mxu0 0.0
  %1546 = vmatpush1.msra.mxu0 0.0
  %1547 = vmatprep.subr.mxu0 0.0
  %1548 = vmatpush1.msra.mxu0 0.0
  %1549 = vmatprep.subr.mxu0 0.0
  %1550 = vmatpush1.msra.mxu0 0.0
  %1551 = vmatprep.subr.mxu0 0.0
  %1552 = vmatpush1.msra.mxu0 0.0
  %1553 = vmatprep.subr.mxu0 0.0
  %1554 = vmatpush1.msra.mxu0 0.0
  %1555 = vmatprep.subr.mxu0 0.0
  %1556 = vmatpush1.msra.mxu0 0.0
  %1557 = vmatprep.subr.mxu0 0.0
  %1558 = vmatpush1.msra.mxu0 0.0
  %1559 = vmatprep.subr.mxu0 0.0
  %1560 = vmatpush1.msra.mxu0 0.0
  %1561 = vmatprep.subr.mxu0 0.0
  %1562 = vmatpush1.msra.mxu0 0.0
  %1563 = vmatprep.subr.mxu0 0.0
  %1564 = vmatpush1.msra.mxu0 0.0
  %1565 = vmatprep.subr.mxu0 0.0
  %1566 = vmatpush1.msra.mxu0 0.0
  %1567 = vmatprep.subr.mxu0 0.0
  %1568 = vmatpush1.msra.mxu0 0.0
  %1569 = vmatprep.subr.mxu0 0.0
  %1570 = vmatpush1.msra.mxu0 0.0
  %1571 = vmatprep.subr.mxu0 0.0
  %1572 = vmatpush1.msra.mxu0 0.0
  %1573 = vmatprep.subr.mxu0 0.0
  %1574 = vmatpush1.msra.mxu0 0.0
  %1575 = vmatprep.subr.mxu0 0.0
  %1576 = vmatpush1.msra.mxu0 0.0
  %1577 = vmatprep.mubr.f32.mxu0 0.0
  %1578 = vmatmul.mubr.f32.gmra.mrb[0].mxu0 %v1508
  %v1579 = vpop.f32.mrb[0].mxu0
  %v1580 = vadd.f32 0.0, %v1579
  %v1581 = vpop.f32.mrb[0].mxu0
  %1582 = vmatprep.mubr.f32.mxu0 0.0
  %1583 = vmatmul.mubr.f32.gmra.mrb[0].mxu0 %v1511
  %v1584 = vpop.f32.mrb[0].mxu0
  %v1585 = vadd.f32 0.0, %v1584
  %v1586 = vpop.f32.mrb[0].mxu0
  %1587 = vdwg.mxu0
  %vm1588 = vcmask 64512
  %v1590 = vsel %vm1588, %v1585, 0
  %1592 = vmatprep.subr.mxu0 0.0
  %1593 = vmatpush1.msra.mxu0 %v1505
  %1594 = vmatprep.subr.mxu0 0.0
  %1595 = vmatpush1.msra.mxu0 0.0
  %1596 = vmatprep.subr.mxu0 0.0
  %1597 = vmatpush1.msra.mxu0 0.0
  %1598 = vmatprep.subr.mxu0 0.0
  %1599 = vmatpush1.msra.mxu0 0.0
  %1600 = vmatprep.subr.mxu0 0.0
  %1601 = vmatpush1.msra.mxu0 0.0
  %1602 = vmatprep.subr.mxu0 0.0
  %1603 = vmatpush1.msra.mxu0 0.0
  %1604 = vmatprep.subr.mxu0 0.0
  %1605 = vmatpush1.msra.mxu0 0.0
  %1606 = vmatprep.subr.mxu0 0.0
  %1607 = vmatpush1.msra.mxu0 0.0
  %1608 = vmatprep.subr.mxu0 0.0
  %1609 = vmatpush1.msra.mxu0 0.0
  %1610 = vmatprep.subr.mxu0 0.0
  %1611 = vmatpush1.msra.mxu0 0.0
  %1612 = vmatprep.subr.mxu0 0.0
  %1613 = vmatpush1.msra.mxu0 0.0
  %1614 = vmatprep.subr.mxu0 0.0
  %1615 = vmatpush1.msra.mxu0 0.0
  %1616 = vmatprep.subr.mxu0 0.0
  %1617 = vmatpush1.msra.mxu0 0.0
  %1618 = vmatprep.subr.mxu0 0.0
  %1619 = vmatpush1.msra.mxu0 0.0
  %1620 = vmatprep.subr.mxu0 0.0
  %1621 = vmatpush1.msra.mxu0 0.0
  %1622 = vmatprep.subr.mxu0 0.0
  %1623 = vmatpush1.msra.mxu0 0.0
  %1624 = vmatprep.subr.mxu0 0.0
  %1625 = vmatpush1.msra.mxu0 0.0
  %1626 = vmatprep.subr.mxu0 0.0
  %1627 = vmatpush1.msra.mxu0 0.0
  %1628 = vmatprep.subr.mxu0 0.0
  %1629 = vmatpush1.msra.mxu0 0.0
  %1630 = vmatprep.subr.mxu0 0.0
  %1631 = vmatpush1.msra.mxu0 0.0
  %1632 = vmatprep.subr.mxu0 0.0
  %1633 = vmatpush1.msra.mxu0 0.0
  %1634 = vmatprep.subr.mxu0 0.0
  %1635 = vmatpush1.msra.mxu0 0.0
  %1636 = vmatprep.subr.mxu0 0.0
  %1637 = vmatpush1.msra.mxu0 0.0
  %1638 = vmatprep.subr.mxu0 0.0
  %1639 = vmatpush1.msra.mxu0 0.0
  %1640 = vmatprep.subr.mxu0 0.0
  %1641 = vmatpush1.msra.mxu0 0.0
  %1642 = vmatprep.subr.mxu0 0.0
  %1643 = vmatpush1.msra.mxu0 0.0
  %1644 = vmatprep.subr.mxu0 0.0
  %1645 = vmatpush1.msra.mxu0 0.0
  %1646 = vmatprep.subr.mxu0 0.0
  %1647 = vmatpush1.msra.mxu0 0.0
  %1648 = vmatprep.subr.mxu0 0.0
  %1649 = vmatpush1.msra.mxu0 0.0
  %1650 = vmatprep.subr.mxu0 0.0
  %1651 = vmatpush1.msra.mxu0 0.0
  %1652 = vmatprep.subr.mxu0 0.0
  %1653 = vmatpush1.msra.mxu0 0.0
  %1654 = vmatprep.subr.mxu0 0.0
  %1655 = vmatpush1.msra.mxu0 0.0
  %1656 = vmatprep.mubr.f32.mxu0 0.0
  %1657 = vmatmul.mubr.f32.gmra.mrb[0].mxu0 %v1590
  %v1658 = vpop.f32.mrb[0].mxu0
  %v1659 = vadd.f32 0.0, %v1658
  %v1660 = vpop.f32.mrb[0].mxu0
  %1661 = vdwg.mxu0
  %v1663 = vsel %vm1588, %v1580, 0
  %1665 = vmatprep.subr.mxu0 0.0
  %1666 = vmatpush1.msra.mxu0 %v1504
  %1667 = vmatprep.subr.mxu0 0.0
  %1668 = vmatpush1.msra.mxu0 0.0
  %1669 = vmatprep.subr.mxu0 0.0
  %1670 = vmatpush1.msra.mxu0 0.0
  %1671 = vmatprep.subr.mxu0 0.0
  %1672 = vmatpush1.msra.mxu0 0.0
  %1673 = vmatprep.subr.mxu0 0.0
  %1674 = vmatpush1.msra.mxu0 0.0
  %1675 = vmatprep.subr.mxu0 0.0
  %1676 = vmatpush1.msra.mxu0 0.0
  %1677 = vmatprep.subr.mxu0 0.0
  %1678 = vmatpush1.msra.mxu0 0.0
  %1679 = vmatprep.subr.mxu0 0.0
  %1680 = vmatpush1.msra.mxu0 0.0
  %1681 = vmatprep.subr.mxu0 0.0
  %1682 = vmatpush1.msra.mxu0 0.0
  %1683 = vmatprep.subr.mxu0 0.0
  %1684 = vmatpush1.msra.mxu0 0.0
  %1685 = vmatprep.subr.mxu0 0.0
  %1686 = vmatpush1.msra.mxu0 0.0
  %1687 = vmatprep.subr.mxu0 0.0
  %1688 = vmatpush1.msra.mxu0 0.0
  %1689 = vmatprep.subr.mxu0 0.0
  %1690 = vmatpush1.msra.mxu0 0.0
  %1691 = vmatprep.subr.mxu0 0.0
  %1692 = vmatpush1.msra.mxu0 0.0
  %1693 = vmatprep.subr.mxu0 0.0
  %1694 = vmatpush1.msra.mxu0 0.0
  %1695 = vmatprep.subr.mxu0 0.0
  %1696 = vmatpush1.msra.mxu0 0.0
  %1697 = vmatprep.subr.mxu0 0.0
  %1698 = vmatpush1.msra.mxu0 0.0
  %1699 = vmatprep.subr.mxu0 0.0
  %1700 = vmatpush1.msra.mxu0 0.0
  %1701 = vmatprep.subr.mxu0 0.0
  %1702 = vmatpush1.msra.mxu0 0.0
  %1703 = vmatprep.subr.mxu0 0.0
  %1704 = vmatpush1.msra.mxu0 0.0
  %1705 = vmatprep.subr.mxu0 0.0
  %1706 = vmatpush1.msra.mxu0 0.0
  %1707 = vmatprep.subr.mxu0 0.0
  %1708 = vmatpush1.msra.mxu0 0.0
  %1709 = vmatprep.subr.mxu0 0.0
  %1710 = vmatpush1.msra.mxu0 0.0
  %1711 = vmatprep.subr.mxu0 0.0
  %1712 = vmatpush1.msra.mxu0 0.0
  %1713 = vmatprep.subr.mxu0 0.0
  %1714 = vmatpush1.msra.mxu0 0.0
  %1715 = vmatprep.subr.mxu0 0.0
  %1716 = vmatpush1.msra.mxu0 0.0
  %1717 = vmatprep.subr.mxu0 0.0
  %1718 = vmatpush1.msra.mxu0 0.0
  %1719 = vmatprep.subr.mxu0 0.0
  %1720 = vmatpush1.msra.mxu0 0.0
  %1721 = vmatprep.subr.mxu0 0.0
  %1722 = vmatpush1.msra.mxu0 0.0
  %1723 = vmatprep.subr.mxu0 0.0
  %1724 = vmatpush1.msra.mxu0 0.0
  %1725 = vmatprep.subr.mxu0 0.0
  %1726 = vmatpush1.msra.mxu0 0.0
  %1727 = vmatprep.subr.mxu0 0.0
  %1728 = vmatpush1.msra.mxu0 0.0
  %1729 = vmatprep.mubr.f32.mxu0 0.0
  %1730 = vmatmul.mubr.f32.gmra.mrb[0].mxu0 %v1663
  %v1731 = vpop.f32.mrb[0].mxu0
  %v1732 = vadd.f32 %v1659, %v1731
  %v1733 = vpop.f32.mrb[0].mxu0
  %1734 = vdwg.mxu0
  %v1736 = vlaneseq
  %v1737 = vshrl.u32 %v1736, 7
  %v1738 = vsub.s32 0, %v1737
  %v1739 = vrot.slane %v1481, %v1738
  %v1742 = vsel %vm1506, %v1732, 0
  %1744 = vmatprep.subr.mxu0 0.0
  %1745 = vmatpush1.msra.mxu0 %v1479
  %1746 = vmatprep.subr.mxu0 0.0
  %1747 = vmatpush1.msra.mxu0 %v1480
  %1748 = vmatprep.subr.mxu0 0.0
  %1749 = vmatpush1.msra.mxu0 0.0
  %1750 = vmatprep.subr.mxu0 0.0
  %1751 = vmatpush1.msra.mxu0 0.0
  %1752 = vmatprep.subr.mxu0 0.0
  %1753 = vmatpush1.msra.mxu0 0.0
  %1754 = vmatprep.subr.mxu0 0.0
  %1755 = vmatpush1.msra.mxu0 0.0
  %1756 = vmatprep.subr.mxu0 0.0
  %1757 = vmatpush1.msra.mxu0 0.0
  %1758 = vmatprep.subr.mxu0 0.0
  %1759 = vmatpush1.msra.mxu0 0.0
  %1760 = vmatprep.subr.mxu0 0.0
  %1761 = vmatpush1.msra.mxu0 0.0
  %1762 = vmatprep.subr.mxu0 0.0
  %1763 = vmatpush1.msra.mxu0 0.0
  %1764 = vmatprep.subr.mxu0 0.0
  %1765 = vmatpush1.msra.mxu0 0.0
  %1766 = vmatprep.subr.mxu0 0.0
  %1767 = vmatpush1.msra.mxu0 0.0
  %1768 = vmatprep.subr.mxu0 0.0
  %1769 = vmatpush1.msra.mxu0 0.0
  %1770 = vmatprep.subr.mxu0 0.0
  %1771 = vmatpush1.msra.mxu0 0.0
  %1772 = vmatprep.subr.mxu0 0.0
  %1773 = vmatpush1.msra.mxu0 0.0
  %1774 = vmatprep.subr.mxu0 0.0
  %1775 = vmatpush1.msra.mxu0 0.0
  %1776 = vmatprep.subr.mxu0 0.0
  %1777 = vmatpush1.msra.mxu0 0.0
  %1778 = vmatprep.subr.mxu0 0.0
  %1779 = vmatpush1.msra.mxu0 0.0
  %1780 = vmatprep.subr.mxu0 0.0
  %1781 = vmatpush1.msra.mxu0 0.0
  %1782 = vmatprep.subr.mxu0 0.0
  %1783 = vmatpush1.msra.mxu0 0.0
  %1784 = vmatprep.subr.mxu0 0.0
  %1785 = vmatpush1.msra.mxu0 0.0
  %1786 = vmatprep.subr.mxu0 0.0
  %1787 = vmatpush1.msra.mxu0 0.0
  %1788 = vmatprep.subr.mxu0 0.0
  %1789 = vmatpush1.msra.mxu0 0.0
  %1790 = vmatprep.subr.mxu0 0.0
  %1791 = vmatpush1.msra.mxu0 0.0
  %1792 = vmatprep.subr.mxu0 0.0
  %1793 = vmatpush1.msra.mxu0 0.0
  %1794 = vmatprep.subr.mxu0 0.0
  %1795 = vmatpush1.msra.mxu0 0.0
  %1796 = vmatprep.subr.mxu0 0.0
  %1797 = vmatpush1.msra.mxu0 0.0
  %1798 = vmatprep.subr.mxu0 0.0
  %1799 = vmatpush1.msra.mxu0 0.0
  %1800 = vmatprep.subr.mxu0 0.0
  %1801 = vmatpush1.msra.mxu0 0.0
  %1802 = vmatprep.subr.mxu0 0.0
  %1803 = vmatpush1.msra.mxu0 0.0
  %1804 = vmatprep.subr.mxu0 0.0
  %1805 = vmatpush1.msra.mxu0 0.0
  %1806 = vmatprep.subr.mxu0 0.0
  %1807 = vmatpush1.msra.mxu0 0.0
  %1808 = vmatprep.mubr.f32.mxu0 0.0
  %1809 = vmatmul.mubr.f32.gmra.mrb[0].mxu0 %v1742
  %v1810 = vpop.f32.mrb[0].mxu0
  %v1811 = vadd.f32 %v1739, %v1810
  %v1812 = vpop.f32.mrb[0].mxu0
  %1813 = vdwg.mxu0
  %v1815 = vsel %vm1588, %v1462, 0
  %v1818 = vsel %vm1588, %v1463, 0
  %v1821 = vsel %vm1588, %v1464, 0
  %v1824 = vsel %vm1588, %v1465, 0
  %v1827 = vsel %vm1588, %v1466, 0
  %v1830 = vsel %vm1588, %v1467, 0
  %v1833 = vsel %vm1588, %v1468, 0
  %v1836 = vsel %vm1588, %v1469, 0
  %1838 = vmatprep.subr.mxu0 0.0
  %1839 = vmatpush1.msra.mxu0 %v1811
  %1840 = vmatprep.subr.mxu0 0.0
  %1841 = vmatpush1.msra.mxu0 0.0
  %1842 = vmatprep.subr.mxu0 0.0
  %1843 = vmatpush1.msra.mxu0 0.0
  %1844 = vmatprep.subr.mxu0 0.0
  %1845 = vmatpush1.msra.mxu0 0.0
  %1846 = vmatprep.subr.mxu0 0.0
  %1847 = vmatpush1.msra.mxu0 0.0
  %1848 = vmatprep.subr.mxu0 0.0
  %1849 = vmatpush1.msra.mxu0 0.0
  %1850 = vmatprep.subr.mxu0 0.0
  %1851 = vmatpush1.msra.mxu0 0.0
  %1852 = vmatprep.subr.mxu0 0.0
  %1853 = vmatpush1.msra.mxu0 0.0
  %1854 = vmatprep.subr.mxu0 0.0
  %1855 = vmatpush1.msra.mxu0 0.0
  %1856 = vmatprep.subr.mxu0 0.0
  %1857 = vmatpush1.msra.mxu0 0.0
  %1858 = vmatprep.subr.mxu0 0.0
  %1859 = vmatpush1.msra.mxu0 0.0
  %1860 = vmatprep.subr.mxu0 0.0
  %1861 = vmatpush1.msra.mxu0 0.0
  %1862 = vmatprep.subr.mxu0 0.0
  %1863 = vmatpush1.msra.mxu0 0.0
  %1864 = vmatprep.subr.mxu0 0.0
  %1865 = vmatpush1.msra.mxu0 0.0
  %1866 = vmatprep.subr.mxu0 0.0
  %1867 = vmatpush1.msra.mxu0 0.0
  %1868 = vmatprep.subr.mxu0 0.0
  %1869 = vmatpush1.msra.mxu0 0.0
  %1870 = vmatprep.subr.mxu0 0.0
  %1871 = vmatpush1.msra.mxu0 0.0
  %1872 = vmatprep.subr.mxu0 0.0
  %1873 = vmatpush1.msra.mxu0 0.0
  %1874 = vmatprep.subr.mxu0 0.0
  %1875 = vmatpush1.msra.mxu0 0.0
  %1876 = vmatprep.subr.mxu0 0.0
  %1877 = vmatpush1.msra.mxu0 0.0
  %1878 = vmatprep.subr.mxu0 0.0
  %1879 = vmatpush1.msra.mxu0 0.0
  %1880 = vmatprep.subr.mxu0 0.0
  %1881 = vmatpush1.msra.mxu0 0.0
  %1882 = vmatprep.subr.mxu0 0.0
  %1883 = vmatpush1.msra.mxu0 0.0
  %1884 = vmatprep.subr.mxu0 0.0
  %1885 = vmatpush1.msra.mxu0 0.0
  %1886 = vmatprep.subr.mxu0 0.0
  %1887 = vmatpush1.msra.mxu0 0.0
  %1888 = vmatprep.subr.mxu0 0.0
  %1889 = vmatpush1.msra.mxu0 0.0
  %1890 = vmatprep.subr.mxu0 0.0
  %1891 = vmatpush1.msra.mxu0 0.0
  %1892 = vmatprep.subr.mxu0 0.0
  %1893 = vmatpush1.msra.mxu0 0.0
  %1894 = vmatprep.subr.mxu0 0.0
  %1895 = vmatpush1.msra.mxu0 0.0
  %1896 = vmatprep.subr.mxu0 0.0
  %1897 = vmatpush1.msra.mxu0 0.0
  %1898 = vmatprep.subr.mxu0 0.0
  %1899 = vmatpush1.msra.mxu0 0.0
  %1900 = vmatprep.subr.mxu0 0.0
  %1901 = vmatpush1.msra.mxu0 0.0
  %1902 = vmatprep.mubr.f32.mxu0 0.0
  %1903 = vmatmul.mubr.f32.gmra.mrb[0].mxu0 %v1815
  %v1904 = vpop.f32.mrb[0].mxu0
  %v1905 = vadd.f32 0.0, %v1904
  %v1906 = vpop.f32.mrb[0].mxu0
  %1907 = vmatprep.mubr.f32.mxu0 0.0
  %1908 = vmatmul.mubr.f32.gmra.mrb[0].mxu0 %v1818
  %v1909 = vpop.f32.mrb[0].mxu0
  %v1910 = vadd.f32 0.0, %v1909
  %v1911 = vpop.f32.mrb[0].mxu0
  %1912 = vmatprep.mubr.f32.mxu0 0.0
  %1913 = vmatmul.mubr.f32.gmra.mrb[0].mxu0 %v1821
  %v1914 = vpop.f32.mrb[0].mxu0
  %v1915 = vadd.f32 0.0, %v1914
  %v1916 = vpop.f32.mrb[0].mxu0
  %1917 = vmatprep.mubr.f32.mxu0 0.0
  %1918 = vmatmul.mubr.f32.gmra.mrb[0].mxu0 %v1824
  %v1919 = vpop.f32.mrb[0].mxu0
  %v1920 = vadd.f32 0.0, %v1919
  %v1921 = vpop.f32.mrb[0].mxu0
  %1922 = vmatprep.mubr.f32.mxu0 0.0
  %1923 = vmatmul.mubr.f32.gmra.mrb[0].mxu0 %v1827
  %v1924 = vpop.f32.mrb[0].mxu0
  %v1925 = vadd.f32 0.0, %v1924
  %v1926 = vpop.f32.mrb[0].mxu0
  %1927 = vmatprep.mubr.f32.mxu0 0.0
  %1928 = vmatmul.mubr.f32.gmra.mrb[0].mxu0 %v1830
  %v1929 = vpop.f32.mrb[0].mxu0
  %v1930 = vadd.f32 0.0, %v1929
  %v1931 = vpop.f32.mrb[0].mxu0
  %1932 = vmatprep.mubr.f32.mxu0 0.0
  %1933 = vmatmul.mubr.f32.gmra.mrb[0].mxu0 %v1833
  %v1934 = vpop.f32.mrb[0].mxu0
  %v1935 = vadd.f32 0.0, %v1934
  %v1936 = vpop.f32.mrb[0].mxu0
  %1937 = vmatprep.mubr.f32.mxu0 0.0
  %1938 = vmatmul.mubr.f32.gmra.mrb[0].mxu0 %v1836
  %v1939 = vpop.f32.mrb[0].mxu0
  %v1940 = vadd.f32 0.0, %v1939
  %v1941 = vpop.f32.mrb[0].mxu0
  %1942 = vdwg.mxu0
  %v1943 = vmul.f32 %v1905, %v1470
  %v1944 = vmul.f32 %v1910, %v1471
  %v1945 = vmul.f32 %v1915, %v1472
  %v1946 = vmul.f32 %v1920, %v1473
  %v1947 = vmul.f32 %v1925, %v1474
  %v1948 = vmul.f32 %v1930, %v1475
  %v1949 = vmul.f32 %v1935, %v1476
  %v1950 = vmul.f32 %v1940, %v1477
  %1952 = vrot.lane.b32.xlu0 %v1811, 112
  %v1953 = vpop.permute.xlu0 %1952
  %v1955 = vsel %vm1506, %v1943, 0
  %v1958 = vsel %vm1506, %v1944, 0
  %v1961 = vsel %vm1506, %v1945, 0
  %v1964 = vsel %vm1506, %v1946, 0
  %v1967 = vsel %vm1506, %v1947, 0
  %v1970 = vsel %vm1506, %v1948, 0
  %v1973 = vsel %vm1506, %v1949, 0
  %v1976 = vsel %vm1506, %v1950, 0
  %v1978 = vsel %vm1506, %v1953, 0
  %1980 = vmatprep.subr.mxu0 0.0
  %1981 = vmatpush1.xpose.msra.mxu0 %v1978
  %1982 = vmatprep.subr.mxu0 0.0
  %1983 = vmatpush1.xpose.msra.mxu0 0.0
  %1984 = vmatprep.subr.mxu0 0.0
  %1985 = vmatpush1.xpose.msra.mxu0 0.0
  %1986 = vmatprep.subr.mxu0 0.0
  %1987 = vmatpush1.xpose.msra.mxu0 0.0
  %1988 = vmatprep.subr.mxu0 0.0
  %1989 = vmatpush1.xpose.msra.mxu0 0.0
  %1990 = vmatprep.subr.mxu0 0.0
  %1991 = vmatpush1.xpose.msra.mxu0 0.0
  %1992 = vmatprep.subr.mxu0 0.0
  %1993 = vmatpush1.xpose.msra.mxu0 0.0
  %1994 = vmatprep.subr.mxu0 0.0
  %1995 = vmatpush1.xpose.msra.mxu0 0.0
  %1996 = vmatprep.subr.mxu0 0.0
  %1997 = vmatpush1.xpose.msra.mxu0 0.0
  %1998 = vmatprep.subr.mxu0 0.0
  %1999 = vmatpush1.xpose.msra.mxu0 0.0
  %2000 = vmatprep.subr.mxu0 0.0
  %2001 = vmatpush1.xpose.msra.mxu0 0.0
  %2002 = vmatprep.subr.mxu0 0.0
  %2003 = vmatpush1.xpose.msra.mxu0 0.0
  %2004 = vmatprep.subr.mxu0 0.0
  %2005 = vmatpush1.xpose.msra.mxu0 0.0
  %2006 = vmatprep.subr.mxu0 0.0
  %2007 = vmatpush1.xpose.msra.mxu0 0.0
  %2008 = vmatprep.subr.mxu0 0.0
  %2009 = vmatpush1.xpose.msra.mxu0 0.0
  %2010 = vmatprep.subr.mxu0 0.0
  %2011 = vmatpush1.xpose.msra.mxu0 0.0
  %2012 = vmatprep.subr.mxu0 0.0
  %2013 = vmatpush1.xpose.msra.mxu0 0.0
  %2014 = vmatprep.subr.mxu0 0.0
  %2015 = vmatpush1.xpose.msra.mxu0 0.0
  %2016 = vmatprep.subr.mxu0 0.0
  %2017 = vmatpush1.xpose.msra.mxu0 0.0
  %2018 = vmatprep.subr.mxu0 0.0
  %2019 = vmatpush1.xpose.msra.mxu0 0.0
  %2020 = vmatprep.subr.mxu0 0.0
  %2021 = vmatpush1.xpose.msra.mxu0 0.0
  %2022 = vmatprep.subr.mxu0 0.0
  %2023 = vmatpush1.xpose.msra.mxu0 0.0
  %2024 = vmatprep.subr.mxu0 0.0
  %2025 = vmatpush1.xpose.msra.mxu0 0.0
  %2026 = vmatprep.subr.mxu0 0.0
  %2027 = vmatpush1.xpose.msra.mxu0 0.0
  %2028 = vmatprep.subr.mxu0 0.0
  %2029 = vmatpush1.xpose.msra.mxu0 0.0
  %2030 = vmatprep.subr.mxu0 0.0
  %2031 = vmatpush1.xpose.msra.mxu0 0.0
  %2032 = vmatprep.subr.mxu0 0.0
  %2033 = vmatpush1.xpose.msra.mxu0 0.0
  %2034 = vmatprep.subr.mxu0 0.0
  %2035 = vmatpush1.xpose.msra.mxu0 0.0
  %2036 = vmatprep.subr.mxu0 0.0
  %2037 = vmatpush1.xpose.msra.mxu0 0.0
  %2038 = vmatprep.subr.mxu0 0.0
  %2039 = vmatpush1.xpose.msra.mxu0 0.0
  %2040 = vmatprep.subr.mxu0 0.0
  %2041 = vmatpush1.xpose.msra.mxu0 0.0
  %2042 = vmatprep.subr.mxu0 0.0
  %2043 = vmatpush1.xpose.msra.mxu0 0.0
  %2044 = vmatprep.mubr.f32.mxu0 0.0
  %2045 = vmatmul.mubr.f32.gmra.mrb[0].mxu0 %v1955
  %v2046 = vpop.f32.mrb[0].mxu0
  %v2047 = vadd.f32 %v1494, %v2046
  %v2048 = vpop.f32.mrb[0].mxu0
  %2049 = vmatprep.mubr.f32.mxu0 0.0
  %2050 = vmatmul.mubr.f32.gmra.mrb[0].mxu0 %v1958
  %v2051 = vpop.f32.mrb[0].mxu0
  %v2052 = vadd.f32 %v1495, %v2051
  %v2053 = vpop.f32.mrb[0].mxu0
  %2054 = vmatprep.mubr.f32.mxu0 0.0
  %2055 = vmatmul.mubr.f32.gmra.mrb[0].mxu0 %v1961
  %v2056 = vpop.f32.mrb[0].mxu0
  %v2057 = vadd.f32 %v1496, %v2056
  %v2058 = vpop.f32.mrb[0].mxu0
  %2059 = vmatprep.mubr.f32.mxu0 0.0
  %2060 = vmatmul.mubr.f32.gmra.mrb[0].mxu0 %v1964
  %v2061 = vpop.f32.mrb[0].mxu0
  %v2062 = vadd.f32 %v1497, %v2061
  %v2063 = vpop.f32.mrb[0].mxu0
  %2064 = vmatprep.mubr.f32.mxu0 0.0
  %2065 = vmatmul.mubr.f32.gmra.mrb[0].mxu0 %v1967
  %v2066 = vpop.f32.mrb[0].mxu0
  %v2067 = vadd.f32 %v1498, %v2066
  %v2068 = vpop.f32.mrb[0].mxu0
  %2069 = vmatprep.mubr.f32.mxu0 0.0
  %2070 = vmatmul.mubr.f32.gmra.mrb[0].mxu0 %v1970
  %v2071 = vpop.f32.mrb[0].mxu0
  %v2072 = vadd.f32 %v1499, %v2071
  %v2073 = vpop.f32.mrb[0].mxu0
  %2074 = vmatprep.mubr.f32.mxu0 0.0
  %2075 = vmatmul.mubr.f32.gmra.mrb[0].mxu0 %v1973
  %v2076 = vpop.f32.mrb[0].mxu0
  %v2077 = vadd.f32 %v1500, %v2076
  %v2078 = vpop.f32.mrb[0].mxu0
  %2079 = vmatprep.mubr.f32.mxu0 0.0
  %2080 = vmatmul.mubr.f32.gmra.mrb[0].mxu0 %v1976
  %v2081 = vpop.f32.mrb[0].mxu0
  %v2082 = vadd.f32 %v1501, %v2081
  %v2083 = vpop.f32.mrb[0].mxu0
  %2084 = vdwg.mxu0
  %v2085 = vsel %vm1588, %v2047, -inf
  %2086 = vmax.xlane.f32.xlu0 %v2085
  %v2087 = vpop.xlane.xlu0 %2086
  %v2088 = vsel %vm1588, %v2052, -inf
  %2089 = vmax.xlane.f32.xlu0 %v2088
  %v2090 = vpop.xlane.xlu0 %2089
  %v2091 = vsel %vm1588, %v2057, -inf
  %2092 = vmax.xlane.f32.xlu0 %v2091
  %v2093 = vpop.xlane.xlu0 %2092
  %v2094 = vsel %vm1588, %v2062, -inf
  %2095 = vmax.xlane.f32.xlu0 %v2094
  %v2096 = vpop.xlane.xlu0 %2095
  %v2097 = vsel %vm1588, %v2067, -inf
  %2098 = vmax.xlane.f32.xlu0 %v2097
  %v2099 = vpop.xlane.xlu0 %2098
  %v2100 = vsel %vm1588, %v2072, -inf
  %2101 = vmax.xlane.f32.xlu0 %v2100
  %v2102 = vpop.xlane.xlu0 %2101
  %v2103 = vsel %vm1588, %v2077, -inf
  %2104 = vmax.xlane.f32.xlu0 %v2103
  %v2105 = vpop.xlane.xlu0 %2104
  %v2106 = vsel %vm1588, %v2082, -inf
  %2107 = vmax.xlane.f32.xlu0 %v2106
  %v2108 = vpop.xlane.xlu0 %2107
  %v2109 = vsub.f32 %v2047, %v2087
  %v2110 = vsub.f32 %v2052, %v2090
  %v2111 = vsub.f32 %v2057, %v2093
  %v2112 = vsub.f32 %v2062, %v2096
  %v2113 = vsub.f32 %v2067, %v2099
  %v2114 = vsub.f32 %v2072, %v2102
  %v2115 = vsub.f32 %v2077, %v2105
  %v2116 = vsub.f32 %v2082, %v2108
  %v2117 = vmul.f32 %v2109, 1.442695
  %v2118 = vpow.pop %v2117
  %v2119 = vmul.f32 %v2110, 1.442695
  %v2120 = vpow.pop %v2119
  %v2121 = vmul.f32 %v2111, 1.442695
  %v2122 = vpow.pop %v2121
  %v2123 = vmul.f32 %v2112, 1.442695
  %v2124 = vpow.pop %v2123
  %v2125 = vmul.f32 %v2113, 1.442695
  %v2126 = vpow.pop %v2125
  %v2127 = vmul.f32 %v2114, 1.442695
  %v2128 = vpow.pop %v2127
  %v2129 = vmul.f32 %v2115, 1.442695
  %v2130 = vpow.pop %v2129
  %v2131 = vmul.f32 %v2116, 1.442695
  %v2132 = vpow.pop %v2131
  %v2133 = vsel %vm1588, %v2118, 0.0
  %2134 = vadd.xlane.f32.xlu0 %v2133
  %v2135 = vpop.xlane.xlu0 %2134
  %v2136 = vsel %vm1588, %v2120, 0.0
  %2137 = vadd.xlane.f32.xlu0 %v2136
  %v2138 = vpop.xlane.xlu0 %2137
  %v2139 = vsel %vm1588, %v2122, 0.0
  %2140 = vadd.xlane.f32.xlu0 %v2139
  %v2141 = vpop.xlane.xlu0 %2140
  %v2142 = vsel %vm1588, %v2124, 0.0
  %2143 = vadd.xlane.f32.xlu0 %v2142
  %v2144 = vpop.xlane.xlu0 %2143
  %v2145 = vsel %vm1588, %v2126, 0.0
  %2146 = vadd.xlane.f32.xlu0 %v2145
  %v2147 = vpop.xlane.xlu0 %2146
  %v2148 = vsel %vm1588, %v2128, 0.0
  %2149 = vadd.xlane.f32.xlu0 %v2148
  %v2150 = vpop.xlane.xlu0 %2149
  %v2151 = vsel %vm1588, %v2130, 0.0
  %2152 = vadd.xlane.f32.xlu0 %v2151
  %v2153 = vpop.xlane.xlu0 %2152
  %v2154 = vsel %vm1588, %v2132, 0.0
  %2155 = vadd.xlane.f32.xlu0 %v2154
  %v2156 = vpop.xlane.xlu0 %2155
  %v2157 = vrcp.pop %v2135
  %v2158 = vrcp.pop %v2138
  %v2159 = vrcp.pop %v2141
  %v2160 = vrcp.pop %v2144
  %v2161 = vrcp.pop %v2147
  %v2162 = vrcp.pop %v2150
  %v2163 = vrcp.pop %v2153
  %v2164 = vrcp.pop %v2156
  %v2165 = vmul.f32 %v2118, %v2157
  %v2166 = vmul.f32 %v2120, %v2158
  %v2167 = vmul.f32 %v2122, %v2159
  %v2168 = vmul.f32 %v2124, %v2160
  %v2169 = vmul.f32 %v2126, %v2161
  %v2170 = vmul.f32 %v2128, %v2162
  %v2171 = vmul.f32 %v2130, %v2163
  %v2172 = vmul.f32 %v2132, %v2164
  %2173 = vrot.lane.b32.xlu0 %v1811, 96
  %v2174 = vpop.permute.xlu0 %2173
  %v2177 = vsel %vm1588, %v2165, 0
  %v2180 = vsel %vm1588, %v2166, 0
  %v2183 = vsel %vm1588, %v2167, 0
  %v2186 = vsel %vm1588, %v2168, 0
  %v2189 = vsel %vm1588, %v2169, 0
  %v2192 = vsel %vm1588, %v2170, 0
  %v2195 = vsel %vm1588, %v2171, 0
  %v2198 = vsel %vm1588, %v2172, 0
  %2200 = vmatprep.subr.mxu0 0.0
  %2201 = vmatpush1.msra.mxu0 %v2174
  %2202 = vmatprep.subr.mxu0 0.0
  %2203 = vmatpush1.msra.mxu0 0.0
  %2204 = vmatprep.subr.mxu0 0.0
  %2205 = vmatpush1.msra.mxu0 0.0
  %2206 = vmatprep.subr.mxu0 0.0
  %2207 = vmatpush1.msra.mxu0 0.0
  %2208 = vmatprep.subr.mxu0 0.0
  %2209 = vmatpush1.msra.mxu0 0.0
  %2210 = vmatprep.subr.mxu0 0.0
  %2211 = vmatpush1.msra.mxu0 0.0
  %2212 = vmatprep.subr.mxu0 0.0
  %2213 = vmatpush1.msra.mxu0 0.0
  %2214 = vmatprep.subr.mxu0 0.0
  %2215 = vmatpush1.msra.mxu0 0.0
  %2216 = vmatprep.subr.mxu0 0.0
  %2217 = vmatpush1.msra.mxu0 0.0
  %2218 = vmatprep.subr.mxu0 0.0
  %2219 = vmatpush1.msra.mxu0 0.0
  %2220 = vmatprep.subr.mxu0 0.0
  %2221 = vmatpush1.msra.mxu0 0.0
  %2222 = vmatprep.subr.mxu0 0.0
  %2223 = vmatpush1.msra.mxu0 0.0
  %2224 = vmatprep.subr.mxu0 0.0
  %2225 = vmatpush1.msra.mxu0 0.0
  %2226 = vmatprep.subr.mxu0 0.0
  %2227 = vmatpush1.msra.mxu0 0.0
  %2228 = vmatprep.subr.mxu0 0.0
  %2229 = vmatpush1.msra.mxu0 0.0
  %2230 = vmatprep.subr.mxu0 0.0
  %2231 = vmatpush1.msra.mxu0 0.0
  %2232 = vmatprep.subr.mxu0 0.0
  %2233 = vmatpush1.msra.mxu0 0.0
  %2234 = vmatprep.subr.mxu0 0.0
  %2235 = vmatpush1.msra.mxu0 0.0
  %2236 = vmatprep.subr.mxu0 0.0
  %2237 = vmatpush1.msra.mxu0 0.0
  %2238 = vmatprep.subr.mxu0 0.0
  %2239 = vmatpush1.msra.mxu0 0.0
  %2240 = vmatprep.subr.mxu0 0.0
  %2241 = vmatpush1.msra.mxu0 0.0
  %2242 = vmatprep.subr.mxu0 0.0
  %2243 = vmatpush1.msra.mxu0 0.0
  %2244 = vmatprep.subr.mxu0 0.0
  %2245 = vmatpush1.msra.mxu0 0.0
  %2246 = vmatprep.subr.mxu0 0.0
  %2247 = vmatpush1.msra.mxu0 0.0
  %2248 = vmatprep.subr.mxu0 0.0
  %2249 = vmatpush1.msra.mxu0 0.0
  %2250 = vmatprep.subr.mxu0 0.0
  %2251 = vmatpush1.msra.mxu0 0.0
  %2252 = vmatprep.subr.mxu0 0.0
  %2253 = vmatpush1.msra.mxu0 0.0
  %2254 = vmatprep.subr.mxu0 0.0
  %2255 = vmatpush1.msra.mxu0 0.0
  %2256 = vmatprep.subr.mxu0 0.0
  %2257 = vmatpush1.msra.mxu0 0.0
  %2258 = vmatprep.subr.mxu0 0.0
  %2259 = vmatpush1.msra.mxu0 0.0
  %2260 = vmatprep.subr.mxu0 0.0
  %2261 = vmatpush1.msra.mxu0 0.0
  %2262 = vmatprep.subr.mxu0 0.0
  %2263 = vmatpush1.msra.mxu0 0.0
  %2264 = vmatprep.mubr.f32.mxu0 0.0
  %2265 = vmatmul.mubr.f32.gmra.mrb[0].mxu0 %v2177
  %v2266 = vpop.f32.mrb[0].mxu0
  %v2267 = vadd.f32 0.0, %v2266
  %v2268 = vpop.f32.mrb[0].mxu0
  %2269 = vmatprep.mubr.f32.mxu0 0.0
  %2270 = vmatmul.mubr.f32.gmra.mrb[0].mxu0 %v2180
  %v2271 = vpop.f32.mrb[0].mxu0
  %v2272 = vadd.f32 0.0, %v2271
  %v2273 = vpop.f32.mrb[0].mxu0
  %2274 = vmatprep.mubr.f32.mxu0 0.0
  %2275 = vmatmul.mubr.f32.gmra.mrb[0].mxu0 %v2183
  %v2276 = vpop.f32.mrb[0].mxu0
  %v2277 = vadd.f32 0.0, %v2276
  %v2278 = vpop.f32.mrb[0].mxu0
  %2279 = vmatprep.mubr.f32.mxu0 0.0
  %2280 = vmatmul.mubr.f32.gmra.mrb[0].mxu0 %v2186
  %v2281 = vpop.f32.mrb[0].mxu0
  %v2282 = vadd.f32 0.0, %v2281
  %v2283 = vpop.f32.mrb[0].mxu0
  %2284 = vmatprep.mubr.f32.mxu0 0.0
  %2285 = vmatmul.mubr.f32.gmra.mrb[0].mxu0 %v2189
  %v2286 = vpop.f32.mrb[0].mxu0
  %v2287 = vadd.f32 0.0, %v2286
  %v2288 = vpop.f32.mrb[0].mxu0
  %2289 = vmatprep.mubr.f32.mxu0 0.0
  %2290 = vmatmul.mubr.f32.gmra.mrb[0].mxu0 %v2192
  %v2291 = vpop.f32.mrb[0].mxu0
  %v2292 = vadd.f32 0.0, %v2291
  %v2293 = vpop.f32.mrb[0].mxu0
  %2294 = vmatprep.mubr.f32.mxu0 0.0
  %2295 = vmatmul.mubr.f32.gmra.mrb[0].mxu0 %v2195
  %v2296 = vpop.f32.mrb[0].mxu0
  %v2297 = vadd.f32 0.0, %v2296
  %v2298 = vpop.f32.mrb[0].mxu0
  %2299 = vmatprep.mubr.f32.mxu0 0.0
  %2300 = vmatmul.mubr.f32.gmra.mrb[0].mxu0 %v2198
  %v2301 = vpop.f32.mrb[0].mxu0
  %v2302 = vadd.f32 0.0, %v2301
  %v2303 = vpop.f32.mrb[0].mxu0
  %2304 = vdwg.mxu0
  %v2305 = vmul.f32 %v2267, %v1470
  %v2306 = vmul.f32 %v2272, %v1471
  %v2307 = vmul.f32 %v2277, %v1472
  %v2308 = vmul.f32 %v2282, %v1473
  %v2309 = vmul.f32 %v2287, %v1474
  %v2310 = vmul.f32 %v2292, %v1475
  %v2311 = vmul.f32 %v2297, %v1476
  %v2312 = vmul.f32 %v2302, %v1477
  %vm2313 = vcmask 523264
  %v2315 = vsel %vm2313, %v1478, 0
  %2317 = vmatprep.subr.mxu0 0.0
  %2318 = vmatpush1.msra.mxu0 %v2305
  %2319 = vmatprep.subr.mxu0 0.0
  %2320 = vmatpush1.msra.mxu0 %v2306
  %2321 = vmatprep.subr.mxu0 0.0
  %2322 = vmatpush1.msra.mxu0 %v2307
  %2323 = vmatprep.subr.mxu0 0.0
  %2324 = vmatpush1.msra.mxu0 %v2308
  %2325 = vmatprep.subr.mxu0 0.0
  %2326 = vmatpush1.msra.mxu0 %v2309
  %2327 = vmatprep.subr.mxu0 0.0
  %2328 = vmatpush1.msra.mxu0 %v2310
  %2329 = vmatprep.subr.mxu0 0.0
  %2330 = vmatpush1.msra.mxu0 %v2311
  %2331 = vmatprep.subr.mxu0 0.0
  %2332 = vmatpush1.msra.mxu0 %v2312
  %2333 = vmatprep.subr.mxu0 0.0
  %2334 = vmatpush1.msra.mxu0 0.0
  %2335 = vmatprep.subr.mxu0 0.0
  %2336 = vmatpush1.msra.mxu0 0.0
  %2337 = vmatprep.subr.mxu0 0.0
  %2338 = vmatpush1.msra.mxu0 0.0
  %2339 = vmatprep.subr.mxu0 0.0
  %2340 = vmatpush1.msra.mxu0 0.0
  %2341 = vmatprep.subr.mxu0 0.0
  %2342 = vmatpush1.msra.mxu0 0.0
  %2343 = vmatprep.subr.mxu0 0.0
  %2344 = vmatpush1.msra.mxu0 0.0
  %2345 = vmatprep.subr.mxu0 0.0
  %2346 = vmatpush1.msra.mxu0 0.0
  %2347 = vmatprep.subr.mxu0 0.0
  %2348 = vmatpush1.msra.mxu0 0.0
  %2349 = vmatprep.subr.mxu0 0.0
  %2350 = vmatpush1.msra.mxu0 0.0
  %2351 = vmatprep.subr.mxu0 0.0
  %2352 = vmatpush1.msra.mxu0 0.0
  %2353 = vmatprep.subr.mxu0 0.0
  %2354 = vmatpush1.msra.mxu0 0.0
  %2355 = vmatprep.subr.mxu0 0.0
  %2356 = vmatpush1.msra.mxu0 0.0
  %2357 = vmatprep.subr.mxu0 0.0
  %2358 = vmatpush1.msra.mxu0 0.0
  %2359 = vmatprep.subr.mxu0 0.0
  %2360 = vmatpush1.msra.mxu0 0.0
  %2361 = vmatprep.subr.mxu0 0.0
  %2362 = vmatpush1.msra.mxu0 0.0
  %2363 = vmatprep.subr.mxu0 0.0
  %2364 = vmatpush1.msra.mxu0 0.0
  %2365 = vmatprep.subr.mxu0 0.0
  %2366 = vmatpush1.msra.mxu0 0.0
  %2367 = vmatprep.subr.mxu0 0.0
  %2368 = vmatpush1.msra.mxu0 0.0
  %2369 = vmatprep.subr.mxu0 0.0
  %2370 = vmatpush1.msra.mxu0 0.0
  %2371 = vmatprep.subr.mxu0 0.0
  %2372 = vmatpush1.msra.mxu0 0.0
  %2373 = vmatprep.subr.mxu0 0.0
  %2374 = vmatpush1.msra.mxu0 0.0
  %2375 = vmatprep.subr.mxu0 0.0
  %2376 = vmatpush1.msra.mxu0 0.0
  %2377 = vmatprep.subr.mxu0 0.0
  %2378 = vmatpush1.msra.mxu0 0.0
  %2379 = vmatprep.subr.mxu0 0.0
  %2380 = vmatpush1.msra.mxu0 0.0
  %2381 = vmatprep.mubr.f32.mxu0 0.0
  %2382 = vmatmul.mubr.f32.gmra.mrb[0].mxu0 %v2315
  %v2383 = vpop.f32.mrb[0].mxu0
  %v2384 = vadd.f32 0.0, %v2383
  %v2385 = vpop.f32.mrb[0].mxu0
  %2386 = vdwg.mxu0
  %v2388 = vsel %vm1506, %v2384, 0
  %2390 = vmatprep.subr.mxu0 0.0
  %2391 = vmatpush1.msra.mxu0 %v1482
  %2392 = vmatprep.subr.mxu0 0.0
  %2393 = vmatpush1.msra.mxu0 %v1483
  %2394 = vmatprep.subr.mxu0 0.0
  %2395 = vmatpush1.msra.mxu0 0.0
  %2396 = vmatprep.subr.mxu0 0.0
  %2397 = vmatpush1.msra.mxu0 0.0
  %2398 = vmatprep.subr.mxu0 0.0
  %2399 = vmatpush1.msra.mxu0 0.0
  %2400 = vmatprep.subr.mxu0 0.0
  %2401 = vmatpush1.msra.mxu0 0.0
  %2402 = vmatprep.subr.mxu0 0.0
  %2403 = vmatpush1.msra.mxu0 0.0
  %2404 = vmatprep.subr.mxu0 0.0
  %2405 = vmatpush1.msra.mxu0 0.0
  %2406 = vmatprep.subr.mxu0 0.0
  %2407 = vmatpush1.msra.mxu0 0.0
  %2408 = vmatprep.subr.mxu0 0.0
  %2409 = vmatpush1.msra.mxu0 0.0
  %2410 = vmatprep.subr.mxu0 0.0
  %2411 = vmatpush1.msra.mxu0 0.0
  %2412 = vmatprep.subr.mxu0 0.0
  %2413 = vmatpush1.msra.mxu0 0.0
  %2414 = vmatprep.subr.mxu0 0.0
  %2415 = vmatpush1.msra.mxu0 0.0
  %2416 = vmatprep.subr.mxu0 0.0
  %2417 = vmatpush1.msra.mxu0 0.0
  %2418 = vmatprep.subr.mxu0 0.0
  %2419 = vmatpush1.msra.mxu0 0.0
  %2420 = vmatprep.subr.mxu0 0.0
  %2421 = vmatpush1.msra.mxu0 0.0
  %2422 = vmatprep.subr.mxu0 0.0
  %2423 = vmatpush1.msra.mxu0 0.0
  %2424 = vmatprep.subr.mxu0 0.0
  %2425 = vmatpush1.msra.mxu0 0.0
  %2426 = vmatprep.subr.mxu0 0.0
  %2427 = vmatpush1.msra.mxu0 0.0
  %2428 = vmatprep.subr.mxu0 0.0
  %2429 = vmatpush1.msra.mxu0 0.0
  %2430 = vmatprep.subr.mxu0 0.0
  %2431 = vmatpush1.msra.mxu0 0.0
  %2432 = vmatprep.subr.mxu0 0.0
  %2433 = vmatpush1.msra.mxu0 0.0
  %2434 = vmatprep.subr.mxu0 0.0
  %2435 = vmatpush1.msra.mxu0 0.0
  %2436 = vmatprep.subr.mxu0 0.0
  %2437 = vmatpush1.msra.mxu0 0.0
  %2438 = vmatprep.subr.mxu0 0.0
  %2439 = vmatpush1.msra.mxu0 0.0
  %2440 = vmatprep.subr.mxu0 0.0
  %2441 = vmatpush1.msra.mxu0 0.0
  %2442 = vmatprep.subr.mxu0 0.0
  %2443 = vmatpush1.msra.mxu0 0.0
  %2444 = vmatprep.subr.mxu0 0.0
  %2445 = vmatpush1.msra.mxu0 0.0
  %2446 = vmatprep.subr.mxu0 0.0
  %2447 = vmatpush1.msra.mxu0 0.0
  %2448 = vmatprep.subr.mxu0 0.0
  %2449 = vmatpush1.msra.mxu0 0.0
  %2450 = vmatprep.subr.mxu0 0.0
  %2451 = vmatpush1.msra.mxu0 0.0
  %2452 = vmatprep.subr.mxu0 0.0
  %2453 = vmatpush1.msra.mxu0 0.0
  %2454 = vmatprep.mubr.f32.mxu0 0.0
  %2455 = vmatmul.mubr.f32.gmra.mrb[0].mxu0 %v2388
  %v2456 = vpop.f32.mrb[0].mxu0
  %v2457 = vadd.f32 0.0, %v2456
  %v2458 = vpop.f32.mrb[0].mxu0
  %2459 = vdwg.mxu0
  %v2460 = vadd.f32 %v1732, %v2457
  %v2462 = vlaneseq
  %v2463 = vshrl.u32 %v2462, 7
  %v2464 = vsub.s32 0, %v2463
  %v2465 = vrot.slane %v1484, %v2464
  %v2467 = vadd.f32 %v2460, %v2465
  %v2468 = vsel %vm1506, %v2467, 0.0
  %2469 = vadd.xlane.f32.xlu0 %v2468
  %v2470 = vpop.xlane.xlu0 %2469
  %v2471 = vrcp.pop 16.0
  %v2472 = vmul.f32 %v2470, %v2471
  %v2473 = vsub.f32 %v2467, %v2472
  %v2474 = vmul.f32 %v2473, %v2473
  %v2475 = vsel %vm1506, %v2474, 0.0
  %2476 = vadd.xlane.f32.xlu0 %v2475
  %v2477 = vpop.xlane.xlu0 %2476
  %v2478 = vmul.f32 %v2477, %v2471
  %v2479 = vadd.f32 %v2478, 1e-05
  %v2480 = vrsqrt.pop %v2479
  %v2481 = vmul.f32 %v2473, %v2480
  %v2483 = vlaneseq
  %v2484 = vshrl.u32 %v2483, 7
  %v2485 = vsub.s32 0, %v2484
  %v2486 = vrot.slane %v1490, %v2485
  %v2488 = vmul.f32 %v2481, %v2486
  %v2490 = vlaneseq
  %v2491 = vshrl.u32 %v2490, 7
  %v2492 = vsub.s32 0, %v2491
  %v2493 = vrot.slane %v1491, %v2492
  %v2495 = vadd.f32 %v2488, %v2493
  %v2497 = vlaneseq
  %v2498 = vshrl.u32 %v2497, 7
  %v2499 = vsub.s32 0, %v2498
  %v2500 = vrot.slane %v1487, %v2499
  %v2503 = vsel %vm1506, %v2495, 0
  %2505 = vmatprep.subr.mxu0 0.0
  %2506 = vmatpush1.msra.mxu0 %v1485
  %2507 = vmatprep.subr.mxu0 0.0
  %2508 = vmatpush1.msra.mxu0 %v1486
  %2509 = vmatprep.subr.mxu0 0.0
  %2510 = vmatpush1.msra.mxu0 0.0
  %2511 = vmatprep.subr.mxu0 0.0
  %2512 = vmatpush1.msra.mxu0 0.0
  %2513 = vmatprep.subr.mxu0 0.0
  %2514 = vmatpush1.msra.mxu0 0.0
  %2515 = vmatprep.subr.mxu0 0.0
  %2516 = vmatpush1.msra.mxu0 0.0
  %2517 = vmatprep.subr.mxu0 0.0
  %2518 = vmatpush1.msra.mxu0 0.0
  %2519 = vmatprep.subr.mxu0 0.0
  %2520 = vmatpush1.msra.mxu0 0.0
  %2521 = vmatprep.subr.mxu0 0.0
  %2522 = vmatpush1.msra.mxu0 0.0
  %2523 = vmatprep.subr.mxu0 0.0
  %2524 = vmatpush1.msra.mxu0 0.0
  %2525 = vmatprep.subr.mxu0 0.0
  %2526 = vmatpush1.msra.mxu0 0.0
  %2527 = vmatprep.subr.mxu0 0.0
  %2528 = vmatpush1.msra.mxu0 0.0
  %2529 = vmatprep.subr.mxu0 0.0
  %2530 = vmatpush1.msra.mxu0 0.0
  %2531 = vmatprep.subr.mxu0 0.0
  %2532 = vmatpush1.msra.mxu0 0.0
  %2533 = vmatprep.subr.mxu0 0.0
  %2534 = vmatpush1.msra.mxu0 0.0
  %2535 = vmatprep.subr.mxu0 0.0
  %2536 = vmatpush1.msra.mxu0 0.0
  %2537 = vmatprep.subr.mxu0 0.0
  %2538 = vmatpush1.msra.mxu0 0.0
  %2539 = vmatprep.subr.mxu0 0.0
  %2540 = vmatpush1.msra.mxu0 0.0
  %2541 = vmatprep.subr.mxu0 0.0
  %2542 = vmatpush1.msra.mxu0 0.0
  %2543 = vmatprep.subr.mxu0 0.0
  %2544 = vmatpush1.msra.mxu0 0.0
  %2545 = vmatprep.subr.mxu0 0.0
  %2546 = vmatpush1.msra.mxu0 0.0
  %2547 = vmatprep.subr.mxu0 0.0
  %2548 = vmatpush1.msra.mxu0 0.0
  %2549 = vmatprep.subr.mxu0 0.0
  %2550 = vmatpush1.msra.mxu0 0.0
  %2551 = vmatprep.subr.mxu0 0.0
  %2552 = vmatpush1.msra.mxu0 0.0
  %2553 = vmatprep.subr.mxu0 0.0
  %2554 = vmatpush1.msra.mxu0 0.0
  %2555 = vmatprep.subr.mxu0 0.0
  %2556 = vmatpush1.msra.mxu0 0.0
  %2557 = vmatprep.subr.mxu0 0.0
  %2558 = vmatpush1.msra.mxu0 0.0
  %2559 = vmatprep.subr.mxu0 0.0
  %2560 = vmatpush1.msra.mxu0 0.0
  %2561 = vmatprep.subr.mxu0 0.0
  %2562 = vmatpush1.msra.mxu0 0.0
  %2563 = vmatprep.subr.mxu0 0.0
  %2564 = vmatpush1.msra.mxu0 0.0
  %2565 = vmatprep.subr.mxu0 0.0
  %2566 = vmatpush1.msra.mxu0 0.0
  %2567 = vmatprep.subr.mxu0 0.0
  %2568 = vmatpush1.msra.mxu0 0.0
  %2569 = vmatprep.mubr.f32.mxu0 0.0
  %2570 = vmatmul.mubr.f32.gmra.mrb[0].mxu0 %v2503
  %v2571 = vpop.f32.mrb[0].mxu0
  %v2572 = vadd.f32 %v2500, %v2571
  %v2573 = vpop.f32.mrb[0].mxu0
  %2574 = vdwg.mxu0
  %v2575 = vmax.f32 %v2572, 0.0
  %vm2576 = vcmask 31744
  %v2578 = vsel %vm2576, %v2575, 0
  %vm2580 = vcmask 1043456
  %v2582 = vsel %vm2580, %v1488, 0
  %2584 = vmatprep.subr.mxu0 0.0
  %2585 = vmatpush1.msra.mxu0 %v2582
  %2586 = vmatprep.subr.mxu0 0.0
  %2587 = vmatpush1.msra.mxu0 0.0
  %2588 = vmatprep.subr.mxu0 0.0
  %2589 = vmatpush1.msra.mxu0 0.0
  %2590 = vmatprep.subr.mxu0 0.0
  %2591 = vmatpush1.msra.mxu0 0.0
  %2592 = vmatprep.subr.mxu0 0.0
  %2593 = vmatpush1.msra.mxu0 0.0
  %2594 = vmatprep.subr.mxu0 0.0
  %2595 = vmatpush1.msra.mxu0 0.0
  %2596 = vmatprep.subr.mxu0 0.0
  %2597 = vmatpush1.msra.mxu0 0.0
  %2598 = vmatprep.subr.mxu0 0.0
  %2599 = vmatpush1.msra.mxu0 0.0
  %2600 = vmatprep.subr.mxu0 0.0
  %2601 = vmatpush1.msra.mxu0 0.0
  %2602 = vmatprep.subr.mxu0 0.0
  %2603 = vmatpush1.msra.mxu0 0.0
  %2604 = vmatprep.subr.mxu0 0.0
  %2605 = vmatpush1.msra.mxu0 0.0
  %2606 = vmatprep.subr.mxu0 0.0
  %2607 = vmatpush1.msra.mxu0 0.0
  %2608 = vmatprep.subr.mxu0 0.0
  %2609 = vmatpush1.msra.mxu0 0.0
  %2610 = vmatprep.subr.mxu0 0.0
  %2611 = vmatpush1.msra.mxu0 0.0
  %2612 = vmatprep.subr.mxu0 0.0
  %2613 = vmatpush1.msra.mxu0 0.0
  %2614 = vmatprep.subr.mxu0 0.0
  %2615 = vmatpush1.msra.mxu0 0.0
  %2616 = vmatprep.subr.mxu0 0.0
  %2617 = vmatpush1.msra.mxu0 0.0
  %2618 = vmatprep.subr.mxu0 0.0
  %2619 = vmatpush1.msra.mxu0 0.0
  %2620 = vmatprep.subr.mxu0 0.0
  %2621 = vmatpush1.msra.mxu0 0.0
  %2622 = vmatprep.subr.mxu0 0.0
  %2623 = vmatpush1.msra.mxu0 0.0
  %2624 = vmatprep.subr.mxu0 0.0
  %2625 = vmatpush1.msra.mxu0 0.0
  %2626 = vmatprep.subr.mxu0 0.0
  %2627 = vmatpush1.msra.mxu0 0.0
  %2628 = vmatprep.subr.mxu0 0.0
  %2629 = vmatpush1.msra.mxu0 0.0
  %2630 = vmatprep.subr.mxu0 0.0
  %2631 = vmatpush1.msra.mxu0 0.0
  %2632 = vmatprep.subr.mxu0 0.0
  %2633 = vmatpush1.msra.mxu0 0.0
  %2634 = vmatprep.subr.mxu0 0.0
  %2635 = vmatpush1.msra.mxu0 0.0
  %2636 = vmatprep.subr.mxu0 0.0
  %2637 = vmatpush1.msra.mxu0 0.0
  %2638 = vmatprep.subr.mxu0 0.0
  %2639 = vmatpush1.msra.mxu0 0.0
  %2640 = vmatprep.subr.mxu0 0.0
  %2641 = vmatpush1.msra.mxu0 0.0
  %2642 = vmatprep.subr.mxu0 0.0
  %2643 = vmatpush1.msra.mxu0 0.0
  %2644 = vmatprep.subr.mxu0 0.0
  %2645 = vmatpush1.msra.mxu0 0.0
  %2646 = vmatprep.subr.mxu0 0.0
  %2647 = vmatpush1.msra.mxu0 0.0
  %2648 = vmatprep.mubr.f32.mxu0 0.0
  %2649 = vmatmul.mubr.f32.gmra.mrb[0].mxu0 %v2578
  %v2650 = vpop.f32.mrb[0].mxu0
  %v2651 = vadd.f32 0.0, %v2650
  %v2652 = vpop.f32.mrb[0].mxu0
  %2653 = vdwg.mxu0
  %v2654 = vadd.f32 %v2495, %v2651
  %v2656 = vlaneseq
  %v2657 = vshrl.u32 %v2656, 7
  %v2658 = vsub.s32 0, %v2657
  %v2659 = vrot.slane %v1489, %v2658
  %v2661 = vadd.f32 %v2654, %v2659
  %v2662 = vsel %vm1506, %v2661, 0.0
  %2663 = vadd.xlane.f32.xlu0 %v2662
  %v2664 = vpop.xlane.xlu0 %2663
  %v2665 = vmul.f32 %v2664, %v2471
  %v2666 = vsub.f32 %v2661, %v2665
  %v2667 = vmul.f32 %v2666, %v2666
  %v2668 = vsel %vm1506, %v2667, 0.0
  %2669 = vadd.xlane.f32.xlu0 %v2668
  %v2670 = vpop.xlane.xlu0 %2669
  %v2671 = vmul.f32 %v2670, %v2471
  %v2672 = vadd.f32 %v2671, 1e-05
  %v2673 = vrsqrt.pop %v2672
  %v2674 = vmul.f32 %v2666, %v2673
  %v2676 = vlaneseq
  %v2677 = vshrl.u32 %v2676, 7
  %v2678 = vsub.s32 0, %v2677
  %v2679 = vrot.slane %v1492, %v2678
  %v2681 = vmul.f32 %v2674, %v2679
  %v2683 = vlaneseq
  %v2684 = vshrl.u32 %v2683, 7
  %v2685 = vsub.s32 0, %v2684
  %v2686 = vrot.slane %v1493, %v2685
  %v2688 = vadd.f32 %v2681, %v2686
  %v2689 = vld [vmem:[%s11] sm:$0xff]
  %v2690 = vld [vmem:[%s11 + $0x8] sm:$0xff]
  %v2691 = vld [vmem:[%s11 + $0x10] sm:$0xff]
  %v2692 = vld [vmem:[%s11 + $0x18] sm:$0xff]
  %v2693 = vld [vmem:[%s13] sm:$0xff]
  %v2694 = vld [vmem:[%s13 + $0x8] sm:$0xff]
  %v2695 = vld [vmem:[%s13 + $0x10] sm:$0xff]
  %v2696 = vld [vmem:[%s13 + $0x18] sm:$0xff]
  %v2697 = vld [vmem:[%s13 + $0x20] sm:$0xff]
  %v2698 = vld [vmem:[%s13 + $0x28] sm:$0xff]
  %v2699 = vld [vmem:[%s13 + $0x30] sm:$0xff]
  %v2700 = vld [vmem:[%s13 + $0x38] sm:$0xff]
  %v2702 = vsel %vm1588, %v2689, 0
  %v2705 = vsel %vm1588, %v2690, 0
  %v2708 = vsel %vm1588, %v2691, 0
  %v2711 = vsel %vm1588, %v2692, 0
  %2713 = vmatprep.subr.mxu0 0.0
  %2714 = vmatpush1.msra.mxu0 %v2688
  %2715 = vmatprep.subr.mxu0 0.0
  %2716 = vmatpush1.msra.mxu0 0.0
  %2717 = vmatprep.subr.mxu0 0.0
  %2718 = vmatpush1.msra.mxu0 0.0
  %2719 = vmatprep.subr.mxu0 0.0
  %2720 = vmatpush1.msra.mxu0 0.0
  %2721 = vmatprep.subr.mxu0 0.0
  %2722 = vmatpush1.msra.mxu0 0.0
  %2723 = vmatprep.subr.mxu0 0.0
  %2724 = vmatpush1.msra.mxu0 0.0
  %2725 = vmatprep.subr.mxu0 0.0
  %2726 = vmatpush1.msra.mxu0 0.0
  %2727 = vmatprep.subr.mxu0 0.0
  %2728 = vmatpush1.msra.mxu0 0.0
  %2729 = vmatprep.subr.mxu0 0.0
  %2730 = vmatpush1.msra.mxu0 0.0
  %2731 = vmatprep.subr.mxu0 0.0
  %2732 = vmatpush1.msra.mxu0 0.0
  %2733 = vmatprep.subr.mxu0 0.0
  %2734 = vmatpush1.msra.mxu0 0.0
  %2735 = vmatprep.subr.mxu0 0.0
  %2736 = vmatpush1.msra.mxu0 0.0
  %2737 = vmatprep.subr.mxu0 0.0
  %2738 = vmatpush1.msra.mxu0 0.0
  %2739 = vmatprep.subr.mxu0 0.0
  %2740 = vmatpush1.msra.mxu0 0.0
  %2741 = vmatprep.subr.mxu0 0.0
  %2742 = vmatpush1.msra.mxu0 0.0
  %2743 = vmatprep.subr.mxu0 0.0
  %2744 = vmatpush1.msra.mxu0 0.0
  %2745 = vmatprep.subr.mxu0 0.0
  %2746 = vmatpush1.msra.mxu0 0.0
  %2747 = vmatprep.subr.mxu0 0.0
  %2748 = vmatpush1.msra.mxu0 0.0
  %2749 = vmatprep.subr.mxu0 0.0
  %2750 = vmatpush1.msra.mxu0 0.0
  %2751 = vmatprep.subr.mxu0 0.0
  %2752 = vmatpush1.msra.mxu0 0.0
  %2753 = vmatprep.subr.mxu0 0.0
  %2754 = vmatpush1.msra.mxu0 0.0
  %2755 = vmatprep.subr.mxu0 0.0
  %2756 = vmatpush1.msra.mxu0 0.0
  %2757 = vmatprep.subr.mxu0 0.0
  %2758 = vmatpush1.msra.mxu0 0.0
  %2759 = vmatprep.subr.mxu0 0.0
  %2760 = vmatpush1.msra.mxu0 0.0
  %2761 = vmatprep.subr.mxu0 0.0
  %2762 = vmatpush1.msra.mxu0 0.0
  %2763 = vmatprep.subr.mxu0 0.0
  %2764 = vmatpush1.msra.mxu0 0.0
  %2765 = vmatprep.subr.mxu0 0.0
  %2766 = vmatpush1.msra.mxu0 0.0
  %2767 = vmatprep.subr.mxu0 0.0
  %2768 = vmatpush1.msra.mxu0 0.0
  %2769 = vmatprep.subr.mxu0 0.0
  %2770 = vmatpush1.msra.mxu0 0.0
  %2771 = vmatprep.subr.mxu0 0.0
  %2772 = vmatpush1.msra.mxu0 0.0
  %2773 = vmatprep.subr.mxu0 0.0
  %2774 = vmatpush1.msra.mxu0 0.0
  %2775 = vmatprep.subr.mxu0 0.0
  %2776 = vmatpush1.msra.mxu0 0.0
  %2777 = vmatprep.mubr.f32.mxu0 0.0
  %2778 = vmatmul.mubr.f32.gmra.mrb[0].mxu0 %v2702
  %v2779 = vpop.f32.mrb[0].mxu0
  %v2780 = vadd.f32 0.0, %v2779
  %v2781 = vpop.f32.mrb[0].mxu0
  %2782 = vmatprep.mubr.f32.mxu0 0.0
  %2783 = vmatmul.mubr.f32.gmra.mrb[0].mxu0 %v2705
  %v2784 = vpop.f32.mrb[0].mxu0
  %v2785 = vadd.f32 0.0, %v2784
  %v2786 = vpop.f32.mrb[0].mxu0
  %2787 = vmatprep.mubr.f32.mxu0 0.0
  %2788 = vmatmul.mubr.f32.gmra.mrb[0].mxu0 %v2708
  %v2789 = vpop.f32.mrb[0].mxu0
  %v2790 = vadd.f32 0.0, %v2789
  %v2791 = vpop.f32.mrb[0].mxu0
  %2792 = vmatprep.mubr.f32.mxu0 0.0
  %2793 = vmatmul.mubr.f32.gmra.mrb[0].mxu0 %v2711
  %v2794 = vpop.f32.mrb[0].mxu0
  %v2795 = vadd.f32 0.0, %v2794
  %v2796 = vpop.f32.mrb[0].mxu0
  %2797 = vdwg.mxu0
  %v2799 = vsel %vm1506, %v2785, 0
  %2801 = vmatprep.subr.mxu0 0.0
  %2802 = vmatpush1.msra.mxu0 %v2695
  %2803 = vmatprep.subr.mxu0 0.0
  %2804 = vmatpush1.msra.mxu0 %v2696
  %2805 = vmatprep.subr.mxu0 0.0
  %2806 = vmatpush1.msra.mxu0 0.0
  %2807 = vmatprep.subr.mxu0 0.0
  %2808 = vmatpush1.msra.mxu0 0.0
  %2809 = vmatprep.subr.mxu0 0.0
  %2810 = vmatpush1.msra.mxu0 0.0
  %2811 = vmatprep.subr.mxu0 0.0
  %2812 = vmatpush1.msra.mxu0 0.0
  %2813 = vmatprep.subr.mxu0 0.0
  %2814 = vmatpush1.msra.mxu0 0.0
  %2815 = vmatprep.subr.mxu0 0.0
  %2816 = vmatpush1.msra.mxu0 0.0
  %2817 = vmatprep.subr.mxu0 0.0
  %2818 = vmatpush1.msra.mxu0 0.0
  %2819 = vmatprep.subr.mxu0 0.0
  %2820 = vmatpush1.msra.mxu0 0.0
  %2821 = vmatprep.subr.mxu0 0.0
  %2822 = vmatpush1.msra.mxu0 0.0
  %2823 = vmatprep.subr.mxu0 0.0
  %2824 = vmatpush1.msra.mxu0 0.0
  %2825 = vmatprep.subr.mxu0 0.0
  %2826 = vmatpush1.msra.mxu0 0.0
  %2827 = vmatprep.subr.mxu0 0.0
  %2828 = vmatpush1.msra.mxu0 0.0
  %2829 = vmatprep.subr.mxu0 0.0
  %2830 = vmatpush1.msra.mxu0 0.0
  %2831 = vmatprep.subr.mxu0 0.0
  %2832 = vmatpush1.msra.mxu0 0.0
  %2833 = vmatprep.subr.mxu0 0.0
  %2834 = vmatpush1.msra.mxu0 0.0
  %2835 = vmatprep.subr.mxu0 0.0
  %2836 = vmatpush1.msra.mxu0 0.0
  %2837 = vmatprep.subr.mxu0 0.0
  %2838 = vmatpush1.msra.mxu0 0.0
  %2839 = vmatprep.subr.mxu0 0.0
  %2840 = vmatpush1.msra.mxu0 0.0
  %2841 = vmatprep.subr.mxu0 0.0
  %2842 = vmatpush1.msra.mxu0 0.0
  %2843 = vmatprep.subr.mxu0 0.0
  %2844 = vmatpush1.msra.mxu0 0.0
  %2845 = vmatprep.subr.mxu0 0.0
  %2846 = vmatpush1.msra.mxu0 0.0
  %2847 = vmatprep.subr.mxu0 0.0
  %2848 = vmatpush1.msra.mxu0 0.0
  %2849 = vmatprep.subr.mxu0 0.0
  %2850 = vmatpush1.msra.mxu0 0.0
  %2851 = vmatprep.subr.mxu0 0.0
  %2852 = vmatpush1.msra.mxu0 0.0
  %2853 = vmatprep.subr.mxu0 0.0
  %2854 = vmatpush1.msra.mxu0 0.0
  %2855 = vmatprep.subr.mxu0 0.0
  %2856 = vmatpush1.msra.mxu0 0.0
  %2857 = vmatprep.subr.mxu0 0.0
  %2858 = vmatpush1.msra.mxu0 0.0
  %2859 = vmatprep.subr.mxu0 0.0
  %2860 = vmatpush1.msra.mxu0 0.0
  %2861 = vmatprep.subr.mxu0 0.0
  %2862 = vmatpush1.msra.mxu0 0.0
  %2863 = vmatprep.subr.mxu0 0.0
  %2864 = vmatpush1.msra.mxu0 0.0
  %2865 = vmatprep.mubr.f32.mxu0 0.0
  %2866 = vmatmul.mubr.f32.gmra.mrb[0].mxu0 %v2799
  %v2867 = vpop.f32.mrb[0].mxu0
  %v2868 = vadd.f32 0.0, %v2867
  %v2869 = vpop.f32.mrb[0].mxu0
  %2870 = vdwg.mxu0
  %v2872 = vsel %vm1506, %v2780, 0
  %2874 = vmatprep.subr.mxu0 0.0
  %2875 = vmatpush1.msra.mxu0 %v2693
  %2876 = vmatprep.subr.mxu0 0.0
  %2877 = vmatpush1.msra.mxu0 %v2694
  %2878 = vmatprep.subr.mxu0 0.0
  %2879 = vmatpush1.msra.mxu0 0.0
  %2880 = vmatprep.subr.mxu0 0.0
  %2881 = vmatpush1.msra.mxu0 0.0
  %2882 = vmatprep.subr.mxu0 0.0
  %2883 = vmatpush1.msra.mxu0 0.0
  %2884 = vmatprep.subr.mxu0 0.0
  %2885 = vmatpush1.msra.mxu0 0.0
  %2886 = vmatprep.subr.mxu0 0.0
  %2887 = vmatpush1.msra.mxu0 0.0
  %2888 = vmatprep.subr.mxu0 0.0
  %2889 = vmatpush1.msra.mxu0 0.0
  %2890 = vmatprep.subr.mxu0 0.0
  %2891 = vmatpush1.msra.mxu0 0.0
  %2892 = vmatprep.subr.mxu0 0.0
  %2893 = vmatpush1.msra.mxu0 0.0
  %2894 = vmatprep.subr.mxu0 0.0
  %2895 = vmatpush1.msra.mxu0 0.0
  %2896 = vmatprep.subr.mxu0 0.0
  %2897 = vmatpush1.msra.mxu0 0.0
  %2898 = vmatprep.subr.mxu0 0.0
  %2899 = vmatpush1.msra.mxu0 0.0
  %2900 = vmatprep.subr.mxu0 0.0
  %2901 = vmatpush1.msra.mxu0 0.0
  %2902 = vmatprep.subr.mxu0 0.0
  %2903 = vmatpush1.msra.mxu0 0.0
  %2904 = vmatprep.subr.mxu0 0.0
  %2905 = vmatpush1.msra.mxu0 0.0
  %2906 = vmatprep.subr.mxu0 0.0
  %2907 = vmatpush1.msra.mxu0 0.0
  %2908 = vmatprep.subr.mxu0 0.0
  %2909 = vmatpush1.msra.mxu0 0.0
  %2910 = vmatprep.subr.mxu0 0.0
  %2911 = vmatpush1.msra.mxu0 0.0
  %2912 = vmatprep.subr.mxu0 0.0
  %2913 = vmatpush1.msra.mxu0 0.0
  %2914 = vmatprep.subr.mxu0 0.0
  %2915 = vmatpush1.msra.mxu0 0.0
  %2916 = vmatprep.subr.mxu0 0.0
  %2917 = vmatpush1.msra.mxu0 0.0
  %2918 = vmatprep.subr.mxu0 0.0
  %2919 = vmatpush1.msra.mxu0 0.0
  %2920 = vmatprep.subr.mxu0 0.0
  %2921 = vmatpush1.msra.mxu0 0.0
  %2922 = vmatprep.subr.mxu0 0.0
  %2923 = vmatpush1.msra.mxu0 0.0
  %2924 = vmatprep.subr.mxu0 0.0
  %2925 = vmatpush1.msra.mxu0 0.0
  %2926 = vmatprep.subr.mxu0 0.0
  %2927 = vmatpush1.msra.mxu0 0.0
  %2928 = vmatprep.subr.mxu0 0.0
  %2929 = vmatpush1.msra.mxu0 0.0
  %2930 = vmatprep.subr.mxu0 0.0
  %2931 = vmatpush1.msra.mxu0 0.0
  %2932 = vmatprep.subr.mxu0 0.0
  %2933 = vmatpush1.msra.mxu0 0.0
  %2934 = vmatprep.subr.mxu0 0.0
  %2935 = vmatpush1.msra.mxu0 0.0
  %2936 = vmatprep.subr.mxu0 0.0
  %2937 = vmatpush1.msra.mxu0 0.0
  %2938 = vmatprep.mubr.f32.mxu0 0.0
  %2939 = vmatmul.mubr.f32.gmra.mrb[0].mxu0 %v2872
  %v2940 = vpop.f32.mrb[0].mxu0
  %v2941 = vadd.f32 %v2868, %v2940
  %v2942 = vpop.f32.mrb[0].mxu0
  %2943 = vdwg.mxu0
  %v2945 = vsel %vm1506, %v2790, 0
  %2947 = vmatprep.subr.mxu0 0.0
  %2948 = vmatpush1.msra.mxu0 %v2697
  %2949 = vmatprep.subr.mxu0 0.0
  %2950 = vmatpush1.msra.mxu0 %v2698
  %2951 = vmatprep.subr.mxu0 0.0
  %2952 = vmatpush1.msra.mxu0 0.0
  %2953 = vmatprep.subr.mxu0 0.0
  %2954 = vmatpush1.msra.mxu0 0.0
  %2955 = vmatprep.subr.mxu0 0.0
  %2956 = vmatpush1.msra.mxu0 0.0
  %2957 = vmatprep.subr.mxu0 0.0
  %2958 = vmatpush1.msra.mxu0 0.0
  %2959 = vmatprep.subr.mxu0 0.0
  %2960 = vmatpush1.msra.mxu0 0.0
  %2961 = vmatprep.subr.mxu0 0.0
  %2962 = vmatpush1.msra.mxu0 0.0
  %2963 = vmatprep.subr.mxu0 0.0
  %2964 = vmatpush1.msra.mxu0 0.0
  %2965 = vmatprep.subr.mxu0 0.0
  %2966 = vmatpush1.msra.mxu0 0.0
  %2967 = vmatprep.subr.mxu0 0.0
  %2968 = vmatpush1.msra.mxu0 0.0
  %2969 = vmatprep.subr.mxu0 0.0
  %2970 = vmatpush1.msra.mxu0 0.0
  %2971 = vmatprep.subr.mxu0 0.0
  %2972 = vmatpush1.msra.mxu0 0.0
  %2973 = vmatprep.subr.mxu0 0.0
  %2974 = vmatpush1.msra.mxu0 0.0
  %2975 = vmatprep.subr.mxu0 0.0
  %2976 = vmatpush1.msra.mxu0 0.0
  %2977 = vmatprep.subr.mxu0 0.0
  %2978 = vmatpush1.msra.mxu0 0.0
  %2979 = vmatprep.subr.mxu0 0.0
  %2980 = vmatpush1.msra.mxu0 0.0
  %2981 = vmatprep.subr.mxu0 0.0
  %2982 = vmatpush1.msra.mxu0 0.0
  %2983 = vmatprep.subr.mxu0 0.0
  %2984 = vmatpush1.msra.mxu0 0.0
  %2985 = vmatprep.subr.mxu0 0.0
  %2986 = vmatpush1.msra.mxu0 0.0
  %2987 = vmatprep.subr.mxu0 0.0
  %2988 = vmatpush1.msra.mxu0 0.0
  %2989 = vmatprep.subr.mxu0 0.0
  %2990 = vmatpush1.msra.mxu0 0.0
  %2991 = vmatprep.subr.mxu0 0.0
  %2992 = vmatpush1.msra.mxu0 0.0
  %2993 = vmatprep.subr.mxu0 0.0
  %2994 = vmatpush1.msra.mxu0 0.0
  %2995 = vmatprep.subr.mxu0 0.0
  %2996 = vmatpush1.msra.mxu0 0.0
  %2997 = vmatprep.subr.mxu0 0.0
  %2998 = vmatpush1.msra.mxu0 0.0
  %2999 = vmatprep.subr.mxu0 0.0
  %3000 = vmatpush1.msra.mxu0 0.0
  %3001 = vmatprep.subr.mxu0 0.0
  %3002 = vmatpush1.msra.mxu0 0.0
  %3003 = vmatprep.subr.mxu0 0.0
  %3004 = vmatpush1.msra.mxu0 0.0
  %3005 = vmatprep.subr.mxu0 0.0
  %3006 = vmatpush1.msra.mxu0 0.0
  %3007 = vmatprep.subr.mxu0 0.0
  %3008 = vmatpush1.msra.mxu0 0.0
  %3009 = vmatprep.subr.mxu0 0.0
  %3010 = vmatpush1.msra.mxu0 0.0
  %3011 = vmatprep.mubr.f32.mxu0 0.0
  %3012 = vmatmul.mubr.f32.gmra.mrb[0].mxu0 %v2945
  %v3013 = vpop.f32.mrb[0].mxu0
  %v3014 = vadd.f32 0.0, %v3013
  %v3015 = vpop.f32.mrb[0].mxu0
  %3016 = vdwg.mxu0
  %v3017 = vadd.f32 %v2941, %v3014
  %v3019 = vsel %vm1506, %v2795, 0
  %3021 = vmatprep.subr.mxu0 0.0
  %3022 = vmatpush1.msra.mxu0 %v2699
  %3023 = vmatprep.subr.mxu0 0.0
  %3024 = vmatpush1.msra.mxu0 %v2700
  %3025 = vmatprep.subr.mxu0 0.0
  %3026 = vmatpush1.msra.mxu0 0.0
  %3027 = vmatprep.subr.mxu0 0.0
  %3028 = vmatpush1.msra.mxu0 0.0
  %3029 = vmatprep.subr.mxu0 0.0
  %3030 = vmatpush1.msra.mxu0 0.0
  %3031 = vmatprep.subr.mxu0 0.0
  %3032 = vmatpush1.msra.mxu0 0.0
  %3033 = vmatprep.subr.mxu0 0.0
  %3034 = vmatpush1.msra.mxu0 0.0
  %3035 = vmatprep.subr.mxu0 0.0
  %3036 = vmatpush1.msra.mxu0 0.0
  %3037 = vmatprep.subr.mxu0 0.0
  %3038 = vmatpush1.msra.mxu0 0.0
  %3039 = vmatprep.subr.mxu0 0.0
  %3040 = vmatpush1.msra.mxu0 0.0
  %3041 = vmatprep.subr.mxu0 0.0
  %3042 = vmatpush1.msra.mxu0 0.0
  %3043 = vmatprep.subr.mxu0 0.0
  %3044 = vmatpush1.msra.mxu0 0.0
  %3045 = vmatprep.subr.mxu0 0.0
  %3046 = vmatpush1.msra.mxu0 0.0
  %3047 = vmatprep.subr.mxu0 0.0
  %3048 = vmatpush1.msra.mxu0 0.0
  %3049 = vmatprep.subr.mxu0 0.0
  %3050 = vmatpush1.msra.mxu0 0.0
  %3051 = vmatprep.subr.mxu0 0.0
  %3052 = vmatpush1.msra.mxu0 0.0
  %3053 = vmatprep.subr.mxu0 0.0
  %3054 = vmatpush1.msra.mxu0 0.0
  %3055 = vmatprep.subr.mxu0 0.0
  %3056 = vmatpush1.msra.mxu0 0.0
  %3057 = vmatprep.subr.mxu0 0.0
  %3058 = vmatpush1.msra.mxu0 0.0
  %3059 = vmatprep.subr.mxu0 0.0
  %3060 = vmatpush1.msra.mxu0 0.0
  %3061 = vmatprep.subr.mxu0 0.0
  %3062 = vmatpush1.msra.mxu0 0.0
  %3063 = vmatprep.subr.mxu0 0.0
  %3064 = vmatpush1.msra.mxu0 0.0
  %3065 = vmatprep.subr.mxu0 0.0
  %3066 = vmatpush1.msra.mxu0 0.0
  %3067 = vmatprep.subr.mxu0 0.0
  %3068 = vmatpush1.msra.mxu0 0.0
  %3069 = vmatprep.subr.mxu0 0.0
  %3070 = vmatpush1.msra.mxu0 0.0
  %3071 = vmatprep.subr.mxu0 0.0
  %3072 = vmatpush1.msra.mxu0 0.0
  %3073 = vmatprep.subr.mxu0 0.0
  %3074 = vmatpush1.msra.mxu0 0.0
  %3075 = vmatprep.subr.mxu0 0.0
  %3076 = vmatpush1.msra.mxu0 0.0
  %3077 = vmatprep.subr.mxu0 0.0
  %3078 = vmatpush1.msra.mxu0 0.0
  %3079 = vmatprep.subr.mxu0 0.0
  %3080 = vmatpush1.msra.mxu0 0.0
  %3081 = vmatprep.subr.mxu0 0.0
  %3082 = vmatpush1.msra.mxu0 0.0
  %3083 = vmatprep.subr.mxu0 0.0
  %3084 = vmatpush1.msra.mxu0 0.0
  %3085 = vmatprep.mubr.f32.mxu0 0.0
  %3086 = vmatmul.mubr.f32.gmra.mrb[0].mxu0 %v3019
  %v3087 = vpop.f32.mrb[0].mxu0
  %v3088 = vadd.f32 0.0, %v3087
  %v3089 = vpop.f32.mrb[0].mxu0
  %3090 = vdwg.mxu0
  %v3091 = vadd.f32 %v3017, %v3088
  %v3093 = vsel %vm1506, %v3091, 0
  %3095 = vmatprep.subr.mxu0 0.0
  %3096 = vmatpush1.msra.mxu0 %v1479
  %3097 = vmatprep.subr.mxu0 0.0
  %3098 = vmatpush1.msra.mxu0 %v1480
  %3099 = vmatprep.subr.mxu0 0.0
  %3100 = vmatpush1.msra.mxu0 0.0
  %3101 = vmatprep.subr.mxu0 0.0
  %3102 = vmatpush1.msra.mxu0 0.0
  %3103 = vmatprep.subr.mxu0 0.0
  %3104 = vmatpush1.msra.mxu0 0.0
  %3105 = vmatprep.subr.mxu0 0.0
  %3106 = vmatpush1.msra.mxu0 0.0
  %3107 = vmatprep.subr.mxu0 0.0
  %3108 = vmatpush1.msra.mxu0 0.0
  %3109 = vmatprep.subr.mxu0 0.0
  %3110 = vmatpush1.msra.mxu0 0.0
  %3111 = vmatprep.subr.mxu0 0.0
  %3112 = vmatpush1.msra.mxu0 0.0
  %3113 = vmatprep.subr.mxu0 0.0
  %3114 = vmatpush1.msra.mxu0 0.0
  %3115 = vmatprep.subr.mxu0 0.0
  %3116 = vmatpush1.msra.mxu0 0.0
  %3117 = vmatprep.subr.mxu0 0.0
  %3118 = vmatpush1.msra.mxu0 0.0
  %3119 = vmatprep.subr.mxu0 0.0
  %3120 = vmatpush1.msra.mxu0 0.0
  %3121 = vmatprep.subr.mxu0 0.0
  %3122 = vmatpush1.msra.mxu0 0.0
  %3123 = vmatprep.subr.mxu0 0.0
  %3124 = vmatpush1.msra.mxu0 0.0
  %3125 = vmatprep.subr.mxu0 0.0
  %3126 = vmatpush1.msra.mxu0 0.0
  %3127 = vmatprep.subr.mxu0 0.0
  %3128 = vmatpush1.msra.mxu0 0.0
  %3129 = vmatprep.subr.mxu0 0.0
  %3130 = vmatpush1.msra.mxu0 0.0
  %3131 = vmatprep.subr.mxu0 0.0
  %3132 = vmatpush1.msra.mxu0 0.0
  %3133 = vmatprep.subr.mxu0 0.0
  %3134 = vmatpush1.msra.mxu0 0.0
  %3135 = vmatprep.subr.mxu0 0.0
  %3136 = vmatpush1.msra.mxu0 0.0
  %3137 = vmatprep.subr.mxu0 0.0
  %3138 = vmatpush1.msra.mxu0 0.0
  %3139 = vmatprep.subr.mxu0 0.0
  %3140 = vmatpush1.msra.mxu0 0.0
  %3141 = vmatprep.subr.mxu0 0.0
  %3142 = vmatpush1.msra.mxu0 0.0
  %3143 = vmatprep.subr.mxu0 0.0
  %3144 = vmatpush1.msra.mxu0 0.0
  %3145 = vmatprep.subr.mxu0 0.0
  %3146 = vmatpush1.msra.mxu0 0.0
  %3147 = vmatprep.subr.mxu0 0.0
  %3148 = vmatpush1.msra.mxu0 0.0
  %3149 = vmatprep.subr.mxu0 0.0
  %3150 = vmatpush1.msra.mxu0 0.0
  %3151 = vmatprep.subr.mxu0 0.0
  %3152 = vmatpush1.msra.mxu0 0.0
  %3153 = vmatprep.subr.mxu0 0.0
  %3154 = vmatpush1.msra.mxu0 0.0
  %3155 = vmatprep.subr.mxu0 0.0
  %3156 = vmatpush1.msra.mxu0 0.0
  %3157 = vmatprep.subr.mxu0 0.0
  %3158 = vmatpush1.msra.mxu0 0.0
  %3159 = vmatprep.mubr.f32.mxu0 0.0
  %3160 = vmatmul.mubr.f32.gmra.mrb[0].mxu0 %v3093
  %v3161 = vpop.f32.mrb[0].mxu0
  %v3162 = vadd.f32 %v1739, %v3161
  %v3163 = vpop.f32.mrb[0].mxu0
  %3164 = vdwg.mxu0
  %3165 = vmatprep.subr.mxu0 0.0
  %3166 = vmatpush1.msra.mxu0 %v3162
  %3167 = vmatprep.subr.mxu0 0.0
  %3168 = vmatpush1.msra.mxu0 0.0
  %3169 = vmatprep.subr.mxu0 0.0
  %3170 = vmatpush1.msra.mxu0 0.0
  %3171 = vmatprep.subr.mxu0 0.0
  %3172 = vmatpush1.msra.mxu0 0.0
  %3173 = vmatprep.subr.mxu0 0.0
  %3174 = vmatpush1.msra.mxu0 0.0
  %3175 = vmatprep.subr.mxu0 0.0
  %3176 = vmatpush1.msra.mxu0 0.0
  %3177 = vmatprep.subr.mxu0 0.0
  %3178 = vmatpush1.msra.mxu0 0.0
  %3179 = vmatprep.subr.mxu0 0.0
  %3180 = vmatpush1.msra.mxu0 0.0
  %3181 = vmatprep.subr.mxu0 0.0
  %3182 = vmatpush1.msra.mxu0 0.0
  %3183 = vmatprep.subr.mxu0 0.0
  %3184 = vmatpush1.msra.mxu0 0.0
  %3185 = vmatprep.subr.mxu0 0.0
  %3186 = vmatpush1.msra.mxu0 0.0
  %3187 = vmatprep.subr.mxu0 0.0
  %3188 = vmatpush1.msra.mxu0 0.0
  %3189 = vmatprep.subr.mxu0 0.0
  %3190 = vmatpush1.msra.mxu0 0.0
  %3191 = vmatprep.subr.mxu0 0.0
  %3192 = vmatpush1.msra.mxu0 0.0
  %3193 = vmatprep.subr.mxu0 0.0
  %3194 = vmatpush1.msra.mxu0 0.0
  %3195 = vmatprep.subr.mxu0 0.0
  %3196 = vmatpush1.msra.mxu0 0.0
  %3197 = vmatprep.subr.mxu0 0.0
  %3198 = vmatpush1.msra.mxu0 0.0
  %3199 = vmatprep.subr.mxu0 0.0
  %3200 = vmatpush1.msra.mxu0 0.0
  %3201 = vmatprep.subr.mxu0 0.0
  %3202 = vmatpush1.msra.mxu0 0.0
  %3203 = vmatprep.subr.mxu0 0.0
  %3204 = vmatpush1.msra.mxu0 0.0
  %3205 = vmatprep.subr.mxu0 0.0
  %3206 = vmatpush1.msra.mxu0 0.0
  %3207 = vmatprep.subr.mxu0 0.0
  %3208 = vmatpush1.msra.mxu0 0.0
  %3209 = vmatprep.subr.mxu0 0.0
  %3210 = vmatpush1.msra.mxu0 0.0
  %3211 = vmatprep.subr.mxu0 0.0
  %3212 = vmatpush1.msra.mxu0 0.0
  %3213 = vmatprep.subr.mxu0 0.0
  %3214 = vmatpush1.msra.mxu0 0.0
  %3215 = vmatprep.subr.mxu0 0.0
  %3216 = vmatpush1.msra.mxu0 0.0
  %3217 = vmatprep.subr.mxu0 0.0
  %3218 = vmatpush1.msra.mxu0 0.0
  %3219 = vmatprep.subr.mxu0 0.0
  %3220 = vmatpush1.msra.mxu0 0.0
  %3221 = vmatprep.subr.mxu0 0.0
  %3222 = vmatpush1.msra.mxu0 0.0
  %3223 = vmatprep.subr.mxu0 0.0
  %3224 = vmatpush1.msra.mxu0 0.0
  %3225 = vmatprep.subr.mxu0 0.0
  %3226 = vmatpush1.msra.mxu0 0.0
  %3227 = vmatprep.subr.mxu0 0.0
  %3228 = vmatpush1.msra.mxu0 0.0
  %3229 = vmatprep.mubr.f32.mxu0 0.0
  %3230 = vmatmul.mubr.f32.gmra.mrb[0].mxu0 %v1815
  %v3231 = vpop.f32.mrb[0].mxu0
  %v3232 = vadd.f32 0.0, %v3231
  %v3233 = vpop.f32.mrb[0].mxu0
  %3234 = vmatprep.mubr.f32.mxu0 0.0
  %3235 = vmatmul.mubr.f32.gmra.mrb[0].mxu0 %v1818
  %v3236 = vpop.f32.mrb[0].mxu0
  %v3237 = vadd.f32 0.0, %v3236
  %v3238 = vpop.f32.mrb[0].mxu0
  %3239 = vmatprep.mubr.f32.mxu0 0.0
  %3240 = vmatmul.mubr.f32.gmra.mrb[0].mxu0 %v1821
  %v3241 = vpop.f32.mrb[0].mxu0
  %v3242 = vadd.f32 0.0, %v3241
  %v3243 = vpop.f32.mrb[0].mxu0
  %3244 = vmatprep.mubr.f32.mxu0 0.0
  %3245 = vmatmul.mubr.f32.gmra.mrb[0].mxu0 %v1824
  %v3246 = vpop.f32.mrb[0].mxu0
  %v3247 = vadd.f32 0.0, %v3246
  %v3248 = vpop.f32.mrb[0].mxu0
  %3249 = vmatprep.mubr.f32.mxu0 0.0
  %3250 = vmatmul.mubr.f32.gmra.mrb[0].mxu0 %v1827
  %v3251 = vpop.f32.mrb[0].mxu0
  %v3252 = vadd.f32 0.0, %v3251
  %v3253 = vpop.f32.mrb[0].mxu0
  %3254 = vmatprep.mubr.f32.mxu0 0.0
  %3255 = vmatmul.mubr.f32.gmra.mrb[0].mxu0 %v1830
  %v3256 = vpop.f32.mrb[0].mxu0
  %v3257 = vadd.f32 0.0, %v3256
  %v3258 = vpop.f32.mrb[0].mxu0
  %3259 = vmatprep.mubr.f32.mxu0 0.0
  %3260 = vmatmul.mubr.f32.gmra.mrb[0].mxu0 %v1833
  %v3261 = vpop.f32.mrb[0].mxu0
  %v3262 = vadd.f32 0.0, %v3261
  %v3263 = vpop.f32.mrb[0].mxu0
  %3264 = vmatprep.mubr.f32.mxu0 0.0
  %3265 = vmatmul.mubr.f32.gmra.mrb[0].mxu0 %v1836
  %v3266 = vpop.f32.mrb[0].mxu0
  %v3267 = vadd.f32 0.0, %v3266
  %v3268 = vpop.f32.mrb[0].mxu0
  %3269 = vdwg.mxu0
  %v3270 = vmul.f32 %v3232, %v1470
  %v3271 = vmul.f32 %v3237, %v1471
  %v3272 = vmul.f32 %v3242, %v1472
  %v3273 = vmul.f32 %v3247, %v1473
  %v3274 = vmul.f32 %v3252, %v1474
  %v3275 = vmul.f32 %v3257, %v1475
  %v3276 = vmul.f32 %v3262, %v1476
  %v3277 = vmul.f32 %v3267, %v1477
  %3279 = vrot.lane.b32.xlu0 %v3162, 112
  %v3280 = vpop.permute.xlu0 %3279
  %v3282 = vsel %vm1506, %v3270, 0
  %v3285 = vsel %vm1506, %v3271, 0
  %v3288 = vsel %vm1506, %v3272, 0
  %v3291 = vsel %vm1506, %v3273, 0
  %v3294 = vsel %vm1506, %v3274, 0
  %v3297 = vsel %vm1506, %v3275, 0
  %v3300 = vsel %vm1506, %v3276, 0
  %v3303 = vsel %vm1506, %v3277, 0
  %v3305 = vsel %vm1506, %v3280, 0
  %3307 = vmatprep.subr.mxu0 0.0
  %3308 = vmatpush1.xpose.msra.mxu0 %v3305
  %3309 = vmatprep.subr.mxu0 0.0
  %3310 = vmatpush1.xpose.msra.mxu0 0.0
  %3311 = vmatprep.subr.mxu0 0.0
  %3312 = vmatpush1.xpose.msra.mxu0 0.0
  %3313 = vmatprep.subr.mxu0 0.0
  %3314 = vmatpush1.xpose.msra.mxu0 0.0
  %3315 = vmatprep.subr.mxu0 0.0
  %3316 = vmatpush1.xpose.msra.mxu0 0.0
  %3317 = vmatprep.subr.mxu0 0.0
  %3318 = vmatpush1.xpose.msra.mxu0 0.0
  %3319 = vmatprep.subr.mxu0 0.0
  %3320 = vmatpush1.xpose.msra.mxu0 0.0
  %3321 = vmatprep.subr.mxu0 0.0
  %3322 = vmatpush1.xpose.msra.mxu0 0.0
  %3323 = vmatprep.subr.mxu0 0.0
  %3324 = vmatpush1.xpose.msra.mxu0 0.0
  %3325 = vmatprep.subr.mxu0 0.0
  %3326 = vmatpush1.xpose.msra.mxu0 0.0
  %3327 = vmatprep.subr.mxu0 0.0
  %3328 = vmatpush1.xpose.msra.mxu0 0.0
  %3329 = vmatprep.subr.mxu0 0.0
  %3330 = vmatpush1.xpose.msra.mxu0 0.0
  %3331 = vmatprep.subr.mxu0 0.0
  %3332 = vmatpush1.xpose.msra.mxu0 0.0
  %3333 = vmatprep.subr.mxu0 0.0
  %3334 = vmatpush1.xpose.msra.mxu0 0.0
  %3335 = vmatprep.subr.mxu0 0.0
  %3336 = vmatpush1.xpose.msra.mxu0 0.0
  %3337 = vmatprep.subr.mxu0 0.0
  %3338 = vmatpush1.xpose.msra.mxu0 0.0
  %3339 = vmatprep.subr.mxu0 0.0
  %3340 = vmatpush1.xpose.msra.mxu0 0.0
  %3341 = vmatprep.subr.mxu0 0.0
  %3342 = vmatpush1.xpose.msra.mxu0 0.0
  %3343 = vmatprep.subr.mxu0 0.0
  %3344 = vmatpush1.xpose.msra.mxu0 0.0
  %3345 = vmatprep.subr.mxu0 0.0
  %3346 = vmatpush1.xpose.msra.mxu0 0.0
  %3347 = vmatprep.subr.mxu0 0.0
  %3348 = vmatpush1.xpose.msra.mxu0 0.0
  %3349 = vmatprep.subr.mxu0 0.0
  %3350 = vmatpush1.xpose.msra.mxu0 0.0
  %3351 = vmatprep.subr.mxu0 0.0
  %3352 = vmatpush1.xpose.msra.mxu0 0.0
  %3353 = vmatprep.subr.mxu0 0.0
  %3354 = vmatpush1.xpose.msra.mxu0 0.0
  %3355 = vmatprep.subr.mxu0 0.0
  %3356 = vmatpush1.xpose.msra.mxu0 0.0
  %3357 = vmatprep.subr.mxu0 0.0
  %3358 = vmatpush1.xpose.msra.mxu0 0.0
  %3359 = vmatprep.subr.mxu0 0.0
  %3360 = vmatpush1.xpose.msra.mxu0 0.0
  %3361 = vmatprep.subr.mxu0 0.0
  %3362 = vmatpush1.xpose.msra.mxu0 0.0
  %3363 = vmatprep.subr.mxu0 0.0
  %3364 = vmatpush1.xpose.msra.mxu0 0.0
  %3365 = vmatprep.subr.mxu0 0.0
  %3366 = vmatpush1.xpose.msra.mxu0 0.0
  %3367 = vmatprep.subr.mxu0 0.0
  %3368 = vmatpush1.xpose.msra.mxu0 0.0
  %3369 = vmatprep.subr.mxu0 0.0
  %3370 = vmatpush1.xpose.msra.mxu0 0.0
  %3371 = vmatprep.mubr.f32.mxu0 0.0
  %3372 = vmatmul.mubr.f32.gmra.mrb[0].mxu0 %v3282
  %v3373 = vpop.f32.mrb[0].mxu0
  %v3374 = vadd.f32 %v1494, %v3373
  %v3375 = vpop.f32.mrb[0].mxu0
  %3376 = vmatprep.mubr.f32.mxu0 0.0
  %3377 = vmatmul.mubr.f32.gmra.mrb[0].mxu0 %v3285
  %v3378 = vpop.f32.mrb[0].mxu0
  %v3379 = vadd.f32 %v1495, %v3378
  %v3380 = vpop.f32.mrb[0].mxu0
  %3381 = vmatprep.mubr.f32.mxu0 0.0
  %3382 = vmatmul.mubr.f32.gmra.mrb[0].mxu0 %v3288
  %v3383 = vpop.f32.mrb[0].mxu0
  %v3384 = vadd.f32 %v1496, %v3383
  %v3385 = vpop.f32.mrb[0].mxu0
  %3386 = vmatprep.mubr.f32.mxu0 0.0
  %3387 = vmatmul.mubr.f32.gmra.mrb[0].mxu0 %v3291
  %v3388 = vpop.f32.mrb[0].mxu0
  %v3389 = vadd.f32 %v1497, %v3388
  %v3390 = vpop.f32.mrb[0].mxu0
  %3391 = vmatprep.mubr.f32.mxu0 0.0
  %3392 = vmatmul.mubr.f32.gmra.mrb[0].mxu0 %v3294
  %v3393 = vpop.f32.mrb[0].mxu0
  %v3394 = vadd.f32 %v1498, %v3393
  %v3395 = vpop.f32.mrb[0].mxu0
  %3396 = vmatprep.mubr.f32.mxu0 0.0
  %3397 = vmatmul.mubr.f32.gmra.mrb[0].mxu0 %v3297
  %v3398 = vpop.f32.mrb[0].mxu0
  %v3399 = vadd.f32 %v1499, %v3398
  %v3400 = vpop.f32.mrb[0].mxu0
  %3401 = vmatprep.mubr.f32.mxu0 0.0
  %3402 = vmatmul.mubr.f32.gmra.mrb[0].mxu0 %v3300
  %v3403 = vpop.f32.mrb[0].mxu0
  %v3404 = vadd.f32 %v1500, %v3403
  %v3405 = vpop.f32.mrb[0].mxu0
  %3406 = vmatprep.mubr.f32.mxu0 0.0
  %3407 = vmatmul.mubr.f32.gmra.mrb[0].mxu0 %v3303
  %v3408 = vpop.f32.mrb[0].mxu0
  %v3409 = vadd.f32 %v1501, %v3408
  %v3410 = vpop.f32.mrb[0].mxu0
  %3411 = vdwg.mxu0
  %v3412 = vsel %vm1588, %v3374, -inf
  %3413 = vmax.xlane.f32.xlu0 %v3412
  %v3414 = vpop.xlane.xlu0 %3413
  %v3415 = vsel %vm1588, %v3379, -inf
  %3416 = vmax.xlane.f32.xlu0 %v3415
  %v3417 = vpop.xlane.xlu0 %3416
  %v3418 = vsel %vm1588, %v3384, -inf
  %3419 = vmax.xlane.f32.xlu0 %v3418
  %v3420 = vpop.xlane.xlu0 %3419
  %v3421 = vsel %vm1588, %v3389, -inf
  %3422 = vmax.xlane.f32.xlu0 %v3421
  %v3423 = vpop.xlane.xlu0 %3422
  %v3424 = vsel %vm1588, %v3394, -inf
  %3425 = vmax.xlane.f32.xlu0 %v3424
  %v3426 = vpop.xlane.xlu0 %3425
  %v3427 = vsel %vm1588, %v3399, -inf
  %3428 = vmax.xlane.f32.xlu0 %v3427
  %v3429 = vpop.xlane.xlu0 %3428
  %v3430 = vsel %vm1588, %v3404, -inf
  %3431 = vmax.xlane.f32.xlu0 %v3430
  %v3432 = vpop.xlane.xlu0 %3431
  %v3433 = vsel %vm1588, %v3409, -inf
  %3434 = vmax.xlane.f32.xlu0 %v3433
  %v3435 = vpop.xlane.xlu0 %3434
  %v3436 = vsub.f32 %v3374, %v3414
  %v3437 = vsub.f32 %v3379, %v3417
  %v3438 = vsub.f32 %v3384, %v3420
  %v3439 = vsub.f32 %v3389, %v3423
  %v3440 = vsub.f32 %v3394, %v3426
  %v3441 = vsub.f32 %v3399, %v3429
  %v3442 = vsub.f32 %v3404, %v3432
  %v3443 = vsub.f32 %v3409, %v3435
  %v3444 = vmul.f32 %v3436, 1.442695
  %v3445 = vpow.pop %v3444
  %v3446 = vmul.f32 %v3437, 1.442695
  %v3447 = vpow.pop %v3446
  %v3448 = vmul.f32 %v3438, 1.442695
  %v3449 = vpow.pop %v3448
  %v3450 = vmul.f32 %v3439, 1.442695
  %v3451 = vpow.pop %v3450
  %v3452 = vmul.f32 %v3440, 1.442695
  %v3453 = vpow.pop %v3452
  %v3454 = vmul.f32 %v3441, 1.442695
  %v3455 = vpow.pop %v3454
  %v3456 = vmul.f32 %v3442, 1.442695
  %v3457 = vpow.pop %v3456
  %v3458 = vmul.f32 %v3443, 1.442695
  %v3459 = vpow.pop %v3458
  %v3460 = vsel %vm1588, %v3445, 0.0
  %3461 = vadd.xlane.f32.xlu0 %v3460
  %v3462 = vpop.xlane.xlu0 %3461
  %v3463 = vsel %vm1588, %v3447, 0.0
  %3464 = vadd.xlane.f32.xlu0 %v3463
  %v3465 = vpop.xlane.xlu0 %3464
  %v3466 = vsel %vm1588, %v3449, 0.0
  %3467 = vadd.xlane.f32.xlu0 %v3466
  %v3468 = vpop.xlane.xlu0 %3467
  %v3469 = vsel %vm1588, %v3451, 0.0
  %3470 = vadd.xlane.f32.xlu0 %v3469
  %v3471 = vpop.xlane.xlu0 %3470
  %v3472 = vsel %vm1588, %v3453, 0.0
  %3473 = vadd.xlane.f32.xlu0 %v3472
  %v3474 = vpop.xlane.xlu0 %3473
  %v3475 = vsel %vm1588, %v3455, 0.0
  %3476 = vadd.xlane.f32.xlu0 %v3475
  %v3477 = vpop.xlane.xlu0 %3476
  %v3478 = vsel %vm1588, %v3457, 0.0
  %3479 = vadd.xlane.f32.xlu0 %v3478
  %v3480 = vpop.xlane.xlu0 %3479
  %v3481 = vsel %vm1588, %v3459, 0.0
  %3482 = vadd.xlane.f32.xlu0 %v3481
  %v3483 = vpop.xlane.xlu0 %3482
  %v3484 = vrcp.pop %v3462
  %v3485 = vrcp.pop %v3465
  %v3486 = vrcp.pop %v3468
  %v3487 = vrcp.pop %v3471
  %v3488 = vrcp.pop %v3474
  %v3489 = vrcp.pop %v3477
  %v3490 = vrcp.pop %v3480
  %v3491 = vrcp.pop %v3483
  %v3492 = vmul.f32 %v3445, %v3484
  %v3493 = vmul.f32 %v3447, %v3485
  %v3494 = vmul.f32 %v3449, %v3486
  %v3495 = vmul.f32 %v3451, %v3487
  %v3496 = vmul.f32 %v3453, %v3488
  %v3497 = vmul.f32 %v3455, %v3489
  %v3498 = vmul.f32 %v3457, %v3490
  %v3499 = vmul.f32 %v3459, %v3491
  %3500 = vrot.lane.b32.xlu0 %v3162, 96
  %v3501 = vpop.permute.xlu0 %3500
  %v3504 = vsel %vm1588, %v3492, 0
  %v3507 = vsel %vm1588, %v3493, 0
  %v3510 = vsel %vm1588, %v3494, 0
  %v3513 = vsel %vm1588, %v3495, 0
  %v3516 = vsel %vm1588, %v3496, 0
  %v3519 = vsel %vm1588, %v3497, 0
  %v3522 = vsel %vm1588, %v3498, 0
  %v3525 = vsel %vm1588, %v3499, 0
  %3527 = vmatprep.subr.mxu0 0.0
  %3528 = vmatpush1.msra.mxu0 %v3501
  %3529 = vmatprep.subr.mxu0 0.0
  %3530 = vmatpush1.msra.mxu0 0.0
  %3531 = vmatprep.subr.mxu0 0.0
  %3532 = vmatpush1.msra.mxu0 0.0
  %3533 = vmatprep.subr.mxu0 0.0
  %3534 = vmatpush1.msra.mxu0 0.0
  %3535 = vmatprep.subr.mxu0 0.0
  %3536 = vmatpush1.msra.mxu0 0.0
  %3537 = vmatprep.subr.mxu0 0.0
  %3538 = vmatpush1.msra.mxu0 0.0
  %3539 = vmatprep.subr.mxu0 0.0
  %3540 = vmatpush1.msra.mxu0 0.0
  %3541 = vmatprep.subr.mxu0 0.0
  %3542 = vmatpush1.msra.mxu0 0.0
  %3543 = vmatprep.subr.mxu0 0.0
  %3544 = vmatpush1.msra.mxu0 0.0
  %3545 = vmatprep.subr.mxu0 0.0
  %3546 = vmatpush1.msra.mxu0 0.0
  %3547 = vmatprep.subr.mxu0 0.0
  %3548 = vmatpush1.msra.mxu0 0.0
  %3549 = vmatprep.subr.mxu0 0.0
  %3550 = vmatpush1.msra.mxu0 0.0
  %3551 = vmatprep.subr.mxu0 0.0
  %3552 = vmatpush1.msra.mxu0 0.0
  %3553 = vmatprep.subr.mxu0 0.0
  %3554 = vmatpush1.msra.mxu0 0.0
  %3555 = vmatprep.subr.mxu0 0.0
  %3556 = vmatpush1.msra.mxu0 0.0
  %3557 = vmatprep.subr.mxu0 0.0
  %3558 = vmatpush1.msra.mxu0 0.0
  %3559 = vmatprep.subr.mxu0 0.0
  %3560 = vmatpush1.msra.mxu0 0.0
  %3561 = vmatprep.subr.mxu0 0.0
  %3562 = vmatpush1.msra.mxu0 0.0
  %3563 = vmatprep.subr.mxu0 0.0
  %3564 = vmatpush1.msra.mxu0 0.0
  %3565 = vmatprep.subr.mxu0 0.0
  %3566 = vmatpush1.msra.mxu0 0.0
  %3567 = vmatprep.subr.mxu0 0.0
  %3568 = vmatpush1.msra.mxu0 0.0
  %3569 = vmatprep.subr.mxu0 0.0
  %3570 = vmatpush1.msra.mxu0 0.0
  %3571 = vmatprep.subr.mxu0 0.0
  %3572 = vmatpush1.msra.mxu0 0.0
  %3573 = vmatprep.subr.mxu0 0.0
  %3574 = vmatpush1.msra.mxu0 0.0
  %3575 = vmatprep.subr.mxu0 0.0
  %3576 = vmatpush1.msra.mxu0 0.0
  %3577 = vmatprep.subr.mxu0 0.0
  %3578 = vmatpush1.msra.mxu0 0.0
  %3579 = vmatprep.subr.mxu0 0.0
  %3580 = vmatpush1.msra.mxu0 0.0
  %3581 = vmatprep.subr.mxu0 0.0
  %3582 = vmatpush1.msra.mxu0 0.0
  %3583 = vmatprep.subr.mxu0 0.0
  %3584 = vmatpush1.msra.mxu0 0.0
  %3585 = vmatprep.subr.mxu0 0.0
  %3586 = vmatpush1.msra.mxu0 0.0
  %3587 = vmatprep.subr.mxu0 0.0
  %3588 = vmatpush1.msra.mxu0 0.0
  %3589 = vmatprep.subr.mxu0 0.0
  %3590 = vmatpush1.msra.mxu0 0.0
  %3591 = vmatprep.mubr.f32.mxu0 0.0
  %3592 = vmatmul.mubr.f32.gmra.mrb[0].mxu0 %v3504
  %v3593 = vpop.f32.mrb[0].mxu0
  %v3594 = vadd.f32 0.0, %v3593
  %v3595 = vpop.f32.mrb[0].mxu0
  %3596 = vmatprep.mubr.f32.mxu0 0.0
  %3597 = vmatmul.mubr.f32.gmra.mrb[0].mxu0 %v3507
  %v3598 = vpop.f32.mrb[0].mxu0
  %v3599 = vadd.f32 0.0, %v3598
  %v3600 = vpop.f32.mrb[0].mxu0
  %3601 = vmatprep.mubr.f32.mxu0 0.0
  %3602 = vmatmul.mubr.f32.gmra.mrb[0].mxu0 %v3510
  %v3603 = vpop.f32.mrb[0].mxu0
  %v3604 = vadd.f32 0.0, %v3603
  %v3605 = vpop.f32.mrb[0].mxu0
  %3606 = vmatprep.mubr.f32.mxu0 0.0
  %3607 = vmatmul.mubr.f32.gmra.mrb[0].mxu0 %v3513
  %v3608 = vpop.f32.mrb[0].mxu0
  %v3609 = vadd.f32 0.0, %v3608
  %v3610 = vpop.f32.mrb[0].mxu0
  %3611 = vmatprep.mubr.f32.mxu0 0.0
  %3612 = vmatmul.mubr.f32.gmra.mrb[0].mxu0 %v3516
  %v3613 = vpop.f32.mrb[0].mxu0
  %v3614 = vadd.f32 0.0, %v3613
  %v3615 = vpop.f32.mrb[0].mxu0
  %3616 = vmatprep.mubr.f32.mxu0 0.0
  %3617 = vmatmul.mubr.f32.gmra.mrb[0].mxu0 %v3519
  %v3618 = vpop.f32.mrb[0].mxu0
  %v3619 = vadd.f32 0.0, %v3618
  %v3620 = vpop.f32.mrb[0].mxu0
  %3621 = vmatprep.mubr.f32.mxu0 0.0
  %3622 = vmatmul.mubr.f32.gmra.mrb[0].mxu0 %v3522
  %v3623 = vpop.f32.mrb[0].mxu0
  %v3624 = vadd.f32 0.0, %v3623
  %v3625 = vpop.f32.mrb[0].mxu0
  %3626 = vmatprep.mubr.f32.mxu0 0.0
  %3627 = vmatmul.mubr.f32.gmra.mrb[0].mxu0 %v3525
  %v3628 = vpop.f32.mrb[0].mxu0
  %v3629 = vadd.f32 0.0, %v3628
  %v3630 = vpop.f32.mrb[0].mxu0
  %3631 = vdwg.mxu0
  %v3632 = vmul.f32 %v3594, %v1470
  %v3633 = vmul.f32 %v3599, %v1471
  %v3634 = vmul.f32 %v3604, %v1472
  %v3635 = vmul.f32 %v3609, %v1473
  %v3636 = vmul.f32 %v3614, %v1474
  %v3637 = vmul.f32 %v3619, %v1475
  %v3638 = vmul.f32 %v3624, %v1476
  %v3639 = vmul.f32 %v3629, %v1477
  %3640 = vmatprep.subr.mxu0 0.0
  %3641 = vmatpush1.msra.mxu0 %v3632
  %3642 = vmatprep.subr.mxu0 0.0
  %3643 = vmatpush1.msra.mxu0 %v3633
  %3644 = vmatprep.subr.mxu0 0.0
  %3645 = vmatpush1.msra.mxu0 %v3634
  %3646 = vmatprep.subr.mxu0 0.0
  %3647 = vmatpush1.msra.mxu0 %v3635
  %3648 = vmatprep.subr.mxu0 0.0
  %3649 = vmatpush1.msra.mxu0 %v3636
  %3650 = vmatprep.subr.mxu0 0.0
  %3651 = vmatpush1.msra.mxu0 %v3637
  %3652 = vmatprep.subr.mxu0 0.0
  %3653 = vmatpush1.msra.mxu0 %v3638
  %3654 = vmatprep.subr.mxu0 0.0
  %3655 = vmatpush1.msra.mxu0 %v3639
  %3656 = vmatprep.subr.mxu0 0.0
  %3657 = vmatpush1.msra.mxu0 0.0
  %3658 = vmatprep.subr.mxu0 0.0
  %3659 = vmatpush1.msra.mxu0 0.0
  %3660 = vmatprep.subr.mxu0 0.0
  %3661 = vmatpush1.msra.mxu0 0.0
  %3662 = vmatprep.subr.mxu0 0.0
  %3663 = vmatpush1.msra.mxu0 0.0
  %3664 = vmatprep.subr.mxu0 0.0
  %3665 = vmatpush1.msra.mxu0 0.0
  %3666 = vmatprep.subr.mxu0 0.0
  %3667 = vmatpush1.msra.mxu0 0.0
  %3668 = vmatprep.subr.mxu0 0.0
  %3669 = vmatpush1.msra.mxu0 0.0
  %3670 = vmatprep.subr.mxu0 0.0
  %3671 = vmatpush1.msra.mxu0 0.0
  %3672 = vmatprep.subr.mxu0 0.0
  %3673 = vmatpush1.msra.mxu0 0.0
  %3674 = vmatprep.subr.mxu0 0.0
  %3675 = vmatpush1.msra.mxu0 0.0
  %3676 = vmatprep.subr.mxu0 0.0
  %3677 = vmatpush1.msra.mxu0 0.0
  %3678 = vmatprep.subr.mxu0 0.0
  %3679 = vmatpush1.msra.mxu0 0.0
  %3680 = vmatprep.subr.mxu0 0.0
  %3681 = vmatpush1.msra.mxu0 0.0
  %3682 = vmatprep.subr.mxu0 0.0
  %3683 = vmatpush1.msra.mxu0 0.0
  %3684 = vmatprep.subr.mxu0 0.0
  %3685 = vmatpush1.msra.mxu0 0.0
  %3686 = vmatprep.subr.mxu0 0.0
  %3687 = vmatpush1.msra.mxu0 0.0
  %3688 = vmatprep.subr.mxu0 0.0
  %3689 = vmatpush1.msra.mxu0 0.0
  %3690 = vmatprep.subr.mxu0 0.0
  %3691 = vmatpush1.msra.mxu0 0.0
  %3692 = vmatprep.subr.mxu0 0.0
  %3693 = vmatpush1.msra.mxu0 0.0
  %3694 = vmatprep.subr.mxu0 0.0
  %3695 = vmatpush1.msra.mxu0 0.0
  %3696 = vmatprep.subr.mxu0 0.0
  %3697 = vmatpush1.msra.mxu0 0.0
  %3698 = vmatprep.subr.mxu0 0.0
  %3699 = vmatpush1.msra.mxu0 0.0
  %3700 = vmatprep.subr.mxu0 0.0
  %3701 = vmatpush1.msra.mxu0 0.0
  %3702 = vmatprep.subr.mxu0 0.0
  %3703 = vmatpush1.msra.mxu0 0.0
  %3704 = vmatprep.mubr.f32.mxu0 0.0
  %3705 = vmatmul.mubr.f32.gmra.mrb[0].mxu0 %v2315
  %v3706 = vpop.f32.mrb[0].mxu0
  %v3707 = vadd.f32 0.0, %v3706
  %v3708 = vpop.f32.mrb[0].mxu0
  %3709 = vdwg.mxu0
  %v3711 = vsel %vm1506, %v3707, 0
  %3713 = vmatprep.subr.mxu0 0.0
  %3714 = vmatpush1.msra.mxu0 %v1482
  %3715 = vmatprep.subr.mxu0 0.0
  %3716 = vmatpush1.msra.mxu0 %v1483
  %3717 = vmatprep.subr.mxu0 0.0
  %3718 = vmatpush1.msra.mxu0 0.0
  %3719 = vmatprep.subr.mxu0 0.0
  %3720 = vmatpush1.msra.mxu0 0.0
  %3721 = vmatprep.subr.mxu0 0.0
  %3722 = vmatpush1.msra.mxu0 0.0
  %3723 = vmatprep.subr.mxu0 0.0
  %3724 = vmatpush1.msra.mxu0 0.0
  %3725 = vmatprep.subr.mxu0 0.0
  %3726 = vmatpush1.msra.mxu0 0.0
  %3727 = vmatprep.subr.mxu0 0.0
  %3728 = vmatpush1.msra.mxu0 0.0
  %3729 = vmatprep.subr.mxu0 0.0
  %3730 = vmatpush1.msra.mxu0 0.0
  %3731 = vmatprep.subr.mxu0 0.0
  %3732 = vmatpush1.msra.mxu0 0.0
  %3733 = vmatprep.subr.mxu0 0.0
  %3734 = vmatpush1.msra.mxu0 0.0
  %3735 = vmatprep.subr.mxu0 0.0
  %3736 = vmatpush1.msra.mxu0 0.0
  %3737 = vmatprep.subr.mxu0 0.0
  %3738 = vmatpush1.msra.mxu0 0.0
  %3739 = vmatprep.subr.mxu0 0.0
  %3740 = vmatpush1.msra.mxu0 0.0
  %3741 = vmatprep.subr.mxu0 0.0
  %3742 = vmatpush1.msra.mxu0 0.0
  %3743 = vmatprep.subr.mxu0 0.0
  %3744 = vmatpush1.msra.mxu0 0.0
  %3745 = vmatprep.subr.mxu0 0.0
  %3746 = vmatpush1.msra.mxu0 0.0
  %3747 = vmatprep.subr.mxu0 0.0
  %3748 = vmatpush1.msra.mxu0 0.0
  %3749 = vmatprep.subr.mxu0 0.0
  %3750 = vmatpush1.msra.mxu0 0.0
  %3751 = vmatprep.subr.mxu0 0.0
  %3752 = vmatpush1.msra.mxu0 0.0
  %3753 = vmatprep.subr.mxu0 0.0
  %3754 = vmatpush1.msra.mxu0 0.0
  %3755 = vmatprep.subr.mxu0 0.0
  %3756 = vmatpush1.msra.mxu0 0.0
  %3757 = vmatprep.subr.mxu0 0.0
  %3758 = vmatpush1.msra.mxu0 0.0
  %3759 = vmatprep.subr.mxu0 0.0
  %3760 = vmatpush1.msra.mxu0 0.0
  %3761 = vmatprep.subr.mxu0 0.0
  %3762 = vmatpush1.msra.mxu0 0.0
  %3763 = vmatprep.subr.mxu0 0.0
  %3764 = vmatpush1.msra.mxu0 0.0
  %3765 = vmatprep.subr.mxu0 0.0
  %3766 = vmatpush1.msra.mxu0 0.0
  %3767 = vmatprep.subr.mxu0 0.0
  %3768 = vmatpush1.msra.mxu0 0.0
  %3769 = vmatprep.subr.mxu0 0.0
  %3770 = vmatpush1.msra.mxu0 0.0
  %3771 = vmatprep.subr.mxu0 0.0
  %3772 = vmatpush1.msra.mxu0 0.0
  %3773 = vmatprep.subr.mxu0 0.0
  %3774 = vmatpush1.msra.mxu0 0.0
  %3775 = vmatprep.subr.mxu0 0.0
  %3776 = vmatpush1.msra.mxu0 0.0
  %3777 = vmatprep.mubr.f32.mxu0 0.0
  %3778 = vmatmul.mubr.f32.gmra.mrb[0].mxu0 %v3711
  %v3779 = vpop.f32.mrb[0].mxu0
  %v3780 = vadd.f32 0.0, %v3779
  %v3781 = vpop.f32.mrb[0].mxu0
  %3782 = vdwg.mxu0
  %v3783 = vadd.f32 %v3091, %v3780
  %v3784 = vadd.f32 %v3783, %v2465
  %v3785 = vsel %vm1506, %v3784, 0.0
  %3786 = vadd.xlane.f32.xlu0 %v3785
  %v3787 = vpop.xlane.xlu0 %3786
  %v3788 = vmul.f32 %v3787, %v2471
  %v3789 = vsub.f32 %v3784, %v3788
  %v3790 = vmul.f32 %v3789, %v3789
  %v3791 = vsel %vm1506, %v3790, 0.0
  %3792 = vadd.xlane.f32.xlu0 %v3791
  %v3793 = vpop.xlane.xlu0 %3792
  %v3794 = vmul.f32 %v3793, %v2471
  %v3795 = vadd.f32 %v3794, 1e-05
  %v3796 = vrsqrt.pop %v3795
  %v3797 = vmul.f32 %v3789, %v3796
  %v3798 = vmul.f32 %v3797, %v2486
  %v3799 = vadd.f32 %v3798, %v2493
  %v3801 = vsel %vm1506, %v3799, 0
  %3803 = vmatprep.subr.mxu0 0.0
  %3804 = vmatpush1.msra.mxu0 %v1485
  %3805 = vmatprep.subr.mxu0 0.0
  %3806 = vmatpush1.msra.mxu0 %v1486
  %3807 = vmatprep.subr.mxu0 0.0
  %3808 = vmatpush1.msra.mxu0 0.0
  %3809 = vmatprep.subr.mxu0 0.0
  %3810 = vmatpush1.msra.mxu0 0.0
  %3811 = vmatprep.subr.mxu0 0.0
  %3812 = vmatpush1.msra.mxu0 0.0
  %3813 = vmatprep.subr.mxu0 0.0
  %3814 = vmatpush1.msra.mxu0 0.0
  %3815 = vmatprep.subr.mxu0 0.0
  %3816 = vmatpush1.msra.mxu0 0.0
  %3817 = vmatprep.subr.mxu0 0.0
  %3818 = vmatpush1.msra.mxu0 0.0
  %3819 = vmatprep.subr.mxu0 0.0
  %3820 = vmatpush1.msra.mxu0 0.0
  %3821 = vmatprep.subr.mxu0 0.0
  %3822 = vmatpush1.msra.mxu0 0.0
  %3823 = vmatprep.subr.mxu0 0.0
  %3824 = vmatpush1.msra.mxu0 0.0
  %3825 = vmatprep.subr.mxu0 0.0
  %3826 = vmatpush1.msra.mxu0 0.0
  %3827 = vmatprep.subr.mxu0 0.0
  %3828 = vmatpush1.msra.mxu0 0.0
  %3829 = vmatprep.subr.mxu0 0.0
  %3830 = vmatpush1.msra.mxu0 0.0
  %3831 = vmatprep.subr.mxu0 0.0
  %3832 = vmatpush1.msra.mxu0 0.0
  %3833 = vmatprep.subr.mxu0 0.0
  %3834 = vmatpush1.msra.mxu0 0.0
  %3835 = vmatprep.subr.mxu0 0.0
  %3836 = vmatpush1.msra.mxu0 0.0
  %3837 = vmatprep.subr.mxu0 0.0
  %3838 = vmatpush1.msra.mxu0 0.0
  %3839 = vmatprep.subr.mxu0 0.0
  %3840 = vmatpush1.msra.mxu0 0.0
  %3841 = vmatprep.subr.mxu0 0.0
  %3842 = vmatpush1.msra.mxu0 0.0
  %3843 = vmatprep.subr.mxu0 0.0
  %3844 = vmatpush1.msra.mxu0 0.0
  %3845 = vmatprep.subr.mxu0 0.0
  %3846 = vmatpush1.msra.mxu0 0.0
  %3847 = vmatprep.subr.mxu0 0.0
  %3848 = vmatpush1.msra.mxu0 0.0
  %3849 = vmatprep.subr.mxu0 0.0
  %3850 = vmatpush1.msra.mxu0 0.0
  %3851 = vmatprep.subr.mxu0 0.0
  %3852 = vmatpush1.msra.mxu0 0.0
  %3853 = vmatprep.subr.mxu0 0.0
  %3854 = vmatpush1.msra.mxu0 0.0
  %3855 = vmatprep.subr.mxu0 0.0
  %3856 = vmatpush1.msra.mxu0 0.0
  %3857 = vmatprep.subr.mxu0 0.0
  %3858 = vmatpush1.msra.mxu0 0.0
  %3859 = vmatprep.subr.mxu0 0.0
  %3860 = vmatpush1.msra.mxu0 0.0
  %3861 = vmatprep.subr.mxu0 0.0
  %3862 = vmatpush1.msra.mxu0 0.0
  %3863 = vmatprep.subr.mxu0 0.0
  %3864 = vmatpush1.msra.mxu0 0.0
  %3865 = vmatprep.subr.mxu0 0.0
  %3866 = vmatpush1.msra.mxu0 0.0
  %3867 = vmatprep.mubr.f32.mxu0 0.0
  %3868 = vmatmul.mubr.f32.gmra.mrb[0].mxu0 %v3801
  %v3869 = vpop.f32.mrb[0].mxu0
  %v3870 = vadd.f32 %v2500, %v3869
  %v3871 = vpop.f32.mrb[0].mxu0
  %3872 = vdwg.mxu0
  %v3873 = vmax.f32 %v3870, 0.0
  %v3875 = vsel %vm2576, %v3873, 0
  %3877 = vmatprep.subr.mxu0 0.0
  %3878 = vmatpush1.msra.mxu0 %v2582
  %3879 = vmatprep.subr.mxu0 0.0
  %3880 = vmatpush1.msra.mxu0 0.0
  %3881 = vmatprep.subr.mxu0 0.0
  %3882 = vmatpush1.msra.mxu0 0.0
  %3883 = vmatprep.subr.mxu0 0.0
  %3884 = vmatpush1.msra.mxu0 0.0
  %3885 = vmatprep.subr.mxu0 0.0
  %3886 = vmatpush1.msra.mxu0 0.0
  %3887 = vmatprep.subr.mxu0 0.0
  %3888 = vmatpush1.msra.mxu0 0.0
  %3889 = vmatprep.subr.mxu0 0.0
  %3890 = vmatpush1.msra.mxu0 0.0
  %3891 = vmatprep.subr.mxu0 0.0
  %3892 = vmatpush1.msra.mxu0 0.0
  %3893 = vmatprep.subr.mxu0 0.0
  %3894 = vmatpush1.msra.mxu0 0.0
  %3895 = vmatprep.subr.mxu0 0.0
  %3896 = vmatpush1.msra.mxu0 0.0
  %3897 = vmatprep.subr.mxu0 0.0
  %3898 = vmatpush1.msra.mxu0 0.0
  %3899 = vmatprep.subr.mxu0 0.0
  %3900 = vmatpush1.msra.mxu0 0.0
  %3901 = vmatprep.subr.mxu0 0.0
  %3902 = vmatpush1.msra.mxu0 0.0
  %3903 = vmatprep.subr.mxu0 0.0
  %3904 = vmatpush1.msra.mxu0 0.0
  %3905 = vmatprep.subr.mxu0 0.0
  %3906 = vmatpush1.msra.mxu0 0.0
  %3907 = vmatprep.subr.mxu0 0.0
  %3908 = vmatpush1.msra.mxu0 0.0
  %3909 = vmatprep.subr.mxu0 0.0
  %3910 = vmatpush1.msra.mxu0 0.0
  %3911 = vmatprep.subr.mxu0 0.0
  %3912 = vmatpush1.msra.mxu0 0.0
  %3913 = vmatprep.subr.mxu0 0.0
  %3914 = vmatpush1.msra.mxu0 0.0
  %3915 = vmatprep.subr.mxu0 0.0
  %3916 = vmatpush1.msra.mxu0 0.0
  %3917 = vmatprep.subr.mxu0 0.0
  %3918 = vmatpush1.msra.mxu0 0.0
  %3919 = vmatprep.subr.mxu0 0.0
  %3920 = vmatpush1.msra.mxu0 0.0
  %3921 = vmatprep.subr.mxu0 0.0
  %3922 = vmatpush1.msra.mxu0 0.0
  %3923 = vmatprep.subr.mxu0 0.0
  %3924 = vmatpush1.msra.mxu0 0.0
  %3925 = vmatprep.subr.mxu0 0.0
  %3926 = vmatpush1.msra.mxu0 0.0
  %3927 = vmatprep.subr.mxu0 0.0
  %3928 = vmatpush1.msra.mxu0 0.0
  %3929 = vmatprep.subr.mxu0 0.0
  %3930 = vmatpush1.msra.mxu0 0.0
  %3931 = vmatprep.subr.mxu0 0.0
  %3932 = vmatpush1.msra.mxu0 0.0
  %3933 = vmatprep.subr.mxu0 0.0
  %3934 = vmatpush1.msra.mxu0 0.0
  %3935 = vmatprep.subr.mxu0 0.0
  %3936 = vmatpush1.msra.mxu0 0.0
  %3937 = vmatprep.subr.mxu0 0.0
  %3938 = vmatpush1.msra.mxu0 0.0
  %3939 = vmatprep.subr.mxu0 0.0
  %3940 = vmatpush1.msra.mxu0 0.0
  %3941 = vmatprep.mubr.f32.mxu0 0.0
  %3942 = vmatmul.mubr.f32.gmra.mrb[0].mxu0 %v3875
  %v3943 = vpop.f32.mrb[0].mxu0
  %v3944 = vadd.f32 0.0, %v3943
  %v3945 = vpop.f32.mrb[0].mxu0
  %3946 = vdwg.mxu0
  %v3947 = vadd.f32 %v3799, %v3944
  %v3948 = vadd.f32 %v3947, %v2659
  %v3949 = vsel %vm1506, %v3948, 0.0
  %3950 = vadd.xlane.f32.xlu0 %v3949
  %v3951 = vpop.xlane.xlu0 %3950
  %v3952 = vmul.f32 %v3951, %v2471
  %v3953 = vsub.f32 %v3948, %v3952
  %v3954 = vmul.f32 %v3953, %v3953
  %v3955 = vsel %vm1506, %v3954, 0.0
  %3956 = vadd.xlane.f32.xlu0 %v3955
  %v3957 = vpop.xlane.xlu0 %3956
  %v3958 = vmul.f32 %v3957, %v2471
  %v3959 = vadd.f32 %v3958, 1e-05
  %v3960 = vrsqrt.pop %v3959
  %v3961 = vmul.f32 %v3953, %v3960
  %v3962 = vmul.f32 %v3961, %v2679
  %v3963 = vadd.f32 %v3962, %v2686
  %v3964 = vld [vmem:[%s15] sm:$0xff]
  %v3965 = vld [vmem:[%s15 + $0x8] sm:$0xff]
  %v3966 = vld [vmem:[%s15 + $0x10] sm:$0xff]
  %v3967 = vld [vmem:[%s15 + $0x18] sm:$0xff]
  %v3968 = vld [vmem:[%s17] sm:$0xff]
  %v3969 = vld [vmem:[%s17 + $0x8] sm:$0xff]
  %v3970 = vld [vmem:[%s17 + $0x10] sm:$0xff]
  %v3971 = vld [vmem:[%s17 + $0x18] sm:$0xff]
  %v3972 = vld [vmem:[%s17 + $0x20] sm:$0xff]
  %v3973 = vld [vmem:[%s17 + $0x28] sm:$0xff]
  %v3974 = vld [vmem:[%s17 + $0x30] sm:$0xff]
  %v3975 = vld [vmem:[%s17 + $0x38] sm:$0xff]
  %v3977 = vsel %vm1588, %v3964, 0
  %v3980 = vsel %vm1588, %v3965, 0
  %v3983 = vsel %vm1588, %v3966, 0
  %v3986 = vsel %vm1588, %v3967, 0
  %3988 = vmatprep.subr.mxu0 0.0
  %3989 = vmatpush1.msra.mxu0 %v3963
  %3990 = vmatprep.subr.mxu0 0.0
  %3991 = vmatpush1.msra.mxu0 0.0
  %3992 = vmatprep.subr.mxu0 0.0
  %3993 = vmatpush1.msra.mxu0 0.0
  %3994 = vmatprep.subr.mxu0 0.0
  %3995 = vmatpush1.msra.mxu0 0.0
  %3996 = vmatprep.subr.mxu0 0.0
  %3997 = vmatpush1.msra.mxu0 0.0
  %3998 = vmatprep.subr.mxu0 0.0
  %3999 = vmatpush1.msra.mxu0 0.0
  %4000 = vmatprep.subr.mxu0 0.0
  %4001 = vmatpush1.msra.mxu0 0.0
  %4002 = vmatprep.subr.mxu0 0.0
  %4003 = vmatpush1.msra.mxu0 0.0
  %4004 = vmatprep.subr.mxu0 0.0
  %4005 = vmatpush1.msra.mxu0 0.0
  %4006 = vmatprep.subr.mxu0 0.0
  %4007 = vmatpush1.msra.mxu0 0.0
  %4008 = vmatprep.subr.mxu0 0.0
  %4009 = vmatpush1.msra.mxu0 0.0
  %4010 = vmatprep.subr.mxu0 0.0
  %4011 = vmatpush1.msra.mxu0 0.0
  %4012 = vmatprep.subr.mxu0 0.0
  %4013 = vmatpush1.msra.mxu0 0.0
  %4014 = vmatprep.subr.mxu0 0.0
  %4015 = vmatpush1.msra.mxu0 0.0
  %4016 = vmatprep.subr.mxu0 0.0
  %4017 = vmatpush1.msra.mxu0 0.0
  %4018 = vmatprep.subr.mxu0 0.0
  %4019 = vmatpush1.msra.mxu0 0.0
  %4020 = vmatprep.subr.mxu0 0.0
  %4021 = vmatpush1.msra.mxu0 0.0
  %4022 = vmatprep.subr.mxu0 0.0
  %4023 = vmatpush1.msra.mxu0 0.0
  %4024 = vmatprep.subr.mxu0 0.0
  %4025 = vmatpush1.msra.mxu0 0.0
  %4026 = vmatprep.subr.mxu0 0.0
  %4027 = vmatpush1.msra.mxu0 0.0
  %4028 = vmatprep.subr.mxu0 0.0
  %4029 = vmatpush1.msra.mxu0 0.0
  %4030 = vmatprep.subr.mxu0 0.0
  %4031 = vmatpush1.msra.mxu0 0.0
  %4032 = vmatprep.subr.mxu0 0.0
  %4033 = vmatpush1.msra.mxu0 0.0
  %4034 = vmatprep.subr.mxu0 0.0
  %4035 = vmatpush1.msra.mxu0 0.0
  %4036 = vmatprep.subr.mxu0 0.0
  %4037 = vmatpush1.msra.mxu0 0.0
  %4038 = vmatprep.subr.mxu0 0.0
  %4039 = vmatpush1.msra.mxu0 0.0
  %4040 = vmatprep.subr.mxu0 0.0
  %4041 = vmatpush1.msra.mxu0 0.0
  %4042 = vmatprep.subr.mxu0 0.0
  %4043 = vmatpush1.msra.mxu0 0.0
  %4044 = vmatprep.subr.mxu0 0.0
  %4045 = vmatpush1.msra.mxu0 0.0
  %4046 = vmatprep.subr.mxu0 0.0
  %4047 = vmatpush1.msra.mxu0 0.0
  %4048 = vmatprep.subr.mxu0 0.0
  %4049 = vmatpush1.msra.mxu0 0.0
  %4050 = vmatprep.subr.mxu0 0.0
  %4051 = vmatpush1.msra.mxu0 0.0
  %4052 = vmatprep.mubr.f32.mxu0 0.0
  %4053 = vmatmul.mubr.f32.gmra.mrb[0].mxu0 %v3977
  %v4054 = vpop.f32.mrb[0].mxu0
  %v4055 = vadd.f32 0.0, %v4054
  %v4056 = vpop.f32.mrb[0].mxu0
  %4057 = vmatprep.mubr.f32.mxu0 0.0
  %4058 = vmatmul.mubr.f32.gmra.mrb[0].mxu0 %v3980
  %v4059 = vpop.f32.mrb[0].mxu0
  %v4060 = vadd.f32 0.0, %v4059
  %v4061 = vpop.f32.mrb[0].mxu0
  %4062 = vmatprep.mubr.f32.mxu0 0.0
  %4063 = vmatmul.mubr.f32.gmra.mrb[0].mxu0 %v3983
  %v4064 = vpop.f32.mrb[0].mxu0
  %v4065 = vadd.f32 0.0, %v4064
  %v4066 = vpop.f32.mrb[0].mxu0
  %4067 = vmatprep.mubr.f32.mxu0 0.0
  %4068 = vmatmul.mubr.f32.gmra.mrb[0].mxu0 %v3986
  %v4069 = vpop.f32.mrb[0].mxu0
  %v4070 = vadd.f32 0.0, %v4069
  %v4071 = vpop.f32.mrb[0].mxu0
  %4072 = vdwg.mxu0
  %v4074 = vsel %vm1506, %v4060, 0
  %4076 = vmatprep.subr.mxu0 0.0
  %4077 = vmatpush1.msra.mxu0 %v3970
  %4078 = vmatprep.subr.mxu0 0.0
  %4079 = vmatpush1.msra.mxu0 %v3971
  %4080 = vmatprep.subr.mxu0 0.0
  %4081 = vmatpush1.msra.mxu0 0.0
  %4082 = vmatprep.subr.mxu0 0.0
  %4083 = vmatpush1.msra.mxu0 0.0
  %4084 = vmatprep.subr.mxu0 0.0
  %4085 = vmatpush1.msra.mxu0 0.0
  %4086 = vmatprep.subr.mxu0 0.0
  %4087 = vmatpush1.msra.mxu0 0.0
  %4088 = vmatprep.subr.mxu0 0.0
  %4089 = vmatpush1.msra.mxu0 0.0
  %4090 = vmatprep.subr.mxu0 0.0
  %4091 = vmatpush1.msra.mxu0 0.0
  %4092 = vmatprep.subr.mxu0 0.0
  %4093 = vmatpush1.msra.mxu0 0.0
  %4094 = vmatprep.subr.mxu0 0.0
  %4095 = vmatpush1.msra.mxu0 0.0
  %4096 = vmatprep.subr.mxu0 0.0
  %4097 = vmatpush1.msra.mxu0 0.0
  %4098 = vmatprep.subr.mxu0 0.0
  %4099 = vmatpush1.msra.mxu0 0.0
  %4100 = vmatprep.subr.mxu0 0.0
  %4101 = vmatpush1.msra.mxu0 0.0
  %4102 = vmatprep.subr.mxu0 0.0
  %4103 = vmatpush1.msra.mxu0 0.0
  %4104 = vmatprep.subr.mxu0 0.0
  %4105 = vmatpush1.msra.mxu0 0.0
  %4106 = vmatprep.subr.mxu0 0.0
  %4107 = vmatpush1.msra.mxu0 0.0
  %4108 = vmatprep.subr.mxu0 0.0
  %4109 = vmatpush1.msra.mxu0 0.0
  %4110 = vmatprep.subr.mxu0 0.0
  %4111 = vmatpush1.msra.mxu0 0.0
  %4112 = vmatprep.subr.mxu0 0.0
  %4113 = vmatpush1.msra.mxu0 0.0
  %4114 = vmatprep.subr.mxu0 0.0
  %4115 = vmatpush1.msra.mxu0 0.0
  %4116 = vmatprep.subr.mxu0 0.0
  %4117 = vmatpush1.msra.mxu0 0.0
  %4118 = vmatprep.subr.mxu0 0.0
  %4119 = vmatpush1.msra.mxu0 0.0
  %4120 = vmatprep.subr.mxu0 0.0
  %4121 = vmatpush1.msra.mxu0 0.0
  %4122 = vmatprep.subr.mxu0 0.0
  %4123 = vmatpush1.msra.mxu0 0.0
  %4124 = vmatprep.subr.mxu0 0.0
  %4125 = vmatpush1.msra.mxu0 0.0
  %4126 = vmatprep.subr.mxu0 0.0
  %4127 = vmatpush1.msra.mxu0 0.0
  %4128 = vmatprep.subr.mxu0 0.0
  %4129 = vmatpush1.msra.mxu0 0.0
  %4130 = vmatprep.subr.mxu0 0.0
  %4131 = vmatpush1.msra.mxu0 0.0
  %4132 = vmatprep.subr.mxu0 0.0
  %4133 = vmatpush1.msra.mxu0 0.0
  %4134 = vmatprep.subr.mxu0 0.0
  %4135 = vmatpush1.msra.mxu0 0.0
  %4136 = vmatprep.subr.mxu0 0.0
  %4137 = vmatpush1.msra.mxu0 0.0
  %4138 = vmatprep.subr.mxu0 0.0
  %4139 = vmatpush1.msra.mxu0 0.0
  %4140 = vmatprep.mubr.f32.mxu0 0.0
  %4141 = vmatmul.mubr.f32.gmra.mrb[0].mxu0 %v4074
  %v4142 = vpop.f32.mrb[0].mxu0
  %v4143 = vadd.f32 0.0, %v4142
  %v4144 = vpop.f32.mrb[0].mxu0
  %4145 = vdwg.mxu0
  %v4147 = vsel %vm1506, %v4055, 0
  %4149 = vmatprep.subr.mxu0 0.0
  %4150 = vmatpush1.msra.mxu0 %v3968
  %4151 = vmatprep.subr.mxu0 0.0
  %4152 = vmatpush1.msra.mxu0 %v3969
  %4153 = vmatprep.subr.mxu0 0.0
  %4154 = vmatpush1.msra.mxu0 0.0
  %4155 = vmatprep.subr.mxu0 0.0
  %4156 = vmatpush1.msra.mxu0 0.0
  %4157 = vmatprep.subr.mxu0 0.0
  %4158 = vmatpush1.msra.mxu0 0.0
  %4159 = vmatprep.subr.mxu0 0.0
  %4160 = vmatpush1.msra.mxu0 0.0
  %4161 = vmatprep.subr.mxu0 0.0
  %4162 = vmatpush1.msra.mxu0 0.0
  %4163 = vmatprep.subr.mxu0 0.0
  %4164 = vmatpush1.msra.mxu0 0.0
  %4165 = vmatprep.subr.mxu0 0.0
  %4166 = vmatpush1.msra.mxu0 0.0
  %4167 = vmatprep.subr.mxu0 0.0
  %4168 = vmatpush1.msra.mxu0 0.0
  %4169 = vmatprep.subr.mxu0 0.0
  %4170 = vmatpush1.msra.mxu0 0.0
  %4171 = vmatprep.subr.mxu0 0.0
  %4172 = vmatpush1.msra.mxu0 0.0
  %4173 = vmatprep.subr.mxu0 0.0
  %4174 = vmatpush1.msra.mxu0 0.0
  %4175 = vmatprep.subr.mxu0 0.0
  %4176 = vmatpush1.msra.mxu0 0.0
  %4177 = vmatprep.subr.mxu0 0.0
  %4178 = vmatpush1.msra.mxu0 0.0
  %4179 = vmatprep.subr.mxu0 0.0
  %4180 = vmatpush1.msra.mxu0 0.0
  %4181 = vmatprep.subr.mxu0 0.0
  %4182 = vmatpush1.msra.mxu0 0.0
  %4183 = vmatprep.subr.mxu0 0.0
  %4184 = vmatpush1.msra.mxu0 0.0
  %4185 = vmatprep.subr.mxu0 0.0
  %4186 = vmatpush1.msra.mxu0 0.0
  %4187 = vmatprep.subr.mxu0 0.0
  %4188 = vmatpush1.msra.mxu0 0.0
  %4189 = vmatprep.subr.mxu0 0.0
  %4190 = vmatpush1.msra.mxu0 0.0
  %4191 = vmatprep.subr.mxu0 0.0
  %4192 = vmatpush1.msra.mxu0 0.0
  %4193 = vmatprep.subr.mxu0 0.0
  %4194 = vmatpush1.msra.mxu0 0.0
  %4195 = vmatprep.subr.mxu0 0.0
  %4196 = vmatpush1.msra.mxu0 0.0
  %4197 = vmatprep.subr.mxu0 0.0
  %4198 = vmatpush1.msra.mxu0 0.0
  %4199 = vmatprep.subr.mxu0 0.0
  %4200 = vmatpush1.msra.mxu0 0.0
  %4201 = vmatprep.subr.mxu0 0.0
  %4202 = vmatpush1.msra.mxu0 0.0
  %4203 = vmatprep.subr.mxu0 0.0
  %4204 = vmatpush1.msra.mxu0 0.0
  %4205 = vmatprep.subr.mxu0 0.0
  %4206 = vmatpush1.msra.mxu0 0.0
  %4207 = vmatprep.subr.mxu0 0.0
  %4208 = vmatpush1.msra.mxu0 0.0
  %4209 = vmatprep.subr.mxu0 0.0
  %4210 = vmatpush1.msra.mxu0 0.0
  %4211 = vmatprep.subr.mxu0 0.0
  %4212 = vmatpush1.msra.mxu0 0.0
  %4213 = vmatprep.mubr.f32.mxu0 0.0
  %4214 = vmatmul.mubr.f32.gmra.mrb[0].mxu0 %v4147
  %v4215 = vpop.f32.mrb[0].mxu0
  %v4216 = vadd.f32 %v4143, %v4215
  %v4217 = vpop.f32.mrb[0].mxu0
  %4218 = vdwg.mxu0
  %v4220 = vsel %vm1506, %v4065, 0
  %4222 = vmatprep.subr.mxu0 0.0
  %4223 = vmatpush1.msra.mxu0 %v3972
  %4224 = vmatprep.subr.mxu0 0.0
  %4225 = vmatpush1.msra.mxu0 %v3973
  %4226 = vmatprep.subr.mxu0 0.0
  %4227 = vmatpush1.msra.mxu0 0.0
  %4228 = vmatprep.subr.mxu0 0.0
  %4229 = vmatpush1.msra.mxu0 0.0
  %4230 = vmatprep.subr.mxu0 0.0
  %4231 = vmatpush1.msra.mxu0 0.0
  %4232 = vmatprep.subr.mxu0 0.0
  %4233 = vmatpush1.msra.mxu0 0.0
  %4234 = vmatprep.subr.mxu0 0.0
  %4235 = vmatpush1.msra.mxu0 0.0
  %4236 = vmatprep.subr.mxu0 0.0
  %4237 = vmatpush1.msra.mxu0 0.0
  %4238 = vmatprep.subr.mxu0 0.0
  %4239 = vmatpush1.msra.mxu0 0.0
  %4240 = vmatprep.subr.mxu0 0.0
  %4241 = vmatpush1.msra.mxu0 0.0
  %4242 = vmatprep.subr.mxu0 0.0
  %4243 = vmatpush1.msra.mxu0 0.0
  %4244 = vmatprep.subr.mxu0 0.0
  %4245 = vmatpush1.msra.mxu0 0.0
  %4246 = vmatprep.subr.mxu0 0.0
  %4247 = vmatpush1.msra.mxu0 0.0
  %4248 = vmatprep.subr.mxu0 0.0
  %4249 = vmatpush1.msra.mxu0 0.0
  %4250 = vmatprep.subr.mxu0 0.0
  %4251 = vmatpush1.msra.mxu0 0.0
  %4252 = vmatprep.subr.mxu0 0.0
  %4253 = vmatpush1.msra.mxu0 0.0
  %4254 = vmatprep.subr.mxu0 0.0
  %4255 = vmatpush1.msra.mxu0 0.0
  %4256 = vmatprep.subr.mxu0 0.0
  %4257 = vmatpush1.msra.mxu0 0.0
  %4258 = vmatprep.subr.mxu0 0.0
  %4259 = vmatpush1.msra.mxu0 0.0
  %4260 = vmatprep.subr.mxu0 0.0
  %4261 = vmatpush1.msra.mxu0 0.0
  %4262 = vmatprep.subr.mxu0 0.0
  %4263 = vmatpush1.msra.mxu0 0.0
  %4264 = vmatprep.subr.mxu0 0.0
  %4265 = vmatpush1.msra.mxu0 0.0
  %4266 = vmatprep.subr.mxu0 0.0
  %4267 = vmatpush1.msra.mxu0 0.0
  %4268 = vmatprep.subr.mxu0 0.0
  %4269 = vmatpush1.msra.mxu0 0.0
  %4270 = vmatprep.subr.mxu0 0.0
  %4271 = vmatpush1.msra.mxu0 0.0
  %4272 = vmatprep.subr.mxu0 0.0
  %4273 = vmatpush1.msra.mxu0 0.0
  %4274 = vmatprep.subr.mxu0 0.0
  %4275 = vmatpush1.msra.mxu0 0.0
  %4276 = vmatprep.subr.mxu0 0.0
  %4277 = vmatpush1.msra.mxu0 0.0
  %4278 = vmatprep.subr.mxu0 0.0
  %4279 = vmatpush1.msra.mxu0 0.0
  %4280 = vmatprep.subr.mxu0 0.0
  %4281 = vmatpush1.msra.mxu0 0.0
  %4282 = vmatprep.subr.mxu0 0.0
  %4283 = vmatpush1.msra.mxu0 0.0
  %4284 = vmatprep.subr.mxu0 0.0
  %4285 = vmatpush1.msra.mxu0 0.0
  %4286 = vmatprep.mubr.f32.mxu0 0.0
  %4287 = vmatmul.mubr.f32.gmra.mrb[0].mxu0 %v4220
  %v4288 = vpop.f32.mrb[0].mxu0
  %v4289 = vadd.f32 0.0, %v4288
  %v4290 = vpop.f32.mrb[0].mxu0
  %4291 = vdwg.mxu0
  %v4292 = vadd.f32 %v4216, %v4289
  %v4294 = vsel %vm1506, %v4070, 0
  %4296 = vmatprep.subr.mxu0 0.0
  %4297 = vmatpush1.msra.mxu0 %v3974
  %4298 = vmatprep.subr.mxu0 0.0
  %4299 = vmatpush1.msra.mxu0 %v3975
  %4300 = vmatprep.subr.mxu0 0.0
  %4301 = vmatpush1.msra.mxu0 0.0
  %4302 = vmatprep.subr.mxu0 0.0
  %4303 = vmatpush1.msra.mxu0 0.0
  %4304 = vmatprep.subr.mxu0 0.0
  %4305 = vmatpush1.msra.mxu0 0.0
  %4306 = vmatprep.subr.mxu0 0.0
  %4307 = vmatpush1.msra.mxu0 0.0
  %4308 = vmatprep.subr.mxu0 0.0
  %4309 = vmatpush1.msra.mxu0 0.0
  %4310 = vmatprep.subr.mxu0 0.0
  %4311 = vmatpush1.msra.mxu0 0.0
  %4312 = vmatprep.subr.mxu0 0.0
  %4313 = vmatpush1.msra.mxu0 0.0
  %4314 = vmatprep.subr.mxu0 0.0
  %4315 = vmatpush1.msra.mxu0 0.0
  %4316 = vmatprep.subr.mxu0 0.0
  %4317 = vmatpush1.msra.mxu0 0.0
  %4318 = vmatprep.subr.mxu0 0.0
  %4319 = vmatpush1.msra.mxu0 0.0
  %4320 = vmatprep.subr.mxu0 0.0
  %4321 = vmatpush1.msra.mxu0 0.0
  %4322 = vmatprep.subr.mxu0 0.0
  %4323 = vmatpush1.msra.mxu0 0.0
  %4324 = vmatprep.subr.mxu0 0.0
  %4325 = vmatpush1.msra.mxu0 0.0
  %4326 = vmatprep.subr.mxu0 0.0
  %4327 = vmatpush1.msra.mxu0 0.0
  %4328 = vmatprep.subr.mxu0 0.0
  %4329 = vmatpush1.msra.mxu0 0.0
  %4330 = vmatprep.subr.mxu0 0.0
  %4331 = vmatpush1.msra.mxu0 0.0
  %4332 = vmatprep.subr.mxu0 0.0
  %4333 = vmatpush1.msra.mxu0 0.0
  %4334 = vmatprep.subr.mxu0 0.0
  %4335 = vmatpush1.msra.mxu0 0.0
  %4336 = vmatprep.subr.mxu0 0.0
  %4337 = vmatpush1.msra.mxu0 0.0
  %4338 = vmatprep.subr.mxu0 0.0
  %4339 = vmatpush1.msra.mxu0 0.0
  %4340 = vmatprep.subr.mxu0 0.0
  %4341 = vmatpush1.msra.mxu0 0.0
  %4342 = vmatprep.subr.mxu0 0.0
  %4343 = vmatpush1.msra.mxu0 0.0
  %4344 = vmatprep.subr.mxu0 0.0
  %4345 = vmatpush1.msra.mxu0 0.0
  %4346 = vmatprep.subr.mxu0 0.0
  %4347 = vmatpush1.msra.mxu0 0.0
  %4348 = vmatprep.subr.mxu0 0.0
  %4349 = vmatpush1.msra.mxu0 0.0
  %4350 = vmatprep.subr.mxu0 0.0
  %4351 = vmatpush1.msra.mxu0 0.0
  %4352 = vmatprep.subr.mxu0 0.0
  %4353 = vmatpush1.msra.mxu0 0.0
  %4354 = vmatprep.subr.mxu0 0.0
  %4355 = vmatpush1.msra.mxu0 0.0
  %4356 = vmatprep.subr.mxu0 0.0
  %4357 = vmatpush1.msra.mxu0 0.0
  %4358 = vmatprep.subr.mxu0 0.0
  %4359 = vmatpush1.msra.mxu0 0.0
  %4360 = vmatprep.mubr.f32.mxu0 0.0
  %4361 = vmatmul.mubr.f32.gmra.mrb[0].mxu0 %v4294
  %v4362 = vpop.f32.mrb[0].mxu0
  %v4363 = vadd.f32 0.0, %v4362
  %v4364 = vpop.f32.mrb[0].mxu0
  %4365 = vdwg.mxu0
  %v4366 = vadd.f32 %v4292, %v4363
  %v4368 = vsel %vm1506, %v4366, 0
  %4370 = vmatprep.subr.mxu0 0.0
  %4371 = vmatpush1.msra.mxu0 %v1479
  %4372 = vmatprep.subr.mxu0 0.0
  %4373 = vmatpush1.msra.mxu0 %v1480
  %4374 = vmatprep.subr.mxu0 0.0
  %4375 = vmatpush1.msra.mxu0 0.0
  %4376 = vmatprep.subr.mxu0 0.0
  %4377 = vmatpush1.msra.mxu0 0.0
  %4378 = vmatprep.subr.mxu0 0.0
  %4379 = vmatpush1.msra.mxu0 0.0
  %4380 = vmatprep.subr.mxu0 0.0
  %4381 = vmatpush1.msra.mxu0 0.0
  %4382 = vmatprep.subr.mxu0 0.0
  %4383 = vmatpush1.msra.mxu0 0.0
  %4384 = vmatprep.subr.mxu0 0.0
  %4385 = vmatpush1.msra.mxu0 0.0
  %4386 = vmatprep.subr.mxu0 0.0
  %4387 = vmatpush1.msra.mxu0 0.0
  %4388 = vmatprep.subr.mxu0 0.0
  %4389 = vmatpush1.msra.mxu0 0.0
  %4390 = vmatprep.subr.mxu0 0.0
  %4391 = vmatpush1.msra.mxu0 0.0
  %4392 = vmatprep.subr.mxu0 0.0
  %4393 = vmatpush1.msra.mxu0 0.0
  %4394 = vmatprep.subr.mxu0 0.0
  %4395 = vmatpush1.msra.mxu0 0.0
  %4396 = vmatprep.subr.mxu0 0.0
  %4397 = vmatpush1.msra.mxu0 0.0
  %4398 = vmatprep.subr.mxu0 0.0
  %4399 = vmatpush1.msra.mxu0 0.0
  %4400 = vmatprep.subr.mxu0 0.0
  %4401 = vmatpush1.msra.mxu0 0.0
  %4402 = vmatprep.subr.mxu0 0.0
  %4403 = vmatpush1.msra.mxu0 0.0
  %4404 = vmatprep.subr.mxu0 0.0
  %4405 = vmatpush1.msra.mxu0 0.0
  %4406 = vmatprep.subr.mxu0 0.0
  %4407 = vmatpush1.msra.mxu0 0.0
  %4408 = vmatprep.subr.mxu0 0.0
  %4409 = vmatpush1.msra.mxu0 0.0
  %4410 = vmatprep.subr.mxu0 0.0
  %4411 = vmatpush1.msra.mxu0 0.0
  %4412 = vmatprep.subr.mxu0 0.0
  %4413 = vmatpush1.msra.mxu0 0.0
  %4414 = vmatprep.subr.mxu0 0.0
  %4415 = vmatpush1.msra.mxu0 0.0
  %4416 = vmatprep.subr.mxu0 0.0
  %4417 = vmatpush1.msra.mxu0 0.0
  %4418 = vmatprep.subr.mxu0 0.0
  %4419 = vmatpush1.msra.mxu0 0.0
  %4420 = vmatprep.subr.mxu0 0.0
  %4421 = vmatpush1.msra.mxu0 0.0
  %4422 = vmatprep.subr.mxu0 0.0
  %4423 = vmatpush1.msra.mxu0 0.0
  %4424 = vmatprep.subr.mxu0 0.0
  %4425 = vmatpush1.msra.mxu0 0.0
  %4426 = vmatprep.subr.mxu0 0.0
  %4427 = vmatpush1.msra.mxu0 0.0
  %4428 = vmatprep.subr.mxu0 0.0
  %4429 = vmatpush1.msra.mxu0 0.0
  %4430 = vmatprep.subr.mxu0 0.0
  %4431 = vmatpush1.msra.mxu0 0.0
  %4432 = vmatprep.subr.mxu0 0.0
  %4433 = vmatpush1.msra.mxu0 0.0
  %4434 = vmatprep.mubr.f32.mxu0 0.0
  %4435 = vmatmul.mubr.f32.gmra.mrb[0].mxu0 %v4368
  %v4436 = vpop.f32.mrb[0].mxu0
  %v4437 = vadd.f32 %v1739, %v4436
  %v4438 = vpop.f32.mrb[0].mxu0
  %4439 = vdwg.mxu0
  %4440 = vmatprep.subr.mxu0 0.0
  %4441 = vmatpush1.msra.mxu0 %v4437
  %4442 = vmatprep.subr.mxu0 0.0
  %4443 = vmatpush1.msra.mxu0 0.0
  %4444 = vmatprep.subr.mxu0 0.0
  %4445 = vmatpush1.msra.mxu0 0.0
  %4446 = vmatprep.subr.mxu0 0.0
  %4447 = vmatpush1.msra.mxu0 0.0
  %4448 = vmatprep.subr.mxu0 0.0
  %4449 = vmatpush1.msra.mxu0 0.0
  %4450 = vmatprep.subr.mxu0 0.0
  %4451 = vmatpush1.msra.mxu0 0.0
  %4452 = vmatprep.subr.mxu0 0.0
  %4453 = vmatpush1.msra.mxu0 0.0
  %4454 = vmatprep.subr.mxu0 0.0
  %4455 = vmatpush1.msra.mxu0 0.0
  %4456 = vmatprep.subr.mxu0 0.0
  %4457 = vmatpush1.msra.mxu0 0.0
  %4458 = vmatprep.subr.mxu0 0.0
  %4459 = vmatpush1.msra.mxu0 0.0
  %4460 = vmatprep.subr.mxu0 0.0
  %4461 = vmatpush1.msra.mxu0 0.0
  %4462 = vmatprep.subr.mxu0 0.0
  %4463 = vmatpush1.msra.mxu0 0.0
  %4464 = vmatprep.subr.mxu0 0.0
  %4465 = vmatpush1.msra.mxu0 0.0
  %4466 = vmatprep.subr.mxu0 0.0
  %4467 = vmatpush1.msra.mxu0 0.0
  %4468 = vmatprep.subr.mxu0 0.0
  %4469 = vmatpush1.msra.mxu0 0.0
  %4470 = vmatprep.subr.mxu0 0.0
  %4471 = vmatpush1.msra.mxu0 0.0
  %4472 = vmatprep.subr.mxu0 0.0
  %4473 = vmatpush1.msra.mxu0 0.0
  %4474 = vmatprep.subr.mxu0 0.0
  %4475 = vmatpush1.msra.mxu0 0.0
  %4476 = vmatprep.subr.mxu0 0.0
  %4477 = vmatpush1.msra.mxu0 0.0
  %4478 = vmatprep.subr.mxu0 0.0
  %4479 = vmatpush1.msra.mxu0 0.0
  %4480 = vmatprep.subr.mxu0 0.0
  %4481 = vmatpush1.msra.mxu0 0.0
  %4482 = vmatprep.subr.mxu0 0.0
  %4483 = vmatpush1.msra.mxu0 0.0
  %4484 = vmatprep.subr.mxu0 0.0
  %4485 = vmatpush1.msra.mxu0 0.0
  %4486 = vmatprep.subr.mxu0 0.0
  %4487 = vmatpush1.msra.mxu0 0.0
  %4488 = vmatprep.subr.mxu0 0.0
  %4489 = vmatpush1.msra.mxu0 0.0
  %4490 = vmatprep.subr.mxu0 0.0
  %4491 = vmatpush1.msra.mxu0 0.0
  %4492 = vmatprep.subr.mxu0 0.0
  %4493 = vmatpush1.msra.mxu0 0.0
  %4494 = vmatprep.subr.mxu0 0.0
  %4495 = vmatpush1.msra.mxu0 0.0
  %4496 = vmatprep.subr.mxu0 0.0
  %4497 = vmatpush1.msra.mxu0 0.0
  %4498 = vmatprep.subr.mxu0 0.0
  %4499 = vmatpush1.msra.mxu0 0.0
  %4500 = vmatprep.subr.mxu0 0.0
  %4501 = vmatpush1.msra.mxu0 0.0
  %4502 = vmatprep.subr.mxu0 0.0
  %4503 = vmatpush1.msra.mxu0 0.0
  %4504 = vmatprep.mubr.f32.mxu0 0.0
  %4505 = vmatmul.mubr.f32.gmra.mrb[0].mxu0 %v1815
  %v4506 = vpop.f32.mrb[0].mxu0
  %v4507 = vadd.f32 0.0, %v4506
  %v4508 = vpop.f32.mrb[0].mxu0
  %4509 = vmatprep.mubr.f32.mxu0 0.0
  %4510 = vmatmul.mubr.f32.gmra.mrb[0].mxu0 %v1818
  %v4511 = vpop.f32.mrb[0].mxu0
  %v4512 = vadd.f32 0.0, %v4511
  %v4513 = vpop.f32.mrb[0].mxu0
  %4514 = vmatprep.mubr.f32.mxu0 0.0
  %4515 = vmatmul.mubr.f32.gmra.mrb[0].mxu0 %v1821
  %v4516 = vpop.f32.mrb[0].mxu0
  %v4517 = vadd.f32 0.0, %v4516
  %v4518 = vpop.f32.mrb[0].mxu0
  %4519 = vmatprep.mubr.f32.mxu0 0.0
  %4520 = vmatmul.mubr.f32.gmra.mrb[0].mxu0 %v1824
  %v4521 = vpop.f32.mrb[0].mxu0
  %v4522 = vadd.f32 0.0, %v4521
  %v4523 = vpop.f32.mrb[0].mxu0
  %4524 = vmatprep.mubr.f32.mxu0 0.0
  %4525 = vmatmul.mubr.f32.gmra.mrb[0].mxu0 %v1827
  %v4526 = vpop.f32.mrb[0].mxu0
  %v4527 = vadd.f32 0.0, %v4526
  %v4528 = vpop.f32.mrb[0].mxu0
  %4529 = vmatprep.mubr.f32.mxu0 0.0
  %4530 = vmatmul.mubr.f32.gmra.mrb[0].mxu0 %v1830
  %v4531 = vpop.f32.mrb[0].mxu0
  %v4532 = vadd.f32 0.0, %v4531
  %v4533 = vpop.f32.mrb[0].mxu0
  %4534 = vmatprep.mubr.f32.mxu0 0.0
  %4535 = vmatmul.mubr.f32.gmra.mrb[0].mxu0 %v1833
  %v4536 = vpop.f32.mrb[0].mxu0
  %v4537 = vadd.f32 0.0, %v4536
  %v4538 = vpop.f32.mrb[0].mxu0
  %4539 = vmatprep.mubr.f32.mxu0 0.0
  %4540 = vmatmul.mubr.f32.gmra.mrb[0].mxu0 %v1836
  %v4541 = vpop.f32.mrb[0].mxu0
  %v4542 = vadd.f32 0.0, %v4541
  %v4543 = vpop.f32.mrb[0].mxu0
  %4544 = vdwg.mxu0
  %v4545 = vmul.f32 %v4507, %v1470
  %v4546 = vmul.f32 %v4512, %v1471
  %v4547 = vmul.f32 %v4517, %v1472
  %v4548 = vmul.f32 %v4522, %v1473
  %v4549 = vmul.f32 %v4527, %v1474
  %v4550 = vmul.f32 %v4532, %v1475
  %v4551 = vmul.f32 %v4537, %v1476
  %v4552 = vmul.f32 %v4542, %v1477
  %4554 = vrot.lane.b32.xlu0 %v4437, 112
  %v4555 = vpop.permute.xlu0 %4554
  %v4557 = vsel %vm1506, %v4545, 0
  %v4560 = vsel %vm1506, %v4546, 0
  %v4563 = vsel %vm1506, %v4547, 0
  %v4566 = vsel %vm1506, %v4548, 0
  %v4569 = vsel %vm1506, %v4549, 0
  %v4572 = vsel %vm1506, %v4550, 0
  %v4575 = vsel %vm1506, %v4551, 0
  %v4578 = vsel %vm1506, %v4552, 0
  %v4580 = vsel %vm1506, %v4555, 0
  %4582 = vmatprep.subr.mxu0 0.0
  %4583 = vmatpush1.xpose.msra.mxu0 %v4580
  %4584 = vmatprep.subr.mxu0 0.0
  %4585 = vmatpush1.xpose.msra.mxu0 0.0
  %4586 = vmatprep.subr.mxu0 0.0
  %4587 = vmatpush1.xpose.msra.mxu0 0.0
  %4588 = vmatprep.subr.mxu0 0.0
  %4589 = vmatpush1.xpose.msra.mxu0 0.0
  %4590 = vmatprep.subr.mxu0 0.0
  %4591 = vmatpush1.xpose.msra.mxu0 0.0
  %4592 = vmatprep.subr.mxu0 0.0
  %4593 = vmatpush1.xpose.msra.mxu0 0.0
  %4594 = vmatprep.subr.mxu0 0.0
  %4595 = vmatpush1.xpose.msra.mxu0 0.0
  %4596 = vmatprep.subr.mxu0 0.0
  %4597 = vmatpush1.xpose.msra.mxu0 0.0
  %4598 = vmatprep.subr.mxu0 0.0
  %4599 = vmatpush1.xpose.msra.mxu0 0.0
  %4600 = vmatprep.subr.mxu0 0.0
  %4601 = vmatpush1.xpose.msra.mxu0 0.0
  %4602 = vmatprep.subr.mxu0 0.0
  %4603 = vmatpush1.xpose.msra.mxu0 0.0
  %4604 = vmatprep.subr.mxu0 0.0
  %4605 = vmatpush1.xpose.msra.mxu0 0.0
  %4606 = vmatprep.subr.mxu0 0.0
  %4607 = vmatpush1.xpose.msra.mxu0 0.0
  %4608 = vmatprep.subr.mxu0 0.0
  %4609 = vmatpush1.xpose.msra.mxu0 0.0
  %4610 = vmatprep.subr.mxu0 0.0
  %4611 = vmatpush1.xpose.msra.mxu0 0.0
  %4612 = vmatprep.subr.mxu0 0.0
  %4613 = vmatpush1.xpose.msra.mxu0 0.0
  %4614 = vmatprep.subr.mxu0 0.0
  %4615 = vmatpush1.xpose.msra.mxu0 0.0
  %4616 = vmatprep.subr.mxu0 0.0
  %4617 = vmatpush1.xpose.msra.mxu0 0.0
  %4618 = vmatprep.subr.mxu0 0.0
  %4619 = vmatpush1.xpose.msra.mxu0 0.0
  %4620 = vmatprep.subr.mxu0 0.0
  %4621 = vmatpush1.xpose.msra.mxu0 0.0
  %4622 = vmatprep.subr.mxu0 0.0
  %4623 = vmatpush1.xpose.msra.mxu0 0.0
  %4624 = vmatprep.subr.mxu0 0.0
  %4625 = vmatpush1.xpose.msra.mxu0 0.0
  %4626 = vmatprep.subr.mxu0 0.0
  %4627 = vmatpush1.xpose.msra.mxu0 0.0
  %4628 = vmatprep.subr.mxu0 0.0
  %4629 = vmatpush1.xpose.msra.mxu0 0.0
  %4630 = vmatprep.subr.mxu0 0.0
  %4631 = vmatpush1.xpose.msra.mxu0 0.0
  %4632 = vmatprep.subr.mxu0 0.0
  %4633 = vmatpush1.xpose.msra.mxu0 0.0
  %4634 = vmatprep.subr.mxu0 0.0
  %4635 = vmatpush1.xpose.msra.mxu0 0.0
  %4636 = vmatprep.subr.mxu0 0.0
  %4637 = vmatpush1.xpose.msra.mxu0 0.0
  %4638 = vmatprep.subr.mxu0 0.0
  %4639 = vmatpush1.xpose.msra.mxu0 0.0
  %4640 = vmatprep.subr.mxu0 0.0
  %4641 = vmatpush1.xpose.msra.mxu0 0.0
  %4642 = vmatprep.subr.mxu0 0.0
  %4643 = vmatpush1.xpose.msra.mxu0 0.0
  %4644 = vmatprep.subr.mxu0 0.0
  %4645 = vmatpush1.xpose.msra.mxu0 0.0
  %4646 = vmatprep.mubr.f32.mxu0 0.0
  %4647 = vmatmul.mubr.f32.gmra.mrb[0].mxu0 %v4557
  %v4648 = vpop.f32.mrb[0].mxu0
  %v4649 = vadd.f32 %v1494, %v4648
  %v4650 = vpop.f32.mrb[0].mxu0
  %4651 = vmatprep.mubr.f32.mxu0 0.0
  %4652 = vmatmul.mubr.f32.gmra.mrb[0].mxu0 %v4560
  %v4653 = vpop.f32.mrb[0].mxu0
  %v4654 = vadd.f32 %v1495, %v4653
  %v4655 = vpop.f32.mrb[0].mxu0
  %4656 = vmatprep.mubr.f32.mxu0 0.0
  %4657 = vmatmul.mubr.f32.gmra.mrb[0].mxu0 %v4563
  %v4658 = vpop.f32.mrb[0].mxu0
  %v4659 = vadd.f32 %v1496, %v4658
  %v4660 = vpop.f32.mrb[0].mxu0
  %4661 = vmatprep.mubr.f32.mxu0 0.0
  %4662 = vmatmul.mubr.f32.gmra.mrb[0].mxu0 %v4566
  %v4663 = vpop.f32.mrb[0].mxu0
  %v4664 = vadd.f32 %v1497, %v4663
  %v4665 = vpop.f32.mrb[0].mxu0
  %4666 = vmatprep.mubr.f32.mxu0 0.0
  %4667 = vmatmul.mubr.f32.gmra.mrb[0].mxu0 %v4569
  %v4668 = vpop.f32.mrb[0].mxu0
  %v4669 = vadd.f32 %v1498, %v4668
  %v4670 = vpop.f32.mrb[0].mxu0
  %4671 = vmatprep.mubr.f32.mxu0 0.0
  %4672 = vmatmul.mubr.f32.gmra.mrb[0].mxu0 %v4572
  %v4673 = vpop.f32.mrb[0].mxu0
  %v4674 = vadd.f32 %v1499, %v4673
  %v4675 = vpop.f32.mrb[0].mxu0
  %4676 = vmatprep.mubr.f32.mxu0 0.0
  %4677 = vmatmul.mubr.f32.gmra.mrb[0].mxu0 %v4575
  %v4678 = vpop.f32.mrb[0].mxu0
  %v4679 = vadd.f32 %v1500, %v4678
  %v4680 = vpop.f32.mrb[0].mxu0
  %4681 = vmatprep.mubr.f32.mxu0 0.0
  %4682 = vmatmul.mubr.f32.gmra.mrb[0].mxu0 %v4578
  %v4683 = vpop.f32.mrb[0].mxu0
  %v4684 = vadd.f32 %v1501, %v4683
  %v4685 = vpop.f32.mrb[0].mxu0
  %4686 = vdwg.mxu0
  %v4687 = vsel %vm1588, %v4649, -inf
  %4688 = vmax.xlane.f32.xlu0 %v4687
  %v4689 = vpop.xlane.xlu0 %4688
  %v4690 = vsel %vm1588, %v4654, -inf
  %4691 = vmax.xlane.f32.xlu0 %v4690
  %v4692 = vpop.xlane.xlu0 %4691
  %v4693 = vsel %vm1588, %v4659, -inf
  %4694 = vmax.xlane.f32.xlu0 %v4693
  %v4695 = vpop.xlane.xlu0 %4694
  %v4696 = vsel %vm1588, %v4664, -inf
  %4697 = vmax.xlane.f32.xlu0 %v4696
  %v4698 = vpop.xlane.xlu0 %4697
  %v4699 = vsel %vm1588, %v4669, -inf
  %4700 = vmax.xlane.f32.xlu0 %v4699
  %v4701 = vpop.xlane.xlu0 %4700
  %v4702 = vsel %vm1588, %v4674, -inf
  %4703 = vmax.xlane.f32.xlu0 %v4702
  %v4704 = vpop.xlane.xlu0 %4703
  %v4705 = vsel %vm1588, %v4679, -inf
  %4706 = vmax.xlane.f32.xlu0 %v4705
  %v4707 = vpop.xlane.xlu0 %4706
  %v4708 = vsel %vm1588, %v4684, -inf
  %4709 = vmax.xlane.f32.xlu0 %v4708
  %v4710 = vpop.xlane.xlu0 %4709
  %v4711 = vsub.f32 %v4649, %v4689
  %v4712 = vsub.f32 %v4654, %v4692
  %v4713 = vsub.f32 %v4659, %v4695
  %v4714 = vsub.f32 %v4664, %v4698
  %v4715 = vsub.f32 %v4669, %v4701
  %v4716 = vsub.f32 %v4674, %v4704
  %v4717 = vsub.f32 %v4679, %v4707
  %v4718 = vsub.f32 %v4684, %v4710
  %v4719 = vmul.f32 %v4711, 1.442695
  %v4720 = vpow.pop %v4719
  %v4721 = vmul.f32 %v4712, 1.442695
  %v4722 = vpow.pop %v4721
  %v4723 = vmul.f32 %v4713, 1.442695
  %v4724 = vpow.pop %v4723
  %v4725 = vmul.f32 %v4714, 1.442695
  %v4726 = vpow.pop %v4725
  %v4727 = vmul.f32 %v4715, 1.442695
  %v4728 = vpow.pop %v4727
  %v4729 = vmul.f32 %v4716, 1.442695
  %v4730 = vpow.pop %v4729
  %v4731 = vmul.f32 %v4717, 1.442695
  %v4732 = vpow.pop %v4731
  %v4733 = vmul.f32 %v4718, 1.442695
  %v4734 = vpow.pop %v4733
  %v4735 = vsel %vm1588, %v4720, 0.0
  %4736 = vadd.xlane.f32.xlu0 %v4735
  %v4737 = vpop.xlane.xlu0 %4736
  %v4738 = vsel %vm1588, %v4722, 0.0
  %4739 = vadd.xlane.f32.xlu0 %v4738
  %v4740 = vpop.xlane.xlu0 %4739
  %v4741 = vsel %vm1588, %v4724, 0.0
  %4742 = vadd.xlane.f32.xlu0 %v4741
  %v4743 = vpop.xlane.xlu0 %4742
  %v4744 = vsel %vm1588, %v4726, 0.0
  %4745 = vadd.xlane.f32.xlu0 %v4744
  %v4746 = vpop.xlane.xlu0 %4745
  %v4747 = vsel %vm1588, %v4728, 0.0
  %4748 = vadd.xlane.f32.xlu0 %v4747
  %v4749 = vpop.xlane.xlu0 %4748
  %v4750 = vsel %vm1588, %v4730, 0.0
  %4751 = vadd.xlane.f32.xlu0 %v4750
  %v4752 = vpop.xlane.xlu0 %4751
  %v4753 = vsel %vm1588, %v4732, 0.0
  %4754 = vadd.xlane.f32.xlu0 %v4753
  %v4755 = vpop.xlane.xlu0 %4754
  %v4756 = vsel %vm1588, %v4734, 0.0
  %4757 = vadd.xlane.f32.xlu0 %v4756
  %v4758 = vpop.xlane.xlu0 %4757
  %v4759 = vrcp.pop %v4737
  %v4760 = vrcp.pop %v4740
  %v4761 = vrcp.pop %v4743
  %v4762 = vrcp.pop %v4746
  %v4763 = vrcp.pop %v4749
  %v4764 = vrcp.pop %v4752
  %v4765 = vrcp.pop %v4755
  %v4766 = vrcp.pop %v4758
  %v4767 = vmul.f32 %v4720, %v4759
  %v4768 = vmul.f32 %v4722, %v4760
  %v4769 = vmul.f32 %v4724, %v4761
  %v4770 = vmul.f32 %v4726, %v4762
  %v4771 = vmul.f32 %v4728, %v4763
  %v4772 = vmul.f32 %v4730, %v4764
  %v4773 = vmul.f32 %v4732, %v4765
  %v4774 = vmul.f32 %v4734, %v4766
  %4775 = vrot.lane.b32.xlu0 %v4437, 96
  %v4776 = vpop.permute.xlu0 %4775
  %v4779 = vsel %vm1588, %v4767, 0
  %v4782 = vsel %vm1588, %v4768, 0
  %v4785 = vsel %vm1588, %v4769, 0
  %v4788 = vsel %vm1588, %v4770, 0
  %v4791 = vsel %vm1588, %v4771, 0
  %v4794 = vsel %vm1588, %v4772, 0
  %v4797 = vsel %vm1588, %v4773, 0
  %v4800 = vsel %vm1588, %v4774, 0
  %4802 = vmatprep.subr.mxu0 0.0
  %4803 = vmatpush1.msra.mxu0 %v4776
  %4804 = vmatprep.subr.mxu0 0.0
  %4805 = vmatpush1.msra.mxu0 0.0
  %4806 = vmatprep.subr.mxu0 0.0
  %4807 = vmatpush1.msra.mxu0 0.0
  %4808 = vmatprep.subr.mxu0 0.0
  %4809 = vmatpush1.msra.mxu0 0.0
  %4810 = vmatprep.subr.mxu0 0.0
  %4811 = vmatpush1.msra.mxu0 0.0
  %4812 = vmatprep.subr.mxu0 0.0
  %4813 = vmatpush1.msra.mxu0 0.0
  %4814 = vmatprep.subr.mxu0 0.0
  %4815 = vmatpush1.msra.mxu0 0.0
  %4816 = vmatprep.subr.mxu0 0.0
  %4817 = vmatpush1.msra.mxu0 0.0
  %4818 = vmatprep.subr.mxu0 0.0
  %4819 = vmatpush1.msra.mxu0 0.0
  %4820 = vmatprep.subr.mxu0 0.0
  %4821 = vmatpush1.msra.mxu0 0.0
  %4822 = vmatprep.subr.mxu0 0.0
  %4823 = vmatpush1.msra.mxu0 0.0
  %4824 = vmatprep.subr.mxu0 0.0
  %4825 = vmatpush1.msra.mxu0 0.0
  %4826 = vmatprep.subr.mxu0 0.0
  %4827 = vmatpush1.msra.mxu0 0.0
  %4828 = vmatprep.subr.mxu0 0.0
  %4829 = vmatpush1.msra.mxu0 0.0
  %4830 = vmatprep.subr.mxu0 0.0
  %4831 = vmatpush1.msra.mxu0 0.0
  %4832 = vmatprep.subr.mxu0 0.0
  %4833 = vmatpush1.msra.mxu0 0.0
  %4834 = vmatprep.subr.mxu0 0.0
  %4835 = vmatpush1.msra.mxu0 0.0
  %4836 = vmatprep.subr.mxu0 0.0
  %4837 = vmatpush1.msra.mxu0 0.0
  %4838 = vmatprep.subr.mxu0 0.0
  %4839 = vmatpush1.msra.mxu0 0.0
  %4840 = vmatprep.subr.mxu0 0.0
  %4841 = vmatpush1.msra.mxu0 0.0
  %4842 = vmatprep.subr.mxu0 0.0
  %4843 = vmatpush1.msra.mxu0 0.0
  %4844 = vmatprep.subr.mxu0 0.0
  %4845 = vmatpush1.msra.mxu0 0.0
  %4846 = vmatprep.subr.mxu0 0.0
  %4847 = vmatpush1.msra.mxu0 0.0
  %4848 = vmatprep.subr.mxu0 0.0
  %4849 = vmatpush1.msra.mxu0 0.0
  %4850 = vmatprep.subr.mxu0 0.0
  %4851 = vmatpush1.msra.mxu0 0.0
  %4852 = vmatprep.subr.mxu0 0.0
  %4853 = vmatpush1.msra.mxu0 0.0
  %4854 = vmatprep.subr.mxu0 0.0
  %4855 = vmatpush1.msra.mxu0 0.0
  %4856 = vmatprep.subr.mxu0 0.0
  %4857 = vmatpush1.msra.mxu0 0.0
  %4858 = vmatprep.subr.mxu0 0.0
  %4859 = vmatpush1.msra.mxu0 0.0
  %4860 = vmatprep.subr.mxu0 0.0
  %4861 = vmatpush1.msra.mxu0 0.0
  %4862 = vmatprep.subr.mxu0 0.0
  %4863 = vmatpush1.msra.mxu0 0.0
  %4864 = vmatprep.subr.mxu0 0.0
  %4865 = vmatpush1.msra.mxu0 0.0
  %4866 = vmatprep.mubr.f32.mxu0 0.0
  %4867 = vmatmul.mubr.f32.gmra.mrb[0].mxu0 %v4779
  %v4868 = vpop.f32.mrb[0].mxu0
  %v4869 = vadd.f32 0.0, %v4868
  %v4870 = vpop.f32.mrb[0].mxu0
  %4871 = vmatprep.mubr.f32.mxu0 0.0
  %4872 = vmatmul.mubr.f32.gmra.mrb[0].mxu0 %v4782
  %v4873 = vpop.f32.mrb[0].mxu0
  %v4874 = vadd.f32 0.0, %v4873
  %v4875 = vpop.f32.mrb[0].mxu0
  %4876 = vmatprep.mubr.f32.mxu0 0.0
  %4877 = vmatmul.mubr.f32.gmra.mrb[0].mxu0 %v4785
  %v4878 = vpop.f32.mrb[0].mxu0
  %v4879 = vadd.f32 0.0, %v4878
  %v4880 = vpop.f32.mrb[0].mxu0
  %4881 = vmatprep.mubr.f32.mxu0 0.0
  %4882 = vmatmul.mubr.f32.gmra.mrb[0].mxu0 %v4788
  %v4883 = vpop.f32.mrb[0].mxu0
  %v4884 = vadd.f32 0.0, %v4883
  %v4885 = vpop.f32.mrb[0].mxu0
  %4886 = vmatprep.mubr.f32.mxu0 0.0
  %4887 = vmatmul.mubr.f32.gmra.mrb[0].mxu0 %v4791
  %v4888 = vpop.f32.mrb[0].mxu0
  %v4889 = vadd.f32 0.0, %v4888
  %v4890 = vpop.f32.mrb[0].mxu0
  %4891 = vmatprep.mubr.f32.mxu0 0.0
  %4892 = vmatmul.mubr.f32.gmra.mrb[0].mxu0 %v4794
  %v4893 = vpop.f32.mrb[0].mxu0
  %v4894 = vadd.f32 0.0, %v4893
  %v4895 = vpop.f32.mrb[0].mxu0
  %4896 = vmatprep.mubr.f32.mxu0 0.0
  %4897 = vmatmul.mubr.f32.gmra.mrb[0].mxu0 %v4797
  %v4898 = vpop.f32.mrb[0].mxu0
  %v4899 = vadd.f32 0.0, %v4898
  %v4900 = vpop.f32.mrb[0].mxu0
  %4901 = vmatprep.mubr.f32.mxu0 0.0
  %4902 = vmatmul.mubr.f32.gmra.mrb[0].mxu0 %v4800
  %v4903 = vpop.f32.mrb[0].mxu0
  %v4904 = vadd.f32 0.0, %v4903
  %v4905 = vpop.f32.mrb[0].mxu0
  %4906 = vdwg.mxu0
  %v4907 = vmul.f32 %v4869, %v1470
  %v4908 = vmul.f32 %v4874, %v1471
  %v4909 = vmul.f32 %v4879, %v1472
  %v4910 = vmul.f32 %v4884, %v1473
  %v4911 = vmul.f32 %v4889, %v1474
  %v4912 = vmul.f32 %v4894, %v1475
  %v4913 = vmul.f32 %v4899, %v1476
  %v4914 = vmul.f32 %v4904, %v1477
  %4915 = vmatprep.subr.mxu0 0.0
  %4916 = vmatpush1.msra.mxu0 %v4907
  %4917 = vmatprep.subr.mxu0 0.0
  %4918 = vmatpush1.msra.mxu0 %v4908
  %4919 = vmatprep.subr.mxu0 0.0
  %4920 = vmatpush1.msra.mxu0 %v4909
  %4921 = vmatprep.subr.mxu0 0.0
  %4922 = vmatpush1.msra.mxu0 %v4910
  %4923 = vmatprep.subr.mxu0 0.0
  %4924 = vmatpush1.msra.mxu0 %v4911
  %4925 = vmatprep.subr.mxu0 0.0
  %4926 = vmatpush1.msra.mxu0 %v4912
  %4927 = vmatprep.subr.mxu0 0.0
  %4928 = vmatpush1.msra.mxu0 %v4913
  %4929 = vmatprep.subr.mxu0 0.0
  %4930 = vmatpush1.msra.mxu0 %v4914
  %4931 = vmatprep.subr.mxu0 0.0
  %4932 = vmatpush1.msra.mxu0 0.0
  %4933 = vmatprep.subr.mxu0 0.0
  %4934 = vmatpush1.msra.mxu0 0.0
  %4935 = vmatprep.subr.mxu0 0.0
  %4936 = vmatpush1.msra.mxu0 0.0
  %4937 = vmatprep.subr.mxu0 0.0
  %4938 = vmatpush1.msra.mxu0 0.0
  %4939 = vmatprep.subr.mxu0 0.0
  %4940 = vmatpush1.msra.mxu0 0.0
  %4941 = vmatprep.subr.mxu0 0.0
  %4942 = vmatpush1.msra.mxu0 0.0
  %4943 = vmatprep.subr.mxu0 0.0
  %4944 = vmatpush1.msra.mxu0 0.0
  %4945 = vmatprep.subr.mxu0 0.0
  %4946 = vmatpush1.msra.mxu0 0.0
  %4947 = vmatprep.subr.mxu0 0.0
  %4948 = vmatpush1.msra.mxu0 0.0
  %4949 = vmatprep.subr.mxu0 0.0
  %4950 = vmatpush1.msra.mxu0 0.0
  %4951 = vmatprep.subr.mxu0 0.0
  %4952 = vmatpush1.msra.mxu0 0.0
  %4953 = vmatprep.subr.mxu0 0.0
  %4954 = vmatpush1.msra.mxu0 0.0
  %4955 = vmatprep.subr.mxu0 0.0
  %4956 = vmatpush1.msra.mxu0 0.0
  %4957 = vmatprep.subr.mxu0 0.0
  %4958 = vmatpush1.msra.mxu0 0.0
  %4959 = vmatprep.subr.mxu0 0.0
  %4960 = vmatpush1.msra.mxu0 0.0
  %4961 = vmatprep.subr.mxu0 0.0
  %4962 = vmatpush1.msra.mxu0 0.0
  %4963 = vmatprep.subr.mxu0 0.0
  %4964 = vmatpush1.msra.mxu0 0.0
  %4965 = vmatprep.subr.mxu0 0.0
  %4966 = vmatpush1.msra.mxu0 0.0
  %4967 = vmatprep.subr.mxu0 0.0
  %4968 = vmatpush1.msra.mxu0 0.0
  %4969 = vmatprep.subr.mxu0 0.0
  %4970 = vmatpush1.msra.mxu0 0.0
  %4971 = vmatprep.subr.mxu0 0.0
  %4972 = vmatpush1.msra.mxu0 0.0
  %4973 = vmatprep.subr.mxu0 0.0
  %4974 = vmatpush1.msra.mxu0 0.0
  %4975 = vmatprep.subr.mxu0 0.0
  %4976 = vmatpush1.msra.mxu0 0.0
  %4977 = vmatprep.subr.mxu0 0.0
  %4978 = vmatpush1.msra.mxu0 0.0
  %4979 = vmatprep.mubr.f32.mxu0 0.0
  %4980 = vmatmul.mubr.f32.gmra.mrb[0].mxu0 %v2315
  %v4981 = vpop.f32.mrb[0].mxu0
  %v4982 = vadd.f32 0.0, %v4981
  %v4983 = vpop.f32.mrb[0].mxu0
  %4984 = vdwg.mxu0
  %v4986 = vsel %vm1506, %v4982, 0
  %4988 = vmatprep.subr.mxu0 0.0
  %4989 = vmatpush1.msra.mxu0 %v1482
  %4990 = vmatprep.subr.mxu0 0.0
  %4991 = vmatpush1.msra.mxu0 %v1483
  %4992 = vmatprep.subr.mxu0 0.0
  %4993 = vmatpush1.msra.mxu0 0.0
  %4994 = vmatprep.subr.mxu0 0.0
  %4995 = vmatpush1.msra.mxu0 0.0
  %4996 = vmatprep.subr.mxu0 0.0
  %4997 = vmatpush1.msra.mxu0 0.0
  %4998 = vmatprep.subr.mxu0 0.0
  %4999 = vmatpush1.msra.mxu0 0.0
  %5000 = vmatprep.subr.mxu0 0.0
  %5001 = vmatpush1.msra.mxu0 0.0
  %5002 = vmatprep.subr.mxu0 0.0
  %5003 = vmatpush1.msra.mxu0 0.0
  %5004 = vmatprep.subr.mxu0 0.0
  %5005 = vmatpush1.msra.mxu0 0.0
  %5006 = vmatprep.subr.mxu0 0.0
  %5007 = vmatpush1.msra.mxu0 0.0
  %5008 = vmatprep.subr.mxu0 0.0
  %5009 = vmatpush1.msra.mxu0 0.0
  %5010 = vmatprep.subr.mxu0 0.0
  %5011 = vmatpush1.msra.mxu0 0.0
  %5012 = vmatprep.subr.mxu0 0.0
  %5013 = vmatpush1.msra.mxu0 0.0
  %5014 = vmatprep.subr.mxu0 0.0
  %5015 = vmatpush1.msra.mxu0 0.0
  %5016 = vmatprep.subr.mxu0 0.0
  %5017 = vmatpush1.msra.mxu0 0.0
  %5018 = vmatprep.subr.mxu0 0.0
  %5019 = vmatpush1.msra.mxu0 0.0
  %5020 = vmatprep.subr.mxu0 0.0
  %5021 = vmatpush1.msra.mxu0 0.0
  %5022 = vmatprep.subr.mxu0 0.0
  %5023 = vmatpush1.msra.mxu0 0.0
  %5024 = vmatprep.subr.mxu0 0.0
  %5025 = vmatpush1.msra.mxu0 0.0
  %5026 = vmatprep.subr.mxu0 0.0
  %5027 = vmatpush1.msra.mxu0 0.0
  %5028 = vmatprep.subr.mxu0 0.0
  %5029 = vmatpush1.msra.mxu0 0.0
  %5030 = vmatprep.subr.mxu0 0.0
  %5031 = vmatpush1.msra.mxu0 0.0
  %5032 = vmatprep.subr.mxu0 0.0
  %5033 = vmatpush1.msra.mxu0 0.0
  %5034 = vmatprep.subr.mxu0 0.0
  %5035 = vmatpush1.msra.mxu0 0.0
  %5036 = vmatprep.subr.mxu0 0.0
  %5037 = vmatpush1.msra.mxu0 0.0
  %5038 = vmatprep.subr.mxu0 0.0
  %5039 = vmatpush1.msra.mxu0 0.0
  %5040 = vmatprep.subr.mxu0 0.0
  %5041 = vmatpush1.msra.mxu0 0.0
  %5042 = vmatprep.subr.mxu0 0.0
  %5043 = vmatpush1.msra.mxu0 0.0
  %5044 = vmatprep.subr.mxu0 0.0
  %5045 = vmatpush1.msra.mxu0 0.0
  %5046 = vmatprep.subr.mxu0 0.0
  %5047 = vmatpush1.msra.mxu0 0.0
  %5048 = vmatprep.subr.mxu0 0.0
  %5049 = vmatpush1.msra.mxu0 0.0
  %5050 = vmatprep.subr.mxu0 0.0
  %5051 = vmatpush1.msra.mxu0 0.0
  %5052 = vmatprep.mubr.f32.mxu0 0.0
  %5053 = vmatmul.mubr.f32.gmra.mrb[0].mxu0 %v4986
  %v5054 = vpop.f32.mrb[0].mxu0
  %v5055 = vadd.f32 0.0, %v5054
  %v5056 = vpop.f32.mrb[0].mxu0
  %5057 = vdwg.mxu0
  %v5058 = vadd.f32 %v4366, %v5055
  %v5059 = vadd.f32 %v5058, %v2465
  %v5060 = vsel %vm1506, %v5059, 0.0
  %5061 = vadd.xlane.f32.xlu0 %v5060
  %v5062 = vpop.xlane.xlu0 %5061
  %v5063 = vmul.f32 %v5062, %v2471
  %v5064 = vsub.f32 %v5059, %v5063
  %v5065 = vmul.f32 %v5064, %v5064
  %v5066 = vsel %vm1506, %v5065, 0.0
  %5067 = vadd.xlane.f32.xlu0 %v5066
  %v5068 = vpop.xlane.xlu0 %5067
  %v5069 = vmul.f32 %v5068, %v2471
  %v5070 = vadd.f32 %v5069, 1e-05
  %v5071 = vrsqrt.pop %v5070
  %v5072 = vmul.f32 %v5064, %v5071
  %v5073 = vmul.f32 %v5072, %v2486
  %v5074 = vadd.f32 %v5073, %v2493
  %v5076 = vsel %vm1506, %v5074, 0
  %5078 = vmatprep.subr.mxu0 0.0
  %5079 = vmatpush1.msra.mxu0 %v1485
  %5080 = vmatprep.subr.mxu0 0.0
  %5081 = vmatpush1.msra.mxu0 %v1486
  %5082 = vmatprep.subr.mxu0 0.0
  %5083 = vmatpush1.msra.mxu0 0.0
  %5084 = vmatprep.subr.mxu0 0.0
  %5085 = vmatpush1.msra.mxu0 0.0
  %5086 = vmatprep.subr.mxu0 0.0
  %5087 = vmatpush1.msra.mxu0 0.0
  %5088 = vmatprep.subr.mxu0 0.0
  %5089 = vmatpush1.msra.mxu0 0.0
  %5090 = vmatprep.subr.mxu0 0.0
  %5091 = vmatpush1.msra.mxu0 0.0
  %5092 = vmatprep.subr.mxu0 0.0
  %5093 = vmatpush1.msra.mxu0 0.0
  %5094 = vmatprep.subr.mxu0 0.0
  %5095 = vmatpush1.msra.mxu0 0.0
  %5096 = vmatprep.subr.mxu0 0.0
  %5097 = vmatpush1.msra.mxu0 0.0
  %5098 = vmatprep.subr.mxu0 0.0
  %5099 = vmatpush1.msra.mxu0 0.0
  %5100 = vmatprep.subr.mxu0 0.0
  %5101 = vmatpush1.msra.mxu0 0.0
  %5102 = vmatprep.subr.mxu0 0.0
  %5103 = vmatpush1.msra.mxu0 0.0
  %5104 = vmatprep.subr.mxu0 0.0
  %5105 = vmatpush1.msra.mxu0 0.0
  %5106 = vmatprep.subr.mxu0 0.0
  %5107 = vmatpush1.msra.mxu0 0.0
  %5108 = vmatprep.subr.mxu0 0.0
  %5109 = vmatpush1.msra.mxu0 0.0
  %5110 = vmatprep.subr.mxu0 0.0
  %5111 = vmatpush1.msra.mxu0 0.0
  %5112 = vmatprep.subr.mxu0 0.0
  %5113 = vmatpush1.msra.mxu0 0.0
  %5114 = vmatprep.subr.mxu0 0.0
  %5115 = vmatpush1.msra.mxu0 0.0
  %5116 = vmatprep.subr.mxu0 0.0
  %5117 = vmatpush1.msra.mxu0 0.0
  %5118 = vmatprep.subr.mxu0 0.0
  %5119 = vmatpush1.msra.mxu0 0.0
  %5120 = vmatprep.subr.mxu0 0.0
  %5121 = vmatpush1.msra.mxu0 0.0
  %5122 = vmatprep.subr.mxu0 0.0
  %5123 = vmatpush1.msra.mxu0 0.0
  %5124 = vmatprep.subr.mxu0 0.0
  %5125 = vmatpush1.msra.mxu0 0.0
  %5126 = vmatprep.subr.mxu0 0.0
  %5127 = vmatpush1.msra.mxu0 0.0
  %5128 = vmatprep.subr.mxu0 0.0
  %5129 = vmatpush1.msra.mxu0 0.0
  %5130 = vmatprep.subr.mxu0 0.0
  %5131 = vmatpush1.msra.mxu0 0.0
  %5132 = vmatprep.subr.mxu0 0.0
  %5133 = vmatpush1.msra.mxu0 0.0
  %5134 = vmatprep.subr.mxu0 0.0
  %5135 = vmatpush1.msra.mxu0 0.0
  %5136 = vmatprep.subr.mxu0 0.0
  %5137 = vmatpush1.msra.mxu0 0.0
  %5138 = vmatprep.subr.mxu0 0.0
  %5139 = vmatpush1.msra.mxu0 0.0
  %5140 = vmatprep.subr.mxu0 0.0
  %5141 = vmatpush1.msra.mxu0 0.0
  %5142 = vmatprep.mubr.f32.mxu0 0.0
  %5143 = vmatmul.mubr.f32.gmra.mrb[0].mxu0 %v5076
  %v5144 = vpop.f32.mrb[0].mxu0
  %v5145 = vadd.f32 %v2500, %v5144
  %v5146 = vpop.f32.mrb[0].mxu0
  %5147 = vdwg.mxu0
  %v5148 = vmax.f32 %v5145, 0.0
  %v5150 = vsel %vm2576, %v5148, 0
  %5152 = vmatprep.subr.mxu0 0.0
  %5153 = vmatpush1.msra.mxu0 %v2582
  %5154 = vmatprep.subr.mxu0 0.0
  %5155 = vmatpush1.msra.mxu0 0.0
  %5156 = vmatprep.subr.mxu0 0.0
  %5157 = vmatpush1.msra.mxu0 0.0
  %5158 = vmatprep.subr.mxu0 0.0
  %5159 = vmatpush1.msra.mxu0 0.0
  %5160 = vmatprep.subr.mxu0 0.0
  %5161 = vmatpush1.msra.mxu0 0.0
  %5162 = vmatprep.subr.mxu0 0.0
  %5163 = vmatpush1.msra.mxu0 0.0
  %5164 = vmatprep.subr.mxu0 0.0
  %5165 = vmatpush1.msra.mxu0 0.0
  %5166 = vmatprep.subr.mxu0 0.0
  %5167 = vmatpush1.msra.mxu0 0.0
  %5168 = vmatprep.subr.mxu0 0.0
  %5169 = vmatpush1.msra.mxu0 0.0
  %5170 = vmatprep.subr.mxu0 0.0
  %5171 = vmatpush1.msra.mxu0 0.0
  %5172 = vmatprep.subr.mxu0 0.0
  %5173 = vmatpush1.msra.mxu0 0.0
  %5174 = vmatprep.subr.mxu0 0.0
  %5175 = vmatpush1.msra.mxu0 0.0
  %5176 = vmatprep.subr.mxu0 0.0
  %5177 = vmatpush1.msra.mxu0 0.0
  %5178 = vmatprep.subr.mxu0 0.0
  %5179 = vmatpush1.msra.mxu0 0.0
  %5180 = vmatprep.subr.mxu0 0.0
  %5181 = vmatpush1.msra.mxu0 0.0
  %5182 = vmatprep.subr.mxu0 0.0
  %5183 = vmatpush1.msra.mxu0 0.0
  %5184 = vmatprep.subr.mxu0 0.0
  %5185 = vmatpush1.msra.mxu0 0.0
  %5186 = vmatprep.subr.mxu0 0.0
  %5187 = vmatpush1.msra.mxu0 0.0
  %5188 = vmatprep.subr.mxu0 0.0
  %5189 = vmatpush1.msra.mxu0 0.0
  %5190 = vmatprep.subr.mxu0 0.0
  %5191 = vmatpush1.msra.mxu0 0.0
  %5192 = vmatprep.subr.mxu0 0.0
  %5193 = vmatpush1.msra.mxu0 0.0
  %5194 = vmatprep.subr.mxu0 0.0
  %5195 = vmatpush1.msra.mxu0 0.0
  %5196 = vmatprep.subr.mxu0 0.0
  %5197 = vmatpush1.msra.mxu0 0.0
  %5198 = vmatprep.subr.mxu0 0.0
  %5199 = vmatpush1.msra.mxu0 0.0
  %5200 = vmatprep.subr.mxu0 0.0
  %5201 = vmatpush1.msra.mxu0 0.0
  %5202 = vmatprep.subr.mxu0 0.0
  %5203 = vmatpush1.msra.mxu0 0.0
  %5204 = vmatprep.subr.mxu0 0.0
  %5205 = vmatpush1.msra.mxu0 0.0
  %5206 = vmatprep.subr.mxu0 0.0
  %5207 = vmatpush1.msra.mxu0 0.0
  %5208 = vmatprep.subr.mxu0 0.0
  %5209 = vmatpush1.msra.mxu0 0.0
  %5210 = vmatprep.subr.mxu0 0.0
  %5211 = vmatpush1.msra.mxu0 0.0
  %5212 = vmatprep.subr.mxu0 0.0
  %5213 = vmatpush1.msra.mxu0 0.0
  %5214 = vmatprep.subr.mxu0 0.0
  %5215 = vmatpush1.msra.mxu0 0.0
  %5216 = vmatprep.mubr.f32.mxu0 0.0
  %5217 = vmatmul.mubr.f32.gmra.mrb[0].mxu0 %v5150
  %v5218 = vpop.f32.mrb[0].mxu0
  %v5219 = vadd.f32 0.0, %v5218
  %v5220 = vpop.f32.mrb[0].mxu0
  %5221 = vdwg.mxu0
  %v5222 = vadd.f32 %v5074, %v5219
  %v5223 = vadd.f32 %v5222, %v2659
  %v5224 = vsel %vm1506, %v5223, 0.0
  %5225 = vadd.xlane.f32.xlu0 %v5224
  %v5226 = vpop.xlane.xlu0 %5225
  %v5227 = vmul.f32 %v5226, %v2471
  %v5228 = vsub.f32 %v5223, %v5227
  %v5229 = vmul.f32 %v5228, %v5228
  %v5230 = vsel %vm1506, %v5229, 0.0
  %5231 = vadd.xlane.f32.xlu0 %v5230
  %v5232 = vpop.xlane.xlu0 %5231
  %v5233 = vmul.f32 %v5232, %v2471
  %v5234 = vadd.f32 %v5233, 1e-05
  %v5235 = vrsqrt.pop %v5234
  %v5236 = vmul.f32 %v5228, %v5235
  %v5237 = vmul.f32 %v5236, %v2679
  %v5238 = vadd.f32 %v5237, %v2686
  %v5239 = vld [vmem:[%s19] sm:$0xff]
  %v5240 = vld [vmem:[%s19 + $0x8] sm:$0xff]
  %v5241 = vld [vmem:[%s19 + $0x10] sm:$0xff]
  %v5242 = vld [vmem:[%s19 + $0x18] sm:$0xff]
  %v5243 = vld [vmem:[%s21] sm:$0xff]
  %v5244 = vld [vmem:[%s21 + $0x8] sm:$0xff]
  %v5245 = vld [vmem:[%s21 + $0x10] sm:$0xff]
  %v5246 = vld [vmem:[%s21 + $0x18] sm:$0xff]
  %v5248 = vsel %vm1588, %v5239, 0
  %v5251 = vsel %vm1588, %v5240, 0
  %v5254 = vsel %vm1588, %v5241, 0
  %v5257 = vsel %vm1588, %v5242, 0
  %5259 = vmatprep.subr.mxu0 0.0
  %5260 = vmatpush1.msra.mxu0 %v5238
  %5261 = vmatprep.subr.mxu0 0.0
  %5262 = vmatpush1.msra.mxu0 0.0
  %5263 = vmatprep.subr.mxu0 0.0
  %5264 = vmatpush1.msra.mxu0 0.0
  %5265 = vmatprep.subr.mxu0 0.0
  %5266 = vmatpush1.msra.mxu0 0.0
  %5267 = vmatprep.subr.mxu0 0.0
  %5268 = vmatpush1.msra.mxu0 0.0
  %5269 = vmatprep.subr.mxu0 0.0
  %5270 = vmatpush1.msra.mxu0 0.0
  %5271 = vmatprep.subr.mxu0 0.0
  %5272 = vmatpush1.msra.mxu0 0.0
  %5273 = vmatprep.subr.mxu0 0.0
  %5274 = vmatpush1.msra.mxu0 0.0
  %5275 = vmatprep.subr.mxu0 0.0
  %5276 = vmatpush1.msra.mxu0 0.0
  %5277 = vmatprep.subr.mxu0 0.0
  %5278 = vmatpush1.msra.mxu0 0.0
  %5279 = vmatprep.subr.mxu0 0.0
  %5280 = vmatpush1.msra.mxu0 0.0
  %5281 = vmatprep.subr.mxu0 0.0
  %5282 = vmatpush1.msra.mxu0 0.0
  %5283 = vmatprep.subr.mxu0 0.0
  %5284 = vmatpush1.msra.mxu0 0.0
  %5285 = vmatprep.subr.mxu0 0.0
  %5286 = vmatpush1.msra.mxu0 0.0
  %5287 = vmatprep.subr.mxu0 0.0
  %5288 = vmatpush1.msra.mxu0 0.0
  %5289 = vmatprep.subr.mxu0 0.0
  %5290 = vmatpush1.msra.mxu0 0.0
  %5291 = vmatprep.subr.mxu0 0.0
  %5292 = vmatpush1.msra.mxu0 0.0
  %5293 = vmatprep.subr.mxu0 0.0
  %5294 = vmatpush1.msra.mxu0 0.0
  %5295 = vmatprep.subr.mxu0 0.0
  %5296 = vmatpush1.msra.mxu0 0.0
  %5297 = vmatprep.subr.mxu0 0.0
  %5298 = vmatpush1.msra.mxu0 0.0
  %5299 = vmatprep.subr.mxu0 0.0
  %5300 = vmatpush1.msra.mxu0 0.0
  %5301 = vmatprep.subr.mxu0 0.0
  %5302 = vmatpush1.msra.mxu0 0.0
  %5303 = vmatprep.subr.mxu0 0.0
  %5304 = vmatpush1.msra.mxu0 0.0
  %5305 = vmatprep.subr.mxu0 0.0
  %5306 = vmatpush1.msra.mxu0 0.0
  %5307 = vmatprep.subr.mxu0 0.0
  %5308 = vmatpush1.msra.mxu0 0.0
  %5309 = vmatprep.subr.mxu0 0.0
  %5310 = vmatpush1.msra.mxu0 0.0
  %5311 = vmatprep.subr.mxu0 0.0
  %5312 = vmatpush1.msra.mxu0 0.0
  %5313 = vmatprep.subr.mxu0 0.0
  %5314 = vmatpush1.msra.mxu0 0.0
  %5315 = vmatprep.subr.mxu0 0.0
  %5316 = vmatpush1.msra.mxu0 0.0
  %5317 = vmatprep.subr.mxu0 0.0
  %5318 = vmatpush1.msra.mxu0 0.0
  %5319 = vmatprep.subr.mxu0 0.0
  %5320 = vmatpush1.msra.mxu0 0.0
  %5321 = vmatprep.subr.mxu0 0.0
  %5322 = vmatpush1.msra.mxu0 0.0
  %5323 = vmatprep.mubr.f32.mxu0 0.0
  %5324 = vmatmul.mubr.f32.gmra.mrb[0].mxu0 %v5248
  %v5325 = vpop.f32.mrb[0].mxu0
  %v5326 = vadd.f32 0.0, %v5325
  %v5327 = vpop.f32.mrb[0].mxu0
  %5328 = vmatprep.mubr.f32.mxu0 0.0
  %5329 = vmatmul.mubr.f32.gmra.mrb[0].mxu0 %v5251
  %v5330 = vpop.f32.mrb[0].mxu0
  %v5331 = vadd.f32 0.0, %v5330
  %v5332 = vpop.f32.mrb[0].mxu0
  %5333 = vmatprep.mubr.f32.mxu0 0.0
  %5334 = vmatmul.mubr.f32.gmra.mrb[0].mxu0 %v5254
  %v5335 = vpop.f32.mrb[0].mxu0
  %v5336 = vadd.f32 0.0, %v5335
  %v5337 = vpop.f32.mrb[0].mxu0
  %5338 = vmatprep.mubr.f32.mxu0 0.0
  %5339 = vmatmul.mubr.f32.gmra.mrb[0].mxu0 %v5257
  %v5340 = vpop.f32.mrb[0].mxu0
  %v5341 = vadd.f32 0.0, %v5340
  %v5342 = vpop.f32.mrb[0].mxu0
  %5343 = vdwg.mxu0
  %v5345 = vsel %vm1506, %v5336, 0
  %v5348 = vsel %vm1506, %v5341, 0
  %5350 = vmatprep.subr.mxu0 0.0
  %5351 = vmatpush1.msra.mxu0 %v5245
  %5352 = vmatprep.subr.mxu0 0.0
  %5353 = vmatpush1.msra.mxu0 %v5246
  %5354 = vmatprep.subr.mxu0 0.0
  %5355 = vmatpush1.msra.mxu0 0.0
  %5356 = vmatprep.subr.mxu0 0.0
  %5357 = vmatpush1.msra.mxu0 0.0
  %5358 = vmatprep.subr.mxu0 0.0
  %5359 = vmatpush1.msra.mxu0 0.0
  %5360 = vmatprep.subr.mxu0 0.0
  %5361 = vmatpush1.msra.mxu0 0.0
  %5362 = vmatprep.subr.mxu0 0.0
  %5363 = vmatpush1.msra.mxu0 0.0
  %5364 = vmatprep.subr.mxu0 0.0
  %5365 = vmatpush1.msra.mxu0 0.0
  %5366 = vmatprep.subr.mxu0 0.0
  %5367 = vmatpush1.msra.mxu0 0.0
  %5368 = vmatprep.subr.mxu0 0.0
  %5369 = vmatpush1.msra.mxu0 0.0
  %5370 = vmatprep.subr.mxu0 0.0
  %5371 = vmatpush1.msra.mxu0 0.0
  %5372 = vmatprep.subr.mxu0 0.0
  %5373 = vmatpush1.msra.mxu0 0.0
  %5374 = vmatprep.subr.mxu0 0.0
  %5375 = vmatpush1.msra.mxu0 0.0
  %5376 = vmatprep.subr.mxu0 0.0
  %5377 = vmatpush1.msra.mxu0 0.0
  %5378 = vmatprep.subr.mxu0 0.0
  %5379 = vmatpush1.msra.mxu0 0.0
  %5380 = vmatprep.subr.mxu0 0.0
  %5381 = vmatpush1.msra.mxu0 0.0
  %5382 = vmatprep.subr.mxu0 0.0
  %5383 = vmatpush1.msra.mxu0 0.0
  %5384 = vmatprep.subr.mxu0 0.0
  %5385 = vmatpush1.msra.mxu0 0.0
  %5386 = vmatprep.subr.mxu0 0.0
  %5387 = vmatpush1.msra.mxu0 0.0
  %5388 = vmatprep.subr.mxu0 0.0
  %5389 = vmatpush1.msra.mxu0 0.0
  %5390 = vmatprep.subr.mxu0 0.0
  %5391 = vmatpush1.msra.mxu0 0.0
  %5392 = vmatprep.subr.mxu0 0.0
  %5393 = vmatpush1.msra.mxu0 0.0
  %5394 = vmatprep.subr.mxu0 0.0
  %5395 = vmatpush1.msra.mxu0 0.0
  %5396 = vmatprep.subr.mxu0 0.0
  %5397 = vmatpush1.msra.mxu0 0.0
  %5398 = vmatprep.subr.mxu0 0.0
  %5399 = vmatpush1.msra.mxu0 0.0
  %5400 = vmatprep.subr.mxu0 0.0
  %5401 = vmatpush1.msra.mxu0 0.0
  %5402 = vmatprep.subr.mxu0 0.0
  %5403 = vmatpush1.msra.mxu0 0.0
  %5404 = vmatprep.subr.mxu0 0.0
  %5405 = vmatpush1.msra.mxu0 0.0
  %5406 = vmatprep.subr.mxu0 0.0
  %5407 = vmatpush1.msra.mxu0 0.0
  %5408 = vmatprep.subr.mxu0 0.0
  %5409 = vmatpush1.msra.mxu0 0.0
  %5410 = vmatprep.subr.mxu0 0.0
  %5411 = vmatpush1.msra.mxu0 0.0
  %5412 = vmatprep.subr.mxu0 0.0
  %5413 = vmatpush1.msra.mxu0 0.0
  %5414 = vmatprep.mubr.f32.mxu0 0.0
  %5415 = vmatmul.mubr.f32.gmra.mrb[0].mxu0 %v5345
  %v5416 = vpop.f32.mrb[0].mxu0
  %v5417 = vadd.f32 0.0, %v5416
  %v5418 = vpop.f32.mrb[0].mxu0
  %5419 = vmatprep.mubr.f32.mxu0 0.0
  %5420 = vmatmul.mubr.f32.gmra.mrb[0].mxu0 %v5348
  %v5421 = vpop.f32.mrb[0].mxu0
  %v5422 = vadd.f32 0.0, %v5421
  %v5423 = vpop.f32.mrb[0].mxu0
  %5424 = vdwg.mxu0
  %v5426 = vsel %vm1506, %v5326, 0
  %v5429 = vsel %vm1506, %v5331, 0
  %5431 = vmatprep.subr.mxu0 0.0
  %5432 = vmatpush1.msra.mxu0 %v5243
  %5433 = vmatprep.subr.mxu0 0.0
  %5434 = vmatpush1.msra.mxu0 %v5244
  %5435 = vmatprep.subr.mxu0 0.0
  %5436 = vmatpush1.msra.mxu0 0.0
  %5437 = vmatprep.subr.mxu0 0.0
  %5438 = vmatpush1.msra.mxu0 0.0
  %5439 = vmatprep.subr.mxu0 0.0
  %5440 = vmatpush1.msra.mxu0 0.0
  %5441 = vmatprep.subr.mxu0 0.0
  %5442 = vmatpush1.msra.mxu0 0.0
  %5443 = vmatprep.subr.mxu0 0.0
  %5444 = vmatpush1.msra.mxu0 0.0
  %5445 = vmatprep.subr.mxu0 0.0
  %5446 = vmatpush1.msra.mxu0 0.0
  %5447 = vmatprep.subr.mxu0 0.0
  %5448 = vmatpush1.msra.mxu0 0.0
  %5449 = vmatprep.subr.mxu0 0.0
  %5450 = vmatpush1.msra.mxu0 0.0
  %5451 = vmatprep.subr.mxu0 0.0
  %5452 = vmatpush1.msra.mxu0 0.0
  %5453 = vmatprep.subr.mxu0 0.0
  %5454 = vmatpush1.msra.mxu0 0.0
  %5455 = vmatprep.subr.mxu0 0.0
  %5456 = vmatpush1.msra.mxu0 0.0
  %5457 = vmatprep.subr.mxu0 0.0
  %5458 = vmatpush1.msra.mxu0 0.0
  %5459 = vmatprep.subr.mxu0 0.0
  %5460 = vmatpush1.msra.mxu0 0.0
  %5461 = vmatprep.subr.mxu0 0.0
  %5462 = vmatpush1.msra.mxu0 0.0
  %5463 = vmatprep.subr.mxu0 0.0
  %5464 = vmatpush1.msra.mxu0 0.0
  %5465 = vmatprep.subr.mxu0 0.0
  %5466 = vmatpush1.msra.mxu0 0.0
  %5467 = vmatprep.subr.mxu0 0.0
  %5468 = vmatpush1.msra.mxu0 0.0
  %5469 = vmatprep.subr.mxu0 0.0
  %5470 = vmatpush1.msra.mxu0 0.0
  %5471 = vmatprep.subr.mxu0 0.0
  %5472 = vmatpush1.msra.mxu0 0.0
  %5473 = vmatprep.subr.mxu0 0.0
  %5474 = vmatpush1.msra.mxu0 0.0
  %5475 = vmatprep.subr.mxu0 0.0
  %5476 = vmatpush1.msra.mxu0 0.0
  %5477 = vmatprep.subr.mxu0 0.0
  %5478 = vmatpush1.msra.mxu0 0.0
  %5479 = vmatprep.subr.mxu0 0.0
  %5480 = vmatpush1.msra.mxu0 0.0
  %5481 = vmatprep.subr.mxu0 0.0
  %5482 = vmatpush1.msra.mxu0 0.0
  %5483 = vmatprep.subr.mxu0 0.0
  %5484 = vmatpush1.msra.mxu0 0.0
  %5485 = vmatprep.subr.mxu0 0.0
  %5486 = vmatpush1.msra.mxu0 0.0
  %5487 = vmatprep.subr.mxu0 0.0
  %5488 = vmatpush1.msra.mxu0 0.0
  %5489 = vmatprep.subr.mxu0 0.0
  %5490 = vmatpush1.msra.mxu0 0.0
  %5491 = vmatprep.subr.mxu0 0.0
  %5492 = vmatpush1.msra.mxu0 0.0
  %5493 = vmatprep.subr.mxu0 0.0
  %5494 = vmatpush1.msra.mxu0 0.0
  %5495 = vmatprep.mubr.f32.mxu0 0.0
  %5496 = vmatmul.mubr.f32.gmra.mrb[0].mxu0 %v5426
  %v5497 = vpop.f32.mrb[0].mxu0
  %v5498 = vadd.f32 %v5417, %v5497
  %v5499 = vpop.f32.mrb[0].mxu0
  %5500 = vmatprep.mubr.f32.mxu0 0.0
  %5501 = vmatmul.mubr.f32.gmra.mrb[0].mxu0 %v5429
  %v5502 = vpop.f32.mrb[0].mxu0
  %v5503 = vadd.f32 %v5422, %v5502
  %v5504 = vpop.f32.mrb[0].mxu0
  %5505 = vdwg.mxu0
  %v5506 = vld [vmem:[%s55] sm:$0xff]
  %v5507 = vld [vmem:[%s55 + $0x8] sm:$0xff]
  %v5508 = vld [vmem:[%s55 + $0x10] sm:$0xff]
  %v5509 = vld [vmem:[%s55 + $0x18] sm:$0xff]
  %v5510 = vld [vmem:[%s55 + $0x20] sm:$0xff]
  %v5511 = vld [vmem:[%s55 + $0x28] sm:$0xff]
  %v5512 = vld [vmem:[%s55 + $0x30] sm:$0xff]
  %v5513 = vld [vmem:[%s55 + $0x38] sm:$0xff]
  %v5514 = vld [vmem:[%s55 + $0x40] sm:$0xff]
  %v5515 = vld [vmem:[%s55 + $0x48] sm:$0xff]
  %v5516 = vld [vmem:[%s55 + $0x50] sm:$0xff]
  %v5517 = vld [vmem:[%s55 + $0x58] sm:$0xff]
  %v5518 = vld [vmem:[%s55 + $0x60] sm:$0xff]
  %v5519 = vld [vmem:[%s55 + $0x68] sm:$0xff]
  %v5520 = vld [vmem:[%s55 + $0x70] sm:$0xff]
  %v5521 = vld [vmem:[%s55 + $0x78] sm:$0xff]
  %v5522 = vld [vmem:[%s55 + $0x80] sm:$0xff]
  %v5523 = vld [vmem:[%s55 + $0x88] sm:$0xff]
  %v5524 = vld [vmem:[%s55 + $0x90] sm:$0xff]
  %v5525 = vld [vmem:[%s55 + $0x98] sm:$0xff]
  %v5526 = vld [vmem:[%s55 + $0xa0] sm:$0xff]
  %v5527 = vld [vmem:[%s55 + $0xa8] sm:$0xff]
  %v5528 = vld [vmem:[%s55 + $0xb0] sm:$0xff]
  %v5529 = vld [vmem:[%s55 + $0xb8] sm:$0xff]
  %v5530 = vld [vmem:[%s57] sm:$0xff]
  %v5531 = vld [vmem:[%s57 + $0x8] sm:$0xff]
  %v5532 = vld [vmem:[%s57 + $0x10] sm:$0xff]
  %v5536 = vlaneseq
  %v5537 = vshrl.u32 %v5536, 7
  %v5538 = vsub.s32 0, %v5537
  %v5539 = vrot.slane %v5530, %v5538
  %v5540 = vlaneseq
  %v5541 = vshrl.u32 %v5540, 7
  %v5542 = vsub.s32 1, %v5541
  %v5543 = vrot.slane %v5530, %v5542
  %v5544 = vlaneseq
  %v5545 = vshrl.u32 %v5544, 7
  %v5546 = vsub.s32 2, %v5545
  %v5547 = vrot.slane %v5530, %v5546
  %v5548 = vlaneseq
  %v5549 = vshrl.u32 %v5548, 7
  %v5550 = vsub.s32 3, %v5549
  %v5551 = vrot.slane %v5530, %v5550
  %v5552 = vlaneseq
  %v5553 = vshrl.u32 %v5552, 7
  %v5554 = vsub.s32 4, %v5553
  %v5555 = vrot.slane %v5530, %v5554
  %v5556 = vlaneseq
  %v5557 = vshrl.u32 %v5556, 7
  %v5558 = vsub.s32 5, %v5557
  %v5559 = vrot.slane %v5530, %v5558
  %v5560 = vlaneseq
  %v5561 = vshrl.u32 %v5560, 7
  %v5562 = vsub.s32 6, %v5561
  %v5563 = vrot.slane %v5530, %v5562
  %v5564 = vlaneseq
  %v5565 = vshrl.u32 %v5564, 7
  %v5566 = vsub.s32 7, %v5565
  %v5567 = vrot.slane %v5530, %v5566
  %v5568 = vlaneseq
  %v5569 = vshrl.u32 %v5568, 7
  %v5570 = vsub.s32 0, %v5569
  %v5571 = vrot.slane %v5531, %v5570
  %v5572 = vlaneseq
  %v5573 = vshrl.u32 %v5572, 7
  %v5574 = vsub.s32 1, %v5573
  %v5575 = vrot.slane %v5531, %v5574
  %v5576 = vlaneseq
  %v5577 = vshrl.u32 %v5576, 7
  %v5578 = vsub.s32 2, %v5577
  %v5579 = vrot.slane %v5531, %v5578
  %v5580 = vlaneseq
  %v5581 = vshrl.u32 %v5580, 7
  %v5582 = vsub.s32 3, %v5581
  %v5583 = vrot.slane %v5531, %v5582
  %v5584 = vlaneseq
  %v5585 = vshrl.u32 %v5584, 7
  %v5586 = vsub.s32 4, %v5585
  %v5587 = vrot.slane %v5531, %v5586
  %v5588 = vlaneseq
  %v5589 = vshrl.u32 %v5588, 7
  %v5590 = vsub.s32 5, %v5589
  %v5591 = vrot.slane %v5531, %v5590
  %v5592 = vlaneseq
  %v5593 = vshrl.u32 %v5592, 7
  %v5594 = vsub.s32 6, %v5593
  %v5595 = vrot.slane %v5531, %v5594
  %v5596 = vlaneseq
  %v5597 = vshrl.u32 %v5596, 7
  %v5598 = vsub.s32 7, %v5597
  %v5599 = vrot.slane %v5531, %v5598
  %v5600 = vlaneseq
  %v5601 = vshrl.u32 %v5600, 7
  %v5602 = vsub.s32 0, %v5601
  %v5603 = vrot.slane %v5532, %v5602
  %v5604 = vlaneseq
  %v5605 = vshrl.u32 %v5604, 7
  %v5606 = vsub.s32 1, %v5605
  %v5607 = vrot.slane %v5532, %v5606
  %v5608 = vlaneseq
  %v5609 = vshrl.u32 %v5608, 7
  %v5610 = vsub.s32 2, %v5609
  %v5611 = vrot.slane %v5532, %v5610
  %v5612 = vlaneseq
  %v5613 = vshrl.u32 %v5612, 7
  %v5614 = vsub.s32 3, %v5613
  %v5615 = vrot.slane %v5532, %v5614
  %v5616 = vlaneseq
  %v5617 = vshrl.u32 %v5616, 7
  %v5618 = vsub.s32 4, %v5617
  %v5619 = vrot.slane %v5532, %v5618
  %v5620 = vlaneseq
  %v5621 = vshrl.u32 %v5620, 7
  %v5622 = vsub.s32 5, %v5621
  %v5623 = vrot.slane %v5532, %v5622
  %v5624 = vlaneseq
  %v5625 = vshrl.u32 %v5624, 7
  %v5626 = vsub.s32 6, %v5625
  %v5627 = vrot.slane %v5532, %v5626
  %v5628 = vlaneseq
  %v5629 = vshrl.u32 %v5628, 7
  %v5630 = vsub.s32 7, %v5629
  %v5631 = vrot.slane %v5532, %v5630
  %v5657 = vsel %vm1588, %v5498, 0
  %v5660 = vsel %vm1588, %v5503, 0
  %5662 = vmatprep.subr.mxu0 %v5507
  %5663 = vmatpush1.msra.mxu0 %v5506
  %5664 = vmatprep.subr.mxu0 0.0
  %5665 = vmatpush1.msra.mxu0 0.0
  %5666 = vmatprep.subr.mxu0 0.0
  %5667 = vmatpush1.msra.mxu0 0.0
  %5668 = vmatprep.subr.mxu0 0.0
  %5669 = vmatpush1.msra.mxu0 0.0
  %5670 = vmatprep.subr.mxu0 0.0
  %5671 = vmatpush1.msra.mxu0 0.0
  %5672 = vmatprep.subr.mxu0 0.0
  %5673 = vmatpush1.msra.mxu0 0.0
  %5674 = vmatprep.subr.mxu0 0.0
  %5675 = vmatpush1.msra.mxu0 0.0
  %5676 = vmatprep.subr.mxu0 0.0
  %5677 = vmatpush1.msra.mxu0 0.0
  %5678 = vmatprep.subr.mxu0 0.0
  %5679 = vmatpush1.msra.mxu0 0.0
  %5680 = vmatprep.subr.mxu0 0.0
  %5681 = vmatpush1.msra.mxu0 0.0
  %5682 = vmatprep.subr.mxu0 0.0
  %5683 = vmatpush1.msra.mxu0 0.0
  %5684 = vmatprep.subr.mxu0 0.0
  %5685 = vmatpush1.msra.mxu0 0.0
  %5686 = vmatprep.subr.mxu0 0.0
  %5687 = vmatpush1.msra.mxu0 0.0
  %5688 = vmatprep.subr.mxu0 0.0
  %5689 = vmatpush1.msra.mxu0 0.0
  %5690 = vmatprep.subr.mxu0 0.0
  %5691 = vmatpush1.msra.mxu0 0.0
  %5692 = vmatprep.subr.mxu0 0.0
  %5693 = vmatpush1.msra.mxu0 0.0
  %5694 = vmatprep.subr.mxu0 0.0
  %5695 = vmatpush1.msra.mxu0 0.0
  %5696 = vmatprep.subr.mxu0 0.0
  %5697 = vmatpush1.msra.mxu0 0.0
  %5698 = vmatprep.subr.mxu0 0.0
  %5699 = vmatpush1.msra.mxu0 0.0
  %5700 = vmatprep.subr.mxu0 0.0
  %5701 = vmatpush1.msra.mxu0 0.0
  %5702 = vmatprep.subr.mxu0 0.0
  %5703 = vmatpush1.msra.mxu0 0.0
  %5704 = vmatprep.subr.mxu0 0.0
  %5705 = vmatpush1.msra.mxu0 0.0
  %5706 = vmatprep.subr.mxu0 0.0
  %5707 = vmatpush1.msra.mxu0 0.0
  %5708 = vmatprep.subr.mxu0 0.0
  %5709 = vmatpush1.msra.mxu0 0.0
  %5710 = vmatprep.subr.mxu0 0.0
  %5711 = vmatpush1.msra.mxu0 0.0
  %5712 = vmatprep.subr.mxu0 0.0
  %5713 = vmatpush1.msra.mxu0 0.0
  %5714 = vmatprep.subr.mxu0 0.0
  %5715 = vmatpush1.msra.mxu0 0.0
  %5716 = vmatprep.subr.mxu0 0.0
  %5717 = vmatpush1.msra.mxu0 0.0
  %5718 = vmatprep.subr.mxu0 0.0
  %5719 = vmatpush1.msra.mxu0 0.0
  %5720 = vmatprep.subr.mxu0 0.0
  %5721 = vmatpush1.msra.mxu0 0.0
  %5722 = vmatprep.subr.mxu0 0.0
  %5723 = vmatpush1.msra.mxu0 0.0
  %5724 = vmatprep.subr.mxu0 0.0
  %5725 = vmatpush1.msra.mxu0 0.0
  %5726 = vmatprep.mubr.f32.mxu0 0.0
  %5727 = vmatmul.mubr.f32.gmra.mrb[0].mxu0 %v5657
  %v5728 = vpop.f32.mrb[0].mxu0
  %v5729 = vadd.f32 %v5539, %v5728
  %v5730 = vpop.f32.mrb[0].mxu0
  %v5731 = vadd.f32 %v5543, %v5730
  %5732 = vmatprep.mubr.f32.mxu0 0.0
  %5733 = vmatmul.mubr.f32.gmra.mrb[0].mxu0 %v5660
  %v5734 = vpop.f32.mrb[0].mxu0
  %v5735 = vadd.f32 %v5539, %v5734
  %v5736 = vpop.f32.mrb[0].mxu0
  %v5737 = vadd.f32 %v5543, %v5736
  %5738 = vdwg.mxu0
  %5739 = vmatprep.subr.mxu0 %v5509
  %5740 = vmatpush1.msra.mxu0 %v5508
  %5741 = vmatprep.subr.mxu0 0.0
  %5742 = vmatpush1.msra.mxu0 0.0
  %5743 = vmatprep.subr.mxu0 0.0
  %5744 = vmatpush1.msra.mxu0 0.0
  %5745 = vmatprep.subr.mxu0 0.0
  %5746 = vmatpush1.msra.mxu0 0.0
  %5747 = vmatprep.subr.mxu0 0.0
  %5748 = vmatpush1.msra.mxu0 0.0
  %5749 = vmatprep.subr.mxu0 0.0
  %5750 = vmatpush1.msra.mxu0 0.0
  %5751 = vmatprep.subr.mxu0 0.0
  %5752 = vmatpush1.msra.mxu0 0.0
  %5753 = vmatprep.subr.mxu0 0.0
  %5754 = vmatpush1.msra.mxu0 0.0
  %5755 = vmatprep.subr.mxu0 0.0
  %5756 = vmatpush1.msra.mxu0 0.0
  %5757 = vmatprep.subr.mxu0 0.0
  %5758 = vmatpush1.msra.mxu0 0.0
  %5759 = vmatprep.subr.mxu0 0.0
  %5760 = vmatpush1.msra.mxu0 0.0
  %5761 = vmatprep.subr.mxu0 0.0
  %5762 = vmatpush1.msra.mxu0 0.0
  %5763 = vmatprep.subr.mxu0 0.0
  %5764 = vmatpush1.msra.mxu0 0.0
  %5765 = vmatprep.subr.mxu0 0.0
  %5766 = vmatpush1.msra.mxu0 0.0
  %5767 = vmatprep.subr.mxu0 0.0
  %5768 = vmatpush1.msra.mxu0 0.0
  %5769 = vmatprep.subr.mxu0 0.0
  %5770 = vmatpush1.msra.mxu0 0.0
  %5771 = vmatprep.subr.mxu0 0.0
  %5772 = vmatpush1.msra.mxu0 0.0
  %5773 = vmatprep.subr.mxu0 0.0
  %5774 = vmatpush1.msra.mxu0 0.0
  %5775 = vmatprep.subr.mxu0 0.0
  %5776 = vmatpush1.msra.mxu0 0.0
  %5777 = vmatprep.subr.mxu0 0.0
  %5778 = vmatpush1.msra.mxu0 0.0
  %5779 = vmatprep.subr.mxu0 0.0
  %5780 = vmatpush1.msra.mxu0 0.0
  %5781 = vmatprep.subr.mxu0 0.0
  %5782 = vmatpush1.msra.mxu0 0.0
  %5783 = vmatprep.subr.mxu0 0.0
  %5784 = vmatpush1.msra.mxu0 0.0
  %5785 = vmatprep.subr.mxu0 0.0
  %5786 = vmatpush1.msra.mxu0 0.0
  %5787 = vmatprep.subr.mxu0 0.0
  %5788 = vmatpush1.msra.mxu0 0.0
  %5789 = vmatprep.subr.mxu0 0.0
  %5790 = vmatpush1.msra.mxu0 0.0
  %5791 = vmatprep.subr.mxu0 0.0
  %5792 = vmatpush1.msra.mxu0 0.0
  %5793 = vmatprep.subr.mxu0 0.0
  %5794 = vmatpush1.msra.mxu0 0.0
  %5795 = vmatprep.subr.mxu0 0.0
  %5796 = vmatpush1.msra.mxu0 0.0
  %5797 = vmatprep.subr.mxu0 0.0
  %5798 = vmatpush1.msra.mxu0 0.0
  %5799 = vmatprep.subr.mxu0 0.0
  %5800 = vmatpush1.msra.mxu0 0.0
  %5801 = vmatprep.subr.mxu0 0.0
  %5802 = vmatpush1.msra.mxu0 0.0
  %5803 = vmatprep.mubr.f32.mxu0 0.0
  %5804 = vmatmul.mubr.f32.gmra.mrb[0].mxu0 %v5657
  %v5805 = vpop.f32.mrb[0].mxu0
  %v5806 = vadd.f32 %v5547, %v5805
  %v5807 = vpop.f32.mrb[0].mxu0
  %v5808 = vadd.f32 %v5551, %v5807
  %5809 = vmatprep.mubr.f32.mxu0 0.0
  %5810 = vmatmul.mubr.f32.gmra.mrb[0].mxu0 %v5660
  %v5811 = vpop.f32.mrb[0].mxu0
  %v5812 = vadd.f32 %v5547, %v5811
  %v5813 = vpop.f32.mrb[0].mxu0
  %v5814 = vadd.f32 %v5551, %v5813
  %5815 = vdwg.mxu0
  %5816 = vmatprep.subr.mxu0 %v5511
  %5817 = vmatpush1.msra.mxu0 %v5510
  %5818 = vmatprep.subr.mxu0 0.0
  %5819 = vmatpush1.msra.mxu0 0.0
  %5820 = vmatprep.subr.mxu0 0.0
  %5821 = vmatpush1.msra.mxu0 0.0
  %5822 = vmatprep.subr.mxu0 0.0
  %5823 = vmatpush1.msra.mxu0 0.0
  %5824 = vmatprep.subr.mxu0 0.0
  %5825 = vmatpush1.msra.mxu0 0.0
  %5826 = vmatprep.subr.mxu0 0.0
  %5827 = vmatpush1.msra.mxu0 0.0
  %5828 = vmatprep.subr.mxu0 0.0
  %5829 = vmatpush1.msra.mxu0 0.0
  %5830 = vmatprep.subr.mxu0 0.0
  %5831 = vmatpush1.msra.mxu0 0.0
  %5832 = vmatprep.subr.mxu0 0.0
  %5833 = vmatpush1.msra.mxu0 0.0
  %5834 = vmatprep.subr.mxu0 0.0
  %5835 = vmatpush1.msra.mxu0 0.0
  %5836 = vmatprep.subr.mxu0 0.0
  %5837 = vmatpush1.msra.mxu0 0.0
  %5838 = vmatprep.subr.mxu0 0.0
  %5839 = vmatpush1.msra.mxu0 0.0
  %5840 = vmatprep.subr.mxu0 0.0
  %5841 = vmatpush1.msra.mxu0 0.0
  %5842 = vmatprep.subr.mxu0 0.0
  %5843 = vmatpush1.msra.mxu0 0.0
  %5844 = vmatprep.subr.mxu0 0.0
  %5845 = vmatpush1.msra.mxu0 0.0
  %5846 = vmatprep.subr.mxu0 0.0
  %5847 = vmatpush1.msra.mxu0 0.0
  %5848 = vmatprep.subr.mxu0 0.0
  %5849 = vmatpush1.msra.mxu0 0.0
  %5850 = vmatprep.subr.mxu0 0.0
  %5851 = vmatpush1.msra.mxu0 0.0
  %5852 = vmatprep.subr.mxu0 0.0
  %5853 = vmatpush1.msra.mxu0 0.0
  %5854 = vmatprep.subr.mxu0 0.0
  %5855 = vmatpush1.msra.mxu0 0.0
  %5856 = vmatprep.subr.mxu0 0.0
  %5857 = vmatpush1.msra.mxu0 0.0
  %5858 = vmatprep.subr.mxu0 0.0
  %5859 = vmatpush1.msra.mxu0 0.0
  %5860 = vmatprep.subr.mxu0 0.0
  %5861 = vmatpush1.msra.mxu0 0.0
  %5862 = vmatprep.subr.mxu0 0.0
  %5863 = vmatpush1.msra.mxu0 0.0
  %5864 = vmatprep.subr.mxu0 0.0
  %5865 = vmatpush1.msra.mxu0 0.0
  %5866 = vmatprep.subr.mxu0 0.0
  %5867 = vmatpush1.msra.mxu0 0.0
  %5868 = vmatprep.subr.mxu0 0.0
  %5869 = vmatpush1.msra.mxu0 0.0
  %5870 = vmatprep.subr.mxu0 0.0
  %5871 = vmatpush1.msra.mxu0 0.0
  %5872 = vmatprep.subr.mxu0 0.0
  %5873 = vmatpush1.msra.mxu0 0.0
  %5874 = vmatprep.subr.mxu0 0.0
  %5875 = vmatpush1.msra.mxu0 0.0
  %5876 = vmatprep.subr.mxu0 0.0
  %5877 = vmatpush1.msra.mxu0 0.0
  %5878 = vmatprep.subr.mxu0 0.0
  %5879 = vmatpush1.msra.mxu0 0.0
  %5880 = vmatprep.mubr.f32.mxu0 0.0
  %5881 = vmatmul.mubr.f32.gmra.mrb[0].mxu0 %v5657
  %v5882 = vpop.f32.mrb[0].mxu0
  %v5883 = vadd.f32 %v5555, %v5882
  %v5884 = vpop.f32.mrb[0].mxu0
  %v5885 = vadd.f32 %v5559, %v5884
  %5886 = vmatprep.mubr.f32.mxu0 0.0
  %5887 = vmatmul.mubr.f32.gmra.mrb[0].mxu0 %v5660
  %v5888 = vpop.f32.mrb[0].mxu0
  %v5889 = vadd.f32 %v5555, %v5888
  %v5890 = vpop.f32.mrb[0].mxu0
  %v5891 = vadd.f32 %v5559, %v5890
  %5892 = vdwg.mxu0
  %5893 = vmatprep.subr.mxu0 %v5513
  %5894 = vmatpush1.msra.mxu0 %v5512
  %5895 = vmatprep.subr.mxu0 0.0
  %5896 = vmatpush1.msra.mxu0 0.0
  %5897 = vmatprep.subr.mxu0 0.0
  %5898 = vmatpush1.msra.mxu0 0.0
  %5899 = vmatprep.subr.mxu0 0.0
  %5900 = vmatpush1.msra.mxu0 0.0
  %5901 = vmatprep.subr.mxu0 0.0
  %5902 = vmatpush1.msra.mxu0 0.0
  %5903 = vmatprep.subr.mxu0 0.0
  %5904 = vmatpush1.msra.mxu0 0.0
  %5905 = vmatprep.subr.mxu0 0.0
  %5906 = vmatpush1.msra.mxu0 0.0
  %5907 = vmatprep.subr.mxu0 0.0
  %5908 = vmatpush1.msra.mxu0 0.0
  %5909 = vmatprep.subr.mxu0 0.0
  %5910 = vmatpush1.msra.mxu0 0.0
  %5911 = vmatprep.subr.mxu0 0.0
  %5912 = vmatpush1.msra.mxu0 0.0
  %5913 = vmatprep.subr.mxu0 0.0
  %5914 = vmatpush1.msra.mxu0 0.0
  %5915 = vmatprep.subr.mxu0 0.0
  %5916 = vmatpush1.msra.mxu0 0.0
  %5917 = vmatprep.subr.mxu0 0.0
  %5918 = vmatpush1.msra.mxu0 0.0
  %5919 = vmatprep.subr.mxu0 0.0
  %5920 = vmatpush1.msra.mxu0 0.0
  %5921 = vmatprep.subr.mxu0 0.0
  %5922 = vmatpush1.msra.mxu0 0.0
  %5923 = vmatprep.subr.mxu0 0.0
  %5924 = vmatpush1.msra.mxu0 0.0
  %5925 = vmatprep.subr.mxu0 0.0
  %5926 = vmatpush1.msra.mxu0 0.0
  %5927 = vmatprep.subr.mxu0 0.0
  %5928 = vmatpush1.msra.mxu0 0.0
  %5929 = vmatprep.subr.mxu0 0.0
  %5930 = vmatpush1.msra.mxu0 0.0
  %5931 = vmatprep.subr.mxu0 0.0
  %5932 = vmatpush1.msra.mxu0 0.0
  %5933 = vmatprep.subr.mxu0 0.0
  %5934 = vmatpush1.msra.mxu0 0.0
  %5935 = vmatprep.subr.mxu0 0.0
  %5936 = vmatpush1.msra.mxu0 0.0
  %5937 = vmatprep.subr.mxu0 0.0
  %5938 = vmatpush1.msra.mxu0 0.0
  %5939 = vmatprep.subr.mxu0 0.0
  %5940 = vmatpush1.msra.mxu0 0.0
  %5941 = vmatprep.subr.mxu0 0.0
  %5942 = vmatpush1.msra.mxu0 0.0
  %5943 = vmatprep.subr.mxu0 0.0
  %5944 = vmatpush1.msra.mxu0 0.0
  %5945 = vmatprep.subr.mxu0 0.0
  %5946 = vmatpush1.msra.mxu0 0.0
  %5947 = vmatprep.subr.mxu0 0.0
  %5948 = vmatpush1.msra.mxu0 0.0
  %5949 = vmatprep.subr.mxu0 0.0
  %5950 = vmatpush1.msra.mxu0 0.0
  %5951 = vmatprep.subr.mxu0 0.0
  %5952 = vmatpush1.msra.mxu0 0.0
  %5953 = vmatprep.subr.mxu0 0.0
  %5954 = vmatpush1.msra.mxu0 0.0
  %5955 = vmatprep.subr.mxu0 0.0
  %5956 = vmatpush1.msra.mxu0 0.0
  %5957 = vmatprep.mubr.f32.mxu0 0.0
  %5958 = vmatmul.mubr.f32.gmra.mrb[0].mxu0 %v5657
  %v5959 = vpop.f32.mrb[0].mxu0
  %v5960 = vadd.f32 %v5563, %v5959
  %v5961 = vpop.f32.mrb[0].mxu0
  %v5962 = vadd.f32 %v5567, %v5961
  %5963 = vmatprep.mubr.f32.mxu0 0.0
  %5964 = vmatmul.mubr.f32.gmra.mrb[0].mxu0 %v5660
  %v5965 = vpop.f32.mrb[0].mxu0
  %v5966 = vadd.f32 %v5563, %v5965
  %v5967 = vpop.f32.mrb[0].mxu0
  %v5968 = vadd.f32 %v5567, %v5967
  %5969 = vdwg.mxu0
  %5970 = vmatprep.subr.mxu0 %v5515
  %5971 = vmatpush1.msra.mxu0 %v5514
  %5972 = vmatprep.subr.mxu0 0.0
  %5973 = vmatpush1.msra.mxu0 0.0
  %5974 = vmatprep.subr.mxu0 0.0
  %5975 = vmatpush1.msra.mxu0 0.0
  %5976 = vmatprep.subr.mxu0 0.0
  %5977 = vmatpush1.msra.mxu0 0.0
  %5978 = vmatprep.subr.mxu0 0.0
  %5979 = vmatpush1.msra.mxu0 0.0
  %5980 = vmatprep.subr.mxu0 0.0
  %5981 = vmatpush1.msra.mxu0 0.0
  %5982 = vmatprep.subr.mxu0 0.0
  %5983 = vmatpush1.msra.mxu0 0.0
  %5984 = vmatprep.subr.mxu0 0.0
  %5985 = vmatpush1.msra.mxu0 0.0
  %5986 = vmatprep.subr.mxu0 0.0
  %5987 = vmatpush1.msra.mxu0 0.0
  %5988 = vmatprep.subr.mxu0 0.0
  %5989 = vmatpush1.msra.mxu0 0.0
  %5990 = vmatprep.subr.mxu0 0.0
  %5991 = vmatpush1.msra.mxu0 0.0
  %5992 = vmatprep.subr.mxu0 0.0
  %5993 = vmatpush1.msra.mxu0 0.0
  %5994 = vmatprep.subr.mxu0 0.0
  %5995 = vmatpush1.msra.mxu0 0.0
  %5996 = vmatprep.subr.mxu0 0.0
  %5997 = vmatpush1.msra.mxu0 0.0
  %5998 = vmatprep.subr.mxu0 0.0
  %5999 = vmatpush1.msra.mxu0 0.0
  %6000 = vmatprep.subr.mxu0 0.0
  %6001 = vmatpush1.msra.mxu0 0.0
  %6002 = vmatprep.subr.mxu0 0.0
  %6003 = vmatpush1.msra.mxu0 0.0
  %6004 = vmatprep.subr.mxu0 0.0
  %6005 = vmatpush1.msra.mxu0 0.0
  %6006 = vmatprep.subr.mxu0 0.0
  %6007 = vmatpush1.msra.mxu0 0.0
  %6008 = vmatprep.subr.mxu0 0.0
  %6009 = vmatpush1.msra.mxu0 0.0
  %6010 = vmatprep.subr.mxu0 0.0
  %6011 = vmatpush1.msra.mxu0 0.0
  %6012 = vmatprep.subr.mxu0 0.0
  %6013 = vmatpush1.msra.mxu0 0.0
  %6014 = vmatprep.subr.mxu0 0.0
  %6015 = vmatpush1.msra.mxu0 0.0
  %6016 = vmatprep.subr.mxu0 0.0
  %6017 = vmatpush1.msra.mxu0 0.0
  %6018 = vmatprep.subr.mxu0 0.0
  %6019 = vmatpush1.msra.mxu0 0.0
  %6020 = vmatprep.subr.mxu0 0.0
  %6021 = vmatpush1.msra.mxu0 0.0
  %6022 = vmatprep.subr.mxu0 0.0
  %6023 = vmatpush1.msra.mxu0 0.0
  %6024 = vmatprep.subr.mxu0 0.0
  %6025 = vmatpush1.msra.mxu0 0.0
  %6026 = vmatprep.subr.mxu0 0.0
  %6027 = vmatpush1.msra.mxu0 0.0
  %6028 = vmatprep.subr.mxu0 0.0
  %6029 = vmatpush1.msra.mxu0 0.0
  %6030 = vmatprep.subr.mxu0 0.0
  %6031 = vmatpush1.msra.mxu0 0.0
  %6032 = vmatprep.subr.mxu0 0.0
  %6033 = vmatpush1.msra.mxu0 0.0
  %6034 = vmatprep.mubr.f32.mxu0 0.0
  %6035 = vmatmul.mubr.f32.gmra.mrb[0].mxu0 %v5657
  %v6036 = vpop.f32.mrb[0].mxu0
  %v6037 = vadd.f32 %v5571, %v6036
  %v6038 = vpop.f32.mrb[0].mxu0
  %v6039 = vadd.f32 %v5575, %v6038
  %6040 = vmatprep.mubr.f32.mxu0 0.0
  %6041 = vmatmul.mubr.f32.gmra.mrb[0].mxu0 %v5660
  %v6042 = vpop.f32.mrb[0].mxu0
  %v6043 = vadd.f32 %v5571, %v6042
  %v6044 = vpop.f32.mrb[0].mxu0
  %v6045 = vadd.f32 %v5575, %v6044
  %6046 = vdwg.mxu0
  %6047 = vmatprep.subr.mxu0 %v5517
  %6048 = vmatpush1.msra.mxu0 %v5516
  %6049 = vmatprep.subr.mxu0 0.0
  %6050 = vmatpush1.msra.mxu0 0.0
  %6051 = vmatprep.subr.mxu0 0.0
  %6052 = vmatpush1.msra.mxu0 0.0
  %6053 = vmatprep.subr.mxu0 0.0
  %6054 = vmatpush1.msra.mxu0 0.0
  %6055 = vmatprep.subr.mxu0 0.0
  %6056 = vmatpush1.msra.mxu0 0.0
  %6057 = vmatprep.subr.mxu0 0.0
  %6058 = vmatpush1.msra.mxu0 0.0
  %6059 = vmatprep.subr.mxu0 0.0
  %6060 = vmatpush1.msra.mxu0 0.0
  %6061 = vmatprep.subr.mxu0 0.0
  %6062 = vmatpush1.msra.mxu0 0.0
  %6063 = vmatprep.subr.mxu0 0.0
  %6064 = vmatpush1.msra.mxu0 0.0
  %6065 = vmatprep.subr.mxu0 0.0
  %6066 = vmatpush1.msra.mxu0 0.0
  %6067 = vmatprep.subr.mxu0 0.0
  %6068 = vmatpush1.msra.mxu0 0.0
  %6069 = vmatprep.subr.mxu0 0.0
  %6070 = vmatpush1.msra.mxu0 0.0
  %6071 = vmatprep.subr.mxu0 0.0
  %6072 = vmatpush1.msra.mxu0 0.0
  %6073 = vmatprep.subr.mxu0 0.0
  %6074 = vmatpush1.msra.mxu0 0.0
  %6075 = vmatprep.subr.mxu0 0.0
  %6076 = vmatpush1.msra.mxu0 0.0
  %6077 = vmatprep.subr.mxu0 0.0
  %6078 = vmatpush1.msra.mxu0 0.0
  %6079 = vmatprep.subr.mxu0 0.0
  %6080 = vmatpush1.msra.mxu0 0.0
  %6081 = vmatprep.subr.mxu0 0.0
  %6082 = vmatpush1.msra.mxu0 0.0
  %6083 = vmatprep.subr.mxu0 0.0
  %6084 = vmatpush1.msra.mxu0 0.0
  %6085 = vmatprep.subr.mxu0 0.0
  %6086 = vmatpush1.msra.mxu0 0.0
  %6087 = vmatprep.subr.mxu0 0.0
  %6088 = vmatpush1.msra.mxu0 0.0
  %6089 = vmatprep.subr.mxu0 0.0
  %6090 = vmatpush1.msra.mxu0 0.0
  %6091 = vmatprep.subr.mxu0 0.0
  %6092 = vmatpush1.msra.mxu0 0.0
  %6093 = vmatprep.subr.mxu0 0.0
  %6094 = vmatpush1.msra.mxu0 0.0
  %6095 = vmatprep.subr.mxu0 0.0
  %6096 = vmatpush1.msra.mxu0 0.0
  %6097 = vmatprep.subr.mxu0 0.0
  %6098 = vmatpush1.msra.mxu0 0.0
  %6099 = vmatprep.subr.mxu0 0.0
  %6100 = vmatpush1.msra.mxu0 0.0
  %6101 = vmatprep.subr.mxu0 0.0
  %6102 = vmatpush1.msra.mxu0 0.0
  %6103 = vmatprep.subr.mxu0 0.0
  %6104 = vmatpush1.msra.mxu0 0.0
  %6105 = vmatprep.subr.mxu0 0.0
  %6106 = vmatpush1.msra.mxu0 0.0
  %6107 = vmatprep.subr.mxu0 0.0
  %6108 = vmatpush1.msra.mxu0 0.0
  %6109 = vmatprep.subr.mxu0 0.0
  %6110 = vmatpush1.msra.mxu0 0.0
  %6111 = vmatprep.mubr.f32.mxu0 0.0
  %6112 = vmatmul.mubr.f32.gmra.mrb[0].mxu0 %v5657
  %v6113 = vpop.f32.mrb[0].mxu0
  %v6114 = vadd.f32 %v5579, %v6113
  %v6115 = vpop.f32.mrb[0].mxu0
  %v6116 = vadd.f32 %v5583, %v6115
  %6117 = vmatprep.mubr.f32.mxu0 0.0
  %6118 = vmatmul.mubr.f32.gmra.mrb[0].mxu0 %v5660
  %v6119 = vpop.f32.mrb[0].mxu0
  %v6120 = vadd.f32 %v5579, %v6119
  %v6121 = vpop.f32.mrb[0].mxu0
  %v6122 = vadd.f32 %v5583, %v6121
  %6123 = vdwg.mxu0
  %6124 = vmatprep.subr.mxu0 %v5519
  %6125 = vmatpush1.msra.mxu0 %v5518
  %6126 = vmatprep.subr.mxu0 0.0
  %6127 = vmatpush1.msra.mxu0 0.0
  %6128 = vmatprep.subr.mxu0 0.0
  %6129 = vmatpush1.msra.mxu0 0.0
  %6130 = vmatprep.subr.mxu0 0.0
  %6131 = vmatpush1.msra.mxu0 0.0
  %6132 = vmatprep.subr.mxu0 0.0
  %6133 = vmatpush1.msra.mxu0 0.0
  %6134 = vmatprep.subr.mxu0 0.0
  %6135 = vmatpush1.msra.mxu0 0.0
  %6136 = vmatprep.subr.mxu0 0.0
  %6137 = vmatpush1.msra.mxu0 0.0
  %6138 = vmatprep.subr.mxu0 0.0
  %6139 = vmatpush1.msra.mxu0 0.0
  %6140 = vmatprep.subr.mxu0 0.0
  %6141 = vmatpush1.msra.mxu0 0.0
  %6142 = vmatprep.subr.mxu0 0.0
  %6143 = vmatpush1.msra.mxu0 0.0
  %6144 = vmatprep.subr.mxu0 0.0
  %6145 = vmatpush1.msra.mxu0 0.0
  %6146 = vmatprep.subr.mxu0 0.0
  %6147 = vmatpush1.msra.mxu0 0.0
  %6148 = vmatprep.subr.mxu0 0.0
  %6149 = vmatpush1.msra.mxu0 0.0
  %6150 = vmatprep.subr.mxu0 0.0
  %6151 = vmatpush1.msra.mxu0 0.0
  %6152 = vmatprep.subr.mxu0 0.0
  %6153 = vmatpush1.msra.mxu0 0.0
  %6154 = vmatprep.subr.mxu0 0.0
  %6155 = vmatpush1.msra.mxu0 0.0
  %6156 = vmatprep.subr.mxu0 0.0
  %6157 = vmatpush1.msra.mxu0 0.0
  %6158 = vmatprep.subr.mxu0 0.0
  %6159 = vmatpush1.msra.mxu0 0.0
  %6160 = vmatprep.subr.mxu0 0.0
  %6161 = vmatpush1.msra.mxu0 0.0
  %6162 = vmatprep.subr.mxu0 0.0
  %6163 = vmatpush1.msra.mxu0 0.0
  %6164 = vmatprep.subr.mxu0 0.0
  %6165 = vmatpush1.msra.mxu0 0.0
  %6166 = vmatprep.subr.mxu0 0.0
  %6167 = vmatpush1.msra.mxu0 0.0
  %6168 = vmatprep.subr.mxu0 0.0
  %6169 = vmatpush1.msra.mxu0 0.0
  %6170 = vmatprep.subr.mxu0 0.0
  %6171 = vmatpush1.msra.mxu0 0.0
  %6172 = vmatprep.subr.mxu0 0.0
  %6173 = vmatpush1.msra.mxu0 0.0
  %6174 = vmatprep.subr.mxu0 0.0
  %6175 = vmatpush1.msra.mxu0 0.0
  %6176 = vmatprep.subr.mxu0 0.0
  %6177 = vmatpush1.msra.mxu0 0.0
  %6178 = vmatprep.subr.mxu0 0.0
  %6179 = vmatpush1.msra.mxu0 0.0
  %6180 = vmatprep.subr.mxu0 0.0
  %6181 = vmatpush1.msra.mxu0 0.0
  %6182 = vmatprep.subr.mxu0 0.0
  %6183 = vmatpush1.msra.mxu0 0.0
  %6184 = vmatprep.subr.mxu0 0.0
  %6185 = vmatpush1.msra.mxu0 0.0
  %6186 = vmatprep.subr.mxu0 0.0
  %6187 = vmatpush1.msra.mxu0 0.0
  %6188 = vmatprep.mubr.f32.mxu0 0.0
  %6189 = vmatmul.mubr.f32.gmra.mrb[0].mxu0 %v5657
  %v6190 = vpop.f32.mrb[0].mxu0
  %v6191 = vadd.f32 %v5587, %v6190
  %v6192 = vpop.f32.mrb[0].mxu0
  %v6193 = vadd.f32 %v5591, %v6192
  %6194 = vmatprep.mubr.f32.mxu0 0.0
  %6195 = vmatmul.mubr.f32.gmra.mrb[0].mxu0 %v5660
  %v6196 = vpop.f32.mrb[0].mxu0
  %v6197 = vadd.f32 %v5587, %v6196
  %v6198 = vpop.f32.mrb[0].mxu0
  %v6199 = vadd.f32 %v5591, %v6198
  %6200 = vdwg.mxu0
  %6201 = vmatprep.subr.mxu0 %v5521
  %6202 = vmatpush1.msra.mxu0 %v5520
  %6203 = vmatprep.subr.mxu0 0.0
  %6204 = vmatpush1.msra.mxu0 0.0
  %6205 = vmatprep.subr.mxu0 0.0
  %6206 = vmatpush1.msra.mxu0 0.0
  %6207 = vmatprep.subr.mxu0 0.0
  %6208 = vmatpush1.msra.mxu0 0.0
  %6209 = vmatprep.subr.mxu0 0.0
  %6210 = vmatpush1.msra.mxu0 0.0
  %6211 = vmatprep.subr.mxu0 0.0
  %6212 = vmatpush1.msra.mxu0 0.0
  %6213 = vmatprep.subr.mxu0 0.0
  %6214 = vmatpush1.msra.mxu0 0.0
  %6215 = vmatprep.subr.mxu0 0.0
  %6216 = vmatpush1.msra.mxu0 0.0
  %6217 = vmatprep.subr.mxu0 0.0
  %6218 = vmatpush1.msra.mxu0 0.0
  %6219 = vmatprep.subr.mxu0 0.0
  %6220 = vmatpush1.msra.mxu0 0.0
  %6221 = vmatprep.subr.mxu0 0.0
  %6222 = vmatpush1.msra.mxu0 0.0
  %6223 = vmatprep.subr.mxu0 0.0
  %6224 = vmatpush1.msra.mxu0 0.0
  %6225 = vmatprep.subr.mxu0 0.0
  %6226 = vmatpush1.msra.mxu0 0.0
  %6227 = vmatprep.subr.mxu0 0.0
  %6228 = vmatpush1.msra.mxu0 0.0
  %6229 = vmatprep.subr.mxu0 0.0
  %6230 = vmatpush1.msra.mxu0 0.0
  %6231 = vmatprep.subr.mxu0 0.0
  %6232 = vmatpush1.msra.mxu0 0.0
  %6233 = vmatprep.subr.mxu0 0.0
  %6234 = vmatpush1.msra.mxu0 0.0
  %6235 = vmatprep.subr.mxu0 0.0
  %6236 = vmatpush1.msra.mxu0 0.0
  %6237 = vmatprep.subr.mxu0 0.0
  %6238 = vmatpush1.msra.mxu0 0.0
  %6239 = vmatprep.subr.mxu0 0.0
  %6240 = vmatpush1.msra.mxu0 0.0
  %6241 = vmatprep.subr.mxu0 0.0
  %6242 = vmatpush1.msra.mxu0 0.0
  %6243 = vmatprep.subr.mxu0 0.0
  %6244 = vmatpush1.msra.mxu0 0.0
  %6245 = vmatprep.subr.mxu0 0.0
  %6246 = vmatpush1.msra.mxu0 0.0
  %6247 = vmatprep.subr.mxu0 0.0
  %6248 = vmatpush1.msra.mxu0 0.0
  %6249 = vmatprep.subr.mxu0 0.0
  %6250 = vmatpush1.msra.mxu0 0.0
  %6251 = vmatprep.subr.mxu0 0.0
  %6252 = vmatpush1.msra.mxu0 0.0
  %6253 = vmatprep.subr.mxu0 0.0
  %6254 = vmatpush1.msra.mxu0 0.0
  %6255 = vmatprep.subr.mxu0 0.0
  %6256 = vmatpush1.msra.mxu0 0.0
  %6257 = vmatprep.subr.mxu0 0.0
  %6258 = vmatpush1.msra.mxu0 0.0
  %6259 = vmatprep.subr.mxu0 0.0
  %6260 = vmatpush1.msra.mxu0 0.0
  %6261 = vmatprep.subr.mxu0 0.0
  %6262 = vmatpush1.msra.mxu0 0.0
  %6263 = vmatprep.subr.mxu0 0.0
  %6264 = vmatpush1.msra.mxu0 0.0
  %6265 = vmatprep.mubr.f32.mxu0 0.0
  %6266 = vmatmul.mubr.f32.gmra.mrb[0].mxu0 %v5657
  %v6267 = vpop.f32.mrb[0].mxu0
  %v6268 = vadd.f32 %v5595, %v6267
  %v6269 = vpop.f32.mrb[0].mxu0
  %v6270 = vadd.f32 %v5599, %v6269
  %6271 = vmatprep.mubr.f32.mxu0 0.0
  %6272 = vmatmul.mubr.f32.gmra.mrb[0].mxu0 %v5660
  %v6273 = vpop.f32.mrb[0].mxu0
  %v6274 = vadd.f32 %v5595, %v6273
  %v6275 = vpop.f32.mrb[0].mxu0
  %v6276 = vadd.f32 %v5599, %v6275
  %6277 = vdwg.mxu0
  %6278 = vmatprep.subr.mxu0 %v5523
  %6279 = vmatpush1.msra.mxu0 %v5522
  %6280 = vmatprep.subr.mxu0 0.0
  %6281 = vmatpush1.msra.mxu0 0.0
  %6282 = vmatprep.subr.mxu0 0.0
  %6283 = vmatpush1.msra.mxu0 0.0
  %6284 = vmatprep.subr.mxu0 0.0
  %6285 = vmatpush1.msra.mxu0 0.0
  %6286 = vmatprep.subr.mxu0 0.0
  %6287 = vmatpush1.msra.mxu0 0.0
  %6288 = vmatprep.subr.mxu0 0.0
  %6289 = vmatpush1.msra.mxu0 0.0
  %6290 = vmatprep.subr.mxu0 0.0
  %6291 = vmatpush1.msra.mxu0 0.0
  %6292 = vmatprep.subr.mxu0 0.0
  %6293 = vmatpush1.msra.mxu0 0.0
  %6294 = vmatprep.subr.mxu0 0.0
  %6295 = vmatpush1.msra.mxu0 0.0
  %6296 = vmatprep.subr.mxu0 0.0
  %6297 = vmatpush1.msra.mxu0 0.0
  %6298 = vmatprep.subr.mxu0 0.0
  %6299 = vmatpush1.msra.mxu0 0.0
  %6300 = vmatprep.subr.mxu0 0.0
  %6301 = vmatpush1.msra.mxu0 0.0
  %6302 = vmatprep.subr.mxu0 0.0
  %6303 = vmatpush1.msra.mxu0 0.0
  %6304 = vmatprep.subr.mxu0 0.0
  %6305 = vmatpush1.msra.mxu0 0.0
  %6306 = vmatprep.subr.mxu0 0.0
  %6307 = vmatpush1.msra.mxu0 0.0
  %6308 = vmatprep.subr.mxu0 0.0
  %6309 = vmatpush1.msra.mxu0 0.0
  %6310 = vmatprep.subr.mxu0 0.0
  %6311 = vmatpush1.msra.mxu0 0.0
  %6312 = vmatprep.subr.mxu0 0.0
  %6313 = vmatpush1.msra.mxu0 0.0
  %6314 = vmatprep.subr.mxu0 0.0
  %6315 = vmatpush1.msra.mxu0 0.0
  %6316 = vmatprep.subr.mxu0 0.0
  %6317 = vmatpush1.msra.mxu0 0.0
  %6318 = vmatprep.subr.mxu0 0.0
  %6319 = vmatpush1.msra.mxu0 0.0
  %6320 = vmatprep.subr.mxu0 0.0
  %6321 = vmatpush1.msra.mxu0 0.0
  %6322 = vmatprep.subr.mxu0 0.0
  %6323 = vmatpush1.msra.mxu0 0.0
  %6324 = vmatprep.subr.mxu0 0.0
  %6325 = vmatpush1.msra.mxu0 0.0
  %6326 = vmatprep.subr.mxu0 0.0
  %6327 = vmatpush1.msra.mxu0 0.0
  %6328 = vmatprep.subr.mxu0 0.0
  %6329 = vmatpush1.msra.mxu0 0.0
  %6330 = vmatprep.subr.mxu0 0.0
  %6331 = vmatpush1.msra.mxu0 0.0
  %6332 = vmatprep.subr.mxu0 0.0
  %6333 = vmatpush1.msra.mxu0 0.0
  %6334 = vmatprep.subr.mxu0 0.0
  %6335 = vmatpush1.msra.mxu0 0.0
  %6336 = vmatprep.subr.mxu0 0.0
  %6337 = vmatpush1.msra.mxu0 0.0
  %6338 = vmatprep.subr.mxu0 0.0
  %6339 = vmatpush1.msra.mxu0 0.0
  %6340 = vmatprep.subr.mxu0 0.0
  %6341 = vmatpush1.msra.mxu0 0.0
  %6342 = vmatprep.mubr.f32.mxu0 0.0
  %6343 = vmatmul.mubr.f32.gmra.mrb[0].mxu0 %v5657
  %v6344 = vpop.f32.mrb[0].mxu0
  %v6345 = vadd.f32 %v5603, %v6344
  %v6346 = vpop.f32.mrb[0].mxu0
  %v6347 = vadd.f32 %v5607, %v6346
  %6348 = vmatprep.mubr.f32.mxu0 0.0
  %6349 = vmatmul.mubr.f32.gmra.mrb[0].mxu0 %v5660
  %v6350 = vpop.f32.mrb[0].mxu0
  %v6351 = vadd.f32 %v5603, %v6350
  %v6352 = vpop.f32.mrb[0].mxu0
  %v6353 = vadd.f32 %v5607, %v6352
  %6354 = vdwg.mxu0
  %6355 = vmatprep.subr.mxu0 %v5525
  %6356 = vmatpush1.msra.mxu0 %v5524
  %6357 = vmatprep.subr.mxu0 0.0
  %6358 = vmatpush1.msra.mxu0 0.0
  %6359 = vmatprep.subr.mxu0 0.0
  %6360 = vmatpush1.msra.mxu0 0.0
  %6361 = vmatprep.subr.mxu0 0.0
  %6362 = vmatpush1.msra.mxu0 0.0
  %6363 = vmatprep.subr.mxu0 0.0
  %6364 = vmatpush1.msra.mxu0 0.0
  %6365 = vmatprep.subr.mxu0 0.0
  %6366 = vmatpush1.msra.mxu0 0.0
  %6367 = vmatprep.subr.mxu0 0.0
  %6368 = vmatpush1.msra.mxu0 0.0
  %6369 = vmatprep.subr.mxu0 0.0
  %6370 = vmatpush1.msra.mxu0 0.0
  %6371 = vmatprep.subr.mxu0 0.0
  %6372 = vmatpush1.msra.mxu0 0.0
  %6373 = vmatprep.subr.mxu0 0.0
  %6374 = vmatpush1.msra.mxu0 0.0
  %6375 = vmatprep.subr.mxu0 0.0
  %6376 = vmatpush1.msra.mxu0 0.0
  %6377 = vmatprep.subr.mxu0 0.0
  %6378 = vmatpush1.msra.mxu0 0.0
  %6379 = vmatprep.subr.mxu0 0.0
  %6380 = vmatpush1.msra.mxu0 0.0
  %6381 = vmatprep.subr.mxu0 0.0
  %6382 = vmatpush1.msra.mxu0 0.0
  %6383 = vmatprep.subr.mxu0 0.0
  %6384 = vmatpush1.msra.mxu0 0.0
  %6385 = vmatprep.subr.mxu0 0.0
  %6386 = vmatpush1.msra.mxu0 0.0
  %6387 = vmatprep.subr.mxu0 0.0
  %6388 = vmatpush1.msra.mxu0 0.0
  %6389 = vmatprep.subr.mxu0 0.0
  %6390 = vmatpush1.msra.mxu0 0.0
  %6391 = vmatprep.subr.mxu0 0.0
  %6392 = vmatpush1.msra.mxu0 0.0
  %6393 = vmatprep.subr.mxu0 0.0
  %6394 = vmatpush1.msra.mxu0 0.0
  %6395 = vmatprep.subr.mxu0 0.0
  %6396 = vmatpush1.msra.mxu0 0.0
  %6397 = vmatprep.subr.mxu0 0.0
  %6398 = vmatpush1.msra.mxu0 0.0
  %6399 = vmatprep.subr.mxu0 0.0
  %6400 = vmatpush1.msra.mxu0 0.0
  %6401 = vmatprep.subr.mxu0 0.0
  %6402 = vmatpush1.msra.mxu0 0.0
  %6403 = vmatprep.subr.mxu0 0.0
  %6404 = vmatpush1.msra.mxu0 0.0
  %6405 = vmatprep.subr.mxu0 0.0
  %6406 = vmatpush1.msra.mxu0 0.0
  %6407 = vmatprep.subr.mxu0 0.0
  %6408 = vmatpush1.msra.mxu0 0.0
  %6409 = vmatprep.subr.mxu0 0.0
  %6410 = vmatpush1.msra.mxu0 0.0
  %6411 = vmatprep.subr.mxu0 0.0
  %6412 = vmatpush1.msra.mxu0 0.0
  %6413 = vmatprep.subr.mxu0 0.0
  %6414 = vmatpush1.msra.mxu0 0.0
  %6415 = vmatprep.subr.mxu0 0.0
  %6416 = vmatpush1.msra.mxu0 0.0
  %6417 = vmatprep.subr.mxu0 0.0
  %6418 = vmatpush1.msra.mxu0 0.0
  %6419 = vmatprep.mubr.f32.mxu0 0.0
  %6420 = vmatmul.mubr.f32.gmra.mrb[0].mxu0 %v5657
  %v6421 = vpop.f32.mrb[0].mxu0
  %v6422 = vadd.f32 %v5611, %v6421
  %v6423 = vpop.f32.mrb[0].mxu0
  %v6424 = vadd.f32 %v5615, %v6423
  %6425 = vmatprep.mubr.f32.mxu0 0.0
  %6426 = vmatmul.mubr.f32.gmra.mrb[0].mxu0 %v5660
  %v6427 = vpop.f32.mrb[0].mxu0
  %v6428 = vadd.f32 %v5611, %v6427
  %v6429 = vpop.f32.mrb[0].mxu0
  %v6430 = vadd.f32 %v5615, %v6429
  %6431 = vdwg.mxu0
  %6432 = vmatprep.subr.mxu0 %v5527
  %6433 = vmatpush1.msra.mxu0 %v5526
  %6434 = vmatprep.subr.mxu0 0.0
  %6435 = vmatpush1.msra.mxu0 0.0
  %6436 = vmatprep.subr.mxu0 0.0
  %6437 = vmatpush1.msra.mxu0 0.0
  %6438 = vmatprep.subr.mxu0 0.0
  %6439 = vmatpush1.msra.mxu0 0.0
  %6440 = vmatprep.subr.mxu0 0.0
  %6441 = vmatpush1.msra.mxu0 0.0
  %6442 = vmatprep.subr.mxu0 0.0
  %6443 = vmatpush1.msra.mxu0 0.0
  %6444 = vmatprep.subr.mxu0 0.0
  %6445 = vmatpush1.msra.mxu0 0.0
  %6446 = vmatprep.subr.mxu0 0.0
  %6447 = vmatpush1.msra.mxu0 0.0
  %6448 = vmatprep.subr.mxu0 0.0
  %6449 = vmatpush1.msra.mxu0 0.0
  %6450 = vmatprep.subr.mxu0 0.0
  %6451 = vmatpush1.msra.mxu0 0.0
  %6452 = vmatprep.subr.mxu0 0.0
  %6453 = vmatpush1.msra.mxu0 0.0
  %6454 = vmatprep.subr.mxu0 0.0
  %6455 = vmatpush1.msra.mxu0 0.0
  %6456 = vmatprep.subr.mxu0 0.0
  %6457 = vmatpush1.msra.mxu0 0.0
  %6458 = vmatprep.subr.mxu0 0.0
  %6459 = vmatpush1.msra.mxu0 0.0
  %6460 = vmatprep.subr.mxu0 0.0
  %6461 = vmatpush1.msra.mxu0 0.0
  %6462 = vmatprep.subr.mxu0 0.0
  %6463 = vmatpush1.msra.mxu0 0.0
  %6464 = vmatprep.subr.mxu0 0.0
  %6465 = vmatpush1.msra.mxu0 0.0
  %6466 = vmatprep.subr.mxu0 0.0
  %6467 = vmatpush1.msra.mxu0 0.0
  %6468 = vmatprep.subr.mxu0 0.0
  %6469 = vmatpush1.msra.mxu0 0.0
  %6470 = vmatprep.subr.mxu0 0.0
  %6471 = vmatpush1.msra.mxu0 0.0
  %6472 = vmatprep.subr.mxu0 0.0
  %6473 = vmatpush1.msra.mxu0 0.0
  %6474 = vmatprep.subr.mxu0 0.0
  %6475 = vmatpush1.msra.mxu0 0.0
  %6476 = vmatprep.subr.mxu0 0.0
  %6477 = vmatpush1.msra.mxu0 0.0
  %6478 = vmatprep.subr.mxu0 0.0
  %6479 = vmatpush1.msra.mxu0 0.0
  %6480 = vmatprep.subr.mxu0 0.0
  %6481 = vmatpush1.msra.mxu0 0.0
  %6482 = vmatprep.subr.mxu0 0.0
  %6483 = vmatpush1.msra.mxu0 0.0
  %6484 = vmatprep.subr.mxu0 0.0
  %6485 = vmatpush1.msra.mxu0 0.0
  %6486 = vmatprep.subr.mxu0 0.0
  %6487 = vmatpush1.msra.mxu0 0.0
  %6488 = vmatprep.subr.mxu0 0.0
  %6489 = vmatpush1.msra.mxu0 0.0
  %6490 = vmatprep.subr.mxu0 0.0
  %6491 = vmatpush1.msra.mxu0 0.0
  %6492 = vmatprep.subr.mxu0 0.0
  %6493 = vmatpush1.msra.mxu0 0.0
  %6494 = vmatprep.subr.mxu0 0.0
  %6495 = vmatpush1.msra.mxu0 0.0
  %6496 = vmatprep.mubr.f32.mxu0 0.0
  %6497 = vmatmul.mubr.f32.gmra.mrb[0].mxu0 %v5657
  %v6498 = vpop.f32.mrb[0].mxu0
  %v6499 = vadd.f32 %v5619, %v6498
  %v6500 = vpop.f32.mrb[0].mxu0
  %v6501 = vadd.f32 %v5623, %v6500
  %6502 = vmatprep.mubr.f32.mxu0 0.0
  %6503 = vmatmul.mubr.f32.gmra.mrb[0].mxu0 %v5660
  %v6504 = vpop.f32.mrb[0].mxu0
  %v6505 = vadd.f32 %v5619, %v6504
  %v6506 = vpop.f32.mrb[0].mxu0
  %v6507 = vadd.f32 %v5623, %v6506
  %6508 = vdwg.mxu0
  %6509 = vmatprep.subr.mxu0 %v5529
  %6510 = vmatpush1.msra.mxu0 %v5528
  %6511 = vmatprep.subr.mxu0 0.0
  %6512 = vmatpush1.msra.mxu0 0.0
  %6513 = vmatprep.subr.mxu0 0.0
  %6514 = vmatpush1.msra.mxu0 0.0
  %6515 = vmatprep.subr.mxu0 0.0
  %6516 = vmatpush1.msra.mxu0 0.0
  %6517 = vmatprep.subr.mxu0 0.0
  %6518 = vmatpush1.msra.mxu0 0.0
  %6519 = vmatprep.subr.mxu0 0.0
  %6520 = vmatpush1.msra.mxu0 0.0
  %6521 = vmatprep.subr.mxu0 0.0
  %6522 = vmatpush1.msra.mxu0 0.0
  %6523 = vmatprep.subr.mxu0 0.0
  %6524 = vmatpush1.msra.mxu0 0.0
  %6525 = vmatprep.subr.mxu0 0.0
  %6526 = vmatpush1.msra.mxu0 0.0
  %6527 = vmatprep.subr.mxu0 0.0
  %6528 = vmatpush1.msra.mxu0 0.0
  %6529 = vmatprep.subr.mxu0 0.0
  %6530 = vmatpush1.msra.mxu0 0.0
  %6531 = vmatprep.subr.mxu0 0.0
  %6532 = vmatpush1.msra.mxu0 0.0
  %6533 = vmatprep.subr.mxu0 0.0
  %6534 = vmatpush1.msra.mxu0 0.0
  %6535 = vmatprep.subr.mxu0 0.0
  %6536 = vmatpush1.msra.mxu0 0.0
  %6537 = vmatprep.subr.mxu0 0.0
  %6538 = vmatpush1.msra.mxu0 0.0
  %6539 = vmatprep.subr.mxu0 0.0
  %6540 = vmatpush1.msra.mxu0 0.0
  %6541 = vmatprep.subr.mxu0 0.0
  %6542 = vmatpush1.msra.mxu0 0.0
  %6543 = vmatprep.subr.mxu0 0.0
  %6544 = vmatpush1.msra.mxu0 0.0
  %6545 = vmatprep.subr.mxu0 0.0
  %6546 = vmatpush1.msra.mxu0 0.0
  %6547 = vmatprep.subr.mxu0 0.0
  %6548 = vmatpush1.msra.mxu0 0.0
  %6549 = vmatprep.subr.mxu0 0.0
  %6550 = vmatpush1.msra.mxu0 0.0
  %6551 = vmatprep.subr.mxu0 0.0
  %6552 = vmatpush1.msra.mxu0 0.0
  %6553 = vmatprep.subr.mxu0 0.0
  %6554 = vmatpush1.msra.mxu0 0.0
  %6555 = vmatprep.subr.mxu0 0.0
  %6556 = vmatpush1.msra.mxu0 0.0
  %6557 = vmatprep.subr.mxu0 0.0
  %6558 = vmatpush1.msra.mxu0 0.0
  %6559 = vmatprep.subr.mxu0 0.0
  %6560 = vmatpush1.msra.mxu0 0.0
  %6561 = vmatprep.subr.mxu0 0.0
  %6562 = vmatpush1.msra.mxu0 0.0
  %6563 = vmatprep.subr.mxu0 0.0
  %6564 = vmatpush1.msra.mxu0 0.0
  %6565 = vmatprep.subr.mxu0 0.0
  %6566 = vmatpush1.msra.mxu0 0.0
  %6567 = vmatprep.subr.mxu0 0.0
  %6568 = vmatpush1.msra.mxu0 0.0
  %6569 = vmatprep.subr.mxu0 0.0
  %6570 = vmatpush1.msra.mxu0 0.0
  %6571 = vmatprep.subr.mxu0 0.0
  %6572 = vmatpush1.msra.mxu0 0.0
  %6573 = vmatprep.mubr.f32.mxu0 0.0
  %6574 = vmatmul.mubr.f32.gmra.mrb[0].mxu0 %v5657
  %v6575 = vpop.f32.mrb[0].mxu0
  %v6576 = vadd.f32 %v5627, %v6575
  %v6577 = vpop.f32.mrb[0].mxu0
  %v6578 = vadd.f32 %v5631, %v6577
  %6579 = vmatprep.mubr.f32.mxu0 0.0
  %6580 = vmatmul.mubr.f32.gmra.mrb[0].mxu0 %v5660
  %v6581 = vpop.f32.mrb[0].mxu0
  %v6582 = vadd.f32 %v5627, %v6581
  %v6583 = vpop.f32.mrb[0].mxu0
  %v6584 = vadd.f32 %v5631, %v6583
  %6585 = vdwg.mxu0
  %v6586 = vadd.f32 %v122, %v5729
  %v6587 = vadd.f32 %v123, %v5731
  %v6588 = vadd.f32 %v124, %v5806
  %v6589 = vadd.f32 %v125, %v5808
  %v6590 = vadd.f32 %v126, %v5883
  %v6591 = vadd.f32 %v127, %v5885
  %v6592 = vadd.f32 %v128, %v5960
  %v6593 = vadd.f32 %v129, %v5962
  %v6594 = vadd.f32 %v130, %v6037
  %v6595 = vadd.f32 %v131, %v6039
  %v6596 = vadd.f32 %v132, %v6114
  %v6597 = vadd.f32 %v133, %v6116
  %v6598 = vadd.f32 %v134, %v6191
  %v6599 = vadd.f32 %v135, %v6193
  %v6600 = vadd.f32 %v136, %v6268
  %v6601 = vadd.f32 %v137, %v6270
  %v6602 = vadd.f32 %v138, %v6345
  %v6603 = vadd.f32 %v139, %v6347
  %v6604 = vadd.f32 %v140, %v6422
  %v6605 = vadd.f32 %v141, %v6424
  %v6606 = vadd.f32 %v142, %v6499
  %v6607 = vadd.f32 %v143, %v6501
  %v6608 = vadd.f32 %v144, %v6576
  %v6609 = vadd.f32 %v145, %v6578
  %v6610 = vadd.f32 %v146, %v5735
  %v6611 = vadd.f32 %v147, %v5737
  %v6612 = vadd.f32 %v148, %v5812
  %v6613 = vadd.f32 %v149, %v5814
  %v6614 = vadd.f32 %v150, %v5889
  %v6615 = vadd.f32 %v151, %v5891
  %v6616 = vadd.f32 %v152, %v5966
  %v6617 = vadd.f32 %v153, %v5968
  %v6618 = vadd.f32 %v154, %v6043
  %v6619 = vadd.f32 %v155, %v6045
  %v6620 = vadd.f32 %v156, %v6120
  %v6621 = vadd.f32 %v157, %v6122
  %v6622 = vadd.f32 %v158, %v6197
  %v6623 = vadd.f32 %v159, %v6199
  %v6624 = vadd.f32 %v160, %v6274
  %v6625 = vadd.f32 %v161, %v6276
  %v6626 = vadd.f32 %v162, %v6351
  %v6627 = vadd.f32 %v163, %v6353
  %v6628 = vadd.f32 %v164, %v6428
  %v6629 = vadd.f32 %v165, %v6430
  %v6630 = vadd.f32 %v166, %v6505
  %v6631 = vadd.f32 %v167, %v6507
  %v6632 = vadd.f32 %v168, %v6582
  %v6633 = vadd.f32 %v169, %v6584
  %6634 = vst [vmem:[%s59] sm:$0xff] %v6586
  %6635 = vst [vmem:[%s59 + $0x8] sm:$0xff] %v6587
  %6636 = vst [vmem:[%s59 + $0x10] sm:$0xff] %v6588
  %6637 = vst [vmem:[%s59 + $0x18] sm:$0xff] %v6589
  %6638 = vst [vmem:[%s59 + $0x20] sm:$0xff] %v6590
  %6639 = vst [vmem:[%s59 + $0x28] sm:$0xff] %v6591
  %6640 = vst [vmem:[%s59 + $0x30] sm:$0xff] %v6592
  %6641 = vst [vmem:[%s59 + $0x38] sm:$0xff] %v6593
  %6642 = vst [vmem:[%s59 + $0x40] sm:$0xff] %v6594
  %6643 = vst [vmem:[%s59 + $0x48] sm:$0xff] %v6595
  %6644 = vst [vmem:[%s59 + $0x50] sm:$0xff] %v6596
  %6645 = vst [vmem:[%s59 + $0x58] sm:$0xff] %v6597
  %6646 = vst [vmem:[%s59 + $0x60] sm:$0xff] %v6598
  %6647 = vst [vmem:[%s59 + $0x68] sm:$0xff] %v6599
  %6648 = vst [vmem:[%s59 + $0x70] sm:$0xff] %v6600
  %6649 = vst [vmem:[%s59 + $0x78] sm:$0xff] %v6601
  %6650 = vst [vmem:[%s59 + $0x80] sm:$0xff] %v6602
  %6651 = vst [vmem:[%s59 + $0x88] sm:$0xff] %v6603
  %6652 = vst [vmem:[%s59 + $0x90] sm:$0xff] %v6604
  %6653 = vst [vmem:[%s59 + $0x98] sm:$0xff] %v6605
  %6654 = vst [vmem:[%s59 + $0xa0] sm:$0xff] %v6606
  %6655 = vst [vmem:[%s59 + $0xa8] sm:$0xff] %v6607
  %6656 = vst [vmem:[%s59 + $0xb0] sm:$0xff] %v6608
  %6657 = vst.msk [vmem:[%s59 + $0xb8] sm:$0xff] %vm555, %v6609
  %6658 = vst [vmem:[%s59 + $0xc0] sm:$0xff] %v6610
  %6659 = vst [vmem:[%s59 + $0xc8] sm:$0xff] %v6611
  %6660 = vst [vmem:[%s59 + $0xd0] sm:$0xff] %v6612
  %6661 = vst [vmem:[%s59 + $0xd8] sm:$0xff] %v6613
  %6662 = vst [vmem:[%s59 + $0xe0] sm:$0xff] %v6614
  %6663 = vst [vmem:[%s59 + $0xe8] sm:$0xff] %v6615
  %6664 = vst [vmem:[%s59 + $0xf0] sm:$0xff] %v6616
  %6665 = vst [vmem:[%s59 + $0xf8] sm:$0xff] %v6617
  %6666 = vst [vmem:[%s59 + $0x100] sm:$0xff] %v6618
  %6667 = vst [vmem:[%s59 + $0x108] sm:$0xff] %v6619
  %6668 = vst [vmem:[%s59 + $0x110] sm:$0xff] %v6620
  %6669 = vst [vmem:[%s59 + $0x118] sm:$0xff] %v6621
  %6670 = vst [vmem:[%s59 + $0x120] sm:$0xff] %v6622
  %6671 = vst [vmem:[%s59 + $0x128] sm:$0xff] %v6623
  %6672 = vst [vmem:[%s59 + $0x130] sm:$0xff] %v6624
  %6673 = vst [vmem:[%s59 + $0x138] sm:$0xff] %v6625
  %6674 = vst [vmem:[%s59 + $0x140] sm:$0xff] %v6626
  %6675 = vst [vmem:[%s59 + $0x148] sm:$0xff] %v6627
  %6676 = vst [vmem:[%s59 + $0x150] sm:$0xff] %v6628
  %6677 = vst [vmem:[%s59 + $0x158] sm:$0xff] %v6629
  %6678 = vst [vmem:[%s59 + $0x160] sm:$0xff] %v6630
  %6679 = vst [vmem:[%s59 + $0x168] sm:$0xff] %v6631
  %6680 = vst [vmem:[%s59 + $0x170] sm:$0xff] %v6632
  %6681 = vst.msk [vmem:[%s59 + $0x178] sm:$0xff] %vm555, %v6633
  // Predicated region
  $region118: #{ch_sp_att_forward.3} parent=0 // pred_check
    _
  $region119: #{ch_sp_att_forward.3} parent=0 // pred_check_branch
    %6683 = sbr.rel (0) target = $region121
  $region120: #{ch_sp_att_forward.3} parent=0 // pred_region
    _
  $region121: #{ch_sp_att_forward.3} parent=0 // pred_fallthru
    _
  // Predicated region
  $region122: #{ch_sp_att_forward.3} parent=0 // pred_check
    _
  $region123: #{ch_sp_att_forward.3} parent=0 // pred_check_branch
    %6685 = sbr.rel (0) target = $region125
  $region124: #{ch_sp_att_forward.3} parent=0 // pred_region
    _
  $region125: #{ch_sp_att_forward.3} parent=0 // pred_fallthru
    _

</llo_original>
